<compile_context>
chip_gen: v7x
topology: tpu7x:2x2x1
jax: 0.10.0
libtpu: 0.0.40
codegen_flags: <defaults>
</compile_context>

<pallas_src>
import functools

import jax
import jax.numpy as jnp
import numpy as np
from jax import lax
from jax.experimental import pallas as pl
from jax.experimental.pallas import tpu as pltpu


def _round_up(v, m):
    return (v + m - 1) // m * m


# ----------------------------------------------------------------------------
# Fused kernel: first conv + 4x (dilated k=3 conv + bias + PReLU) + transpose
# ----------------------------------------------------------------------------
def _fused_encoder_kernel(x_ref, w1_ref, wd_ref, b1_ref, bd_ref, a_ref, o_ref,
                          *, TT, HALO, T1, dilations, halo_sched, split_taps):
    """One (time-tile, batch) grid step.

    x_ref  : [1, 1, W0, K]  framed raw-sample window (f32); row r holds the K
                            samples of global frame (t0 - HALO + r), zeros
                            outside the signal.
    w1_ref : [K, N]         first-conv weight (f32)
    wd_ref : [4, 3N, N]     dilated-conv weights, tap-major (bf16)
                            (or [4, 3, N, N] when split_taps=True)
    b1_ref : [1, N]         first-conv bias (f32)
    bd_ref : [4, 1, N]      dilated-conv biases (f32)
    a_ref  : [4]            PReLU alphas (f32, SMEM)
    o_ref  : [1, N, TT]     output tile, channels-first (transpose fused here)
    """
    j = pl.program_id(0)
    t0 = j * TT                        # first output frame of this tile
    W0 = TT + 2 * HALO                 # frames produced by the first conv

    # ---- first conv: ONE [W0, K] @ [K, N] f32 contraction -------------------
    xwin = x_ref[0, 0]                                     # [W0, K] f32
    h = jnp.dot(xwin, w1_ref[...], preferred_element_type=jnp.float32)
    h = h + b1_ref[...]                                    # [W0, N] f32

    # ---- boundary masks: ONE shared iota per tile ---------------------------
    N = h.shape[1]
    giota = lax.broadcasted_iota(jnp.int32, (W0, N), 0) + (t0 - HALO)

    def mask_invalid(arr, halo):
        # Zero rows whose global frame index lies outside [0, T1): reproduces
        # the zero padding each dilated conv applies at the sequence edges.
        w = arr.shape[0]
        off = HALO - halo
        g = giota[off:off + w]
        return jnp.where(jnp.logical_and(g >= 0, g < T1), arr, 0.0)

    h = mask_invalid(h, HALO)

    # ---- 4 x (dilated k=3 conv + bias + PReLU), all VMEM/vreg resident ------
    halo_in = HALO
    n_layers = len(dilations)
    for l in range(n_layers):
        d = dilations[l]
        halo_out = halo_sched[l]
        w_out = TT + 2 * halo_out
        off = halo_in - halo_out - d
        hb = h.astype(jnp.bfloat16)
        if split_taps:
            # v5e-friendly: 3 accumulating K=N dots (128-deep MXU, no concat).
            y = jnp.dot(hb[off:off + w_out, :], wd_ref[l, 0],
                        preferred_element_type=jnp.float32)
            y = y + jnp.dot(hb[off + d:off + d + w_out, :], wd_ref[l, 1],
                            preferred_element_type=jnp.float32)
            y = y + jnp.dot(hb[off + 2 * d:off + 2 * d + w_out, :], wd_ref[l, 2],
                            preferred_element_type=jnp.float32)
        else:
            # v6e/v7x: collapse the 3 taps into one K=3N deep contraction
            # (fills the 256-deep MXU).
            xc = jnp.concatenate(
                [hb[off:off + w_out, :],
                 hb[off + d:off + d + w_out, :],
                 hb[off + 2 * d:off + 2 * d + w_out, :]], axis=-1)   # [w_out,3N]
            y = jnp.dot(xc, wd_ref[l], preferred_element_type=jnp.float32)
        y = y + bd_ref[l]
        a = a_ref[l]
        y = jnp.where(y > 0, y, a * y)                     # PReLU (f32)
        if l < n_layers - 1:
            y = mask_invalid(y, halo_out)
        h = y
        halo_in = halo_out

    # Fused NCT transpose on the store path.
    # TODO(synk): if a bundle dump shows the XLU/vst slot saturating, emit the
    # tile time-major instead and transpose in the consumer.
    o_ref[0] = jnp.transpose(h, (1, 0)).astype(o_ref.dtype)   # [N, TT]


# ----------------------------------------------------------------------------
# Forward wrapper
# ----------------------------------------------------------------------------
def deep_encoder_forward(params, x, kernel_size, stride, *,
                         time_tile=512, split_taps=False):
    """x: [B, T] float32 -> [B, N, T1]  (matches PyTorch DeepEncoder.forward).

    split_taps=False : one K=3N deep-contraction dot per dilated layer
                       (best for the 256-deep MXUs of v6e/v7x).
    split_taps=True  : three accumulating K=N dots per dilated layer
                       (fits v5e's 128-deep MXU; no lane-concat buffer).
    """
    B, T = x.shape
    K, S = int(kernel_size), int(stride)
    w1 = params["w1"]
    N = w1.shape[0]
    T1 = (T - K) // S + 1

    dilations = (1, 2, 4, 8)
    halo_sched = tuple(sum(dilations[i + 1:]) for i in range(len(dilations)))
    HALO = _round_up(sum(dilations), 8)            # 15 -> 16 (sublane aligned)

    # Output frames per grid step: large tiles amortize the ~0.35us per-step
    # overhead and shrink halo recompute (2*HALO/TT); multiple of 128 keeps the
    # output stores lane-dense.  Per-tile footprint at TT=512 is a few MB.
    TT = max(128, _round_up(min(int(time_tile), _round_up(T1, 128)), 128))
    NT = pl.cdiv(T1, TT)
    W0 = TT + 2 * HALO                             # per-tile frames incl. halo

    # ---- per-tile framed windows ---------------------------------------------
    # x_win[b, j, r, k] = x[b, (j*TT - HALO + r)*S + k]  (zero outside signal).
    # This is an im2col of the raw waveform only (~K/S-fold duplication of the
    # smallest tensor in the pipeline); it bounds the kernel's input block to
    # [W0, K] independently of T, so VMEM no longer scales with sequence length.
    pad_left = HALO * S
    need = ((NT - 1) * TT + W0 - 1) * S + K
    pad_right = max(0, need - T - pad_left)
    xp = jnp.pad(x, ((0, 0), (pad_left, pad_right)))
    widx = ((jnp.arange(NT, dtype=jnp.int32)[:, None, None] * TT
             + jnp.arange(W0, dtype=jnp.int32)[None, :, None]) * S
            + jnp.arange(K, dtype=jnp.int32)[None, None, :])    # [NT, W0, K]
    x_win = xp[:, widx]                                          # [B, NT, W0, K]

    # ---- weights: channels-last matmul layouts -------------------------------
    w1_km = jnp.transpose(w1[:, 0, :], (1, 0)).astype(jnp.float32)   # [K, N] f32
    b1 = params["b1"].reshape(1, N).astype(jnp.float32)
    wd3 = jnp.stack([jnp.transpose(params[f"w{i}"], (2, 1, 0))
                     for i in (2, 3, 4, 5)]).astype(jnp.bfloat16)    # [4,3,N,N]
    if split_taps:
        wd = wd3                                                     # [4,3,N,N]
        wd_spec = pl.BlockSpec((4, 3, N, N), lambda j, b: (0, 0, 0, 0))
    else:
        wd = wd3.reshape(4, 3 * N, N)                                # [4,3N,N]
        wd_spec = pl.BlockSpec((4, 3 * N, N), lambda j, b: (0, 0, 0))
    bd = jnp.stack([params[f"b{i}"].reshape(1, N) for i in (2, 3, 4, 5)])
    bd = bd.astype(jnp.float32)                                      # [4, 1, N]
    alphas = jnp.concatenate([params[f"a{i}"] for i in (2, 3, 4, 5)])
    alphas = alphas.astype(jnp.float32)                              # [4]

    kernel = functools.partial(
        _fused_encoder_kernel, TT=TT, HALO=HALO, T1=T1,
        dilations=dilations, halo_sched=halo_sched, split_taps=split_taps)

    # Grid: time-tiles first (the long axis) so megacore sharding on v7x splits
    # it evenly; batch second.  out_shape is exactly (B, N, T1): the ragged
    # last tile (T1 % TT != 0) is masked by Pallas boundary-block handling, so
    # there is no post-hoc HBM slice/copy.
    return pl.pallas_call(
        kernel,
        out_shape=jax.ShapeDtypeStruct((B, N, T1), jnp.float32),
        grid=(NT, B),
        in_specs=[
            pl.BlockSpec((1, 1, W0, K), lambda j, b: (b, j, 0, 0)),  # x window
            pl.BlockSpec((K, N), lambda j, b: (0, 0)),               # w1
            wd_spec,                                                 # wd
            pl.BlockSpec((1, N), lambda j, b: (0, 0)),               # b1
            pl.BlockSpec((4, 1, N), lambda j, b: (0, 0, 0)),         # bd
            pl.BlockSpec(memory_space=pltpu.MemorySpace.SMEM),       # alphas
        ],
        out_specs=pl.BlockSpec((1, N, TT), lambda j, b: (b, 0, j)),
        compiler_params=pltpu.CompilerParams(
            dimension_semantics=("parallel", "parallel"),
            # ~2 MB of double-buffered pipeline blocks + ~2 MB of live
            # intermediates at TT=512; 40 MiB gives generous headroom while
            # staying below v7x's 64 MiB physical VMEM.
            vmem_limit_bytes=40 * 1024 * 1024),
    )(x_win, w1_km, wd, b1, bd, alphas)


# ----------------------------------------------------------------------------
# Parameter construction (torch-style Conv1d init)
# ----------------------------------------------------------------------------
def init_params(key, in_channels, out_channels, kernel_size):
    N, K = out_channels, kernel_size
    ks = jax.random.split(key, 12)

    def u(k, shape, fan_in):
        s = 1.0 / np.sqrt(fan_in)
        return jax.random.uniform(k, shape, jnp.float32, -s, s)

    params = {
        "w1": u(ks[0], (N, in_channels, K), in_channels * K),
        "b1": u(ks[1], (N,), in_channels * K),
    }
    for i, kw in enumerate([2, 3, 4, 5]):
        params[f"w{kw}"] = u(ks[2 + 2 * i], (N, N, 3), N * 3)
        params[f"b{kw}"] = u(ks[3 + 2 * i], (N,), N * 3)
    # PReLU scalars (num_parameters=1 per module); distinct values -> stricter test
    params["a2"] = jnp.array([0.25], jnp.float32)
    params["a3"] = jnp.array([0.20], jnp.float32)
    params["a4"] = jnp.array([0.15], jnp.float32)
    params["a5"] = jnp.array([0.10], jnp.float32)
    return params


# ----------------------------------------------------------------------------
# Pure-JAX (XLA) reference for the correctness check
# ----------------------------------------------------------------------------
def _conv1d_ref(x, w, b, stride=1, dilation=1, padding=0):
    out = lax.conv_general_dilated(
        x, w, window_strides=(stride,), padding=[(padding, padding)],
        rhs_dilation=(dilation,), dimension_numbers=("NCH", "OIH", "NCH"))
    return out + b[None, :, None]


def _prelu_ref(x, a):
    return jnp.where(x > 0, x, a[0] * x)


def deep_encoder_ref(params, x, kernel_size, stride):
    h = x[:, None, :]                                                 # [B,1,T]
    h = _conv1d_ref(h, params["w1"], params["b1"], stride=stride)
    h = _conv1d_ref(h, params["w2"], params["b2"], dilation=1, padding=1)
    h = _prelu_ref(h, params["a2"])
    h = _conv1d_ref(h, params["w3"], params["b3"], dilation=2, padding=2)
    h = _prelu_ref(h, params["a3"])
    h = _conv1d_ref(h, params["w4"], params["b4"], dilation=4, padding=4)
    h = _prelu_ref(h, params["a4"])
    h = _conv1d_ref(h, params["w5"], params["b5"], dilation=8, padding=8)
    h = _prelu_ref(h, params["a5"])
    return h                                                          # [B,N,T1]


def _run_case(key, *, B, T1_target, kernel_size, stride, time_tile, split_taps):
    N = 128
    T = (T1_target - 1) * stride + kernel_size
    kx, kp = jax.random.split(key)
    x = jax.random.normal(kx, (B, T), jnp.float32)
    params = init_params(kp, 1, N, kernel_size)
    fwd = jax.jit(functools.partial(
        deep_encoder_forward, kernel_size=kernel_size, stride=stride,
        time_tile=time_tile, split_taps=split_taps))
    out = jax.block_until_ready(fwd(params, x))
    ref = deep_encoder_ref(params, x, kernel_size, stride)
    T1 = (T - kernel_size) // stride + 1
    assert out.shape == (B, N, T1), out.shape
    np.testing.assert_allclose(np.asarray(out), np.asarray(ref),
                               rtol=5e-2, atol=2e-2)


if __name__ == "__main__":
    key = jax.random.PRNGKey(0)
    k1, k2 = jax.random.split(key)
    # Case 1: TT=512, 2 time tiles x 2 batches (grid 2x2); exercises both
    # sequence-edge masks and the K=3N deep-contraction path (v6e/v7x default).
    _run_case(k1, B=2, T1_target=1024, kernel_size=16, stride=8,
              time_tile=512, split_taps=False)
    # Case 2: short ragged sequence (T1 not a multiple of the tile) with the
    # v5e-style split-tap path; exercises Pallas boundary-block masking.
    _run_case(k2, B=2, T1_target=200, kernel_size=16, stride=8,
              time_tile=512, split_taps=True)
    print("KERNEL_OK")
</pallas_src>

<mosaic_0001>
module attributes {stable_mosaic.version = 11 : i64} {
  func.func @_fused_encoder_kernel(%arg0: i32, %arg1: i32, %arg2: memref<1x1x544x16xf32, #tpu.memory_space<vmem>>, %arg3: memref<16x128xf32, #tpu.memory_space<vmem>>, %arg4: memref<4x384x128xbf16, #tpu.memory_space<vmem>>, %arg5: memref<1x128xf32, #tpu.memory_space<vmem>>, %arg6: memref<4x1x128xf32, #tpu.memory_space<vmem>>, %arg7: memref<4xf32, #tpu.memory_space<smem>>, %arg8: memref<1x128x512xf32, #tpu.memory_space<vmem>>) attributes {dimension_semantics = [#tpu.dimension_semantics<parallel>, #tpu.dimension_semantics<parallel>], iteration_bounds = array<i64: 2, 2>, scalar_prefetch = 0 : i64, scratch_operands = 0 : i64, tpu.core_type = #tpu.core_type<tc>, window_params = [{transform_indices = @transform_0, window_bounds = array<i64: 1, 1, 544, 16>}, {pipeline_mode = #tpu.pipeline_mode<synchronous>, transform_indices = @transform_1, window_bounds = array<i64: 16, 128>}, {pipeline_mode = #tpu.pipeline_mode<synchronous>, transform_indices = @transform_2, window_bounds = array<i64: 4, 384, 128>}, {pipeline_mode = #tpu.pipeline_mode<synchronous>, transform_indices = @transform_3, window_bounds = array<i64: 1, 128>}, {pipeline_mode = #tpu.pipeline_mode<synchronous>, transform_indices = @transform_4, window_bounds = array<i64: 4, 1, 128>}, {transform_indices = @transform_5, window_bounds = array<i64: 4>}, {transform_indices = @transform_6, window_bounds = array<i64: 1, 128, 512>}]} {
    %c512_i32 = arith.constant 512 : i32
    %0 = arith.muli %arg0, %c512_i32 : i32
    %c0 = arith.constant 0 : index
    %c0_0 = arith.constant 0 : index
    %c0_1 = arith.constant 0 : index
    %c0_2 = arith.constant 0 : index
    %1 = vector.load %arg2[%c0, %c0_0, %c0_1, %c0_2] : memref<1x1x544x16xf32, #tpu.memory_space<vmem>>, vector<1x1x544x16xf32>
    %2 = vector.shape_cast %1 : vector<1x1x544x16xf32> to vector<544x16xf32>
    %c0_3 = arith.constant 0 : index
    %c0_4 = arith.constant 0 : index
    %3 = vector.load %arg3[%c0_3, %c0_4] : memref<16x128xf32, #tpu.memory_space<vmem>>, vector<16x128xf32>
    %cst = arith.constant dense<0.000000e+00> : vector<544x128xf32>
    %4 = tpu.matmul %2, %3, %cst {dimension_numbers = #tpu.dot_dimension_numbers<[1], [0], [0], [1], [0, 0, 1, 1], [], []>} : vector<544x16xf32>, vector<16x128xf32>, vector<544x128xf32> -> vector<544x128xf32>
    %c0_5 = arith.constant 0 : index
    %c0_6 = arith.constant 0 : index
    %5 = vector.load %arg5[%c0_5, %c0_6] : memref<1x128xf32, #tpu.memory_space<vmem>>, vector<1x128xf32>
    %6 = vector.broadcast %5 : vector<1x128xf32> to vector<544x128xf32>
    %7 = arith.addf %4, %6 : vector<544x128xf32>
    %8 = tpu.iota {dimensions = array<i32: 0>} : vector<544x128xi32>
    %c16_i32 = arith.constant 16 : i32
    %9 = arith.subi %0, %c16_i32 : i32
    %10 = vector.broadcast %9 : i32 to vector<544x128xi32>
    %11 = arith.addi %8, %10 : vector<544x128xi32>
    %c0_i32 = arith.constant 0 : i32
    %12 = vector.broadcast %c0_i32 : i32 to vector<544x128xi32>
    %13 = arith.cmpi sge, %11, %12 : vector<544x128xi32>
    %c1024_i32 = arith.constant 1024 : i32
    %14 = vector.broadcast %c1024_i32 : i32 to vector<544x128xi32>
    %15 = arith.cmpi slt, %11, %14 : vector<544x128xi32>
    %16 = arith.andi %13, %15 : vector<544x128xi1>
    %cst_7 = arith.constant 0.000000e+00 : f32
    %17 = vector.broadcast %cst_7 : f32 to vector<544x128xf32>
    %18 = arith.select %16, %7, %17 : vector<544x128xi1>, vector<544x128xf32>
    %19 = arith.truncf %18 : vector<544x128xf32> to vector<544x128xbf16>
    %20 = vector.extract_strided_slice %19 {offsets = [1, 0], sizes = [540, 128], strides = [1, 1]} : vector<544x128xbf16> to vector<540x128xbf16>
    %21 = vector.extract_strided_slice %19 {offsets = [2, 0], sizes = [540, 128], strides = [1, 1]} : vector<544x128xbf16> to vector<540x128xbf16>
    %22 = vector.extract_strided_slice %19 {offsets = [3, 0], sizes = [540, 128], strides = [1, 1]} : vector<544x128xbf16> to vector<540x128xbf16>
    %23 = tpu.concatenate %20, %21, %22 in 1 : vector<540x128xbf16>, vector<540x128xbf16>, vector<540x128xbf16> -> vector<540x384xbf16>
    %c0_8 = arith.constant 0 : index
    %c0_9 = arith.constant 0 : index
    %c0_10 = arith.constant 0 : index
    %24 = vector.load %arg4[%c0_8, %c0_9, %c0_10] : memref<4x384x128xbf16, #tpu.memory_space<vmem>>, vector<1x384x128xbf16>
    %25 = vector.shape_cast %24 : vector<1x384x128xbf16> to vector<384x128xbf16>
    %cst_11 = arith.constant dense<0.000000e+00> : vector<540x128xf32>
    %26 = tpu.matmul %23, %25, %cst_11 {dimension_numbers = #tpu.dot_dimension_numbers<[1], [0], [0], [1], [0, 0, 1, 1], [], []>} : vector<540x384xbf16>, vector<384x128xbf16>, vector<540x128xf32> -> vector<540x128xf32>
    %c0_12 = arith.constant 0 : index
    %c0_13 = arith.constant 0 : index
    %c0_14 = arith.constant 0 : index
    %27 = vector.load %arg6[%c0_12, %c0_13, %c0_14] : memref<4x1x128xf32, #tpu.memory_space<vmem>>, vector<1x1x128xf32>
    %28 = vector.shape_cast %27 : vector<1x1x128xf32> to vector<1x128xf32>
    %29 = vector.broadcast %28 : vector<1x128xf32> to vector<540x128xf32>
    %30 = arith.addf %26, %29 : vector<540x128xf32>
    %c0_15 = arith.constant 0 : index
    %31 = memref.load %arg7[%c0_15] : memref<4xf32, #tpu.memory_space<smem>>
    %cst_16 = arith.constant 0.000000e+00 : f32
    %32 = vector.broadcast %cst_16 : f32 to vector<540x128xf32>
    %33 = arith.cmpf ogt, %30, %32 : vector<540x128xf32>
    %34 = vector.broadcast %31 : f32 to vector<540x128xf32>
    %35 = arith.mulf %34, %30 : vector<540x128xf32>
    %36 = arith.select %33, %30, %35 : vector<540x128xi1>, vector<540x128xf32>
    %37 = vector.extract_strided_slice %11 {offsets = [2, 0], sizes = [540, 128], strides = [1, 1]} : vector<544x128xi32> to vector<540x128xi32>
    %c0_i32_17 = arith.constant 0 : i32
    %38 = vector.broadcast %c0_i32_17 : i32 to vector<540x128xi32>
    %39 = arith.cmpi sge, %37, %38 : vector<540x128xi32>
    %c1024_i32_18 = arith.constant 1024 : i32
    %40 = vector.broadcast %c1024_i32_18 : i32 to vector<540x128xi32>
    %41 = arith.cmpi slt, %37, %40 : vector<540x128xi32>
    %42 = arith.andi %39, %41 : vector<540x128xi1>
    %cst_19 = arith.constant 0.000000e+00 : f32
    %43 = vector.broadcast %cst_19 : f32 to vector<540x128xf32>
    %44 = arith.select %42, %36, %43 : vector<540x128xi1>, vector<540x128xf32>
    %45 = arith.truncf %44 : vector<540x128xf32> to vector<540x128xbf16>
    %46 = vector.extract_strided_slice %45 {offsets = [0, 0], sizes = [536, 128], strides = [1, 1]} : vector<540x128xbf16> to vector<536x128xbf16>
    %47 = vector.extract_strided_slice %45 {offsets = [2, 0], sizes = [536, 128], strides = [1, 1]} : vector<540x128xbf16> to vector<536x128xbf16>
    %48 = vector.extract_strided_slice %45 {offsets = [4, 0], sizes = [536, 128], strides = [1, 1]} : vector<540x128xbf16> to vector<536x128xbf16>
    %49 = tpu.concatenate %46, %47, %48 in 1 : vector<536x128xbf16>, vector<536x128xbf16>, vector<536x128xbf16> -> vector<536x384xbf16>
    %c1 = arith.constant 1 : index
    %c0_20 = arith.constant 0 : index
    %c0_21 = arith.constant 0 : index
    %50 = vector.load %arg4[%c1, %c0_20, %c0_21] : memref<4x384x128xbf16, #tpu.memory_space<vmem>>, vector<1x384x128xbf16>
    %51 = vector.shape_cast %50 : vector<1x384x128xbf16> to vector<384x128xbf16>
    %cst_22 = arith.constant dense<0.000000e+00> : vector<536x128xf32>
    %52 = tpu.matmul %49, %51, %cst_22 {dimension_numbers = #tpu.dot_dimension_numbers<[1], [0], [0], [1], [0, 0, 1, 1], [], []>} : vector<536x384xbf16>, vector<384x128xbf16>, vector<536x128xf32> -> vector<536x128xf32>
    %c1_23 = arith.constant 1 : index
    %c0_24 = arith.constant 0 : index
    %c0_25 = arith.constant 0 : index
    %53 = vector.load %arg6[%c1_23, %c0_24, %c0_25] : memref<4x1x128xf32, #tpu.memory_space<vmem>>, vector<1x1x128xf32>
    %54 = vector.shape_cast %53 : vector<1x1x128xf32> to vector<1x128xf32>
    %55 = vector.broadcast %54 : vector<1x128xf32> to vector<536x128xf32>
    %56 = arith.addf %52, %55 : vector<536x128xf32>
    %c1_26 = arith.constant 1 : index
    %57 = memref.load %arg7[%c1_26] : memref<4xf32, #tpu.memory_space<smem>>
    %cst_27 = arith.constant 0.000000e+00 : f32
    %58 = vector.broadcast %cst_27 : f32 to vector<536x128xf32>
    %59 = arith.cmpf ogt, %56, %58 : vector<536x128xf32>
    %60 = vector.broadcast %57 : f32 to vector<536x128xf32>
    %61 = arith.mulf %60, %56 : vector<536x128xf32>
    %62 = arith.select %59, %56, %61 : vector<536x128xi1>, vector<536x128xf32>
    %63 = vector.extract_strided_slice %11 {offsets = [4, 0], sizes = [536, 128], strides = [1, 1]} : vector<544x128xi32> to vector<536x128xi32>
    %c0_i32_28 = arith.constant 0 : i32
    %64 = vector.broadcast %c0_i32_28 : i32 to vector<536x128xi32>
    %65 = arith.cmpi sge, %63, %64 : vector<536x128xi32>
    %c1024_i32_29 = arith.constant 1024 : i32
    %66 = vector.broadcast %c1024_i32_29 : i32 to vector<536x128xi32>
    %67 = arith.cmpi slt, %63, %66 : vector<536x128xi32>
    %68 = arith.andi %65, %67 : vector<536x128xi1>
    %cst_30 = arith.constant 0.000000e+00 : f32
    %69 = vector.broadcast %cst_30 : f32 to vector<536x128xf32>
    %70 = arith.select %68, %62, %69 : vector<536x128xi1>, vector<536x128xf32>
    %71 = arith.truncf %70 : vector<536x128xf32> to vector<536x128xbf16>
    %72 = vector.extract_strided_slice %71 {offsets = [0, 0], sizes = [528, 128], strides = [1, 1]} : vector<536x128xbf16> to vector<528x128xbf16>
    %73 = vector.extract_strided_slice %71 {offsets = [4, 0], sizes = [528, 128], strides = [1, 1]} : vector<536x128xbf16> to vector<528x128xbf16>
    %74 = vector.extract_strided_slice %71 {offsets = [8, 0], sizes = [528, 128], strides = [1, 1]} : vector<536x128xbf16> to vector<528x128xbf16>
    %75 = tpu.concatenate %72, %73, %74 in 1 : vector<528x128xbf16>, vector<528x128xbf16>, vector<528x128xbf16> -> vector<528x384xbf16>
    %c2 = arith.constant 2 : index
    %c0_31 = arith.constant 0 : index
    %c0_32 = arith.constant 0 : index
    %76 = vector.load %arg4[%c2, %c0_31, %c0_32] : memref<4x384x128xbf16, #tpu.memory_space<vmem>>, vector<1x384x128xbf16>
    %77 = vector.shape_cast %76 : vector<1x384x128xbf16> to vector<384x128xbf16>
    %cst_33 = arith.constant dense<0.000000e+00> : vector<528x128xf32>
    %78 = tpu.matmul %75, %77, %cst_33 {dimension_numbers = #tpu.dot_dimension_numbers<[1], [0], [0], [1], [0, 0, 1, 1], [], []>} : vector<528x384xbf16>, vector<384x128xbf16>, vector<528x128xf32> -> vector<528x128xf32>
    %c2_34 = arith.constant 2 : index
    %c0_35 = arith.constant 0 : index
    %c0_36 = arith.constant 0 : index
    %79 = vector.load %arg6[%c2_34, %c0_35, %c0_36] : memref<4x1x128xf32, #tpu.memory_space<vmem>>, vector<1x1x128xf32>
    %80 = vector.shape_cast %79 : vector<1x1x128xf32> to vector<1x128xf32>
    %81 = vector.broadcast %80 : vector<1x128xf32> to vector<528x128xf32>
    %82 = arith.addf %78, %81 : vector<528x128xf32>
    %c2_37 = arith.constant 2 : index
    %83 = memref.load %arg7[%c2_37] : memref<4xf32, #tpu.memory_space<smem>>
    %cst_38 = arith.constant 0.000000e+00 : f32
    %84 = vector.broadcast %cst_38 : f32 to vector<528x128xf32>
    %85 = arith.cmpf ogt, %82, %84 : vector<528x128xf32>
    %86 = vector.broadcast %83 : f32 to vector<528x128xf32>
    %87 = arith.mulf %86, %82 : vector<528x128xf32>
    %88 = arith.select %85, %82, %87 : vector<528x128xi1>, vector<528x128xf32>
    %89 = vector.extract_strided_slice %11 {offsets = [8, 0], sizes = [528, 128], strides = [1, 1]} : vector<544x128xi32> to vector<528x128xi32>
    %c0_i32_39 = arith.constant 0 : i32
    %90 = vector.broadcast %c0_i32_39 : i32 to vector<528x128xi32>
    %91 = arith.cmpi sge, %89, %90 : vector<528x128xi32>
    %c1024_i32_40 = arith.constant 1024 : i32
    %92 = vector.broadcast %c1024_i32_40 : i32 to vector<528x128xi32>
    %93 = arith.cmpi slt, %89, %92 : vector<528x128xi32>
    %94 = arith.andi %91, %93 : vector<528x128xi1>
    %cst_41 = arith.constant 0.000000e+00 : f32
    %95 = vector.broadcast %cst_41 : f32 to vector<528x128xf32>
    %96 = arith.select %94, %88, %95 : vector<528x128xi1>, vector<528x128xf32>
    %97 = arith.truncf %96 : vector<528x128xf32> to vector<528x128xbf16>
    %98 = vector.extract_strided_slice %97 {offsets = [0, 0], sizes = [512, 128], strides = [1, 1]} : vector<528x128xbf16> to vector<512x128xbf16>
    %99 = vector.extract_strided_slice %97 {offsets = [8, 0], sizes = [512, 128], strides = [1, 1]} : vector<528x128xbf16> to vector<512x128xbf16>
    %100 = vector.extract_strided_slice %97 {offsets = [16, 0], sizes = [512, 128], strides = [1, 1]} : vector<528x128xbf16> to vector<512x128xbf16>
    %101 = tpu.concatenate %98, %99, %100 in 1 : vector<512x128xbf16>, vector<512x128xbf16>, vector<512x128xbf16> -> vector<512x384xbf16>
    %c3 = arith.constant 3 : index
    %c0_42 = arith.constant 0 : index
    %c0_43 = arith.constant 0 : index
    %102 = vector.load %arg4[%c3, %c0_42, %c0_43] : memref<4x384x128xbf16, #tpu.memory_space<vmem>>, vector<1x384x128xbf16>
    %103 = vector.shape_cast %102 : vector<1x384x128xbf16> to vector<384x128xbf16>
    %cst_44 = arith.constant dense<0.000000e+00> : vector<512x128xf32>
    %104 = tpu.matmul %101, %103, %cst_44 {dimension_numbers = #tpu.dot_dimension_numbers<[1], [0], [0], [1], [0, 0, 1, 1], [], []>} : vector<512x384xbf16>, vector<384x128xbf16>, vector<512x128xf32> -> vector<512x128xf32>
    %c3_45 = arith.constant 3 : index
    %c0_46 = arith.constant 0 : index
    %c0_47 = arith.constant 0 : index
    %105 = vector.load %arg6[%c3_45, %c0_46, %c0_47] : memref<4x1x128xf32, #tpu.memory_space<vmem>>, vector<1x1x128xf32>
    %106 = vector.shape_cast %105 : vector<1x1x128xf32> to vector<1x128xf32>
    %107 = vector.broadcast %106 : vector<1x128xf32> to vector<512x128xf32>
    %108 = arith.addf %104, %107 : vector<512x128xf32>
    %c3_48 = arith.constant 3 : index
    %109 = memref.load %arg7[%c3_48] : memref<4xf32, #tpu.memory_space<smem>>
    %cst_49 = arith.constant 0.000000e+00 : f32
    %110 = vector.broadcast %cst_49 : f32 to vector<512x128xf32>
    %111 = arith.cmpf ogt, %108, %110 : vector<512x128xf32>
    %112 = vector.broadcast %109 : f32 to vector<512x128xf32>
    %113 = arith.mulf %112, %108 : vector<512x128xf32>
    %114 = arith.select %111, %108, %113 : vector<512x128xi1>, vector<512x128xf32>
    %115 = tpu.transpose %114, [1, 0] : vector<512x128xf32> -> vector<128x512xf32>
    %c0_50 = arith.constant 0 : index
    %c0_51 = arith.constant 0 : index
    %c0_52 = arith.constant 0 : index
    %116 = vector.load %arg8[%c0_50, %c0_51, %c0_52] : memref<1x128x512xf32, #tpu.memory_space<vmem>>, vector<1x128x512xf32>
    %117 = vector.shape_cast %116 : vector<1x128x512xf32> to vector<128x512xf32>
    %118 = vector.shape_cast %115 : vector<128x512xf32> to vector<1x128x512xf32>
    tpu.vector_store %arg8[%c0_50, %c0_51, %c0_52], %118 {strides = array<i32>} : memref<1x128x512xf32, #tpu.memory_space<vmem>>, vector<1x128x512xf32>,
    return
  }
  func.func @transform_0(%arg0: i32, %arg1: i32) -> (i32, i32, i32, i32) {
    %c0_i32 = arith.constant 0 : i32
    %c0_i32_0 = arith.constant 0 : i32
    %c0_i32_1 = arith.constant 0 : i32
    return %arg1, %arg0, %c0_i32, %c0_i32_0 : i32, i32, i32, i32
  }
  func.func @transform_1(%arg0: i32, %arg1: i32) -> (i32, i32) {
    %c0_i32 = arith.constant 0 : i32
    %c0_i32_0 = arith.constant 0 : i32
    %c0_i32_1 = arith.constant 0 : i32
    return %c0_i32, %c0_i32_0 : i32, i32
  }
  func.func @transform_2(%arg0: i32, %arg1: i32) -> (i32, i32, i32) {
    %c0_i32 = arith.constant 0 : i32
    %c0_i32_0 = arith.constant 0 : i32
    %c0_i32_1 = arith.constant 0 : i32
    %c0_i32_2 = arith.constant 0 : i32
    return %c0_i32, %c0_i32_0, %c0_i32_1 : i32, i32, i32
  }
  func.func @transform_3(%arg0: i32, %arg1: i32) -> (i32, i32) {
    %c0_i32 = arith.constant 0 : i32
    %c0_i32_0 = arith.constant 0 : i32
    %c0_i32_1 = arith.constant 0 : i32
    return %c0_i32, %c0_i32_0 : i32, i32
  }
  func.func @transform_4(%arg0: i32, %arg1: i32) -> (i32, i32, i32) {
    %c0_i32 = arith.constant 0 : i32
    %c0_i32_0 = arith.constant 0 : i32
    %c0_i32_1 = arith.constant 0 : i32
    %c0_i32_2 = arith.constant 0 : i32
    return %c0_i32, %c0_i32_0, %c0_i32_1 : i32, i32, i32
  }
  func.func @transform_5(%arg0: i32, %arg1: i32) -> i32 {
    %c0_i32 = arith.constant 0 : i32
    %c0_i32_0 = arith.constant 0 : i32
    return %c0_i32 : i32
  }
  func.func @transform_6(%arg0: i32, %arg1: i32) -> (i32, i32, i32) {
    %c0_i32 = arith.constant 0 : i32
    %c0_i32_0 = arith.constant 0 : i32
    return %arg1, %c0_i32, %arg0 : i32, i32, i32
  }
}

</mosaic_0001>

<llo_original>
// kernel: deep_encoder_forward.1
$region0: #{deep_encoder_forward.1}
  #allocation0 [shape = 'u32[]', space=smem, size = 0x4, offset = 0x4, fixed_abs, tag = 'smem constant byte address 0x4 - core index']
  #allocation1 [shape = 'u32[144,128]{1,0:T(1,128)}', space=vmem, size = 0x12000, scoped, tag = 'internal scratch']
  %s0 = inlined_call_operand.vmem [shape: f32[2,2,544,16], index: 0, kind: input, shape index: {}]
  %s1 = inlined_call_operand.vmem [shape: f32[16,128], index: 1, kind: input, shape index: {}]
  %s2 = inlined_call_operand.vmem [shape: bf16[4,384,128], index: 2, kind: input, shape index: {}]
  %s3 = inlined_call_operand.vmem [shape: f32[1,128], index: 3, kind: input, shape index: {}]
  %s4 = inlined_call_operand.vmem [shape: f32[4,1,128], index: 4, kind: input, shape index: {}]
  %s5 = inlined_call_operand.vmem [shape: f32[4], index: 5, kind: input, shape index: {}]
  %s6 = inlined_call_operand.hbm [shape: f32[2,128,1024], index: 6, kind: output, shape index: {}]
  %s7 = sld [smem:[#allocation0]]
  $region61: #{deep_encoder_forward.1} parent=0
    _
  %s9 = ssub.s32 1, %s7
  %s10 = scalar_select 0, %s9, %s7
  $region1: #{deep_encoder_forward.1} parent=0
    #allocation2 [shape = 'u8[512]{0}', space=smem, size = 0x200, scoped, tag = 'input window, operand 5, single buffered']
    #allocation3 [shape = 's32[2]{0}', space=sflag, size = 0x8, scoped, tag = 'scoped memory for deep_encoder_forward.1']
    #allocation4 [shape = 's32[2]{0}', space=sflag, size = 0x8, scoped, tag = 'scoped memory for deep_encoder_forward.1']
    #allocation5 [shape = 'u8[524288]{0}', space=vmem, size = 0x80000, scoped, tag = 'output window, operand 0']
    %11 = vsyncpa [#allocation4], 0
    %12 = vsyncpa [#allocation3], 0
    %s13 = scalar_lea.sflag [#allocation3], 1
    %14 = vsyncpa %s13, 0
    loop: start=0, step=1, limit=6
    $region2: #{deep_encoder_forward.1} parent=1 // loop_pre_header
      _
    $region3: #{deep_encoder_forward.1} parent=1 // loop_header
      %s16 = sphi 0, %s20
      %p17 = scmp.ge.s32.totalorder %s16, 6
      %s23 = sphi 0, %s35
      %s24 = sphi 0, %s31
      %s25 = sphi 0, %s23
      %s26 = sphi 0, %s24
      %s27 = sphi 0, %s25
      %s28 = sphi 0, %s26
      %s40 = sphi 0, %s42
      %s43 = sphi 0, %s40
      %s44 = sphi 0, %s43
      %s60 = sphi 0, %s44
      %s64 = sphi 0, %s64
      %s66 = sphi 0, %s64
      %s67 = sphi 0, %s66
      %s81 = sphi 0, %s67
      %s85 = sphi 0, %s85
      %s87 = sphi 0, %s85
      %s88 = sphi 0, %s87
      %s102 = sphi 0, %s88
      %s106 = sphi 0, %s106
      %s108 = sphi 0, %s106
      %s109 = sphi 0, %s108
      %s123 = sphi 0, %s109
      %s127 = sphi 0, %s127
      %s129 = sphi 0, %s127
      %s130 = sphi 0, %s129
      %s144 = sphi 0, %s130
      %s148 = sphi 0, %s148
      %s150 = sphi 0, %s148
      %s151 = sphi 0, %s150
      %s165 = sphi 0, %s151
      %s173 = sphi 0, %s175
      %s176 = sphi 0, %s173
      %s177 = sphi 0, %s176
      %s193 = sphi 0, %s177
    $region4: #{deep_encoder_forward.1} parent=1 // loop_header_branch
      %19 = sbr.rel (%p17) target = $region8
    $region5: #{deep_encoder_forward.1} parent=1 // loop_body
      %s21 = ssub.s32 %s16, 1
      %s22 = ssub.s32 %s16, 2
      %s29 = sadd.s32 1, %s24
      %p30 = scmp.ge.s32.totalorder %s29, 2
      %s31 = scalar_select %p30, 0, %s29
      %s32 = sadd.s32 1, %s23
      %s33 = scalar_select %p30, %s32, %s23
      %p34 = scmp.ge.s32.totalorder %s33, 2
      %s35 = scalar_select %p34, 0, %s33
      %s36 = ssub.s32 %s24, %s31
      %s37 = ssub.s32 %s23, %s35
      %s38 = sor.u32 %s36, %s37
      %p39 = scmp.eq.s32.totalorder %s38, 0
      %s41 = sadd.s32 %s40, 1
      %s42 = scalar_select %p39, %s40, %s41
      %p45 = pneg %p39
      %p46 = scmp.eq.s32.totalorder %s16, 3
      %p47 = por %p45, %p46
      %p48 = scmp.ne.s32.totalorder %s40, %s43
      %p49 = scmp.eq.s32.totalorder %s16, 0
      %p50 = por %p48, %p49
      %p51 = scmp.ne.s32.totalorder %s40, %s43
      %p52 = scmp.eq.s32.totalorder %s21, 3
      %p53 = por %p51, %p52
      %p54 = scmp.ne.s32.totalorder %s43, %s44
      %p55 = scmp.eq.s32.totalorder %s21, 0
      %p56 = por %p54, %p55
      %p57 = scmp.ne.s32.totalorder %s43, %s44
      %p58 = scmp.eq.s32.totalorder %s22, 3
      %p59 = por %p57, %p58
      %p61 = scmp.ne.s32.totalorder %s44, %s60
      %p62 = scmp.eq.s32.totalorder %s22, 0
      %p63 = por %p61, %p62
      %s65 = sadd.s32 %s64, 1
      %p68 = scmp.eq.s32.totalorder %s16, 3
      %p69 = scmp.ne.s32.totalorder %s64, %s66
      %p70 = scmp.eq.s32.totalorder %s16, 0
      %p71 = por %p69, %p70
      %p72 = scmp.ne.s32.totalorder %s64, %s66
      %p73 = scmp.eq.s32.totalorder %s21, 3
      %p74 = por %p72, %p73
      %p75 = scmp.ne.s32.totalorder %s66, %s67
      %p76 = scmp.eq.s32.totalorder %s21, 0
      %p77 = por %p75, %p76
      %p78 = scmp.ne.s32.totalorder %s66, %s67
      %p79 = scmp.eq.s32.totalorder %s22, 3
      %p80 = por %p78, %p79
      %p82 = scmp.ne.s32.totalorder %s67, %s81
      %p83 = scmp.eq.s32.totalorder %s22, 0
      %p84 = por %p82, %p83
      %s86 = sadd.s32 %s85, 1
      %p89 = scmp.eq.s32.totalorder %s16, 3
      %p90 = scmp.ne.s32.totalorder %s85, %s87
      %p91 = scmp.eq.s32.totalorder %s16, 0
      %p92 = por %p90, %p91
      %p93 = scmp.ne.s32.totalorder %s85, %s87
      %p94 = scmp.eq.s32.totalorder %s21, 3
      %p95 = por %p93, %p94
      %p96 = scmp.ne.s32.totalorder %s87, %s88
      %p97 = scmp.eq.s32.totalorder %s21, 0
      %p98 = por %p96, %p97
      %p99 = scmp.ne.s32.totalorder %s87, %s88
      %p100 = scmp.eq.s32.totalorder %s22, 3
      %p101 = por %p99, %p100
      %p103 = scmp.ne.s32.totalorder %s88, %s102
      %p104 = scmp.eq.s32.totalorder %s22, 0
      %p105 = por %p103, %p104
      %s107 = sadd.s32 %s106, 1
      %p110 = scmp.eq.s32.totalorder %s16, 3
      %p111 = scmp.ne.s32.totalorder %s106, %s108
      %p112 = scmp.eq.s32.totalorder %s16, 0
      %p113 = por %p111, %p112
      %p114 = scmp.ne.s32.totalorder %s106, %s108
      %p115 = scmp.eq.s32.totalorder %s21, 3
      %p116 = por %p114, %p115
      %p117 = scmp.ne.s32.totalorder %s108, %s109
      %p118 = scmp.eq.s32.totalorder %s21, 0
      %p119 = por %p117, %p118
      %p120 = scmp.ne.s32.totalorder %s108, %s109
      %p121 = scmp.eq.s32.totalorder %s22, 3
      %p122 = por %p120, %p121
      %p124 = scmp.ne.s32.totalorder %s109, %s123
      %p125 = scmp.eq.s32.totalorder %s22, 0
      %p126 = por %p124, %p125
      %s128 = sadd.s32 %s127, 1
      %p131 = scmp.eq.s32.totalorder %s16, 3
      %p132 = scmp.ne.s32.totalorder %s127, %s129
      %p133 = scmp.eq.s32.totalorder %s16, 0
      %p134 = por %p132, %p133
      %p135 = scmp.ne.s32.totalorder %s127, %s129
      %p136 = scmp.eq.s32.totalorder %s21, 3
      %p137 = por %p135, %p136
      %p138 = scmp.ne.s32.totalorder %s129, %s130
      %p139 = scmp.eq.s32.totalorder %s21, 0
      %p140 = por %p138, %p139
      %p141 = scmp.ne.s32.totalorder %s129, %s130
      %p142 = scmp.eq.s32.totalorder %s22, 3
      %p143 = por %p141, %p142
      %p145 = scmp.ne.s32.totalorder %s130, %s144
      %p146 = scmp.eq.s32.totalorder %s22, 0
      %p147 = por %p145, %p146
      %s149 = sadd.s32 %s148, 1
      %p152 = scmp.eq.s32.totalorder %s16, 3
      %p153 = scmp.ne.s32.totalorder %s148, %s150
      %p154 = scmp.eq.s32.totalorder %s16, 0
      %p155 = por %p153, %p154
      %p156 = scmp.ne.s32.totalorder %s148, %s150
      %p157 = scmp.eq.s32.totalorder %s21, 3
      %p158 = por %p156, %p157
      %p159 = scmp.ne.s32.totalorder %s150, %s151
      %p160 = scmp.eq.s32.totalorder %s21, 0
      %p161 = por %p159, %p160
      %p162 = scmp.ne.s32.totalorder %s150, %s151
      %p163 = scmp.eq.s32.totalorder %s22, 3
      %p164 = por %p162, %p163
      %p166 = scmp.ne.s32.totalorder %s151, %s165
      %p167 = scmp.eq.s32.totalorder %s22, 0
      %p168 = por %p166, %p167
      %s169 = ssub.s32 %s24, %s31
      %s170 = ssub.s32 %s23, %s35
      %s171 = sor.u32 %s169, %s170
      %p172 = scmp.eq.s32.totalorder %s171, 0
      %s174 = sadd.s32 %s173, 1
      %s175 = scalar_select %p172, %s173, %s174
      %p178 = pneg %p172
      %p179 = scmp.eq.s32.totalorder %s16, 3
      %p180 = por %p178, %p179
      %p181 = scmp.ne.s32.totalorder %s173, %s176
      %p182 = scmp.eq.s32.totalorder %s16, 0
      %p183 = por %p181, %p182
      %p184 = scmp.ne.s32.totalorder %s173, %s176
      %p185 = scmp.eq.s32.totalorder %s21, 3
      %p186 = por %p184, %p185
      %p187 = scmp.ne.s32.totalorder %s176, %s177
      %p188 = scmp.eq.s32.totalorder %s21, 0
      %p189 = por %p187, %p188
      %p190 = scmp.ne.s32.totalorder %s176, %s177
      %p191 = scmp.eq.s32.totalorder %s22, 3
      %p192 = por %p190, %p191
      %p194 = scmp.ne.s32.totalorder %s177, %s193
      %p195 = scmp.eq.s32.totalorder %s22, 0
      %p196 = por %p194, %p195
      %p197 = scmp.le.s32.totalorder 1, %s16
      %p198 = scmp.lt.s32.totalorder %s16, 5
      %p199 = pnand %p197, %p198
      %p200 = pneg %p199
      // Predicated region
      $region9: #{deep_encoder_forward.1} parent=5 // pred_check
        _
      $region10: #{deep_encoder_forward.1} parent=5 // pred_check_branch
        %202 = sbr.rel (%p199) target = $region12
      $region11: #{deep_encoder_forward.1} parent=5 // pred_region
        %s203 = ssub.s32 %s16, 1
        // Predicated region
        $region13: #{deep_encoder_forward.1} parent=11 // pred_check
          %p204 = pneg %p77
        $region14: #{deep_encoder_forward.1} parent=11 // pred_check_branch
          %206 = sbr.rel (%p204) target = $region16
        $region15: #{deep_encoder_forward.1} parent=11 // pred_region
          _
        $region16: #{deep_encoder_forward.1} parent=11 // pred_fallthru
          _
        // Predicated region
        $region17: #{deep_encoder_forward.1} parent=11 // pred_check
          %p207 = pneg %p98
        $region18: #{deep_encoder_forward.1} parent=11 // pred_check_branch
          %209 = sbr.rel (%p207) target = $region20
        $region19: #{deep_encoder_forward.1} parent=11 // pred_region
          _
        $region20: #{deep_encoder_forward.1} parent=11 // pred_fallthru
          _
        // Predicated region
        $region21: #{deep_encoder_forward.1} parent=11 // pred_check
          %p210 = pneg %p119
        $region22: #{deep_encoder_forward.1} parent=11 // pred_check_branch
          %212 = sbr.rel (%p210) target = $region24
        $region23: #{deep_encoder_forward.1} parent=11 // pred_region
          _
        $region24: #{deep_encoder_forward.1} parent=11 // pred_fallthru
          _
        // Predicated region
        $region25: #{deep_encoder_forward.1} parent=11 // pred_check
          %p213 = pneg %p140
        $region26: #{deep_encoder_forward.1} parent=11 // pred_check_branch
          %215 = sbr.rel (%p213) target = $region28
        $region27: #{deep_encoder_forward.1} parent=11 // pred_region
          _
        $region28: #{deep_encoder_forward.1} parent=11 // pred_fallthru
          _
        // Predicated region
        $region29: #{deep_encoder_forward.1} parent=11 // pred_check
          %p216 = pneg %p161
        $region30: #{deep_encoder_forward.1} parent=11 // pred_check_branch
          %218 = sbr.rel (%p216) target = $region32
        $region31: #{deep_encoder_forward.1} parent=11 // pred_region
          %s220 = ssub.s32 16, 16
          %221 = vsyncadd [#allocation4], %s220
          %s223 = sshll.u32 %s5, 4
          %s224 = int_to_ptr.vmem [resolvable:$true] %s223
          %226 = dma.vmem_to_smem %s224, 16, [#allocation2], [#allocation4]
        $region32: #{deep_encoder_forward.1} parent=11 // pred_fallthru
          _
      $region12: #{deep_encoder_forward.1} parent=5 // pred_fallthru
        _
      %p227 = scmp.lt.s32.totalorder %s16, 4
      // Predicated region
      $region33: #{deep_encoder_forward.1} parent=5 // pred_check
        %p228 = pneg %p227
      $region34: #{deep_encoder_forward.1} parent=5 // pred_check_branch
        %230 = sbr.rel (%p228) target = $region36
      $region35: #{deep_encoder_forward.1} parent=5 // pred_region
        // Predicated region
        $region37: #{deep_encoder_forward.1} parent=35 // pred_check
          %p231 = pneg %p50
        $region38: #{deep_encoder_forward.1} parent=35 // pred_check_branch
          %233 = sbr.rel (%p231) target = $region40
        $region39: #{deep_encoder_forward.1} parent=35 // pred_region
          %p234 = scmp.lt.s32.totalorder %s24, 1
          %s235 = scalar_select %p234, %s24, 1
          %p236 = scmp.lt.s32.totalorder %s23, 1
          %s237 = scalar_select %p236, %s23, 1
          %s238 = smul.addr %s237, 68
          %s239 = smul.addr %s235, 136
          %s240 = sadd.s32 %s238, %s239
          %s241 = smul.addr %s240, 8
          %s242 = scalar_lea.vmem %s0, %s241
        $region40: #{deep_encoder_forward.1} parent=35 // pred_fallthru
          _
      $region36: #{deep_encoder_forward.1} parent=5 // pred_fallthru
        _
      %p243 = scmp.le.s32.totalorder 1, %s16
      %p244 = scmp.lt.s32.totalorder %s16, 5
      %p245 = pnand %p243, %p244
      %p246 = pneg %p245
      // Predicated region
      $region41: #{deep_encoder_forward.1} parent=5 // pred_check
        _
      $region42: #{deep_encoder_forward.1} parent=5 // pred_check_branch
        %248 = sbr.rel (%p245) target = $region44
      $region43: #{deep_encoder_forward.1} parent=5 // pred_region
        %s249 = ssub.s32 %s16, 1
        // Predicated region
        $region45: #{deep_encoder_forward.1} parent=43 // pred_check
          %p250 = pneg %p161
        $region46: #{deep_encoder_forward.1} parent=43 // pred_check_branch
          %252 = sbr.rel (%p250) target = $region48
        $region47: #{deep_encoder_forward.1} parent=43 // pred_region
          %253 = dma.done [#allocation4], 16
        $region48: #{deep_encoder_forward.1} parent=43 // pred_fallthru
          _
        %254 = sfence
        %p255 = scmp.lt.s32.totalorder %s26, 1
        %s256 = scalar_select %p255, %s26, 1
        %p257 = scmp.lt.s32.totalorder %s25, 1
        %s258 = scalar_select %p257, %s25, 1
        %s259 = smul.addr %s258, 68
        %s260 = smul.addr %s256, 136
        %s261 = sadd.s32 %s259, %s260
        %s262 = smul.addr %s261, 8
        %s263 = scalar_lea.vmem %s0, %s262
        %p264 = pneg %p56
        %p265 = pneg %p53
        %p266 = pneg %p77
        %p267 = pneg %p74
        %p268 = pneg %p98
        %p269 = pneg %p95
        %p270 = pneg %p119
        %p271 = pneg %p116
        %p272 = pneg %p140
        %p273 = pneg %p137
        %p274 = pneg %p161
        %p275 = pneg %p158
        %p276 = pneg %p189
        %p277 = pneg %p186
        %s278 = sand.u32 %s176, 1
        %s279 = scalar_lea.sflag [#allocation3], %s278
        %s280 = sand.u32 %s176, 1
        %s281 = smul.addr %s280, 512
        %s282 = scalar_lea.vmem [#allocation5], %s281
        %p283 = scmp.lt.s32.totalorder %s26, 1
        %s284 = scalar_select %p283, %s26, 1
        %p285 = scmp.lt.s32.totalorder %s25, 1
        %s286 = scalar_select %p285, %s25, 1
        %s287 = smul.addr %s286, 68
        %s288 = smul.addr %s284, 136
        %s289 = sadd.s32 %s287, %s288
        %s290 = smul.addr %s289, 8
        %s291 = scalar_lea.vmem %s0, %s290
        %s292 = smul.u32 4, %s25
        %s294 = smul.u32 %s25, 512
        %v295 = vld [vmem:[%s291] sm:$0xff]
        %v296 = vld [vmem:[%s291 + $0x8] sm:$0xff]
        %v297 = vld [vmem:[%s291 + $0x10] sm:$0xff]
        %v298 = vld [vmem:[%s291 + $0x18] sm:$0xff]
        %v299 = vld [vmem:[%s291 + $0x20] sm:$0xff]
        %v300 = vld [vmem:[%s291 + $0x28] sm:$0xff]
        %v301 = vld [vmem:[%s291 + $0x30] sm:$0xff]
        %v302 = vld [vmem:[%s291 + $0x38] sm:$0xff]
        %v303 = vld [vmem:[%s291 + $0x40] sm:$0xff]
        %v304 = vld [vmem:[%s291 + $0x48] sm:$0xff]
        %v305 = vld [vmem:[%s291 + $0x50] sm:$0xff]
        %v306 = vld [vmem:[%s291 + $0x58] sm:$0xff]
        %v307 = vld [vmem:[%s291 + $0x60] sm:$0xff]
        %v308 = vld [vmem:[%s291 + $0x68] sm:$0xff]
        %v309 = vld [vmem:[%s291 + $0x70] sm:$0xff]
        %v310 = vld [vmem:[%s291 + $0x78] sm:$0xff]
        %v311 = vld [vmem:[%s291 + $0x80] sm:$0xff]
        %v312 = vld [vmem:[%s291 + $0x88] sm:$0xff]
        %v313 = vld [vmem:[%s291 + $0x90] sm:$0xff]
        %v314 = vld [vmem:[%s291 + $0x98] sm:$0xff]
        %v315 = vld [vmem:[%s291 + $0xa0] sm:$0xff]
        %v316 = vld [vmem:[%s291 + $0xa8] sm:$0xff]
        %v317 = vld [vmem:[%s291 + $0xb0] sm:$0xff]
        %v318 = vld [vmem:[%s291 + $0xb8] sm:$0xff]
        %v319 = vld [vmem:[%s291 + $0xc0] sm:$0xff]
        %v320 = vld [vmem:[%s291 + $0xc8] sm:$0xff]
        %v321 = vld [vmem:[%s291 + $0xd0] sm:$0xff]
        %v322 = vld [vmem:[%s291 + $0xd8] sm:$0xff]
        %v323 = vld [vmem:[%s291 + $0xe0] sm:$0xff]
        %v324 = vld [vmem:[%s291 + $0xe8] sm:$0xff]
        %v325 = vld [vmem:[%s291 + $0xf0] sm:$0xff]
        %v326 = vld [vmem:[%s291 + $0xf8] sm:$0xff]
        %v327 = vld [vmem:[%s291 + $0x100] sm:$0xff]
        %v328 = vld [vmem:[%s291 + $0x108] sm:$0xff]
        %v329 = vld [vmem:[%s291 + $0x110] sm:$0xff]
        %v330 = vld [vmem:[%s291 + $0x118] sm:$0xff]
        %v331 = vld [vmem:[%s291 + $0x120] sm:$0xff]
        %v332 = vld [vmem:[%s291 + $0x128] sm:$0xff]
        %v333 = vld [vmem:[%s291 + $0x130] sm:$0xff]
        %v334 = vld [vmem:[%s291 + $0x138] sm:$0xff]
        %v335 = vld [vmem:[%s291 + $0x140] sm:$0xff]
        %v336 = vld [vmem:[%s291 + $0x148] sm:$0xff]
        %v337 = vld [vmem:[%s291 + $0x150] sm:$0xff]
        %v338 = vld [vmem:[%s291 + $0x158] sm:$0xff]
        %v339 = vld [vmem:[%s291 + $0x160] sm:$0xff]
        %v340 = vld [vmem:[%s291 + $0x168] sm:$0xff]
        %v341 = vld [vmem:[%s291 + $0x170] sm:$0xff]
        %v342 = vld [vmem:[%s291 + $0x178] sm:$0xff]
        %v343 = vld [vmem:[%s291 + $0x180] sm:$0xff]
        %v344 = vld [vmem:[%s291 + $0x188] sm:$0xff]
        %v345 = vld [vmem:[%s291 + $0x190] sm:$0xff]
        %v346 = vld [vmem:[%s291 + $0x198] sm:$0xff]
        %v347 = vld [vmem:[%s291 + $0x1a0] sm:$0xff]
        %v348 = vld [vmem:[%s291 + $0x1a8] sm:$0xff]
        %v349 = vld [vmem:[%s291 + $0x1b0] sm:$0xff]
        %v350 = vld [vmem:[%s291 + $0x1b8] sm:$0xff]
        %v351 = vld [vmem:[%s291 + $0x1c0] sm:$0xff]
        %v352 = vld [vmem:[%s291 + $0x1c8] sm:$0xff]
        %v353 = vld [vmem:[%s291 + $0x1d0] sm:$0xff]
        %v354 = vld [vmem:[%s291 + $0x1d8] sm:$0xff]
        %v355 = vld [vmem:[%s291 + $0x1e0] sm:$0xff]
        %v356 = vld [vmem:[%s291 + $0x1e8] sm:$0xff]
        %v357 = vld [vmem:[%s291 + $0x1f0] sm:$0xff]
        %v358 = vld [vmem:[%s291 + $0x1f8] sm:$0xff]
        %v359 = vld [vmem:[%s291 + $0x200] sm:$0xff]
        %v360 = vld [vmem:[%s291 + $0x208] sm:$0xff]
        %v361 = vld [vmem:[%s291 + $0x210] sm:$0xff]
        %v362 = vld [vmem:[%s291 + $0x218] sm:$0xff]
        %v363 = vld [vmem:[%s1] sm:$0xff]
        %v364 = vld [vmem:[%s1 + $0x8] sm:$0xff]
        %v365 = vld [vmem:[%s3] sm:$0x1]
        %v367 = vlaneseq
        %v368 = vshrl.u32 %v367, 7
        %v369 = vsub.s32 0, %v368
        %v370 = vrot.slane %v365, %v369
        %vm372 = vcmask 130048
        %v374 = vsel %vm372, %v295, 0
        %v377 = vsel %vm372, %v296, 0
        %v380 = vsel %vm372, %v297, 0
        %v383 = vsel %vm372, %v298, 0
        %v386 = vsel %vm372, %v299, 0
        %v389 = vsel %vm372, %v300, 0
        %v392 = vsel %vm372, %v301, 0
        %v395 = vsel %vm372, %v302, 0
        %v398 = vsel %vm372, %v303, 0
        %v401 = vsel %vm372, %v304, 0
        %v404 = vsel %vm372, %v305, 0
        %v407 = vsel %vm372, %v306, 0
        %v410 = vsel %vm372, %v307, 0
        %v413 = vsel %vm372, %v308, 0
        %v416 = vsel %vm372, %v309, 0
        %v419 = vsel %vm372, %v310, 0
        %v422 = vsel %vm372, %v311, 0
        %v425 = vsel %vm372, %v312, 0
        %v428 = vsel %vm372, %v313, 0
        %v431 = vsel %vm372, %v314, 0
        %v434 = vsel %vm372, %v315, 0
        %v437 = vsel %vm372, %v316, 0
        %v440 = vsel %vm372, %v317, 0
        %v443 = vsel %vm372, %v318, 0
        %v446 = vsel %vm372, %v319, 0
        %v449 = vsel %vm372, %v320, 0
        %v452 = vsel %vm372, %v321, 0
        %v455 = vsel %vm372, %v322, 0
        %v458 = vsel %vm372, %v323, 0
        %v461 = vsel %vm372, %v324, 0
        %v464 = vsel %vm372, %v325, 0
        %v467 = vsel %vm372, %v326, 0
        %v470 = vsel %vm372, %v327, 0
        %v473 = vsel %vm372, %v328, 0
        %v476 = vsel %vm372, %v329, 0
        %v479 = vsel %vm372, %v330, 0
        %v482 = vsel %vm372, %v331, 0
        %v485 = vsel %vm372, %v332, 0
        %v488 = vsel %vm372, %v333, 0
        %v491 = vsel %vm372, %v334, 0
        %v494 = vsel %vm372, %v335, 0
        %v497 = vsel %vm372, %v336, 0
        %v500 = vsel %vm372, %v337, 0
        %v503 = vsel %vm372, %v338, 0
        %v506 = vsel %vm372, %v339, 0
        %v509 = vsel %vm372, %v340, 0
        %v512 = vsel %vm372, %v341, 0
        %v515 = vsel %vm372, %v342, 0
        %v518 = vsel %vm372, %v343, 0
        %v521 = vsel %vm372, %v344, 0
        %v524 = vsel %vm372, %v345, 0
        %v527 = vsel %vm372, %v346, 0
        %v530 = vsel %vm372, %v347, 0
        %v533 = vsel %vm372, %v348, 0
        %v536 = vsel %vm372, %v349, 0
        %v539 = vsel %vm372, %v350, 0
        %v542 = vsel %vm372, %v351, 0
        %v545 = vsel %vm372, %v352, 0
        %v548 = vsel %vm372, %v353, 0
        %v551 = vsel %vm372, %v354, 0
        %v554 = vsel %vm372, %v355, 0
        %v557 = vsel %vm372, %v356, 0
        %v560 = vsel %vm372, %v357, 0
        %v563 = vsel %vm372, %v358, 0
        %v566 = vsel %vm372, %v359, 0
        %v569 = vsel %vm372, %v360, 0
        %v572 = vsel %vm372, %v361, 0
        %v575 = vsel %vm372, %v362, 0
        %577 = vmatprep.subr.mxu0 0.0
        %578 = vmatpush1.msra.mxu0 %v363
        %579 = vmatprep.subr.mxu0 0.0
        %580 = vmatpush1.msra.mxu0 %v364
        %581 = vmatprep.subr.mxu0 0.0
        %582 = vmatpush1.msra.mxu0 0.0
        %583 = vmatprep.subr.mxu0 0.0
        %584 = vmatpush1.msra.mxu0 0.0
        %585 = vmatprep.subr.mxu0 0.0
        %586 = vmatpush1.msra.mxu0 0.0
        %587 = vmatprep.subr.mxu0 0.0
        %588 = vmatpush1.msra.mxu0 0.0
        %589 = vmatprep.subr.mxu0 0.0
        %590 = vmatpush1.msra.mxu0 0.0
        %591 = vmatprep.subr.mxu0 0.0
        %592 = vmatpush1.msra.mxu0 0.0
        %593 = vmatprep.subr.mxu0 0.0
        %594 = vmatpush1.msra.mxu0 0.0
        %595 = vmatprep.subr.mxu0 0.0
        %596 = vmatpush1.msra.mxu0 0.0
        %597 = vmatprep.subr.mxu0 0.0
        %598 = vmatpush1.msra.mxu0 0.0
        %599 = vmatprep.subr.mxu0 0.0
        %600 = vmatpush1.msra.mxu0 0.0
        %601 = vmatprep.subr.mxu0 0.0
        %602 = vmatpush1.msra.mxu0 0.0
        %603 = vmatprep.subr.mxu0 0.0
        %604 = vmatpush1.msra.mxu0 0.0
        %605 = vmatprep.subr.mxu0 0.0
        %606 = vmatpush1.msra.mxu0 0.0
        %607 = vmatprep.subr.mxu0 0.0
        %608 = vmatpush1.msra.mxu0 0.0
        %609 = vmatprep.subr.mxu0 0.0
        %610 = vmatpush1.msra.mxu0 0.0
        %611 = vmatprep.subr.mxu0 0.0
        %612 = vmatpush1.msra.mxu0 0.0
        %613 = vmatprep.subr.mxu0 0.0
        %614 = vmatpush1.msra.mxu0 0.0
        %615 = vmatprep.subr.mxu0 0.0
        %616 = vmatpush1.msra.mxu0 0.0
        %617 = vmatprep.subr.mxu0 0.0
        %618 = vmatpush1.msra.mxu0 0.0
        %619 = vmatprep.subr.mxu0 0.0
        %620 = vmatpush1.msra.mxu0 0.0
        %621 = vmatprep.subr.mxu0 0.0
        %622 = vmatpush1.msra.mxu0 0.0
        %623 = vmatprep.subr.mxu0 0.0
        %624 = vmatpush1.msra.mxu0 0.0
        %625 = vmatprep.subr.mxu0 0.0
        %626 = vmatpush1.msra.mxu0 0.0
        %627 = vmatprep.subr.mxu0 0.0
        %628 = vmatpush1.msra.mxu0 0.0
        %629 = vmatprep.subr.mxu0 0.0
        %630 = vmatpush1.msra.mxu0 0.0
        %631 = vmatprep.subr.mxu0 0.0
        %632 = vmatpush1.msra.mxu0 0.0
        %633 = vmatprep.subr.mxu0 0.0
        %634 = vmatpush1.msra.mxu0 0.0
        %635 = vmatprep.subr.mxu0 0.0
        %636 = vmatpush1.msra.mxu0 0.0
        %637 = vmatprep.subr.mxu0 0.0
        %638 = vmatpush1.msra.mxu0 0.0
        %639 = vmatprep.subr.mxu0 0.0
        %640 = vmatpush1.msra.mxu0 0.0
        %641 = vmatprep.mubr.f32.mxu0 0.0
        %642 = vmatmul.mubr.f32.gmra.mrb[0].mxu0 %v374
        %v643 = vpop.f32.mrb[0].mxu0
        %v644 = vadd.f32 %v370, %v643
        %v645 = vpop.f32.mrb[0].mxu0
        %646 = vmatprep.mubr.f32.mxu0 0.0
        %647 = vmatmul.mubr.f32.gmra.mrb[0].mxu0 %v377
        %v648 = vpop.f32.mrb[0].mxu0
        %v649 = vadd.f32 %v370, %v648
        %v650 = vpop.f32.mrb[0].mxu0
        %651 = vmatprep.mubr.f32.mxu0 0.0
        %652 = vmatmul.mubr.f32.gmra.mrb[0].mxu0 %v380
        %v653 = vpop.f32.mrb[0].mxu0
        %v654 = vadd.f32 %v370, %v653
        %v655 = vpop.f32.mrb[0].mxu0
        %656 = vmatprep.mubr.f32.mxu0 0.0
        %657 = vmatmul.mubr.f32.gmra.mrb[0].mxu0 %v383
        %v658 = vpop.f32.mrb[0].mxu0
        %v659 = vadd.f32 %v370, %v658
        %v660 = vpop.f32.mrb[0].mxu0
        %661 = vmatprep.mubr.f32.mxu0 0.0
        %662 = vmatmul.mubr.f32.gmra.mrb[0].mxu0 %v386
        %v663 = vpop.f32.mrb[0].mxu0
        %v664 = vadd.f32 %v370, %v663
        %v665 = vpop.f32.mrb[0].mxu0
        %666 = vmatprep.mubr.f32.mxu0 0.0
        %667 = vmatmul.mubr.f32.gmra.mrb[0].mxu0 %v389
        %v668 = vpop.f32.mrb[0].mxu0
        %v669 = vadd.f32 %v370, %v668
        %v670 = vpop.f32.mrb[0].mxu0
        %671 = vmatprep.mubr.f32.mxu0 0.0
        %672 = vmatmul.mubr.f32.gmra.mrb[0].mxu0 %v392
        %v673 = vpop.f32.mrb[0].mxu0
        %v674 = vadd.f32 %v370, %v673
        %v675 = vpop.f32.mrb[0].mxu0
        %676 = vmatprep.mubr.f32.mxu0 0.0
        %677 = vmatmul.mubr.f32.gmra.mrb[0].mxu0 %v395
        %v678 = vpop.f32.mrb[0].mxu0
        %v679 = vadd.f32 %v370, %v678
        %v680 = vpop.f32.mrb[0].mxu0
        %681 = vmatprep.mubr.f32.mxu0 0.0
        %682 = vmatmul.mubr.f32.gmra.mrb[0].mxu0 %v398
        %v683 = vpop.f32.mrb[0].mxu0
        %v684 = vadd.f32 %v370, %v683
        %v685 = vpop.f32.mrb[0].mxu0
        %686 = vmatprep.mubr.f32.mxu0 0.0
        %687 = vmatmul.mubr.f32.gmra.mrb[0].mxu0 %v401
        %v688 = vpop.f32.mrb[0].mxu0
        %v689 = vadd.f32 %v370, %v688
        %v690 = vpop.f32.mrb[0].mxu0
        %691 = vmatprep.mubr.f32.mxu0 0.0
        %692 = vmatmul.mubr.f32.gmra.mrb[0].mxu0 %v404
        %v693 = vpop.f32.mrb[0].mxu0
        %v694 = vadd.f32 %v370, %v693
        %v695 = vpop.f32.mrb[0].mxu0
        %696 = vmatprep.mubr.f32.mxu0 0.0
        %697 = vmatmul.mubr.f32.gmra.mrb[0].mxu0 %v407
        %v698 = vpop.f32.mrb[0].mxu0
        %v699 = vadd.f32 %v370, %v698
        %v700 = vpop.f32.mrb[0].mxu0
        %701 = vmatprep.mubr.f32.mxu0 0.0
        %702 = vmatmul.mubr.f32.gmra.mrb[0].mxu0 %v410
        %v703 = vpop.f32.mrb[0].mxu0
        %v704 = vadd.f32 %v370, %v703
        %v705 = vpop.f32.mrb[0].mxu0
        %706 = vmatprep.mubr.f32.mxu0 0.0
        %707 = vmatmul.mubr.f32.gmra.mrb[0].mxu0 %v413
        %v708 = vpop.f32.mrb[0].mxu0
        %v709 = vadd.f32 %v370, %v708
        %v710 = vpop.f32.mrb[0].mxu0
        %711 = vmatprep.mubr.f32.mxu0 0.0
        %712 = vmatmul.mubr.f32.gmra.mrb[0].mxu0 %v416
        %v713 = vpop.f32.mrb[0].mxu0
        %v714 = vadd.f32 %v370, %v713
        %v715 = vpop.f32.mrb[0].mxu0
        %716 = vmatprep.mubr.f32.mxu0 0.0
        %717 = vmatmul.mubr.f32.gmra.mrb[0].mxu0 %v419
        %v718 = vpop.f32.mrb[0].mxu0
        %v719 = vadd.f32 %v370, %v718
        %v720 = vpop.f32.mrb[0].mxu0
        %721 = vmatprep.mubr.f32.mxu0 0.0
        %722 = vmatmul.mubr.f32.gmra.mrb[0].mxu0 %v422
        %v723 = vpop.f32.mrb[0].mxu0
        %v724 = vadd.f32 %v370, %v723
        %v725 = vpop.f32.mrb[0].mxu0
        %726 = vmatprep.mubr.f32.mxu0 0.0
        %727 = vmatmul.mubr.f32.gmra.mrb[0].mxu0 %v425
        %v728 = vpop.f32.mrb[0].mxu0
        %v729 = vadd.f32 %v370, %v728
        %v730 = vpop.f32.mrb[0].mxu0
        %731 = vmatprep.mubr.f32.mxu0 0.0
        %732 = vmatmul.mubr.f32.gmra.mrb[0].mxu0 %v428
        %v733 = vpop.f32.mrb[0].mxu0
        %v734 = vadd.f32 %v370, %v733
        %v735 = vpop.f32.mrb[0].mxu0
        %736 = vmatprep.mubr.f32.mxu0 0.0
        %737 = vmatmul.mubr.f32.gmra.mrb[0].mxu0 %v431
        %v738 = vpop.f32.mrb[0].mxu0
        %v739 = vadd.f32 %v370, %v738
        %v740 = vpop.f32.mrb[0].mxu0
        %741 = vmatprep.mubr.f32.mxu0 0.0
        %742 = vmatmul.mubr.f32.gmra.mrb[0].mxu0 %v434
        %v743 = vpop.f32.mrb[0].mxu0
        %v744 = vadd.f32 %v370, %v743
        %v745 = vpop.f32.mrb[0].mxu0
        %746 = vmatprep.mubr.f32.mxu0 0.0
        %747 = vmatmul.mubr.f32.gmra.mrb[0].mxu0 %v437
        %v748 = vpop.f32.mrb[0].mxu0
        %v749 = vadd.f32 %v370, %v748
        %v750 = vpop.f32.mrb[0].mxu0
        %751 = vmatprep.mubr.f32.mxu0 0.0
        %752 = vmatmul.mubr.f32.gmra.mrb[0].mxu0 %v440
        %v753 = vpop.f32.mrb[0].mxu0
        %v754 = vadd.f32 %v370, %v753
        %v755 = vpop.f32.mrb[0].mxu0
        %756 = vmatprep.mubr.f32.mxu0 0.0
        %757 = vmatmul.mubr.f32.gmra.mrb[0].mxu0 %v443
        %v758 = vpop.f32.mrb[0].mxu0
        %v759 = vadd.f32 %v370, %v758
        %v760 = vpop.f32.mrb[0].mxu0
        %761 = vmatprep.mubr.f32.mxu0 0.0
        %762 = vmatmul.mubr.f32.gmra.mrb[0].mxu0 %v446
        %v763 = vpop.f32.mrb[0].mxu0
        %v764 = vadd.f32 %v370, %v763
        %v765 = vpop.f32.mrb[0].mxu0
        %766 = vmatprep.mubr.f32.mxu0 0.0
        %767 = vmatmul.mubr.f32.gmra.mrb[0].mxu0 %v449
        %v768 = vpop.f32.mrb[0].mxu0
        %v769 = vadd.f32 %v370, %v768
        %v770 = vpop.f32.mrb[0].mxu0
        %771 = vmatprep.mubr.f32.mxu0 0.0
        %772 = vmatmul.mubr.f32.gmra.mrb[0].mxu0 %v452
        %v773 = vpop.f32.mrb[0].mxu0
        %v774 = vadd.f32 %v370, %v773
        %v775 = vpop.f32.mrb[0].mxu0
        %776 = vmatprep.mubr.f32.mxu0 0.0
        %777 = vmatmul.mubr.f32.gmra.mrb[0].mxu0 %v455
        %v778 = vpop.f32.mrb[0].mxu0
        %v779 = vadd.f32 %v370, %v778
        %v780 = vpop.f32.mrb[0].mxu0
        %781 = vmatprep.mubr.f32.mxu0 0.0
        %782 = vmatmul.mubr.f32.gmra.mrb[0].mxu0 %v458
        %v783 = vpop.f32.mrb[0].mxu0
        %v784 = vadd.f32 %v370, %v783
        %v785 = vpop.f32.mrb[0].mxu0
        %786 = vmatprep.mubr.f32.mxu0 0.0
        %787 = vmatmul.mubr.f32.gmra.mrb[0].mxu0 %v461
        %v788 = vpop.f32.mrb[0].mxu0
        %v789 = vadd.f32 %v370, %v788
        %v790 = vpop.f32.mrb[0].mxu0
        %791 = vmatprep.mubr.f32.mxu0 0.0
        %792 = vmatmul.mubr.f32.gmra.mrb[0].mxu0 %v464
        %v793 = vpop.f32.mrb[0].mxu0
        %v794 = vadd.f32 %v370, %v793
        %v795 = vpop.f32.mrb[0].mxu0
        %796 = vmatprep.mubr.f32.mxu0 0.0
        %797 = vmatmul.mubr.f32.gmra.mrb[0].mxu0 %v467
        %v798 = vpop.f32.mrb[0].mxu0
        %v799 = vadd.f32 %v370, %v798
        %v800 = vpop.f32.mrb[0].mxu0
        %801 = vmatprep.mubr.f32.mxu0 0.0
        %802 = vmatmul.mubr.f32.gmra.mrb[0].mxu0 %v470
        %v803 = vpop.f32.mrb[0].mxu0
        %v804 = vadd.f32 %v370, %v803
        %v805 = vpop.f32.mrb[0].mxu0
        %806 = vmatprep.mubr.f32.mxu0 0.0
        %807 = vmatmul.mubr.f32.gmra.mrb[0].mxu0 %v473
        %v808 = vpop.f32.mrb[0].mxu0
        %v809 = vadd.f32 %v370, %v808
        %v810 = vpop.f32.mrb[0].mxu0
        %811 = vmatprep.mubr.f32.mxu0 0.0
        %812 = vmatmul.mubr.f32.gmra.mrb[0].mxu0 %v476
        %v813 = vpop.f32.mrb[0].mxu0
        %v814 = vadd.f32 %v370, %v813
        %v815 = vpop.f32.mrb[0].mxu0
        %816 = vmatprep.mubr.f32.mxu0 0.0
        %817 = vmatmul.mubr.f32.gmra.mrb[0].mxu0 %v479
        %v818 = vpop.f32.mrb[0].mxu0
        %v819 = vadd.f32 %v370, %v818
        %v820 = vpop.f32.mrb[0].mxu0
        %821 = vmatprep.mubr.f32.mxu0 0.0
        %822 = vmatmul.mubr.f32.gmra.mrb[0].mxu0 %v482
        %v823 = vpop.f32.mrb[0].mxu0
        %v824 = vadd.f32 %v370, %v823
        %v825 = vpop.f32.mrb[0].mxu0
        %826 = vmatprep.mubr.f32.mxu0 0.0
        %827 = vmatmul.mubr.f32.gmra.mrb[0].mxu0 %v485
        %v828 = vpop.f32.mrb[0].mxu0
        %v829 = vadd.f32 %v370, %v828
        %v830 = vpop.f32.mrb[0].mxu0
        %831 = vmatprep.mubr.f32.mxu0 0.0
        %832 = vmatmul.mubr.f32.gmra.mrb[0].mxu0 %v488
        %v833 = vpop.f32.mrb[0].mxu0
        %v834 = vadd.f32 %v370, %v833
        %v835 = vpop.f32.mrb[0].mxu0
        %836 = vmatprep.mubr.f32.mxu0 0.0
        %837 = vmatmul.mubr.f32.gmra.mrb[0].mxu0 %v491
        %v838 = vpop.f32.mrb[0].mxu0
        %v839 = vadd.f32 %v370, %v838
        %v840 = vpop.f32.mrb[0].mxu0
        %841 = vmatprep.mubr.f32.mxu0 0.0
        %842 = vmatmul.mubr.f32.gmra.mrb[0].mxu0 %v494
        %v843 = vpop.f32.mrb[0].mxu0
        %v844 = vadd.f32 %v370, %v843
        %v845 = vpop.f32.mrb[0].mxu0
        %846 = vmatprep.mubr.f32.mxu0 0.0
        %847 = vmatmul.mubr.f32.gmra.mrb[0].mxu0 %v497
        %v848 = vpop.f32.mrb[0].mxu0
        %v849 = vadd.f32 %v370, %v848
        %v850 = vpop.f32.mrb[0].mxu0
        %851 = vmatprep.mubr.f32.mxu0 0.0
        %852 = vmatmul.mubr.f32.gmra.mrb[0].mxu0 %v500
        %v853 = vpop.f32.mrb[0].mxu0
        %v854 = vadd.f32 %v370, %v853
        %v855 = vpop.f32.mrb[0].mxu0
        %856 = vmatprep.mubr.f32.mxu0 0.0
        %857 = vmatmul.mubr.f32.gmra.mrb[0].mxu0 %v503
        %v858 = vpop.f32.mrb[0].mxu0
        %v859 = vadd.f32 %v370, %v858
        %v860 = vpop.f32.mrb[0].mxu0
        %861 = vmatprep.mubr.f32.mxu0 0.0
        %862 = vmatmul.mubr.f32.gmra.mrb[0].mxu0 %v506
        %v863 = vpop.f32.mrb[0].mxu0
        %v864 = vadd.f32 %v370, %v863
        %v865 = vpop.f32.mrb[0].mxu0
        %866 = vmatprep.mubr.f32.mxu0 0.0
        %867 = vmatmul.mubr.f32.gmra.mrb[0].mxu0 %v509
        %v868 = vpop.f32.mrb[0].mxu0
        %v869 = vadd.f32 %v370, %v868
        %v870 = vpop.f32.mrb[0].mxu0
        %871 = vmatprep.mubr.f32.mxu0 0.0
        %872 = vmatmul.mubr.f32.gmra.mrb[0].mxu0 %v512
        %v873 = vpop.f32.mrb[0].mxu0
        %v874 = vadd.f32 %v370, %v873
        %v875 = vpop.f32.mrb[0].mxu0
        %876 = vmatprep.mubr.f32.mxu0 0.0
        %877 = vmatmul.mubr.f32.gmra.mrb[0].mxu0 %v515
        %v878 = vpop.f32.mrb[0].mxu0
        %v879 = vadd.f32 %v370, %v878
        %v880 = vpop.f32.mrb[0].mxu0
        %881 = vmatprep.mubr.f32.mxu0 0.0
        %882 = vmatmul.mubr.f32.gmra.mrb[0].mxu0 %v518
        %v883 = vpop.f32.mrb[0].mxu0
        %v884 = vadd.f32 %v370, %v883
        %v885 = vpop.f32.mrb[0].mxu0
        %886 = vmatprep.mubr.f32.mxu0 0.0
        %887 = vmatmul.mubr.f32.gmra.mrb[0].mxu0 %v521
        %v888 = vpop.f32.mrb[0].mxu0
        %v889 = vadd.f32 %v370, %v888
        %v890 = vpop.f32.mrb[0].mxu0
        %891 = vmatprep.mubr.f32.mxu0 0.0
        %892 = vmatmul.mubr.f32.gmra.mrb[0].mxu0 %v524
        %v893 = vpop.f32.mrb[0].mxu0
        %v894 = vadd.f32 %v370, %v893
        %v895 = vpop.f32.mrb[0].mxu0
        %896 = vmatprep.mubr.f32.mxu0 0.0
        %897 = vmatmul.mubr.f32.gmra.mrb[0].mxu0 %v527
        %v898 = vpop.f32.mrb[0].mxu0
        %v899 = vadd.f32 %v370, %v898
        %v900 = vpop.f32.mrb[0].mxu0
        %901 = vmatprep.mubr.f32.mxu0 0.0
        %902 = vmatmul.mubr.f32.gmra.mrb[0].mxu0 %v530
        %v903 = vpop.f32.mrb[0].mxu0
        %v904 = vadd.f32 %v370, %v903
        %v905 = vpop.f32.mrb[0].mxu0
        %906 = vmatprep.mubr.f32.mxu0 0.0
        %907 = vmatmul.mubr.f32.gmra.mrb[0].mxu0 %v533
        %v908 = vpop.f32.mrb[0].mxu0
        %v909 = vadd.f32 %v370, %v908
        %v910 = vpop.f32.mrb[0].mxu0
        %911 = vmatprep.mubr.f32.mxu0 0.0
        %912 = vmatmul.mubr.f32.gmra.mrb[0].mxu0 %v536
        %v913 = vpop.f32.mrb[0].mxu0
        %v914 = vadd.f32 %v370, %v913
        %v915 = vpop.f32.mrb[0].mxu0
        %916 = vmatprep.mubr.f32.mxu0 0.0
        %917 = vmatmul.mubr.f32.gmra.mrb[0].mxu0 %v539
        %v918 = vpop.f32.mrb[0].mxu0
        %v919 = vadd.f32 %v370, %v918
        %v920 = vpop.f32.mrb[0].mxu0
        %921 = vmatprep.mubr.f32.mxu0 0.0
        %922 = vmatmul.mubr.f32.gmra.mrb[0].mxu0 %v542
        %v923 = vpop.f32.mrb[0].mxu0
        %v924 = vadd.f32 %v370, %v923
        %v925 = vpop.f32.mrb[0].mxu0
        %926 = vmatprep.mubr.f32.mxu0 0.0
        %927 = vmatmul.mubr.f32.gmra.mrb[0].mxu0 %v545
        %v928 = vpop.f32.mrb[0].mxu0
        %v929 = vadd.f32 %v370, %v928
        %v930 = vpop.f32.mrb[0].mxu0
        %931 = vmatprep.mubr.f32.mxu0 0.0
        %932 = vmatmul.mubr.f32.gmra.mrb[0].mxu0 %v548
        %v933 = vpop.f32.mrb[0].mxu0
        %v934 = vadd.f32 %v370, %v933
        %v935 = vpop.f32.mrb[0].mxu0
        %936 = vmatprep.mubr.f32.mxu0 0.0
        %937 = vmatmul.mubr.f32.gmra.mrb[0].mxu0 %v551
        %v938 = vpop.f32.mrb[0].mxu0
        %v939 = vadd.f32 %v370, %v938
        %v940 = vpop.f32.mrb[0].mxu0
        %941 = vmatprep.mubr.f32.mxu0 0.0
        %942 = vmatmul.mubr.f32.gmra.mrb[0].mxu0 %v554
        %v943 = vpop.f32.mrb[0].mxu0
        %v944 = vadd.f32 %v370, %v943
        %v945 = vpop.f32.mrb[0].mxu0
        %946 = vmatprep.mubr.f32.mxu0 0.0
        %947 = vmatmul.mubr.f32.gmra.mrb[0].mxu0 %v557
        %v948 = vpop.f32.mrb[0].mxu0
        %v949 = vadd.f32 %v370, %v948
        %v950 = vpop.f32.mrb[0].mxu0
        %951 = vmatprep.mubr.f32.mxu0 0.0
        %952 = vmatmul.mubr.f32.gmra.mrb[0].mxu0 %v560
        %v953 = vpop.f32.mrb[0].mxu0
        %v954 = vadd.f32 %v370, %v953
        %v955 = vpop.f32.mrb[0].mxu0
        %956 = vmatprep.mubr.f32.mxu0 0.0
        %957 = vmatmul.mubr.f32.gmra.mrb[0].mxu0 %v563
        %v958 = vpop.f32.mrb[0].mxu0
        %v959 = vadd.f32 %v370, %v958
        %v960 = vpop.f32.mrb[0].mxu0
        %961 = vmatprep.mubr.f32.mxu0 0.0
        %962 = vmatmul.mubr.f32.gmra.mrb[0].mxu0 %v566
        %v963 = vpop.f32.mrb[0].mxu0
        %v964 = vadd.f32 %v370, %v963
        %v965 = vpop.f32.mrb[0].mxu0
        %966 = vmatprep.mubr.f32.mxu0 0.0
        %967 = vmatmul.mubr.f32.gmra.mrb[0].mxu0 %v569
        %v968 = vpop.f32.mrb[0].mxu0
        %v969 = vadd.f32 %v370, %v968
        %v970 = vpop.f32.mrb[0].mxu0
        %971 = vmatprep.mubr.f32.mxu0 0.0
        %972 = vmatmul.mubr.f32.gmra.mrb[0].mxu0 %v572
        %v973 = vpop.f32.mrb[0].mxu0
        %v974 = vadd.f32 %v370, %v973
        %v975 = vpop.f32.mrb[0].mxu0
        %976 = vmatprep.mubr.f32.mxu0 0.0
        %977 = vmatmul.mubr.f32.gmra.mrb[0].mxu0 %v575
        %v978 = vpop.f32.mrb[0].mxu0
        %v979 = vadd.f32 %v370, %v978
        %v980 = vpop.f32.mrb[0].mxu0
        %981 = vdwg.mxu0
        %v982 = vlaneseq
        %v983 = vshrl.u32 %v982, 7
        %v984 = vadd.s32 %v983, 8
        %v985 = vadd.s32 %v983, 16
        %v986 = vadd.s32 %v983, 24
        %v987 = vadd.s32 %v983, 32
        %v988 = vadd.s32 %v983, 40
        %v989 = vadd.s32 %v983, 48
        %v990 = vadd.s32 %v983, 56
        %v991 = vadd.s32 %v983, 64
        %v992 = vadd.s32 %v983, 72
        %v993 = vadd.s32 %v983, 80
        %v994 = vadd.s32 %v983, 88
        %v995 = vadd.s32 %v983, 96
        %v996 = vadd.s32 %v983, 104
        %v997 = vadd.s32 %v983, 112
        %v998 = vadd.s32 %v983, 120
        %v999 = vadd.s32 %v983, 128
        %v1000 = vadd.s32 %v983, 136
        %v1001 = vadd.s32 %v983, 144
        %v1002 = vadd.s32 %v983, 152
        %v1003 = vadd.s32 %v983, 160
        %v1004 = vadd.s32 %v983, 168
        %v1005 = vadd.s32 %v983, 176
        %v1006 = vadd.s32 %v983, 184
        %v1007 = vadd.s32 %v983, 192
        %v1008 = vadd.s32 %v983, 200
        %v1009 = vadd.s32 %v983, 208
        %v1010 = vadd.s32 %v983, 216
        %v1011 = vadd.s32 %v983, 224
        %v1012 = vadd.s32 %v983, 232
        %v1013 = vadd.s32 %v983, 240
        %v1014 = vadd.s32 %v983, 248
        %v1015 = vadd.s32 %v983, 256
        %v1016 = vadd.s32 %v983, 264
        %v1017 = vadd.s32 %v983, 272
        %v1018 = vadd.s32 %v983, 280
        %v1019 = vadd.s32 %v983, 288
        %v1020 = vadd.s32 %v983, 296
        %v1021 = vadd.s32 %v983, 304
        %v1022 = vadd.s32 %v983, 312
        %v1023 = vadd.s32 %v983, 320
        %v1024 = vadd.s32 %v983, 328
        %v1025 = vadd.s32 %v983, 336
        %v1026 = vadd.s32 %v983, 344
        %v1027 = vadd.s32 %v983, 352
        %v1028 = vadd.s32 %v983, 360
        %v1029 = vadd.s32 %v983, 368
        %v1030 = vadd.s32 %v983, 376
        %v1031 = vadd.s32 %v983, 384
        %v1032 = vadd.s32 %v983, 392
        %v1033 = vadd.s32 %v983, 400
        %v1034 = vadd.s32 %v983, 408
        %v1035 = vadd.s32 %v983, 416
        %v1036 = vadd.s32 %v983, 424
        %v1037 = vadd.s32 %v983, 432
        %v1038 = vadd.s32 %v983, 440
        %v1039 = vadd.s32 %v983, 448
        %v1040 = vadd.s32 %v983, 456
        %v1041 = vadd.s32 %v983, 464
        %v1042 = vadd.s32 %v983, 472
        %v1043 = vadd.s32 %v983, 480
        %v1044 = vadd.s32 %v983, 488
        %v1045 = vadd.s32 %v983, 496
        %v1046 = vadd.s32 %v983, 504
        %v1047 = vadd.s32 %v983, 512
        %v1048 = vadd.s32 %v983, 520
        %v1049 = vadd.s32 %v983, 528
        %v1050 = vadd.s32 %v983, 536
        %s1051 = ssub.s32 %s294, 16
        %v1052 = vstv %s1051
        %v1053 = vadd.s32 %v983, %v1052
        %v1054 = vadd.s32 %v984, %v1052
        %v1055 = vadd.s32 %v985, %v1052
        %v1056 = vadd.s32 %v986, %v1052
        %v1057 = vadd.s32 %v987, %v1052
        %v1058 = vadd.s32 %v988, %v1052
        %v1059 = vadd.s32 %v989, %v1052
        %v1060 = vadd.s32 %v990, %v1052
        %v1061 = vadd.s32 %v991, %v1052
        %v1062 = vadd.s32 %v992, %v1052
        %v1063 = vadd.s32 %v993, %v1052
        %v1064 = vadd.s32 %v994, %v1052
        %v1065 = vadd.s32 %v995, %v1052
        %v1066 = vadd.s32 %v996, %v1052
        %v1067 = vadd.s32 %v997, %v1052
        %v1068 = vadd.s32 %v998, %v1052
        %v1069 = vadd.s32 %v999, %v1052
        %v1070 = vadd.s32 %v1000, %v1052
        %v1071 = vadd.s32 %v1001, %v1052
        %v1072 = vadd.s32 %v1002, %v1052
        %v1073 = vadd.s32 %v1003, %v1052
        %v1074 = vadd.s32 %v1004, %v1052
        %v1075 = vadd.s32 %v1005, %v1052
        %v1076 = vadd.s32 %v1006, %v1052
        %v1077 = vadd.s32 %v1007, %v1052
        %v1078 = vadd.s32 %v1008, %v1052
        %v1079 = vadd.s32 %v1009, %v1052
        %v1080 = vadd.s32 %v1010, %v1052
        %v1081 = vadd.s32 %v1011, %v1052
        %v1082 = vadd.s32 %v1012, %v1052
        %v1083 = vadd.s32 %v1013, %v1052
        %v1084 = vadd.s32 %v1014, %v1052
        %v1085 = vadd.s32 %v1015, %v1052
        %v1086 = vadd.s32 %v1016, %v1052
        %v1087 = vadd.s32 %v1017, %v1052
        %v1088 = vadd.s32 %v1018, %v1052
        %v1089 = vadd.s32 %v1019, %v1052
        %v1090 = vadd.s32 %v1020, %v1052
        %v1091 = vadd.s32 %v1021, %v1052
        %v1092 = vadd.s32 %v1022, %v1052
        %v1093 = vadd.s32 %v1023, %v1052
        %v1094 = vadd.s32 %v1024, %v1052
        %v1095 = vadd.s32 %v1025, %v1052
        %v1096 = vadd.s32 %v1026, %v1052
        %v1097 = vadd.s32 %v1027, %v1052
        %v1098 = vadd.s32 %v1028, %v1052
        %v1099 = vadd.s32 %v1029, %v1052
        %v1100 = vadd.s32 %v1030, %v1052
        %v1101 = vadd.s32 %v1031, %v1052
        %v1102 = vadd.s32 %v1032, %v1052
        %v1103 = vadd.s32 %v1033, %v1052
        %v1104 = vadd.s32 %v1034, %v1052
        %v1105 = vadd.s32 %v1035, %v1052
        %v1106 = vadd.s32 %v1036, %v1052
        %v1107 = vadd.s32 %v1037, %v1052
        %v1108 = vadd.s32 %v1038, %v1052
        %v1109 = vadd.s32 %v1039, %v1052
        %v1110 = vadd.s32 %v1040, %v1052
        %v1111 = vadd.s32 %v1041, %v1052
        %v1112 = vadd.s32 %v1042, %v1052
        %v1113 = vadd.s32 %v1043, %v1052
        %v1114 = vadd.s32 %v1044, %v1052
        %v1115 = vadd.s32 %v1045, %v1052
        %v1116 = vadd.s32 %v1046, %v1052
        %v1117 = vadd.s32 %v1047, %v1052
        %v1118 = vadd.s32 %v1048, %v1052
        %v1119 = vadd.s32 %v1049, %v1052
        %v1120 = vadd.s32 %v1050, %v1052
        %vm1121 = vcmp.ge.s32.totalorder %v1053, 0
        %vm1122 = vcmp.ge.s32.totalorder %v1054, 0
        %vm1123 = vcmp.ge.s32.totalorder %v1055, 0
        %vm1124 = vcmp.ge.s32.totalorder %v1056, 0
        %vm1125 = vcmp.ge.s32.totalorder %v1057, 0
        %vm1126 = vcmp.ge.s32.totalorder %v1058, 0
        %vm1127 = vcmp.ge.s32.totalorder %v1059, 0
        %vm1128 = vcmp.ge.s32.totalorder %v1060, 0
        %vm1129 = vcmp.ge.s32.totalorder %v1061, 0
        %vm1130 = vcmp.ge.s32.totalorder %v1062, 0
        %vm1131 = vcmp.ge.s32.totalorder %v1063, 0
        %vm1132 = vcmp.ge.s32.totalorder %v1064, 0
        %vm1133 = vcmp.ge.s32.totalorder %v1065, 0
        %vm1134 = vcmp.ge.s32.totalorder %v1066, 0
        %vm1135 = vcmp.ge.s32.totalorder %v1067, 0
        %vm1136 = vcmp.ge.s32.totalorder %v1068, 0
        %vm1137 = vcmp.ge.s32.totalorder %v1069, 0
        %vm1138 = vcmp.ge.s32.totalorder %v1070, 0
        %vm1139 = vcmp.ge.s32.totalorder %v1071, 0
        %vm1140 = vcmp.ge.s32.totalorder %v1072, 0
        %vm1141 = vcmp.ge.s32.totalorder %v1073, 0
        %vm1142 = vcmp.ge.s32.totalorder %v1074, 0
        %vm1143 = vcmp.ge.s32.totalorder %v1075, 0
        %vm1144 = vcmp.ge.s32.totalorder %v1076, 0
        %vm1145 = vcmp.ge.s32.totalorder %v1077, 0
        %vm1146 = vcmp.ge.s32.totalorder %v1078, 0
        %vm1147 = vcmp.ge.s32.totalorder %v1079, 0
        %vm1148 = vcmp.ge.s32.totalorder %v1080, 0
        %vm1149 = vcmp.ge.s32.totalorder %v1081, 0
        %vm1150 = vcmp.ge.s32.totalorder %v1082, 0
        %vm1151 = vcmp.ge.s32.totalorder %v1083, 0
        %vm1152 = vcmp.ge.s32.totalorder %v1084, 0
        %vm1153 = vcmp.ge.s32.totalorder %v1085, 0
        %vm1154 = vcmp.ge.s32.totalorder %v1086, 0
        %vm1155 = vcmp.ge.s32.totalorder %v1087, 0
        %vm1156 = vcmp.ge.s32.totalorder %v1088, 0
        %vm1157 = vcmp.ge.s32.totalorder %v1089, 0
        %vm1158 = vcmp.ge.s32.totalorder %v1090, 0
        %vm1159 = vcmp.ge.s32.totalorder %v1091, 0
        %vm1160 = vcmp.ge.s32.totalorder %v1092, 0
        %vm1161 = vcmp.ge.s32.totalorder %v1093, 0
        %vm1162 = vcmp.ge.s32.totalorder %v1094, 0
        %vm1163 = vcmp.ge.s32.totalorder %v1095, 0
        %vm1164 = vcmp.ge.s32.totalorder %v1096, 0
        %vm1165 = vcmp.ge.s32.totalorder %v1097, 0
        %vm1166 = vcmp.ge.s32.totalorder %v1098, 0
        %vm1167 = vcmp.ge.s32.totalorder %v1099, 0
        %vm1168 = vcmp.ge.s32.totalorder %v1100, 0
        %vm1169 = vcmp.ge.s32.totalorder %v1101, 0
        %vm1170 = vcmp.ge.s32.totalorder %v1102, 0
        %vm1171 = vcmp.ge.s32.totalorder %v1103, 0
        %vm1172 = vcmp.ge.s32.totalorder %v1104, 0
        %vm1173 = vcmp.ge.s32.totalorder %v1105, 0
        %vm1174 = vcmp.ge.s32.totalorder %v1106, 0
        %vm1175 = vcmp.ge.s32.totalorder %v1107, 0
        %vm1176 = vcmp.ge.s32.totalorder %v1108, 0
        %vm1177 = vcmp.ge.s32.totalorder %v1109, 0
        %vm1178 = vcmp.ge.s32.totalorder %v1110, 0
        %vm1179 = vcmp.ge.s32.totalorder %v1111, 0
        %vm1180 = vcmp.ge.s32.totalorder %v1112, 0
        %vm1181 = vcmp.ge.s32.totalorder %v1113, 0
        %vm1182 = vcmp.ge.s32.totalorder %v1114, 0
        %vm1183 = vcmp.ge.s32.totalorder %v1115, 0
        %vm1184 = vcmp.ge.s32.totalorder %v1116, 0
        %vm1185 = vcmp.ge.s32.totalorder %v1117, 0
        %vm1186 = vcmp.ge.s32.totalorder %v1118, 0
        %vm1187 = vcmp.ge.s32.totalorder %v1119, 0
        %vm1188 = vcmp.ge.s32.totalorder %v1120, 0
        %vm1189 = vcmp.lt.s32.totalorder %v1053, 1024
        %vm1190 = vcmp.lt.s32.totalorder %v1054, 1024
        %vm1191 = vcmp.lt.s32.totalorder %v1055, 1024
        %vm1192 = vcmp.lt.s32.totalorder %v1056, 1024
        %vm1193 = vcmp.lt.s32.totalorder %v1057, 1024
        %vm1194 = vcmp.lt.s32.totalorder %v1058, 1024
        %vm1195 = vcmp.lt.s32.totalorder %v1059, 1024
        %vm1196 = vcmp.lt.s32.totalorder %v1060, 1024
        %vm1197 = vcmp.lt.s32.totalorder %v1061, 1024
        %vm1198 = vcmp.lt.s32.totalorder %v1062, 1024
        %vm1199 = vcmp.lt.s32.totalorder %v1063, 1024
        %vm1200 = vcmp.lt.s32.totalorder %v1064, 1024
        %vm1201 = vcmp.lt.s32.totalorder %v1065, 1024
        %vm1202 = vcmp.lt.s32.totalorder %v1066, 1024
        %vm1203 = vcmp.lt.s32.totalorder %v1067, 1024
        %vm1204 = vcmp.lt.s32.totalorder %v1068, 1024
        %vm1205 = vcmp.lt.s32.totalorder %v1069, 1024
        %vm1206 = vcmp.lt.s32.totalorder %v1070, 1024
        %vm1207 = vcmp.lt.s32.totalorder %v1071, 1024
        %vm1208 = vcmp.lt.s32.totalorder %v1072, 1024
        %vm1209 = vcmp.lt.s32.totalorder %v1073, 1024
        %vm1210 = vcmp.lt.s32.totalorder %v1074, 1024
        %vm1211 = vcmp.lt.s32.totalorder %v1075, 1024
        %vm1212 = vcmp.lt.s32.totalorder %v1076, 1024
        %vm1213 = vcmp.lt.s32.totalorder %v1077, 1024
        %vm1214 = vcmp.lt.s32.totalorder %v1078, 1024
        %vm1215 = vcmp.lt.s32.totalorder %v1079, 1024
        %vm1216 = vcmp.lt.s32.totalorder %v1080, 1024
        %vm1217 = vcmp.lt.s32.totalorder %v1081, 1024
        %vm1218 = vcmp.lt.s32.totalorder %v1082, 1024
        %vm1219 = vcmp.lt.s32.totalorder %v1083, 1024
        %vm1220 = vcmp.lt.s32.totalorder %v1084, 1024
        %vm1221 = vcmp.lt.s32.totalorder %v1085, 1024
        %vm1222 = vcmp.lt.s32.totalorder %v1086, 1024
        %vm1223 = vcmp.lt.s32.totalorder %v1087, 1024
        %vm1224 = vcmp.lt.s32.totalorder %v1088, 1024
        %vm1225 = vcmp.lt.s32.totalorder %v1089, 1024
        %vm1226 = vcmp.lt.s32.totalorder %v1090, 1024
        %vm1227 = vcmp.lt.s32.totalorder %v1091, 1024
        %vm1228 = vcmp.lt.s32.totalorder %v1092, 1024
        %vm1229 = vcmp.lt.s32.totalorder %v1093, 1024
        %vm1230 = vcmp.lt.s32.totalorder %v1094, 1024
        %vm1231 = vcmp.lt.s32.totalorder %v1095, 1024
        %vm1232 = vcmp.lt.s32.totalorder %v1096, 1024
        %vm1233 = vcmp.lt.s32.totalorder %v1097, 1024
        %vm1234 = vcmp.lt.s32.totalorder %v1098, 1024
        %vm1235 = vcmp.lt.s32.totalorder %v1099, 1024
        %vm1236 = vcmp.lt.s32.totalorder %v1100, 1024
        %vm1237 = vcmp.lt.s32.totalorder %v1101, 1024
        %vm1238 = vcmp.lt.s32.totalorder %v1102, 1024
        %vm1239 = vcmp.lt.s32.totalorder %v1103, 1024
        %vm1240 = vcmp.lt.s32.totalorder %v1104, 1024
        %vm1241 = vcmp.lt.s32.totalorder %v1105, 1024
        %vm1242 = vcmp.lt.s32.totalorder %v1106, 1024
        %vm1243 = vcmp.lt.s32.totalorder %v1107, 1024
        %vm1244 = vcmp.lt.s32.totalorder %v1108, 1024
        %vm1245 = vcmp.lt.s32.totalorder %v1109, 1024
        %vm1246 = vcmp.lt.s32.totalorder %v1110, 1024
        %vm1247 = vcmp.lt.s32.totalorder %v1111, 1024
        %vm1248 = vcmp.lt.s32.totalorder %v1112, 1024
        %vm1249 = vcmp.lt.s32.totalorder %v1113, 1024
        %vm1250 = vcmp.lt.s32.totalorder %v1114, 1024
        %vm1251 = vcmp.lt.s32.totalorder %v1115, 1024
        %vm1252 = vcmp.lt.s32.totalorder %v1116, 1024
        %vm1253 = vcmp.lt.s32.totalorder %v1117, 1024
        %vm1254 = vcmp.lt.s32.totalorder %v1118, 1024
        %vm1255 = vcmp.lt.s32.totalorder %v1119, 1024
        %vm1256 = vcmp.lt.s32.totalorder %v1120, 1024
        %vm1257 = vmand %vm1121, %vm1189
        %vm1258 = vmand %vm1122, %vm1190
        %vm1259 = vmand %vm1123, %vm1191
        %vm1260 = vmand %vm1124, %vm1192
        %vm1261 = vmand %vm1125, %vm1193
        %vm1262 = vmand %vm1126, %vm1194
        %vm1263 = vmand %vm1127, %vm1195
        %vm1264 = vmand %vm1128, %vm1196
        %vm1265 = vmand %vm1129, %vm1197
        %vm1266 = vmand %vm1130, %vm1198
        %vm1267 = vmand %vm1131, %vm1199
        %vm1268 = vmand %vm1132, %vm1200
        %vm1269 = vmand %vm1133, %vm1201
        %vm1270 = vmand %vm1134, %vm1202
        %vm1271 = vmand %vm1135, %vm1203
        %vm1272 = vmand %vm1136, %vm1204
        %vm1273 = vmand %vm1137, %vm1205
        %vm1274 = vmand %vm1138, %vm1206
        %vm1275 = vmand %vm1139, %vm1207
        %vm1276 = vmand %vm1140, %vm1208
        %vm1277 = vmand %vm1141, %vm1209
        %vm1278 = vmand %vm1142, %vm1210
        %vm1279 = vmand %vm1143, %vm1211
        %vm1280 = vmand %vm1144, %vm1212
        %vm1281 = vmand %vm1145, %vm1213
        %vm1282 = vmand %vm1146, %vm1214
        %vm1283 = vmand %vm1147, %vm1215
        %vm1284 = vmand %vm1148, %vm1216
        %vm1285 = vmand %vm1149, %vm1217
        %vm1286 = vmand %vm1150, %vm1218
        %vm1287 = vmand %vm1151, %vm1219
        %vm1288 = vmand %vm1152, %vm1220
        %vm1289 = vmand %vm1153, %vm1221
        %vm1290 = vmand %vm1154, %vm1222
        %vm1291 = vmand %vm1155, %vm1223
        %vm1292 = vmand %vm1156, %vm1224
        %vm1293 = vmand %vm1157, %vm1225
        %vm1294 = vmand %vm1158, %vm1226
        %vm1295 = vmand %vm1159, %vm1227
        %vm1296 = vmand %vm1160, %vm1228
        %vm1297 = vmand %vm1161, %vm1229
        %vm1298 = vmand %vm1162, %vm1230
        %vm1299 = vmand %vm1163, %vm1231
        %vm1300 = vmand %vm1164, %vm1232
        %vm1301 = vmand %vm1165, %vm1233
        %vm1302 = vmand %vm1166, %vm1234
        %vm1303 = vmand %vm1167, %vm1235
        %vm1304 = vmand %vm1168, %vm1236
        %vm1305 = vmand %vm1169, %vm1237
        %vm1306 = vmand %vm1170, %vm1238
        %vm1307 = vmand %vm1171, %vm1239
        %vm1308 = vmand %vm1172, %vm1240
        %vm1309 = vmand %vm1173, %vm1241
        %vm1310 = vmand %vm1174, %vm1242
        %vm1311 = vmand %vm1175, %vm1243
        %vm1312 = vmand %vm1176, %vm1244
        %vm1313 = vmand %vm1177, %vm1245
        %vm1314 = vmand %vm1178, %vm1246
        %vm1315 = vmand %vm1179, %vm1247
        %vm1316 = vmand %vm1180, %vm1248
        %vm1317 = vmand %vm1181, %vm1249
        %vm1318 = vmand %vm1182, %vm1250
        %vm1319 = vmand %vm1183, %vm1251
        %vm1320 = vmand %vm1184, %vm1252
        %vm1321 = vmand %vm1185, %vm1253
        %vm1322 = vmand %vm1186, %vm1254
        %vm1323 = vmand %vm1187, %vm1255
        %vm1324 = vmand %vm1188, %vm1256
        %v1325 = vsel %vm1257, %v644, 0.0
        %v1326 = vsel %vm1258, %v649, 0.0
        %v1327 = vsel %vm1259, %v654, 0.0
        %v1328 = vsel %vm1260, %v659, 0.0
        %v1329 = vsel %vm1261, %v664, 0.0
        %v1330 = vsel %vm1262, %v669, 0.0
        %v1331 = vsel %vm1263, %v674, 0.0
        %v1332 = vsel %vm1264, %v679, 0.0
        %v1333 = vsel %vm1265, %v684, 0.0
        %v1334 = vsel %vm1266, %v689, 0.0
        %v1335 = vsel %vm1267, %v694, 0.0
        %v1336 = vsel %vm1268, %v699, 0.0
        %v1337 = vsel %vm1269, %v704, 0.0
        %v1338 = vsel %vm1270, %v709, 0.0
        %v1339 = vsel %vm1271, %v714, 0.0
        %v1340 = vsel %vm1272, %v719, 0.0
        %v1341 = vsel %vm1273, %v724, 0.0
        %v1342 = vsel %vm1274, %v729, 0.0
        %v1343 = vsel %vm1275, %v734, 0.0
        %v1344 = vsel %vm1276, %v739, 0.0
        %v1345 = vsel %vm1277, %v744, 0.0
        %v1346 = vsel %vm1278, %v749, 0.0
        %v1347 = vsel %vm1279, %v754, 0.0
        %v1348 = vsel %vm1280, %v759, 0.0
        %v1349 = vsel %vm1281, %v764, 0.0
        %v1350 = vsel %vm1282, %v769, 0.0
        %v1351 = vsel %vm1283, %v774, 0.0
        %v1352 = vsel %vm1284, %v779, 0.0
        %v1353 = vsel %vm1285, %v784, 0.0
        %v1354 = vsel %vm1286, %v789, 0.0
        %v1355 = vsel %vm1287, %v794, 0.0
        %v1356 = vsel %vm1288, %v799, 0.0
        %v1357 = vsel %vm1289, %v804, 0.0
        %v1358 = vsel %vm1290, %v809, 0.0
        %v1359 = vsel %vm1291, %v814, 0.0
        %v1360 = vsel %vm1292, %v819, 0.0
        %v1361 = vsel %vm1293, %v824, 0.0
        %v1362 = vsel %vm1294, %v829, 0.0
        %v1363 = vsel %vm1295, %v834, 0.0
        %v1364 = vsel %vm1296, %v839, 0.0
        %v1365 = vsel %vm1297, %v844, 0.0
        %v1366 = vsel %vm1298, %v849, 0.0
        %v1367 = vsel %vm1299, %v854, 0.0
        %v1368 = vsel %vm1300, %v859, 0.0
        %v1369 = vsel %vm1301, %v864, 0.0
        %v1370 = vsel %vm1302, %v869, 0.0
        %v1371 = vsel %vm1303, %v874, 0.0
        %v1372 = vsel %vm1304, %v879, 0.0
        %v1373 = vsel %vm1305, %v884, 0.0
        %v1374 = vsel %vm1306, %v889, 0.0
        %v1375 = vsel %vm1307, %v894, 0.0
        %v1376 = vsel %vm1308, %v899, 0.0
        %v1377 = vsel %vm1309, %v904, 0.0
        %v1378 = vsel %vm1310, %v909, 0.0
        %v1379 = vsel %vm1311, %v914, 0.0
        %v1380 = vsel %vm1312, %v919, 0.0
        %v1381 = vsel %vm1313, %v924, 0.0
        %v1382 = vsel %vm1314, %v929, 0.0
        %v1383 = vsel %vm1315, %v934, 0.0
        %v1384 = vsel %vm1316, %v939, 0.0
        %v1385 = vsel %vm1317, %v944, 0.0
        %v1386 = vsel %vm1318, %v949, 0.0
        %v1387 = vsel %vm1319, %v954, 0.0
        %v1388 = vsel %vm1320, %v959, 0.0
        %v1389 = vsel %vm1321, %v964, 0.0
        %v1390 = vsel %vm1322, %v969, 0.0
        %v1391 = vsel %vm1323, %v974, 0.0
        %v1392 = vsel %vm1324, %v979, 0.0
        %v1393 = vpack.c.bf16 %v1326, %v1325
        %v1394 = vpack.c.bf16 %v1328, %v1327
        %v1395 = vpack.c.bf16 %v1330, %v1329
        %v1396 = vpack.c.bf16 %v1332, %v1331
        %v1397 = vpack.c.bf16 %v1334, %v1333
        %v1398 = vpack.c.bf16 %v1336, %v1335
        %v1399 = vpack.c.bf16 %v1338, %v1337
        %v1400 = vpack.c.bf16 %v1340, %v1339
        %v1401 = vpack.c.bf16 %v1342, %v1341
        %v1402 = vpack.c.bf16 %v1344, %v1343
        %v1403 = vpack.c.bf16 %v1346, %v1345
        %v1404 = vpack.c.bf16 %v1348, %v1347
        %v1405 = vpack.c.bf16 %v1350, %v1349
        %v1406 = vpack.c.bf16 %v1352, %v1351
        %v1407 = vpack.c.bf16 %v1354, %v1353
        %v1408 = vpack.c.bf16 %v1356, %v1355
        %v1409 = vpack.c.bf16 %v1358, %v1357
        %v1410 = vpack.c.bf16 %v1360, %v1359
        %v1411 = vpack.c.bf16 %v1362, %v1361
        %v1412 = vpack.c.bf16 %v1364, %v1363
        %v1413 = vpack.c.bf16 %v1366, %v1365
        %v1414 = vpack.c.bf16 %v1368, %v1367
        %v1415 = vpack.c.bf16 %v1370, %v1369
        %v1416 = vpack.c.bf16 %v1372, %v1371
        %v1417 = vpack.c.bf16 %v1374, %v1373
        %v1418 = vpack.c.bf16 %v1376, %v1375
        %v1419 = vpack.c.bf16 %v1378, %v1377
        %v1420 = vpack.c.bf16 %v1380, %v1379
        %v1421 = vpack.c.bf16 %v1382, %v1381
        %v1422 = vpack.c.bf16 %v1384, %v1383
        %v1423 = vpack.c.bf16 %v1386, %v1385
        %v1424 = vpack.c.bf16 %v1388, %v1387
        %v1425 = vpack.c.bf16 %v1390, %v1389
        %v1426 = vpack.c.bf16 %v1392, %v1391
        %vm1427 = vsmask.f32 7424
        %v1429 = vshrl.u32 %v1393, 16
        %v1431 = vshll.u32 %v1393, 16
        %v1433 = vrot.slane %v1431, 1
        %v1434 = vor.u32 %v1429, %v1433
        %v1436 = vshll.u32 %v1394, 16
        %v1438 = vrot.slane %v1436, 1
        %v1439 = vsel %vm1427, %v1434, %v1438
        %v1440 = vshrl.u32 %v1394, 16
        %v1442 = vor.u32 %v1440, %v1438
        %v1444 = vshll.u32 %v1395, 16
        %v1446 = vrot.slane %v1444, 1
        %v1447 = vsel %vm1427, %v1442, %v1446
        %v1448 = vshrl.u32 %v1395, 16
        %v1450 = vor.u32 %v1448, %v1446
        %v1452 = vshll.u32 %v1396, 16
        %v1454 = vrot.slane %v1452, 1
        %v1455 = vsel %vm1427, %v1450, %v1454
        %v1456 = vshrl.u32 %v1396, 16
        %v1458 = vor.u32 %v1456, %v1454
        %v1460 = vshll.u32 %v1397, 16
        %v1462 = vrot.slane %v1460, 1
        %v1463 = vsel %vm1427, %v1458, %v1462
        %v1464 = vshrl.u32 %v1397, 16
        %v1466 = vor.u32 %v1464, %v1462
        %v1468 = vshll.u32 %v1398, 16
        %v1470 = vrot.slane %v1468, 1
        %v1471 = vsel %vm1427, %v1466, %v1470
        %v1472 = vshrl.u32 %v1398, 16
        %v1474 = vor.u32 %v1472, %v1470
        %v1476 = vshll.u32 %v1399, 16
        %v1478 = vrot.slane %v1476, 1
        %v1479 = vsel %vm1427, %v1474, %v1478
        %v1480 = vshrl.u32 %v1399, 16
        %v1482 = vor.u32 %v1480, %v1478
        %v1484 = vshll.u32 %v1400, 16
        %v1486 = vrot.slane %v1484, 1
        %v1487 = vsel %vm1427, %v1482, %v1486
        %v1488 = vshrl.u32 %v1400, 16
        %v1490 = vor.u32 %v1488, %v1486
        %v1492 = vshll.u32 %v1401, 16
        %v1494 = vrot.slane %v1492, 1
        %v1495 = vsel %vm1427, %v1490, %v1494
        %v1496 = vshrl.u32 %v1401, 16
        %v1498 = vor.u32 %v1496, %v1494
        %v1500 = vshll.u32 %v1402, 16
        %v1502 = vrot.slane %v1500, 1
        %v1503 = vsel %vm1427, %v1498, %v1502
        %v1504 = vshrl.u32 %v1402, 16
        %v1506 = vor.u32 %v1504, %v1502
        %v1508 = vshll.u32 %v1403, 16
        %v1510 = vrot.slane %v1508, 1
        %v1511 = vsel %vm1427, %v1506, %v1510
        %v1512 = vshrl.u32 %v1403, 16
        %v1514 = vor.u32 %v1512, %v1510
        %v1516 = vshll.u32 %v1404, 16
        %v1518 = vrot.slane %v1516, 1
        %v1519 = vsel %vm1427, %v1514, %v1518
        %v1520 = vshrl.u32 %v1404, 16
        %v1522 = vor.u32 %v1520, %v1518
        %v1524 = vshll.u32 %v1405, 16
        %v1526 = vrot.slane %v1524, 1
        %v1527 = vsel %vm1427, %v1522, %v1526
        %v1528 = vshrl.u32 %v1405, 16
        %v1530 = vor.u32 %v1528, %v1526
        %v1532 = vshll.u32 %v1406, 16
        %v1534 = vrot.slane %v1532, 1
        %v1535 = vsel %vm1427, %v1530, %v1534
        %v1536 = vshrl.u32 %v1406, 16
        %v1538 = vor.u32 %v1536, %v1534
        %v1540 = vshll.u32 %v1407, 16
        %v1542 = vrot.slane %v1540, 1
        %v1543 = vsel %vm1427, %v1538, %v1542
        %v1544 = vshrl.u32 %v1407, 16
        %v1546 = vor.u32 %v1544, %v1542
        %v1548 = vshll.u32 %v1408, 16
        %v1550 = vrot.slane %v1548, 1
        %v1551 = vsel %vm1427, %v1546, %v1550
        %v1552 = vshrl.u32 %v1408, 16
        %v1554 = vor.u32 %v1552, %v1550
        %v1556 = vshll.u32 %v1409, 16
        %v1558 = vrot.slane %v1556, 1
        %v1559 = vsel %vm1427, %v1554, %v1558
        %v1560 = vshrl.u32 %v1409, 16
        %v1562 = vor.u32 %v1560, %v1558
        %v1564 = vshll.u32 %v1410, 16
        %v1566 = vrot.slane %v1564, 1
        %v1567 = vsel %vm1427, %v1562, %v1566
        %v1568 = vshrl.u32 %v1410, 16
        %v1570 = vor.u32 %v1568, %v1566
        %v1572 = vshll.u32 %v1411, 16
        %v1574 = vrot.slane %v1572, 1
        %v1575 = vsel %vm1427, %v1570, %v1574
        %v1576 = vshrl.u32 %v1411, 16
        %v1578 = vor.u32 %v1576, %v1574
        %v1580 = vshll.u32 %v1412, 16
        %v1582 = vrot.slane %v1580, 1
        %v1583 = vsel %vm1427, %v1578, %v1582
        %v1584 = vshrl.u32 %v1412, 16
        %v1586 = vor.u32 %v1584, %v1582
        %v1588 = vshll.u32 %v1413, 16
        %v1590 = vrot.slane %v1588, 1
        %v1591 = vsel %vm1427, %v1586, %v1590
        %v1592 = vshrl.u32 %v1413, 16
        %v1594 = vor.u32 %v1592, %v1590
        %v1596 = vshll.u32 %v1414, 16
        %v1598 = vrot.slane %v1596, 1
        %v1599 = vsel %vm1427, %v1594, %v1598
        %v1600 = vshrl.u32 %v1414, 16
        %v1602 = vor.u32 %v1600, %v1598
        %v1604 = vshll.u32 %v1415, 16
        %v1606 = vrot.slane %v1604, 1
        %v1607 = vsel %vm1427, %v1602, %v1606
        %v1608 = vshrl.u32 %v1415, 16
        %v1610 = vor.u32 %v1608, %v1606
        %v1612 = vshll.u32 %v1416, 16
        %v1614 = vrot.slane %v1612, 1
        %v1615 = vsel %vm1427, %v1610, %v1614
        %v1616 = vshrl.u32 %v1416, 16
        %v1618 = vor.u32 %v1616, %v1614
        %v1620 = vshll.u32 %v1417, 16
        %v1622 = vrot.slane %v1620, 1
        %v1623 = vsel %vm1427, %v1618, %v1622
        %v1624 = vshrl.u32 %v1417, 16
        %v1626 = vor.u32 %v1624, %v1622
        %v1628 = vshll.u32 %v1418, 16
        %v1630 = vrot.slane %v1628, 1
        %v1631 = vsel %vm1427, %v1626, %v1630
        %v1632 = vshrl.u32 %v1418, 16
        %v1634 = vor.u32 %v1632, %v1630
        %v1636 = vshll.u32 %v1419, 16
        %v1638 = vrot.slane %v1636, 1
        %v1639 = vsel %vm1427, %v1634, %v1638
        %v1640 = vshrl.u32 %v1419, 16
        %v1642 = vor.u32 %v1640, %v1638
        %v1644 = vshll.u32 %v1420, 16
        %v1646 = vrot.slane %v1644, 1
        %v1647 = vsel %vm1427, %v1642, %v1646
        %v1648 = vshrl.u32 %v1420, 16
        %v1650 = vor.u32 %v1648, %v1646
        %v1652 = vshll.u32 %v1421, 16
        %v1654 = vrot.slane %v1652, 1
        %v1655 = vsel %vm1427, %v1650, %v1654
        %v1656 = vshrl.u32 %v1421, 16
        %v1658 = vor.u32 %v1656, %v1654
        %v1660 = vshll.u32 %v1422, 16
        %v1662 = vrot.slane %v1660, 1
        %v1663 = vsel %vm1427, %v1658, %v1662
        %v1664 = vshrl.u32 %v1422, 16
        %v1666 = vor.u32 %v1664, %v1662
        %v1668 = vshll.u32 %v1423, 16
        %v1670 = vrot.slane %v1668, 1
        %v1671 = vsel %vm1427, %v1666, %v1670
        %v1672 = vshrl.u32 %v1423, 16
        %v1674 = vor.u32 %v1672, %v1670
        %v1676 = vshll.u32 %v1424, 16
        %v1678 = vrot.slane %v1676, 1
        %v1679 = vsel %vm1427, %v1674, %v1678
        %v1680 = vshrl.u32 %v1424, 16
        %v1682 = vor.u32 %v1680, %v1678
        %v1684 = vshll.u32 %v1425, 16
        %v1686 = vrot.slane %v1684, 1
        %v1687 = vsel %vm1427, %v1682, %v1686
        %v1688 = vshrl.u32 %v1425, 16
        %v1690 = vor.u32 %v1688, %v1686
        %v1692 = vshll.u32 %v1426, 16
        %v1694 = vrot.slane %v1692, 1
        %v1695 = vsel %vm1427, %v1690, %v1694
        %v1696 = vshrl.u32 %v1426, 16
        %v1698 = vor.u32 %v1696, %v1694
        %vm1733 = vcmask 1046528
        %v1734 = vrot.slane %v1393, 1
        %v1735 = vrot.slane %v1394, 1
        %v1736 = vsel %vm1733, %v1734, %v1735
        %v1737 = vrot.slane %v1395, 1
        %v1738 = vsel %vm1733, %v1735, %v1737
        %v1739 = vrot.slane %v1396, 1
        %v1740 = vsel %vm1733, %v1737, %v1739
        %v1741 = vrot.slane %v1397, 1
        %v1742 = vsel %vm1733, %v1739, %v1741
        %v1743 = vrot.slane %v1398, 1
        %v1744 = vsel %vm1733, %v1741, %v1743
        %v1745 = vrot.slane %v1399, 1
        %v1746 = vsel %vm1733, %v1743, %v1745
        %v1747 = vrot.slane %v1400, 1
        %v1748 = vsel %vm1733, %v1745, %v1747
        %v1749 = vrot.slane %v1401, 1
        %v1750 = vsel %vm1733, %v1747, %v1749
        %v1751 = vrot.slane %v1402, 1
        %v1752 = vsel %vm1733, %v1749, %v1751
        %v1753 = vrot.slane %v1403, 1
        %v1754 = vsel %vm1733, %v1751, %v1753
        %v1755 = vrot.slane %v1404, 1
        %v1756 = vsel %vm1733, %v1753, %v1755
        %v1757 = vrot.slane %v1405, 1
        %v1758 = vsel %vm1733, %v1755, %v1757
        %v1759 = vrot.slane %v1406, 1
        %v1760 = vsel %vm1733, %v1757, %v1759
        %v1761 = vrot.slane %v1407, 1
        %v1762 = vsel %vm1733, %v1759, %v1761
        %v1763 = vrot.slane %v1408, 1
        %v1764 = vsel %vm1733, %v1761, %v1763
        %v1765 = vrot.slane %v1409, 1
        %v1766 = vsel %vm1733, %v1763, %v1765
        %v1767 = vrot.slane %v1410, 1
        %v1768 = vsel %vm1733, %v1765, %v1767
        %v1769 = vrot.slane %v1411, 1
        %v1770 = vsel %vm1733, %v1767, %v1769
        %v1771 = vrot.slane %v1412, 1
        %v1772 = vsel %vm1733, %v1769, %v1771
        %v1773 = vrot.slane %v1413, 1
        %v1774 = vsel %vm1733, %v1771, %v1773
        %v1775 = vrot.slane %v1414, 1
        %v1776 = vsel %vm1733, %v1773, %v1775
        %v1777 = vrot.slane %v1415, 1
        %v1778 = vsel %vm1733, %v1775, %v1777
        %v1779 = vrot.slane %v1416, 1
        %v1780 = vsel %vm1733, %v1777, %v1779
        %v1781 = vrot.slane %v1417, 1
        %v1782 = vsel %vm1733, %v1779, %v1781
        %v1783 = vrot.slane %v1418, 1
        %v1784 = vsel %vm1733, %v1781, %v1783
        %v1785 = vrot.slane %v1419, 1
        %v1786 = vsel %vm1733, %v1783, %v1785
        %v1787 = vrot.slane %v1420, 1
        %v1788 = vsel %vm1733, %v1785, %v1787
        %v1789 = vrot.slane %v1421, 1
        %v1790 = vsel %vm1733, %v1787, %v1789
        %v1791 = vrot.slane %v1422, 1
        %v1792 = vsel %vm1733, %v1789, %v1791
        %v1793 = vrot.slane %v1423, 1
        %v1794 = vsel %vm1733, %v1791, %v1793
        %v1795 = vrot.slane %v1424, 1
        %v1796 = vsel %vm1733, %v1793, %v1795
        %v1797 = vrot.slane %v1425, 1
        %v1798 = vsel %vm1733, %v1795, %v1797
        %v1799 = vrot.slane %v1426, 1
        %v1800 = vsel %vm1733, %v1797, %v1799
        %v1801 = vld [vmem:[%s2] sm:$0xf]
        %v1802 = vld [vmem:[%s2 + $0x4] sm:$0xf]
        %v1803 = vld [vmem:[%s2 + $0x8] sm:$0xf]
        %v1804 = vld [vmem:[%s2 + $0xc] sm:$0xf]
        %v1805 = vld [vmem:[%s2 + $0x10] sm:$0xf]
        %v1806 = vld [vmem:[%s2 + $0x14] sm:$0xf]
        %v1807 = vld [vmem:[%s2 + $0x18] sm:$0xf]
        %v1808 = vld [vmem:[%s2 + $0x1c] sm:$0xf]
        %v1809 = vld [vmem:[%s2 + $0x20] sm:$0xf]
        %v1810 = vld [vmem:[%s2 + $0x24] sm:$0xf]
        %v1811 = vld [vmem:[%s2 + $0x28] sm:$0xf]
        %v1812 = vld [vmem:[%s2 + $0x2c] sm:$0xf]
        %v1813 = vld [vmem:[%s2 + $0x30] sm:$0xf]
        %v1814 = vld [vmem:[%s2 + $0x34] sm:$0xf]
        %v1815 = vld [vmem:[%s2 + $0x38] sm:$0xf]
        %v1816 = vld [vmem:[%s2 + $0x3c] sm:$0xf]
        %v1817 = vld [vmem:[%s2 + $0x40] sm:$0xf]
        %v1818 = vld [vmem:[%s2 + $0x44] sm:$0xf]
        %v1819 = vld [vmem:[%s2 + $0x48] sm:$0xf]
        %v1820 = vld [vmem:[%s2 + $0x4c] sm:$0xf]
        %v1821 = vld [vmem:[%s2 + $0x50] sm:$0xf]
        %v1822 = vld [vmem:[%s2 + $0x54] sm:$0xf]
        %v1823 = vld [vmem:[%s2 + $0x58] sm:$0xf]
        %v1824 = vld [vmem:[%s2 + $0x5c] sm:$0xf]
        %v1825 = vld [vmem:[%s2 + $0x60] sm:$0xf]
        %v1826 = vld [vmem:[%s2 + $0x64] sm:$0xf]
        %v1827 = vld [vmem:[%s2 + $0x68] sm:$0xf]
        %v1828 = vld [vmem:[%s2 + $0x6c] sm:$0xf]
        %v1829 = vld [vmem:[%s2 + $0x70] sm:$0xf]
        %v1830 = vld [vmem:[%s2 + $0x74] sm:$0xf]
        %v1831 = vld [vmem:[%s2 + $0x78] sm:$0xf]
        %v1832 = vld [vmem:[%s2 + $0x7c] sm:$0xf]
        %v1833 = vld [vmem:[%s2 + $0x80] sm:$0xf]
        %v1834 = vld [vmem:[%s2 + $0x84] sm:$0xf]
        %v1835 = vld [vmem:[%s2 + $0x88] sm:$0xf]
        %v1836 = vld [vmem:[%s2 + $0x8c] sm:$0xf]
        %v1837 = vld [vmem:[%s2 + $0x90] sm:$0xf]
        %v1838 = vld [vmem:[%s2 + $0x94] sm:$0xf]
        %v1839 = vld [vmem:[%s2 + $0x98] sm:$0xf]
        %v1840 = vld [vmem:[%s2 + $0x9c] sm:$0xf]
        %v1841 = vld [vmem:[%s2 + $0xa0] sm:$0xf]
        %v1842 = vld [vmem:[%s2 + $0xa4] sm:$0xf]
        %v1843 = vld [vmem:[%s2 + $0xa8] sm:$0xf]
        %v1844 = vld [vmem:[%s2 + $0xac] sm:$0xf]
        %v1845 = vld [vmem:[%s2 + $0xb0] sm:$0xf]
        %v1846 = vld [vmem:[%s2 + $0xb4] sm:$0xf]
        %v1847 = vld [vmem:[%s2 + $0xb8] sm:$0xf]
        %v1848 = vld [vmem:[%s2 + $0xbc] sm:$0xf]
        %v1849 = vld [vmem:[%s4] sm:$0x1]
        %v1851 = vlaneseq
        %v1852 = vshrl.u32 %v1851, 7
        %v1853 = vsub.s32 0, %v1852
        %v1854 = vrot.slane %v1849, %v1853
        %v1857 = vshrl.u32 %v1439, 16
        %v1859 = vshll.u32 %v1439, 16
        %v1861 = vrot.slane %v1859, 1
        %v1862 = vor.u32 %v1857, %v1861
        %v1864 = vshll.u32 %v1447, 16
        %v1866 = vrot.slane %v1864, 1
        %v1867 = vsel %vm1427, %v1862, %v1866
        %v1869 = vshrl.u32 %v1736, 16
        %v1871 = vshll.u32 %v1736, 16
        %v1873 = vrot.slane %v1871, 1
        %v1874 = vor.u32 %v1869, %v1873
        %v1876 = vshll.u32 %v1738, 16
        %v1878 = vrot.slane %v1876, 1
        %v1879 = vsel %vm1427, %v1874, %v1878
        %v1880 = vshrl.u32 %v1447, 16
        %v1882 = vor.u32 %v1880, %v1866
        %v1884 = vshll.u32 %v1455, 16
        %v1886 = vrot.slane %v1884, 1
        %v1887 = vsel %vm1427, %v1882, %v1886
        %v1888 = vshrl.u32 %v1738, 16
        %v1890 = vor.u32 %v1888, %v1878
        %v1892 = vshll.u32 %v1740, 16
        %v1894 = vrot.slane %v1892, 1
        %v1895 = vsel %vm1427, %v1890, %v1894
        %v1896 = vshrl.u32 %v1455, 16
        %v1898 = vor.u32 %v1896, %v1886
        %v1900 = vshll.u32 %v1463, 16
        %v1902 = vrot.slane %v1900, 1
        %v1903 = vsel %vm1427, %v1898, %v1902
        %v1904 = vshrl.u32 %v1740, 16
        %v1906 = vor.u32 %v1904, %v1894
        %v1908 = vshll.u32 %v1742, 16
        %v1910 = vrot.slane %v1908, 1
        %v1911 = vsel %vm1427, %v1906, %v1910
        %v1912 = vshrl.u32 %v1463, 16
        %v1914 = vor.u32 %v1912, %v1902
        %v1916 = vshll.u32 %v1471, 16
        %v1918 = vrot.slane %v1916, 1
        %v1919 = vsel %vm1427, %v1914, %v1918
        %v1920 = vshrl.u32 %v1742, 16
        %v1922 = vor.u32 %v1920, %v1910
        %v1924 = vshll.u32 %v1744, 16
        %v1926 = vrot.slane %v1924, 1
        %v1927 = vsel %vm1427, %v1922, %v1926
        %v1928 = vshrl.u32 %v1471, 16
        %v1930 = vor.u32 %v1928, %v1918
        %v1932 = vshll.u32 %v1479, 16
        %v1934 = vrot.slane %v1932, 1
        %v1935 = vsel %vm1427, %v1930, %v1934
        %v1936 = vshrl.u32 %v1744, 16
        %v1938 = vor.u32 %v1936, %v1926
        %v1940 = vshll.u32 %v1746, 16
        %v1942 = vrot.slane %v1940, 1
        %v1943 = vsel %vm1427, %v1938, %v1942
        %v1944 = vshrl.u32 %v1479, 16
        %v1946 = vor.u32 %v1944, %v1934
        %v1948 = vshll.u32 %v1487, 16
        %v1950 = vrot.slane %v1948, 1
        %v1951 = vsel %vm1427, %v1946, %v1950
        %v1952 = vshrl.u32 %v1746, 16
        %v1954 = vor.u32 %v1952, %v1942
        %v1956 = vshll.u32 %v1748, 16
        %v1958 = vrot.slane %v1956, 1
        %v1959 = vsel %vm1427, %v1954, %v1958
        %v1960 = vshrl.u32 %v1487, 16
        %v1962 = vor.u32 %v1960, %v1950
        %v1964 = vshll.u32 %v1495, 16
        %v1966 = vrot.slane %v1964, 1
        %v1967 = vsel %vm1427, %v1962, %v1966
        %v1968 = vshrl.u32 %v1748, 16
        %v1970 = vor.u32 %v1968, %v1958
        %v1972 = vshll.u32 %v1750, 16
        %v1974 = vrot.slane %v1972, 1
        %v1975 = vsel %vm1427, %v1970, %v1974
        %v1976 = vshrl.u32 %v1495, 16
        %v1978 = vor.u32 %v1976, %v1966
        %v1980 = vshll.u32 %v1503, 16
        %v1982 = vrot.slane %v1980, 1
        %v1983 = vsel %vm1427, %v1978, %v1982
        %v1984 = vshrl.u32 %v1750, 16
        %v1986 = vor.u32 %v1984, %v1974
        %v1988 = vshll.u32 %v1752, 16
        %v1990 = vrot.slane %v1988, 1
        %v1991 = vsel %vm1427, %v1986, %v1990
        %v1992 = vshrl.u32 %v1503, 16
        %v1994 = vor.u32 %v1992, %v1982
        %v1996 = vshll.u32 %v1511, 16
        %v1998 = vrot.slane %v1996, 1
        %v1999 = vsel %vm1427, %v1994, %v1998
        %v2000 = vshrl.u32 %v1752, 16
        %v2002 = vor.u32 %v2000, %v1990
        %v2004 = vshll.u32 %v1754, 16
        %v2006 = vrot.slane %v2004, 1
        %v2007 = vsel %vm1427, %v2002, %v2006
        %v2008 = vshrl.u32 %v1511, 16
        %v2010 = vor.u32 %v2008, %v1998
        %v2012 = vshll.u32 %v1519, 16
        %v2014 = vrot.slane %v2012, 1
        %v2015 = vsel %vm1427, %v2010, %v2014
        %v2016 = vshrl.u32 %v1754, 16
        %v2018 = vor.u32 %v2016, %v2006
        %v2020 = vshll.u32 %v1756, 16
        %v2022 = vrot.slane %v2020, 1
        %v2023 = vsel %vm1427, %v2018, %v2022
        %v2024 = vshrl.u32 %v1519, 16
        %v2026 = vor.u32 %v2024, %v2014
        %v2028 = vshll.u32 %v1527, 16
        %v2030 = vrot.slane %v2028, 1
        %v2031 = vsel %vm1427, %v2026, %v2030
        %v2032 = vshrl.u32 %v1756, 16
        %v2034 = vor.u32 %v2032, %v2022
        %v2036 = vshll.u32 %v1758, 16
        %v2038 = vrot.slane %v2036, 1
        %v2039 = vsel %vm1427, %v2034, %v2038
        %v2040 = vshrl.u32 %v1527, 16
        %v2042 = vor.u32 %v2040, %v2030
        %v2044 = vshll.u32 %v1535, 16
        %v2046 = vrot.slane %v2044, 1
        %v2047 = vsel %vm1427, %v2042, %v2046
        %v2048 = vshrl.u32 %v1758, 16
        %v2050 = vor.u32 %v2048, %v2038
        %v2052 = vshll.u32 %v1760, 16
        %v2054 = vrot.slane %v2052, 1
        %v2055 = vsel %vm1427, %v2050, %v2054
        %v2056 = vshrl.u32 %v1535, 16
        %v2058 = vor.u32 %v2056, %v2046
        %v2060 = vshll.u32 %v1543, 16
        %v2062 = vrot.slane %v2060, 1
        %v2063 = vsel %vm1427, %v2058, %v2062
        %v2064 = vshrl.u32 %v1760, 16
        %v2066 = vor.u32 %v2064, %v2054
        %v2068 = vshll.u32 %v1762, 16
        %v2070 = vrot.slane %v2068, 1
        %v2071 = vsel %vm1427, %v2066, %v2070
        %v2072 = vshrl.u32 %v1543, 16
        %v2074 = vor.u32 %v2072, %v2062
        %v2076 = vshll.u32 %v1551, 16
        %v2078 = vrot.slane %v2076, 1
        %v2079 = vsel %vm1427, %v2074, %v2078
        %v2080 = vshrl.u32 %v1762, 16
        %v2082 = vor.u32 %v2080, %v2070
        %v2084 = vshll.u32 %v1764, 16
        %v2086 = vrot.slane %v2084, 1
        %v2087 = vsel %vm1427, %v2082, %v2086
        %v2088 = vshrl.u32 %v1551, 16
        %v2090 = vor.u32 %v2088, %v2078
        %v2092 = vshll.u32 %v1559, 16
        %v2094 = vrot.slane %v2092, 1
        %v2095 = vsel %vm1427, %v2090, %v2094
        %v2096 = vshrl.u32 %v1764, 16
        %v2098 = vor.u32 %v2096, %v2086
        %v2100 = vshll.u32 %v1766, 16
        %v2102 = vrot.slane %v2100, 1
        %v2103 = vsel %vm1427, %v2098, %v2102
        %v2104 = vshrl.u32 %v1559, 16
        %v2106 = vor.u32 %v2104, %v2094
        %v2108 = vshll.u32 %v1567, 16
        %v2110 = vrot.slane %v2108, 1
        %v2111 = vsel %vm1427, %v2106, %v2110
        %v2112 = vshrl.u32 %v1766, 16
        %v2114 = vor.u32 %v2112, %v2102
        %v2116 = vshll.u32 %v1768, 16
        %v2118 = vrot.slane %v2116, 1
        %v2119 = vsel %vm1427, %v2114, %v2118
        %v2120 = vshrl.u32 %v1567, 16
        %v2122 = vor.u32 %v2120, %v2110
        %v2124 = vshll.u32 %v1575, 16
        %v2126 = vrot.slane %v2124, 1
        %v2127 = vsel %vm1427, %v2122, %v2126
        %v2128 = vshrl.u32 %v1768, 16
        %v2130 = vor.u32 %v2128, %v2118
        %v2132 = vshll.u32 %v1770, 16
        %v2134 = vrot.slane %v2132, 1
        %v2135 = vsel %vm1427, %v2130, %v2134
        %v2136 = vshrl.u32 %v1575, 16
        %v2138 = vor.u32 %v2136, %v2126
        %v2140 = vshll.u32 %v1583, 16
        %v2142 = vrot.slane %v2140, 1
        %v2143 = vsel %vm1427, %v2138, %v2142
        %v2144 = vshrl.u32 %v1770, 16
        %v2146 = vor.u32 %v2144, %v2134
        %v2148 = vshll.u32 %v1772, 16
        %v2150 = vrot.slane %v2148, 1
        %v2151 = vsel %vm1427, %v2146, %v2150
        %v2152 = vshrl.u32 %v1583, 16
        %v2154 = vor.u32 %v2152, %v2142
        %v2156 = vshll.u32 %v1591, 16
        %v2158 = vrot.slane %v2156, 1
        %v2159 = vsel %vm1427, %v2154, %v2158
        %v2160 = vshrl.u32 %v1772, 16
        %v2162 = vor.u32 %v2160, %v2150
        %v2164 = vshll.u32 %v1774, 16
        %v2166 = vrot.slane %v2164, 1
        %v2167 = vsel %vm1427, %v2162, %v2166
        %v2168 = vshrl.u32 %v1591, 16
        %v2170 = vor.u32 %v2168, %v2158
        %v2172 = vshll.u32 %v1599, 16
        %v2174 = vrot.slane %v2172, 1
        %v2175 = vsel %vm1427, %v2170, %v2174
        %v2176 = vshrl.u32 %v1774, 16
        %v2178 = vor.u32 %v2176, %v2166
        %v2180 = vshll.u32 %v1776, 16
        %v2182 = vrot.slane %v2180, 1
        %v2183 = vsel %vm1427, %v2178, %v2182
        %v2184 = vshrl.u32 %v1599, 16
        %v2186 = vor.u32 %v2184, %v2174
        %v2188 = vshll.u32 %v1607, 16
        %v2190 = vrot.slane %v2188, 1
        %v2191 = vsel %vm1427, %v2186, %v2190
        %v2192 = vshrl.u32 %v1776, 16
        %v2194 = vor.u32 %v2192, %v2182
        %v2196 = vshll.u32 %v1778, 16
        %v2198 = vrot.slane %v2196, 1
        %v2199 = vsel %vm1427, %v2194, %v2198
        %v2200 = vshrl.u32 %v1607, 16
        %v2202 = vor.u32 %v2200, %v2190
        %v2204 = vshll.u32 %v1615, 16
        %v2206 = vrot.slane %v2204, 1
        %v2207 = vsel %vm1427, %v2202, %v2206
        %v2208 = vshrl.u32 %v1778, 16
        %v2210 = vor.u32 %v2208, %v2198
        %v2212 = vshll.u32 %v1780, 16
        %v2214 = vrot.slane %v2212, 1
        %v2215 = vsel %vm1427, %v2210, %v2214
        %v2216 = vshrl.u32 %v1615, 16
        %v2218 = vor.u32 %v2216, %v2206
        %v2220 = vshll.u32 %v1623, 16
        %v2222 = vrot.slane %v2220, 1
        %v2223 = vsel %vm1427, %v2218, %v2222
        %v2224 = vshrl.u32 %v1780, 16
        %v2226 = vor.u32 %v2224, %v2214
        %v2228 = vshll.u32 %v1782, 16
        %v2230 = vrot.slane %v2228, 1
        %v2231 = vsel %vm1427, %v2226, %v2230
        %v2232 = vshrl.u32 %v1623, 16
        %v2234 = vor.u32 %v2232, %v2222
        %v2236 = vshll.u32 %v1631, 16
        %v2238 = vrot.slane %v2236, 1
        %v2239 = vsel %vm1427, %v2234, %v2238
        %v2240 = vshrl.u32 %v1782, 16
        %v2242 = vor.u32 %v2240, %v2230
        %v2244 = vshll.u32 %v1784, 16
        %v2246 = vrot.slane %v2244, 1
        %v2247 = vsel %vm1427, %v2242, %v2246
        %v2248 = vshrl.u32 %v1631, 16
        %v2250 = vor.u32 %v2248, %v2238
        %v2252 = vshll.u32 %v1639, 16
        %v2254 = vrot.slane %v2252, 1
        %v2255 = vsel %vm1427, %v2250, %v2254
        %v2256 = vshrl.u32 %v1784, 16
        %v2258 = vor.u32 %v2256, %v2246
        %v2260 = vshll.u32 %v1786, 16
        %v2262 = vrot.slane %v2260, 1
        %v2263 = vsel %vm1427, %v2258, %v2262
        %v2264 = vshrl.u32 %v1639, 16
        %v2266 = vor.u32 %v2264, %v2254
        %v2268 = vshll.u32 %v1647, 16
        %v2270 = vrot.slane %v2268, 1
        %v2271 = vsel %vm1427, %v2266, %v2270
        %v2272 = vshrl.u32 %v1786, 16
        %v2274 = vor.u32 %v2272, %v2262
        %v2276 = vshll.u32 %v1788, 16
        %v2278 = vrot.slane %v2276, 1
        %v2279 = vsel %vm1427, %v2274, %v2278
        %v2280 = vshrl.u32 %v1647, 16
        %v2282 = vor.u32 %v2280, %v2270
        %v2284 = vshll.u32 %v1655, 16
        %v2286 = vrot.slane %v2284, 1
        %v2287 = vsel %vm1427, %v2282, %v2286
        %v2288 = vshrl.u32 %v1788, 16
        %v2290 = vor.u32 %v2288, %v2278
        %v2292 = vshll.u32 %v1790, 16
        %v2294 = vrot.slane %v2292, 1
        %v2295 = vsel %vm1427, %v2290, %v2294
        %v2296 = vshrl.u32 %v1655, 16
        %v2298 = vor.u32 %v2296, %v2286
        %v2300 = vshll.u32 %v1663, 16
        %v2302 = vrot.slane %v2300, 1
        %v2303 = vsel %vm1427, %v2298, %v2302
        %v2304 = vshrl.u32 %v1790, 16
        %v2306 = vor.u32 %v2304, %v2294
        %v2308 = vshll.u32 %v1792, 16
        %v2310 = vrot.slane %v2308, 1
        %v2311 = vsel %vm1427, %v2306, %v2310
        %v2312 = vshrl.u32 %v1663, 16
        %v2314 = vor.u32 %v2312, %v2302
        %v2316 = vshll.u32 %v1671, 16
        %v2318 = vrot.slane %v2316, 1
        %v2319 = vsel %vm1427, %v2314, %v2318
        %v2320 = vshrl.u32 %v1792, 16
        %v2322 = vor.u32 %v2320, %v2310
        %v2324 = vshll.u32 %v1794, 16
        %v2326 = vrot.slane %v2324, 1
        %v2327 = vsel %vm1427, %v2322, %v2326
        %v2328 = vshrl.u32 %v1671, 16
        %v2330 = vor.u32 %v2328, %v2318
        %v2332 = vshll.u32 %v1679, 16
        %v2334 = vrot.slane %v2332, 1
        %v2335 = vsel %vm1427, %v2330, %v2334
        %v2336 = vshrl.u32 %v1794, 16
        %v2338 = vor.u32 %v2336, %v2326
        %v2340 = vshll.u32 %v1796, 16
        %v2342 = vrot.slane %v2340, 1
        %v2343 = vsel %vm1427, %v2338, %v2342
        %v2344 = vshrl.u32 %v1679, 16
        %v2346 = vor.u32 %v2344, %v2334
        %v2348 = vshll.u32 %v1687, 16
        %v2350 = vrot.slane %v2348, 1
        %v2351 = vsel %vm1427, %v2346, %v2350
        %v2352 = vshrl.u32 %v1796, 16
        %v2354 = vor.u32 %v2352, %v2342
        %v2356 = vshll.u32 %v1798, 16
        %v2358 = vrot.slane %v2356, 1
        %v2359 = vsel %vm1427, %v2354, %v2358
        %v2360 = vshrl.u32 %v1687, 16
        %v2362 = vor.u32 %v2360, %v2350
        %v2364 = vshll.u32 %v1695, 16
        %v2366 = vrot.slane %v2364, 1
        %v2367 = vsel %vm1427, %v2362, %v2366
        %v2368 = vshrl.u32 %v1798, 16
        %v2370 = vor.u32 %v2368, %v2358
        %v2372 = vshll.u32 %v1800, 16
        %v2374 = vrot.slane %v2372, 1
        %v2375 = vsel %vm1427, %v2370, %v2374
        %v2376 = vshrl.u32 %v1695, 16
        %v2378 = vor.u32 %v2376, %v2366
        %v2380 = vshll.u32 %v1698, 16
        %v2382 = vrot.slane %v2380, 1
        %v2383 = vsel %vm1427, %v2378, %v2382
        %v2384 = vshrl.u32 %v1800, 16
        %v2386 = vor.u32 %v2384, %v2374
        %v2388 = vshll.u32 %v1799, 16
        %v2390 = vrot.slane %v2388, 1
        %v2391 = vsel %vm1427, %v2386, %v2390
        %v2392 = vshrl.u32 %v1698, 16
        %v2394 = vor.u32 %v2392, %v2382
        %v2395 = vshrl.u32 %v1799, 16
        %v2397 = vor.u32 %v2395, %v2390
        %v2548 = vunpack.c.l.b16 %v1801
        %v2549 = vunpack.c.l.b16 %v1802
        %v2550 = vunpack.c.l.b16 %v1803
        %v2551 = vunpack.c.l.b16 %v1804
        %v2552 = vunpack.c.l.b16 %v1805
        %v2553 = vunpack.c.l.b16 %v1806
        %v2554 = vunpack.c.l.b16 %v1807
        %v2555 = vunpack.c.l.b16 %v1808
        %v2556 = vunpack.c.l.b16 %v1809
        %v2557 = vunpack.c.l.b16 %v1810
        %v2558 = vunpack.c.l.b16 %v1811
        %v2559 = vunpack.c.l.b16 %v1812
        %v2560 = vunpack.c.l.b16 %v1813
        %v2561 = vunpack.c.l.b16 %v1814
        %v2562 = vunpack.c.l.b16 %v1815
        %v2563 = vunpack.c.l.b16 %v1816
        %v2564 = vunpack.c.l.b16 %v1817
        %v2565 = vunpack.c.l.b16 %v1818
        %v2566 = vunpack.c.l.b16 %v1819
        %v2567 = vunpack.c.l.b16 %v1820
        %v2568 = vunpack.c.l.b16 %v1821
        %v2569 = vunpack.c.l.b16 %v1822
        %v2570 = vunpack.c.l.b16 %v1823
        %v2571 = vunpack.c.l.b16 %v1824
        %v2572 = vunpack.c.l.b16 %v1825
        %v2573 = vunpack.c.l.b16 %v1826
        %v2574 = vunpack.c.l.b16 %v1827
        %v2575 = vunpack.c.l.b16 %v1828
        %v2576 = vunpack.c.l.b16 %v1829
        %v2577 = vunpack.c.l.b16 %v1830
        %v2578 = vunpack.c.l.b16 %v1831
        %v2579 = vunpack.c.l.b16 %v1832
        %v2580 = vunpack.c.l.b16 %v1833
        %v2581 = vunpack.c.l.b16 %v1834
        %v2582 = vunpack.c.l.b16 %v1835
        %v2583 = vunpack.c.l.b16 %v1836
        %v2584 = vunpack.c.l.b16 %v1837
        %v2585 = vunpack.c.l.b16 %v1838
        %v2586 = vunpack.c.l.b16 %v1839
        %v2587 = vunpack.c.l.b16 %v1840
        %v2588 = vunpack.c.l.b16 %v1841
        %v2589 = vunpack.c.l.b16 %v1842
        %v2590 = vunpack.c.l.b16 %v1843
        %v2591 = vunpack.c.l.b16 %v1844
        %v2592 = vunpack.c.l.b16 %v1845
        %v2593 = vunpack.c.l.b16 %v1846
        %v2594 = vunpack.c.l.b16 %v1847
        %v2595 = vunpack.c.l.b16 %v1848
        %v2596 = vpack.c.b16 %v2549, %v2548
        %v2597 = vpack.c.b16 %v2551, %v2550
        %v2598 = vpack.c.b16 %v2553, %v2552
        %v2599 = vpack.c.b16 %v2555, %v2554
        %v2600 = vpack.c.b16 %v2557, %v2556
        %v2601 = vpack.c.b16 %v2559, %v2558
        %v2602 = vpack.c.b16 %v2561, %v2560
        %v2603 = vpack.c.b16 %v2563, %v2562
        %v2604 = vpack.c.b16 %v2565, %v2564
        %v2605 = vpack.c.b16 %v2567, %v2566
        %v2606 = vpack.c.b16 %v2569, %v2568
        %v2607 = vpack.c.b16 %v2571, %v2570
        %v2608 = vpack.c.b16 %v2573, %v2572
        %v2609 = vpack.c.b16 %v2575, %v2574
        %v2610 = vpack.c.b16 %v2577, %v2576
        %v2611 = vpack.c.b16 %v2579, %v2578
        %v2612 = vpack.c.b16 %v2581, %v2580
        %v2613 = vpack.c.b16 %v2583, %v2582
        %v2614 = vpack.c.b16 %v2585, %v2584
        %v2615 = vpack.c.b16 %v2587, %v2586
        %v2616 = vpack.c.b16 %v2589, %v2588
        %v2617 = vpack.c.b16 %v2591, %v2590
        %v2618 = vpack.c.b16 %v2593, %v2592
        %v2619 = vpack.c.b16 %v2595, %v2594
        %2644 = vmatprep.subr.bf16.mxu0 0
        %2645 = vmatpush1.bf16.msra.mxu0 %v2596
        %2646 = vmatprep.subr.bf16.mxu0 0
        %2647 = vmatpush1.bf16.msra.mxu0 %v2597
        %2648 = vmatprep.subr.bf16.mxu0 0
        %2649 = vmatpush1.bf16.msra.mxu0 %v2598
        %2650 = vmatprep.subr.bf16.mxu0 0
        %2651 = vmatpush1.bf16.msra.mxu0 %v2599
        %2652 = vmatprep.subr.bf16.mxu0 0
        %2653 = vmatpush1.bf16.msra.mxu0 %v2600
        %2654 = vmatprep.subr.bf16.mxu0 0
        %2655 = vmatpush1.bf16.msra.mxu0 %v2601
        %2656 = vmatprep.subr.bf16.mxu0 0
        %2657 = vmatpush1.bf16.msra.mxu0 %v2602
        %2658 = vmatprep.subr.bf16.mxu0 0
        %2659 = vmatpush1.bf16.msra.mxu0 %v2603
        %2660 = vmatprep.subr.bf16.mxu0 0
        %2661 = vmatpush1.bf16.msra.mxu0 %v2604
        %2662 = vmatprep.subr.bf16.mxu0 0
        %2663 = vmatpush1.bf16.msra.mxu0 %v2605
        %2664 = vmatprep.subr.bf16.mxu0 0
        %2665 = vmatpush1.bf16.msra.mxu0 %v2606
        %2666 = vmatprep.subr.bf16.mxu0 0
        %2667 = vmatpush1.bf16.msra.mxu0 %v2607
        %2668 = vmatprep.subr.bf16.mxu0 0
        %2669 = vmatpush1.bf16.msra.mxu0 %v2608
        %2670 = vmatprep.subr.bf16.mxu0 0
        %2671 = vmatpush1.bf16.msra.mxu0 %v2609
        %2672 = vmatprep.subr.bf16.mxu0 0
        %2673 = vmatpush1.bf16.msra.mxu0 %v2610
        %2674 = vmatprep.subr.bf16.mxu0 0
        %2675 = vmatpush1.bf16.msra.mxu0 %v2611
        %2676 = vmatprep.mubr.bf16.mxu0 %v1867
        %2677 = vmatmul.mubr.bf16.gmra.mrb[0].mxu0 %v1439
        %v2678 = vpop.f32.mrb[0].mxu0
        %v2679 = vadd.f32 %v1854, %v2678
        %v2680 = vpop.f32.mrb[0].mxu0
        %v2681 = vpop.f32.mrb[0].mxu0
        %v2682 = vadd.f32 %v1854, %v2681
        %v2683 = vpop.f32.mrb[0].mxu0
        %2684 = vmatprep.mubr.bf16.mxu0 %v1887
        %2685 = vmatmul.mubr.bf16.gmra.mrb[0].mxu0 %v1447
        %v2686 = vpop.f32.mrb[0].mxu0
        %v2687 = vadd.f32 %v1854, %v2686
        %v2688 = vpop.f32.mrb[0].mxu0
        %v2689 = vpop.f32.mrb[0].mxu0
        %v2690 = vadd.f32 %v1854, %v2689
        %v2691 = vpop.f32.mrb[0].mxu0
        %2692 = vmatprep.mubr.bf16.mxu0 %v1903
        %2693 = vmatmul.mubr.bf16.gmra.mrb[0].mxu0 %v1455
        %v2694 = vpop.f32.mrb[0].mxu0
        %v2695 = vadd.f32 %v1854, %v2694
        %v2696 = vpop.f32.mrb[0].mxu0
        %v2697 = vpop.f32.mrb[0].mxu0
        %v2698 = vadd.f32 %v1854, %v2697
        %v2699 = vpop.f32.mrb[0].mxu0
        %2700 = vmatprep.mubr.bf16.mxu0 %v1919
        %2701 = vmatmul.mubr.bf16.gmra.mrb[0].mxu0 %v1463
        %v2702 = vpop.f32.mrb[0].mxu0
        %v2703 = vadd.f32 %v1854, %v2702
        %v2704 = vpop.f32.mrb[0].mxu0
        %v2705 = vpop.f32.mrb[0].mxu0
        %v2706 = vadd.f32 %v1854, %v2705
        %v2707 = vpop.f32.mrb[0].mxu0
        %2708 = vmatprep.mubr.bf16.mxu0 %v1935
        %2709 = vmatmul.mubr.bf16.gmra.mrb[0].mxu0 %v1471
        %v2710 = vpop.f32.mrb[0].mxu0
        %v2711 = vadd.f32 %v1854, %v2710
        %v2712 = vpop.f32.mrb[0].mxu0
        %v2713 = vpop.f32.mrb[0].mxu0
        %v2714 = vadd.f32 %v1854, %v2713
        %v2715 = vpop.f32.mrb[0].mxu0
        %2716 = vmatprep.mubr.bf16.mxu0 %v1951
        %2717 = vmatmul.mubr.bf16.gmra.mrb[0].mxu0 %v1479
        %v2718 = vpop.f32.mrb[0].mxu0
        %v2719 = vadd.f32 %v1854, %v2718
        %v2720 = vpop.f32.mrb[0].mxu0
        %v2721 = vpop.f32.mrb[0].mxu0
        %v2722 = vadd.f32 %v1854, %v2721
        %v2723 = vpop.f32.mrb[0].mxu0
        %2724 = vmatprep.mubr.bf16.mxu0 %v1967
        %2725 = vmatmul.mubr.bf16.gmra.mrb[0].mxu0 %v1487
        %v2726 = vpop.f32.mrb[0].mxu0
        %v2727 = vadd.f32 %v1854, %v2726
        %v2728 = vpop.f32.mrb[0].mxu0
        %v2729 = vpop.f32.mrb[0].mxu0
        %v2730 = vadd.f32 %v1854, %v2729
        %v2731 = vpop.f32.mrb[0].mxu0
        %2732 = vmatprep.mubr.bf16.mxu0 %v1983
        %2733 = vmatmul.mubr.bf16.gmra.mrb[0].mxu0 %v1495
        %v2734 = vpop.f32.mrb[0].mxu0
        %v2735 = vadd.f32 %v1854, %v2734
        %v2736 = vpop.f32.mrb[0].mxu0
        %v2737 = vpop.f32.mrb[0].mxu0
        %v2738 = vadd.f32 %v1854, %v2737
        %v2739 = vpop.f32.mrb[0].mxu0
        %2740 = vmatprep.mubr.bf16.mxu0 %v1999
        %2741 = vmatmul.mubr.bf16.gmra.mrb[0].mxu0 %v1503
        %v2742 = vpop.f32.mrb[0].mxu0
        %v2743 = vadd.f32 %v1854, %v2742
        %v2744 = vpop.f32.mrb[0].mxu0
        %v2745 = vpop.f32.mrb[0].mxu0
        %v2746 = vadd.f32 %v1854, %v2745
        %v2747 = vpop.f32.mrb[0].mxu0
        %2748 = vmatprep.mubr.bf16.mxu0 %v2015
        %2749 = vmatmul.mubr.bf16.gmra.mrb[0].mxu0 %v1511
        %v2750 = vpop.f32.mrb[0].mxu0
        %v2751 = vadd.f32 %v1854, %v2750
        %v2752 = vpop.f32.mrb[0].mxu0
        %v2753 = vpop.f32.mrb[0].mxu0
        %v2754 = vadd.f32 %v1854, %v2753
        %v2755 = vpop.f32.mrb[0].mxu0
        %2756 = vmatprep.mubr.bf16.mxu0 %v2031
        %2757 = vmatmul.mubr.bf16.gmra.mrb[0].mxu0 %v1519
        %v2758 = vpop.f32.mrb[0].mxu0
        %v2759 = vadd.f32 %v1854, %v2758
        %v2760 = vpop.f32.mrb[0].mxu0
        %v2761 = vpop.f32.mrb[0].mxu0
        %v2762 = vadd.f32 %v1854, %v2761
        %v2763 = vpop.f32.mrb[0].mxu0
        %2764 = vmatprep.mubr.bf16.mxu0 %v2047
        %2765 = vmatmul.mubr.bf16.gmra.mrb[0].mxu0 %v1527
        %v2766 = vpop.f32.mrb[0].mxu0
        %v2767 = vadd.f32 %v1854, %v2766
        %v2768 = vpop.f32.mrb[0].mxu0
        %v2769 = vpop.f32.mrb[0].mxu0
        %v2770 = vadd.f32 %v1854, %v2769
        %v2771 = vpop.f32.mrb[0].mxu0
        %2772 = vmatprep.mubr.bf16.mxu0 %v2063
        %2773 = vmatmul.mubr.bf16.gmra.mrb[0].mxu0 %v1535
        %v2774 = vpop.f32.mrb[0].mxu0
        %v2775 = vadd.f32 %v1854, %v2774
        %v2776 = vpop.f32.mrb[0].mxu0
        %v2777 = vpop.f32.mrb[0].mxu0
        %v2778 = vadd.f32 %v1854, %v2777
        %v2779 = vpop.f32.mrb[0].mxu0
        %2780 = vmatprep.mubr.bf16.mxu0 %v2079
        %2781 = vmatmul.mubr.bf16.gmra.mrb[0].mxu0 %v1543
        %v2782 = vpop.f32.mrb[0].mxu0
        %v2783 = vadd.f32 %v1854, %v2782
        %v2784 = vpop.f32.mrb[0].mxu0
        %v2785 = vpop.f32.mrb[0].mxu0
        %v2786 = vadd.f32 %v1854, %v2785
        %v2787 = vpop.f32.mrb[0].mxu0
        %2788 = vmatprep.mubr.bf16.mxu0 %v2095
        %2789 = vmatmul.mubr.bf16.gmra.mrb[0].mxu0 %v1551
        %v2790 = vpop.f32.mrb[0].mxu0
        %v2791 = vadd.f32 %v1854, %v2790
        %v2792 = vpop.f32.mrb[0].mxu0
        %v2793 = vpop.f32.mrb[0].mxu0
        %v2794 = vadd.f32 %v1854, %v2793
        %v2795 = vpop.f32.mrb[0].mxu0
        %2796 = vmatprep.mubr.bf16.mxu0 %v2111
        %2797 = vmatmul.mubr.bf16.gmra.mrb[0].mxu0 %v1559
        %v2798 = vpop.f32.mrb[0].mxu0
        %v2799 = vadd.f32 %v1854, %v2798
        %v2800 = vpop.f32.mrb[0].mxu0
        %v2801 = vpop.f32.mrb[0].mxu0
        %v2802 = vadd.f32 %v1854, %v2801
        %v2803 = vpop.f32.mrb[0].mxu0
        %2804 = vmatprep.mubr.bf16.mxu0 %v2127
        %2805 = vmatmul.mubr.bf16.gmra.mrb[0].mxu0 %v1567
        %v2806 = vpop.f32.mrb[0].mxu0
        %v2807 = vadd.f32 %v1854, %v2806
        %v2808 = vpop.f32.mrb[0].mxu0
        %v2809 = vpop.f32.mrb[0].mxu0
        %v2810 = vadd.f32 %v1854, %v2809
        %v2811 = vpop.f32.mrb[0].mxu0
        %2812 = vmatprep.mubr.bf16.mxu0 %v2143
        %2813 = vmatmul.mubr.bf16.gmra.mrb[0].mxu0 %v1575
        %v2814 = vpop.f32.mrb[0].mxu0
        %v2815 = vadd.f32 %v1854, %v2814
        %v2816 = vpop.f32.mrb[0].mxu0
        %v2817 = vpop.f32.mrb[0].mxu0
        %v2818 = vadd.f32 %v1854, %v2817
        %v2819 = vpop.f32.mrb[0].mxu0
        %2820 = vmatprep.mubr.bf16.mxu0 %v2159
        %2821 = vmatmul.mubr.bf16.gmra.mrb[0].mxu0 %v1583
        %v2822 = vpop.f32.mrb[0].mxu0
        %v2823 = vadd.f32 %v1854, %v2822
        %v2824 = vpop.f32.mrb[0].mxu0
        %v2825 = vpop.f32.mrb[0].mxu0
        %v2826 = vadd.f32 %v1854, %v2825
        %v2827 = vpop.f32.mrb[0].mxu0
        %2828 = vmatprep.mubr.bf16.mxu0 %v2175
        %2829 = vmatmul.mubr.bf16.gmra.mrb[0].mxu0 %v1591
        %v2830 = vpop.f32.mrb[0].mxu0
        %v2831 = vadd.f32 %v1854, %v2830
        %v2832 = vpop.f32.mrb[0].mxu0
        %v2833 = vpop.f32.mrb[0].mxu0
        %v2834 = vadd.f32 %v1854, %v2833
        %v2835 = vpop.f32.mrb[0].mxu0
        %2836 = vmatprep.mubr.bf16.mxu0 %v2191
        %2837 = vmatmul.mubr.bf16.gmra.mrb[0].mxu0 %v1599
        %v2838 = vpop.f32.mrb[0].mxu0
        %v2839 = vadd.f32 %v1854, %v2838
        %v2840 = vpop.f32.mrb[0].mxu0
        %v2841 = vpop.f32.mrb[0].mxu0
        %v2842 = vadd.f32 %v1854, %v2841
        %v2843 = vpop.f32.mrb[0].mxu0
        %2844 = vmatprep.mubr.bf16.mxu0 %v2207
        %2845 = vmatmul.mubr.bf16.gmra.mrb[0].mxu0 %v1607
        %v2846 = vpop.f32.mrb[0].mxu0
        %v2847 = vadd.f32 %v1854, %v2846
        %v2848 = vpop.f32.mrb[0].mxu0
        %v2849 = vpop.f32.mrb[0].mxu0
        %v2850 = vadd.f32 %v1854, %v2849
        %v2851 = vpop.f32.mrb[0].mxu0
        %2852 = vmatprep.mubr.bf16.mxu0 %v2223
        %2853 = vmatmul.mubr.bf16.gmra.mrb[0].mxu0 %v1615
        %v2854 = vpop.f32.mrb[0].mxu0
        %v2855 = vadd.f32 %v1854, %v2854
        %v2856 = vpop.f32.mrb[0].mxu0
        %v2857 = vpop.f32.mrb[0].mxu0
        %v2858 = vadd.f32 %v1854, %v2857
        %v2859 = vpop.f32.mrb[0].mxu0
        %2860 = vmatprep.mubr.bf16.mxu0 %v2239
        %2861 = vmatmul.mubr.bf16.gmra.mrb[0].mxu0 %v1623
        %v2862 = vpop.f32.mrb[0].mxu0
        %v2863 = vadd.f32 %v1854, %v2862
        %v2864 = vpop.f32.mrb[0].mxu0
        %v2865 = vpop.f32.mrb[0].mxu0
        %v2866 = vadd.f32 %v1854, %v2865
        %v2867 = vpop.f32.mrb[0].mxu0
        %2868 = vmatprep.mubr.bf16.mxu0 %v2255
        %2869 = vmatmul.mubr.bf16.gmra.mrb[0].mxu0 %v1631
        %v2870 = vpop.f32.mrb[0].mxu0
        %v2871 = vadd.f32 %v1854, %v2870
        %v2872 = vpop.f32.mrb[0].mxu0
        %v2873 = vpop.f32.mrb[0].mxu0
        %v2874 = vadd.f32 %v1854, %v2873
        %v2875 = vpop.f32.mrb[0].mxu0
        %2876 = vmatprep.mubr.bf16.mxu0 %v2271
        %2877 = vmatmul.mubr.bf16.gmra.mrb[0].mxu0 %v1639
        %v2878 = vpop.f32.mrb[0].mxu0
        %v2879 = vadd.f32 %v1854, %v2878
        %v2880 = vpop.f32.mrb[0].mxu0
        %v2881 = vpop.f32.mrb[0].mxu0
        %v2882 = vadd.f32 %v1854, %v2881
        %v2883 = vpop.f32.mrb[0].mxu0
        %2884 = vmatprep.mubr.bf16.mxu0 %v2287
        %2885 = vmatmul.mubr.bf16.gmra.mrb[0].mxu0 %v1647
        %v2886 = vpop.f32.mrb[0].mxu0
        %v2887 = vadd.f32 %v1854, %v2886
        %v2888 = vpop.f32.mrb[0].mxu0
        %v2889 = vpop.f32.mrb[0].mxu0
        %v2890 = vadd.f32 %v1854, %v2889
        %v2891 = vpop.f32.mrb[0].mxu0
        %2892 = vmatprep.mubr.bf16.mxu0 %v2303
        %2893 = vmatmul.mubr.bf16.gmra.mrb[0].mxu0 %v1655
        %v2894 = vpop.f32.mrb[0].mxu0
        %v2895 = vadd.f32 %v1854, %v2894
        %v2896 = vpop.f32.mrb[0].mxu0
        %v2897 = vpop.f32.mrb[0].mxu0
        %v2898 = vadd.f32 %v1854, %v2897
        %v2899 = vpop.f32.mrb[0].mxu0
        %2900 = vmatprep.mubr.bf16.mxu0 %v2319
        %2901 = vmatmul.mubr.bf16.gmra.mrb[0].mxu0 %v1663
        %v2902 = vpop.f32.mrb[0].mxu0
        %v2903 = vadd.f32 %v1854, %v2902
        %v2904 = vpop.f32.mrb[0].mxu0
        %v2905 = vpop.f32.mrb[0].mxu0
        %v2906 = vadd.f32 %v1854, %v2905
        %v2907 = vpop.f32.mrb[0].mxu0
        %2908 = vmatprep.mubr.bf16.mxu0 %v2335
        %2909 = vmatmul.mubr.bf16.gmra.mrb[0].mxu0 %v1671
        %v2910 = vpop.f32.mrb[0].mxu0
        %v2911 = vadd.f32 %v1854, %v2910
        %v2912 = vpop.f32.mrb[0].mxu0
        %v2913 = vpop.f32.mrb[0].mxu0
        %v2914 = vadd.f32 %v1854, %v2913
        %v2915 = vpop.f32.mrb[0].mxu0
        %2916 = vmatprep.mubr.bf16.mxu0 %v2351
        %2917 = vmatmul.mubr.bf16.gmra.mrb[0].mxu0 %v1679
        %v2918 = vpop.f32.mrb[0].mxu0
        %v2919 = vadd.f32 %v1854, %v2918
        %v2920 = vpop.f32.mrb[0].mxu0
        %v2921 = vpop.f32.mrb[0].mxu0
        %v2922 = vadd.f32 %v1854, %v2921
        %v2923 = vpop.f32.mrb[0].mxu0
        %2924 = vmatprep.mubr.bf16.mxu0 %v2367
        %2925 = vmatmul.mubr.bf16.gmra.mrb[0].mxu0 %v1687
        %v2926 = vpop.f32.mrb[0].mxu0
        %v2927 = vadd.f32 %v1854, %v2926
        %v2928 = vpop.f32.mrb[0].mxu0
        %v2929 = vpop.f32.mrb[0].mxu0
        %v2930 = vadd.f32 %v1854, %v2929
        %v2931 = vpop.f32.mrb[0].mxu0
        %2932 = vmatprep.mubr.bf16.mxu0 %v2383
        %2933 = vmatmul.mubr.bf16.gmra.mrb[0].mxu0 %v1695
        %v2934 = vpop.f32.mrb[0].mxu0
        %v2935 = vadd.f32 %v1854, %v2934
        %v2936 = vpop.f32.mrb[0].mxu0
        %v2937 = vpop.f32.mrb[0].mxu0
        %v2938 = vadd.f32 %v1854, %v2937
        %v2939 = vpop.f32.mrb[0].mxu0
        %2940 = vmatprep.mubr.bf16.mxu0 %v2394
        %2941 = vmatmul.mubr.bf16.gmra.mrb[0].mxu0 %v1698
        %v2942 = vpop.f32.mrb[0].mxu0
        %v2943 = vadd.f32 %v1854, %v2942
        %v2944 = vpop.f32.mrb[0].mxu0
        %v2945 = vpop.f32.mrb[0].mxu0
        %v2946 = vadd.f32 %v1854, %v2945
        %v2947 = vpop.f32.mrb[0].mxu0
        %2948 = vdwg.mxu0
        %2949 = vmatprep.subr.bf16.mxu0 0
        %2950 = vmatpush1.bf16.msra.mxu0 %v2612
        %2951 = vmatprep.subr.bf16.mxu0 0
        %2952 = vmatpush1.bf16.msra.mxu0 %v2613
        %2953 = vmatprep.subr.bf16.mxu0 0
        %2954 = vmatpush1.bf16.msra.mxu0 %v2614
        %2955 = vmatprep.subr.bf16.mxu0 0
        %2956 = vmatpush1.bf16.msra.mxu0 %v2615
        %2957 = vmatprep.subr.bf16.mxu0 0
        %2958 = vmatpush1.bf16.msra.mxu0 %v2616
        %2959 = vmatprep.subr.bf16.mxu0 0
        %2960 = vmatpush1.bf16.msra.mxu0 %v2617
        %2961 = vmatprep.subr.bf16.mxu0 0
        %2962 = vmatpush1.bf16.msra.mxu0 %v2618
        %2963 = vmatprep.subr.bf16.mxu0 0
        %2964 = vmatpush1.bf16.msra.mxu0 %v2619
        %2965 = vmatprep.subr.bf16.mxu0 0
        %2966 = vmatpush1.bf16.msra.mxu0 0
        %2967 = vmatprep.subr.bf16.mxu0 0
        %2968 = vmatpush1.bf16.msra.mxu0 0
        %2969 = vmatprep.subr.bf16.mxu0 0
        %2970 = vmatpush1.bf16.msra.mxu0 0
        %2971 = vmatprep.subr.bf16.mxu0 0
        %2972 = vmatpush1.bf16.msra.mxu0 0
        %2973 = vmatprep.subr.bf16.mxu0 0
        %2974 = vmatpush1.bf16.msra.mxu0 0
        %2975 = vmatprep.subr.bf16.mxu0 0
        %2976 = vmatpush1.bf16.msra.mxu0 0
        %2977 = vmatprep.subr.bf16.mxu0 0
        %2978 = vmatpush1.bf16.msra.mxu0 0
        %2979 = vmatprep.subr.bf16.mxu0 0
        %2980 = vmatpush1.bf16.msra.mxu0 0
        %2981 = vmatprep.mubr.bf16.mxu0 0
        %2982 = vmatmul.mubr.bf16.gmra.mrb[0].mxu0 %v1879
        %v2983 = vpop.f32.mrb[0].mxu0
        %v2984 = vadd.f32 %v2679, %v2983
        %v2985 = vpop.f32.mrb[0].mxu0
        %v2986 = vpop.f32.mrb[0].mxu0
        %v2987 = vadd.f32 %v2682, %v2986
        %v2988 = vpop.f32.mrb[0].mxu0
        %2989 = vmatprep.mubr.bf16.mxu0 0
        %2990 = vmatmul.mubr.bf16.gmra.mrb[0].mxu0 %v1895
        %v2991 = vpop.f32.mrb[0].mxu0
        %v2992 = vadd.f32 %v2687, %v2991
        %v2993 = vpop.f32.mrb[0].mxu0
        %v2994 = vpop.f32.mrb[0].mxu0
        %v2995 = vadd.f32 %v2690, %v2994
        %v2996 = vpop.f32.mrb[0].mxu0
        %2997 = vmatprep.mubr.bf16.mxu0 0
        %2998 = vmatmul.mubr.bf16.gmra.mrb[0].mxu0 %v1911
        %v2999 = vpop.f32.mrb[0].mxu0
        %v3000 = vadd.f32 %v2695, %v2999
        %v3001 = vpop.f32.mrb[0].mxu0
        %v3002 = vpop.f32.mrb[0].mxu0
        %v3003 = vadd.f32 %v2698, %v3002
        %v3004 = vpop.f32.mrb[0].mxu0
        %3005 = vmatprep.mubr.bf16.mxu0 0
        %3006 = vmatmul.mubr.bf16.gmra.mrb[0].mxu0 %v1927
        %v3007 = vpop.f32.mrb[0].mxu0
        %v3008 = vadd.f32 %v2703, %v3007
        %v3009 = vpop.f32.mrb[0].mxu0
        %v3010 = vpop.f32.mrb[0].mxu0
        %v3011 = vadd.f32 %v2706, %v3010
        %v3012 = vpop.f32.mrb[0].mxu0
        %3013 = vmatprep.mubr.bf16.mxu0 0
        %3014 = vmatmul.mubr.bf16.gmra.mrb[0].mxu0 %v1943
        %v3015 = vpop.f32.mrb[0].mxu0
        %v3016 = vadd.f32 %v2711, %v3015
        %v3017 = vpop.f32.mrb[0].mxu0
        %v3018 = vpop.f32.mrb[0].mxu0
        %v3019 = vadd.f32 %v2714, %v3018
        %v3020 = vpop.f32.mrb[0].mxu0
        %3021 = vmatprep.mubr.bf16.mxu0 0
        %3022 = vmatmul.mubr.bf16.gmra.mrb[0].mxu0 %v1959
        %v3023 = vpop.f32.mrb[0].mxu0
        %v3024 = vadd.f32 %v2719, %v3023
        %v3025 = vpop.f32.mrb[0].mxu0
        %v3026 = vpop.f32.mrb[0].mxu0
        %v3027 = vadd.f32 %v2722, %v3026
        %v3028 = vpop.f32.mrb[0].mxu0
        %3029 = vmatprep.mubr.bf16.mxu0 0
        %3030 = vmatmul.mubr.bf16.gmra.mrb[0].mxu0 %v1975
        %v3031 = vpop.f32.mrb[0].mxu0
        %v3032 = vadd.f32 %v2727, %v3031
        %v3033 = vpop.f32.mrb[0].mxu0
        %v3034 = vpop.f32.mrb[0].mxu0
        %v3035 = vadd.f32 %v2730, %v3034
        %v3036 = vpop.f32.mrb[0].mxu0
        %3037 = vmatprep.mubr.bf16.mxu0 0
        %3038 = vmatmul.mubr.bf16.gmra.mrb[0].mxu0 %v1991
        %v3039 = vpop.f32.mrb[0].mxu0
        %v3040 = vadd.f32 %v2735, %v3039
        %v3041 = vpop.f32.mrb[0].mxu0
        %v3042 = vpop.f32.mrb[0].mxu0
        %v3043 = vadd.f32 %v2738, %v3042
        %v3044 = vpop.f32.mrb[0].mxu0
        %3045 = vmatprep.mubr.bf16.mxu0 0
        %3046 = vmatmul.mubr.bf16.gmra.mrb[0].mxu0 %v2007
        %v3047 = vpop.f32.mrb[0].mxu0
        %v3048 = vadd.f32 %v2743, %v3047
        %v3049 = vpop.f32.mrb[0].mxu0
        %v3050 = vpop.f32.mrb[0].mxu0
        %v3051 = vadd.f32 %v2746, %v3050
        %v3052 = vpop.f32.mrb[0].mxu0
        %3053 = vmatprep.mubr.bf16.mxu0 0
        %3054 = vmatmul.mubr.bf16.gmra.mrb[0].mxu0 %v2023
        %v3055 = vpop.f32.mrb[0].mxu0
        %v3056 = vadd.f32 %v2751, %v3055
        %v3057 = vpop.f32.mrb[0].mxu0
        %v3058 = vpop.f32.mrb[0].mxu0
        %v3059 = vadd.f32 %v2754, %v3058
        %v3060 = vpop.f32.mrb[0].mxu0
        %3061 = vmatprep.mubr.bf16.mxu0 0
        %3062 = vmatmul.mubr.bf16.gmra.mrb[0].mxu0 %v2039
        %v3063 = vpop.f32.mrb[0].mxu0
        %v3064 = vadd.f32 %v2759, %v3063
        %v3065 = vpop.f32.mrb[0].mxu0
        %v3066 = vpop.f32.mrb[0].mxu0
        %v3067 = vadd.f32 %v2762, %v3066
        %v3068 = vpop.f32.mrb[0].mxu0
        %3069 = vmatprep.mubr.bf16.mxu0 0
        %3070 = vmatmul.mubr.bf16.gmra.mrb[0].mxu0 %v2055
        %v3071 = vpop.f32.mrb[0].mxu0
        %v3072 = vadd.f32 %v2767, %v3071
        %v3073 = vpop.f32.mrb[0].mxu0
        %v3074 = vpop.f32.mrb[0].mxu0
        %v3075 = vadd.f32 %v2770, %v3074
        %v3076 = vpop.f32.mrb[0].mxu0
        %3077 = vmatprep.mubr.bf16.mxu0 0
        %3078 = vmatmul.mubr.bf16.gmra.mrb[0].mxu0 %v2071
        %v3079 = vpop.f32.mrb[0].mxu0
        %v3080 = vadd.f32 %v2775, %v3079
        %v3081 = vpop.f32.mrb[0].mxu0
        %v3082 = vpop.f32.mrb[0].mxu0
        %v3083 = vadd.f32 %v2778, %v3082
        %v3084 = vpop.f32.mrb[0].mxu0
        %3085 = vmatprep.mubr.bf16.mxu0 0
        %3086 = vmatmul.mubr.bf16.gmra.mrb[0].mxu0 %v2087
        %v3087 = vpop.f32.mrb[0].mxu0
        %v3088 = vadd.f32 %v2783, %v3087
        %v3089 = vpop.f32.mrb[0].mxu0
        %v3090 = vpop.f32.mrb[0].mxu0
        %v3091 = vadd.f32 %v2786, %v3090
        %v3092 = vpop.f32.mrb[0].mxu0
        %3093 = vmatprep.mubr.bf16.mxu0 0
        %3094 = vmatmul.mubr.bf16.gmra.mrb[0].mxu0 %v2103
        %v3095 = vpop.f32.mrb[0].mxu0
        %v3096 = vadd.f32 %v2791, %v3095
        %v3097 = vpop.f32.mrb[0].mxu0
        %v3098 = vpop.f32.mrb[0].mxu0
        %v3099 = vadd.f32 %v2794, %v3098
        %v3100 = vpop.f32.mrb[0].mxu0
        %3101 = vmatprep.mubr.bf16.mxu0 0
        %3102 = vmatmul.mubr.bf16.gmra.mrb[0].mxu0 %v2119
        %v3103 = vpop.f32.mrb[0].mxu0
        %v3104 = vadd.f32 %v2799, %v3103
        %v3105 = vpop.f32.mrb[0].mxu0
        %v3106 = vpop.f32.mrb[0].mxu0
        %v3107 = vadd.f32 %v2802, %v3106
        %v3108 = vpop.f32.mrb[0].mxu0
        %3109 = vmatprep.mubr.bf16.mxu0 0
        %3110 = vmatmul.mubr.bf16.gmra.mrb[0].mxu0 %v2135
        %v3111 = vpop.f32.mrb[0].mxu0
        %v3112 = vadd.f32 %v2807, %v3111
        %v3113 = vpop.f32.mrb[0].mxu0
        %v3114 = vpop.f32.mrb[0].mxu0
        %v3115 = vadd.f32 %v2810, %v3114
        %v3116 = vpop.f32.mrb[0].mxu0
        %3117 = vmatprep.mubr.bf16.mxu0 0
        %3118 = vmatmul.mubr.bf16.gmra.mrb[0].mxu0 %v2151
        %v3119 = vpop.f32.mrb[0].mxu0
        %v3120 = vadd.f32 %v2815, %v3119
        %v3121 = vpop.f32.mrb[0].mxu0
        %v3122 = vpop.f32.mrb[0].mxu0
        %v3123 = vadd.f32 %v2818, %v3122
        %v3124 = vpop.f32.mrb[0].mxu0
        %3125 = vmatprep.mubr.bf16.mxu0 0
        %3126 = vmatmul.mubr.bf16.gmra.mrb[0].mxu0 %v2167
        %v3127 = vpop.f32.mrb[0].mxu0
        %v3128 = vadd.f32 %v2823, %v3127
        %v3129 = vpop.f32.mrb[0].mxu0
        %v3130 = vpop.f32.mrb[0].mxu0
        %v3131 = vadd.f32 %v2826, %v3130
        %v3132 = vpop.f32.mrb[0].mxu0
        %3133 = vmatprep.mubr.bf16.mxu0 0
        %3134 = vmatmul.mubr.bf16.gmra.mrb[0].mxu0 %v2183
        %v3135 = vpop.f32.mrb[0].mxu0
        %v3136 = vadd.f32 %v2831, %v3135
        %v3137 = vpop.f32.mrb[0].mxu0
        %v3138 = vpop.f32.mrb[0].mxu0
        %v3139 = vadd.f32 %v2834, %v3138
        %v3140 = vpop.f32.mrb[0].mxu0
        %3141 = vmatprep.mubr.bf16.mxu0 0
        %3142 = vmatmul.mubr.bf16.gmra.mrb[0].mxu0 %v2199
        %v3143 = vpop.f32.mrb[0].mxu0
        %v3144 = vadd.f32 %v2839, %v3143
        %v3145 = vpop.f32.mrb[0].mxu0
        %v3146 = vpop.f32.mrb[0].mxu0
        %v3147 = vadd.f32 %v2842, %v3146
        %v3148 = vpop.f32.mrb[0].mxu0
        %3149 = vmatprep.mubr.bf16.mxu0 0
        %3150 = vmatmul.mubr.bf16.gmra.mrb[0].mxu0 %v2215
        %v3151 = vpop.f32.mrb[0].mxu0
        %v3152 = vadd.f32 %v2847, %v3151
        %v3153 = vpop.f32.mrb[0].mxu0
        %v3154 = vpop.f32.mrb[0].mxu0
        %v3155 = vadd.f32 %v2850, %v3154
        %v3156 = vpop.f32.mrb[0].mxu0
        %3157 = vmatprep.mubr.bf16.mxu0 0
        %3158 = vmatmul.mubr.bf16.gmra.mrb[0].mxu0 %v2231
        %v3159 = vpop.f32.mrb[0].mxu0
        %v3160 = vadd.f32 %v2855, %v3159
        %v3161 = vpop.f32.mrb[0].mxu0
        %v3162 = vpop.f32.mrb[0].mxu0
        %v3163 = vadd.f32 %v2858, %v3162
        %v3164 = vpop.f32.mrb[0].mxu0
        %3165 = vmatprep.mubr.bf16.mxu0 0
        %3166 = vmatmul.mubr.bf16.gmra.mrb[0].mxu0 %v2247
        %v3167 = vpop.f32.mrb[0].mxu0
        %v3168 = vadd.f32 %v2863, %v3167
        %v3169 = vpop.f32.mrb[0].mxu0
        %v3170 = vpop.f32.mrb[0].mxu0
        %v3171 = vadd.f32 %v2866, %v3170
        %v3172 = vpop.f32.mrb[0].mxu0
        %3173 = vmatprep.mubr.bf16.mxu0 0
        %3174 = vmatmul.mubr.bf16.gmra.mrb[0].mxu0 %v2263
        %v3175 = vpop.f32.mrb[0].mxu0
        %v3176 = vadd.f32 %v2871, %v3175
        %v3177 = vpop.f32.mrb[0].mxu0
        %v3178 = vpop.f32.mrb[0].mxu0
        %v3179 = vadd.f32 %v2874, %v3178
        %v3180 = vpop.f32.mrb[0].mxu0
        %3181 = vmatprep.mubr.bf16.mxu0 0
        %3182 = vmatmul.mubr.bf16.gmra.mrb[0].mxu0 %v2279
        %v3183 = vpop.f32.mrb[0].mxu0
        %v3184 = vadd.f32 %v2879, %v3183
        %v3185 = vpop.f32.mrb[0].mxu0
        %v3186 = vpop.f32.mrb[0].mxu0
        %v3187 = vadd.f32 %v2882, %v3186
        %v3188 = vpop.f32.mrb[0].mxu0
        %3189 = vmatprep.mubr.bf16.mxu0 0
        %3190 = vmatmul.mubr.bf16.gmra.mrb[0].mxu0 %v2295
        %v3191 = vpop.f32.mrb[0].mxu0
        %v3192 = vadd.f32 %v2887, %v3191
        %v3193 = vpop.f32.mrb[0].mxu0
        %v3194 = vpop.f32.mrb[0].mxu0
        %v3195 = vadd.f32 %v2890, %v3194
        %v3196 = vpop.f32.mrb[0].mxu0
        %3197 = vmatprep.mubr.bf16.mxu0 0
        %3198 = vmatmul.mubr.bf16.gmra.mrb[0].mxu0 %v2311
        %v3199 = vpop.f32.mrb[0].mxu0
        %v3200 = vadd.f32 %v2895, %v3199
        %v3201 = vpop.f32.mrb[0].mxu0
        %v3202 = vpop.f32.mrb[0].mxu0
        %v3203 = vadd.f32 %v2898, %v3202
        %v3204 = vpop.f32.mrb[0].mxu0
        %3205 = vmatprep.mubr.bf16.mxu0 0
        %3206 = vmatmul.mubr.bf16.gmra.mrb[0].mxu0 %v2327
        %v3207 = vpop.f32.mrb[0].mxu0
        %v3208 = vadd.f32 %v2903, %v3207
        %v3209 = vpop.f32.mrb[0].mxu0
        %v3210 = vpop.f32.mrb[0].mxu0
        %v3211 = vadd.f32 %v2906, %v3210
        %v3212 = vpop.f32.mrb[0].mxu0
        %3213 = vmatprep.mubr.bf16.mxu0 0
        %3214 = vmatmul.mubr.bf16.gmra.mrb[0].mxu0 %v2343
        %v3215 = vpop.f32.mrb[0].mxu0
        %v3216 = vadd.f32 %v2911, %v3215
        %v3217 = vpop.f32.mrb[0].mxu0
        %v3218 = vpop.f32.mrb[0].mxu0
        %v3219 = vadd.f32 %v2914, %v3218
        %v3220 = vpop.f32.mrb[0].mxu0
        %3221 = vmatprep.mubr.bf16.mxu0 0
        %3222 = vmatmul.mubr.bf16.gmra.mrb[0].mxu0 %v2359
        %v3223 = vpop.f32.mrb[0].mxu0
        %v3224 = vadd.f32 %v2919, %v3223
        %v3225 = vpop.f32.mrb[0].mxu0
        %v3226 = vpop.f32.mrb[0].mxu0
        %v3227 = vadd.f32 %v2922, %v3226
        %v3228 = vpop.f32.mrb[0].mxu0
        %3229 = vmatprep.mubr.bf16.mxu0 0
        %3230 = vmatmul.mubr.bf16.gmra.mrb[0].mxu0 %v2375
        %v3231 = vpop.f32.mrb[0].mxu0
        %v3232 = vadd.f32 %v2927, %v3231
        %v3233 = vpop.f32.mrb[0].mxu0
        %v3234 = vpop.f32.mrb[0].mxu0
        %v3235 = vadd.f32 %v2930, %v3234
        %v3236 = vpop.f32.mrb[0].mxu0
        %3237 = vmatprep.mubr.bf16.mxu0 0
        %3238 = vmatmul.mubr.bf16.gmra.mrb[0].mxu0 %v2391
        %v3239 = vpop.f32.mrb[0].mxu0
        %v3240 = vadd.f32 %v2935, %v3239
        %v3241 = vpop.f32.mrb[0].mxu0
        %v3242 = vpop.f32.mrb[0].mxu0
        %v3243 = vadd.f32 %v2938, %v3242
        %v3244 = vpop.f32.mrb[0].mxu0
        %3245 = vmatprep.mubr.bf16.mxu0 0
        %3246 = vmatmul.mubr.bf16.gmra.mrb[0].mxu0 %v2397
        %v3247 = vpop.f32.mrb[0].mxu0
        %v3248 = vadd.f32 %v2943, %v3247
        %v3249 = vpop.f32.mrb[0].mxu0
        %v3250 = vpop.f32.mrb[0].mxu0
        %v3251 = vadd.f32 %v2946, %v3250
        %v3252 = vpop.f32.mrb[0].mxu0
        %3253 = vdwg.mxu0
        %s3254 = sld [smem:[#allocation2]]
        %vm3255 = vcmp.gt.f32.partialorder %v2984, 0.0
        %vm3256 = vcmp.gt.f32.partialorder %v2987, 0.0
        %vm3257 = vcmp.gt.f32.partialorder %v2992, 0.0
        %vm3258 = vcmp.gt.f32.partialorder %v2995, 0.0
        %vm3259 = vcmp.gt.f32.partialorder %v3000, 0.0
        %vm3260 = vcmp.gt.f32.partialorder %v3003, 0.0
        %vm3261 = vcmp.gt.f32.partialorder %v3008, 0.0
        %vm3262 = vcmp.gt.f32.partialorder %v3011, 0.0
        %vm3263 = vcmp.gt.f32.partialorder %v3016, 0.0
        %vm3264 = vcmp.gt.f32.partialorder %v3019, 0.0
        %vm3265 = vcmp.gt.f32.partialorder %v3024, 0.0
        %vm3266 = vcmp.gt.f32.partialorder %v3027, 0.0
        %vm3267 = vcmp.gt.f32.partialorder %v3032, 0.0
        %vm3268 = vcmp.gt.f32.partialorder %v3035, 0.0
        %vm3269 = vcmp.gt.f32.partialorder %v3040, 0.0
        %vm3270 = vcmp.gt.f32.partialorder %v3043, 0.0
        %vm3271 = vcmp.gt.f32.partialorder %v3048, 0.0
        %vm3272 = vcmp.gt.f32.partialorder %v3051, 0.0
        %vm3273 = vcmp.gt.f32.partialorder %v3056, 0.0
        %vm3274 = vcmp.gt.f32.partialorder %v3059, 0.0
        %vm3275 = vcmp.gt.f32.partialorder %v3064, 0.0
        %vm3276 = vcmp.gt.f32.partialorder %v3067, 0.0
        %vm3277 = vcmp.gt.f32.partialorder %v3072, 0.0
        %vm3278 = vcmp.gt.f32.partialorder %v3075, 0.0
        %vm3279 = vcmp.gt.f32.partialorder %v3080, 0.0
        %vm3280 = vcmp.gt.f32.partialorder %v3083, 0.0
        %vm3281 = vcmp.gt.f32.partialorder %v3088, 0.0
        %vm3282 = vcmp.gt.f32.partialorder %v3091, 0.0
        %vm3283 = vcmp.gt.f32.partialorder %v3096, 0.0
        %vm3284 = vcmp.gt.f32.partialorder %v3099, 0.0
        %vm3285 = vcmp.gt.f32.partialorder %v3104, 0.0
        %vm3286 = vcmp.gt.f32.partialorder %v3107, 0.0
        %vm3287 = vcmp.gt.f32.partialorder %v3112, 0.0
        %vm3288 = vcmp.gt.f32.partialorder %v3115, 0.0
        %vm3289 = vcmp.gt.f32.partialorder %v3120, 0.0
        %vm3290 = vcmp.gt.f32.partialorder %v3123, 0.0
        %vm3291 = vcmp.gt.f32.partialorder %v3128, 0.0
        %vm3292 = vcmp.gt.f32.partialorder %v3131, 0.0
        %vm3293 = vcmp.gt.f32.partialorder %v3136, 0.0
        %vm3294 = vcmp.gt.f32.partialorder %v3139, 0.0
        %vm3295 = vcmp.gt.f32.partialorder %v3144, 0.0
        %vm3296 = vcmp.gt.f32.partialorder %v3147, 0.0
        %vm3297 = vcmp.gt.f32.partialorder %v3152, 0.0
        %vm3298 = vcmp.gt.f32.partialorder %v3155, 0.0
        %vm3299 = vcmp.gt.f32.partialorder %v3160, 0.0
        %vm3300 = vcmp.gt.f32.partialorder %v3163, 0.0
        %vm3301 = vcmp.gt.f32.partialorder %v3168, 0.0
        %vm3302 = vcmp.gt.f32.partialorder %v3171, 0.0
        %vm3303 = vcmp.gt.f32.partialorder %v3176, 0.0
        %vm3304 = vcmp.gt.f32.partialorder %v3179, 0.0
        %vm3305 = vcmp.gt.f32.partialorder %v3184, 0.0
        %vm3306 = vcmp.gt.f32.partialorder %v3187, 0.0
        %vm3307 = vcmp.gt.f32.partialorder %v3192, 0.0
        %vm3308 = vcmp.gt.f32.partialorder %v3195, 0.0
        %vm3309 = vcmp.gt.f32.partialorder %v3200, 0.0
        %vm3310 = vcmp.gt.f32.partialorder %v3203, 0.0
        %vm3311 = vcmp.gt.f32.partialorder %v3208, 0.0
        %vm3312 = vcmp.gt.f32.partialorder %v3211, 0.0
        %vm3313 = vcmp.gt.f32.partialorder %v3216, 0.0
        %vm3314 = vcmp.gt.f32.partialorder %v3219, 0.0
        %vm3315 = vcmp.gt.f32.partialorder %v3224, 0.0
        %vm3316 = vcmp.gt.f32.partialorder %v3227, 0.0
        %vm3317 = vcmp.gt.f32.partialorder %v3232, 0.0
        %vm3318 = vcmp.gt.f32.partialorder %v3235, 0.0
        %vm3319 = vcmp.gt.f32.partialorder %v3240, 0.0
        %vm3320 = vcmp.gt.f32.partialorder %v3243, 0.0
        %vm3321 = vcmp.gt.f32.partialorder %v3248, 0.0
        %vm3322 = vcmp.gt.f32.partialorder %v3251, 0.0
        %v3323 = vstv %s3254
        %v3324 = vmul.f32 %v3323, %v2984
        %v3325 = vmul.f32 %v3323, %v2987
        %v3326 = vmul.f32 %v3323, %v2992
        %v3327 = vmul.f32 %v3323, %v2995
        %v3328 = vmul.f32 %v3323, %v3000
        %v3329 = vmul.f32 %v3323, %v3003
        %v3330 = vmul.f32 %v3323, %v3008
        %v3331 = vmul.f32 %v3323, %v3011
        %v3332 = vmul.f32 %v3323, %v3016
        %v3333 = vmul.f32 %v3323, %v3019
        %v3334 = vmul.f32 %v3323, %v3024
        %v3335 = vmul.f32 %v3323, %v3027
        %v3336 = vmul.f32 %v3323, %v3032
        %v3337 = vmul.f32 %v3323, %v3035
        %v3338 = vmul.f32 %v3323, %v3040
        %v3339 = vmul.f32 %v3323, %v3043
        %v3340 = vmul.f32 %v3323, %v3048
        %v3341 = vmul.f32 %v3323, %v3051
        %v3342 = vmul.f32 %v3323, %v3056
        %v3343 = vmul.f32 %v3323, %v3059
        %v3344 = vmul.f32 %v3323, %v3064
        %v3345 = vmul.f32 %v3323, %v3067
        %v3346 = vmul.f32 %v3323, %v3072
        %v3347 = vmul.f32 %v3323, %v3075
        %v3348 = vmul.f32 %v3323, %v3080
        %v3349 = vmul.f32 %v3323, %v3083
        %v3350 = vmul.f32 %v3323, %v3088
        %v3351 = vmul.f32 %v3323, %v3091
        %v3352 = vmul.f32 %v3323, %v3096
        %v3353 = vmul.f32 %v3323, %v3099
        %v3354 = vmul.f32 %v3323, %v3104
        %v3355 = vmul.f32 %v3323, %v3107
        %v3356 = vmul.f32 %v3323, %v3112
        %v3357 = vmul.f32 %v3323, %v3115
        %v3358 = vmul.f32 %v3323, %v3120
        %v3359 = vmul.f32 %v3323, %v3123
        %v3360 = vmul.f32 %v3323, %v3128
        %v3361 = vmul.f32 %v3323, %v3131
        %v3362 = vmul.f32 %v3323, %v3136
        %v3363 = vmul.f32 %v3323, %v3139
        %v3364 = vmul.f32 %v3323, %v3144
        %v3365 = vmul.f32 %v3323, %v3147
        %v3366 = vmul.f32 %v3323, %v3152
        %v3367 = vmul.f32 %v3323, %v3155
        %v3368 = vmul.f32 %v3323, %v3160
        %v3369 = vmul.f32 %v3323, %v3163
        %v3370 = vmul.f32 %v3323, %v3168
        %v3371 = vmul.f32 %v3323, %v3171
        %v3372 = vmul.f32 %v3323, %v3176
        %v3373 = vmul.f32 %v3323, %v3179
        %v3374 = vmul.f32 %v3323, %v3184
        %v3375 = vmul.f32 %v3323, %v3187
        %v3376 = vmul.f32 %v3323, %v3192
        %v3377 = vmul.f32 %v3323, %v3195
        %v3378 = vmul.f32 %v3323, %v3200
        %v3379 = vmul.f32 %v3323, %v3203
        %v3380 = vmul.f32 %v3323, %v3208
        %v3381 = vmul.f32 %v3323, %v3211
        %v3382 = vmul.f32 %v3323, %v3216
        %v3383 = vmul.f32 %v3323, %v3219
        %v3384 = vmul.f32 %v3323, %v3224
        %v3385 = vmul.f32 %v3323, %v3227
        %v3386 = vmul.f32 %v3323, %v3232
        %v3387 = vmul.f32 %v3323, %v3235
        %v3388 = vmul.f32 %v3323, %v3240
        %v3389 = vmul.f32 %v3323, %v3243
        %v3390 = vmul.f32 %v3323, %v3248
        %v3391 = vmul.f32 %v3323, %v3251
        %v3392 = vsel %vm3255, %v2984, %v3324
        %v3393 = vsel %vm3256, %v2987, %v3325
        %v3394 = vsel %vm3257, %v2992, %v3326
        %v3395 = vsel %vm3258, %v2995, %v3327
        %v3396 = vsel %vm3259, %v3000, %v3328
        %v3397 = vsel %vm3260, %v3003, %v3329
        %v3398 = vsel %vm3261, %v3008, %v3330
        %v3399 = vsel %vm3262, %v3011, %v3331
        %v3400 = vsel %vm3263, %v3016, %v3332
        %v3401 = vsel %vm3264, %v3019, %v3333
        %v3402 = vsel %vm3265, %v3024, %v3334
        %v3403 = vsel %vm3266, %v3027, %v3335
        %v3404 = vsel %vm3267, %v3032, %v3336
        %v3405 = vsel %vm3268, %v3035, %v3337
        %v3406 = vsel %vm3269, %v3040, %v3338
        %v3407 = vsel %vm3270, %v3043, %v3339
        %v3408 = vsel %vm3271, %v3048, %v3340
        %v3409 = vsel %vm3272, %v3051, %v3341
        %v3410 = vsel %vm3273, %v3056, %v3342
        %v3411 = vsel %vm3274, %v3059, %v3343
        %v3412 = vsel %vm3275, %v3064, %v3344
        %v3413 = vsel %vm3276, %v3067, %v3345
        %v3414 = vsel %vm3277, %v3072, %v3346
        %v3415 = vsel %vm3278, %v3075, %v3347
        %v3416 = vsel %vm3279, %v3080, %v3348
        %v3417 = vsel %vm3280, %v3083, %v3349
        %v3418 = vsel %vm3281, %v3088, %v3350
        %v3419 = vsel %vm3282, %v3091, %v3351
        %v3420 = vsel %vm3283, %v3096, %v3352
        %v3421 = vsel %vm3284, %v3099, %v3353
        %v3422 = vsel %vm3285, %v3104, %v3354
        %v3423 = vsel %vm3286, %v3107, %v3355
        %v3424 = vsel %vm3287, %v3112, %v3356
        %v3425 = vsel %vm3288, %v3115, %v3357
        %v3426 = vsel %vm3289, %v3120, %v3358
        %v3427 = vsel %vm3290, %v3123, %v3359
        %v3428 = vsel %vm3291, %v3128, %v3360
        %v3429 = vsel %vm3292, %v3131, %v3361
        %v3430 = vsel %vm3293, %v3136, %v3362
        %v3431 = vsel %vm3294, %v3139, %v3363
        %v3432 = vsel %vm3295, %v3144, %v3364
        %v3433 = vsel %vm3296, %v3147, %v3365
        %v3434 = vsel %vm3297, %v3152, %v3366
        %v3435 = vsel %vm3298, %v3155, %v3367
        %v3436 = vsel %vm3299, %v3160, %v3368
        %v3437 = vsel %vm3300, %v3163, %v3369
        %v3438 = vsel %vm3301, %v3168, %v3370
        %v3439 = vsel %vm3302, %v3171, %v3371
        %v3440 = vsel %vm3303, %v3176, %v3372
        %v3441 = vsel %vm3304, %v3179, %v3373
        %v3442 = vsel %vm3305, %v3184, %v3374
        %v3443 = vsel %vm3306, %v3187, %v3375
        %v3444 = vsel %vm3307, %v3192, %v3376
        %v3445 = vsel %vm3308, %v3195, %v3377
        %v3446 = vsel %vm3309, %v3200, %v3378
        %v3447 = vsel %vm3310, %v3203, %v3379
        %v3448 = vsel %vm3311, %v3208, %v3380
        %v3449 = vsel %vm3312, %v3211, %v3381
        %v3450 = vsel %vm3313, %v3216, %v3382
        %v3451 = vsel %vm3314, %v3219, %v3383
        %v3452 = vsel %vm3315, %v3224, %v3384
        %v3453 = vsel %vm3316, %v3227, %v3385
        %v3454 = vsel %vm3317, %v3232, %v3386
        %v3455 = vsel %vm3318, %v3235, %v3387
        %v3456 = vsel %vm3319, %v3240, %v3388
        %v3457 = vsel %vm3320, %v3243, %v3389
        %v3458 = vsel %vm3321, %v3248, %v3390
        %v3459 = vsel %vm3322, %v3251, %v3391
        %vm3528 = vcmask 1041408
        %v3529 = vrot.slane %v3392, 6
        %v3530 = vrot.slane %v3393, 6
        %v3531 = vsel %vm3528, %v3529, %v3530
        %v3532 = vrot.slane %v3394, 6
        %v3533 = vsel %vm3528, %v3530, %v3532
        %v3534 = vrot.slane %v3395, 6
        %v3535 = vsel %vm3528, %v3532, %v3534
        %v3536 = vrot.slane %v3396, 6
        %v3537 = vsel %vm3528, %v3534, %v3536
        %v3538 = vrot.slane %v3397, 6
        %v3539 = vsel %vm3528, %v3536, %v3538
        %v3540 = vrot.slane %v3398, 6
        %v3541 = vsel %vm3528, %v3538, %v3540
        %v3542 = vrot.slane %v3399, 6
        %v3543 = vsel %vm3528, %v3540, %v3542
        %v3544 = vrot.slane %v3400, 6
        %v3545 = vsel %vm3528, %v3542, %v3544
        %v3546 = vrot.slane %v3401, 6
        %v3547 = vsel %vm3528, %v3544, %v3546
        %v3548 = vrot.slane %v3402, 6
        %v3549 = vsel %vm3528, %v3546, %v3548
        %v3550 = vrot.slane %v3403, 6
        %v3551 = vsel %vm3528, %v3548, %v3550
        %v3552 = vrot.slane %v3404, 6
        %v3553 = vsel %vm3528, %v3550, %v3552
        %v3554 = vrot.slane %v3405, 6
        %v3555 = vsel %vm3528, %v3552, %v3554
        %v3556 = vrot.slane %v3406, 6
        %v3557 = vsel %vm3528, %v3554, %v3556
        %v3558 = vrot.slane %v3407, 6
        %v3559 = vsel %vm3528, %v3556, %v3558
        %v3560 = vrot.slane %v3408, 6
        %v3561 = vsel %vm3528, %v3558, %v3560
        %v3562 = vrot.slane %v3409, 6
        %v3563 = vsel %vm3528, %v3560, %v3562
        %v3564 = vrot.slane %v3410, 6
        %v3565 = vsel %vm3528, %v3562, %v3564
        %v3566 = vrot.slane %v3411, 6
        %v3567 = vsel %vm3528, %v3564, %v3566
        %v3568 = vrot.slane %v3412, 6
        %v3569 = vsel %vm3528, %v3566, %v3568
        %v3570 = vrot.slane %v3413, 6
        %v3571 = vsel %vm3528, %v3568, %v3570
        %v3572 = vrot.slane %v3414, 6
        %v3573 = vsel %vm3528, %v3570, %v3572
        %v3574 = vrot.slane %v3415, 6
        %v3575 = vsel %vm3528, %v3572, %v3574
        %v3576 = vrot.slane %v3416, 6
        %v3577 = vsel %vm3528, %v3574, %v3576
        %v3578 = vrot.slane %v3417, 6
        %v3579 = vsel %vm3528, %v3576, %v3578
        %v3580 = vrot.slane %v3418, 6
        %v3581 = vsel %vm3528, %v3578, %v3580
        %v3582 = vrot.slane %v3419, 6
        %v3583 = vsel %vm3528, %v3580, %v3582
        %v3584 = vrot.slane %v3420, 6
        %v3585 = vsel %vm3528, %v3582, %v3584
        %v3586 = vrot.slane %v3421, 6
        %v3587 = vsel %vm3528, %v3584, %v3586
        %v3588 = vrot.slane %v3422, 6
        %v3589 = vsel %vm3528, %v3586, %v3588
        %v3590 = vrot.slane %v3423, 6
        %v3591 = vsel %vm3528, %v3588, %v3590
        %v3592 = vrot.slane %v3424, 6
        %v3593 = vsel %vm3528, %v3590, %v3592
        %v3594 = vrot.slane %v3425, 6
        %v3595 = vsel %vm3528, %v3592, %v3594
        %v3596 = vrot.slane %v3426, 6
        %v3597 = vsel %vm3528, %v3594, %v3596
        %v3598 = vrot.slane %v3427, 6
        %v3599 = vsel %vm3528, %v3596, %v3598
        %v3600 = vrot.slane %v3428, 6
        %v3601 = vsel %vm3528, %v3598, %v3600
        %v3602 = vrot.slane %v3429, 6
        %v3603 = vsel %vm3528, %v3600, %v3602
        %v3604 = vrot.slane %v3430, 6
        %v3605 = vsel %vm3528, %v3602, %v3604
        %v3606 = vrot.slane %v3431, 6
        %v3607 = vsel %vm3528, %v3604, %v3606
        %v3608 = vrot.slane %v3432, 6
        %v3609 = vsel %vm3528, %v3606, %v3608
        %v3610 = vrot.slane %v3433, 6
        %v3611 = vsel %vm3528, %v3608, %v3610
        %v3612 = vrot.slane %v3434, 6
        %v3613 = vsel %vm3528, %v3610, %v3612
        %v3614 = vrot.slane %v3435, 6
        %v3615 = vsel %vm3528, %v3612, %v3614
        %v3616 = vrot.slane %v3436, 6
        %v3617 = vsel %vm3528, %v3614, %v3616
        %v3618 = vrot.slane %v3437, 6
        %v3619 = vsel %vm3528, %v3616, %v3618
        %v3620 = vrot.slane %v3438, 6
        %v3621 = vsel %vm3528, %v3618, %v3620
        %v3622 = vrot.slane %v3439, 6
        %v3623 = vsel %vm3528, %v3620, %v3622
        %v3624 = vrot.slane %v3440, 6
        %v3625 = vsel %vm3528, %v3622, %v3624
        %v3626 = vrot.slane %v3441, 6
        %v3627 = vsel %vm3528, %v3624, %v3626
        %v3628 = vrot.slane %v3442, 6
        %v3629 = vsel %vm3528, %v3626, %v3628
        %v3630 = vrot.slane %v3443, 6
        %v3631 = vsel %vm3528, %v3628, %v3630
        %v3632 = vrot.slane %v3444, 6
        %v3633 = vsel %vm3528, %v3630, %v3632
        %v3634 = vrot.slane %v3445, 6
        %v3635 = vsel %vm3528, %v3632, %v3634
        %v3636 = vrot.slane %v3446, 6
        %v3637 = vsel %vm3528, %v3634, %v3636
        %v3638 = vrot.slane %v3447, 6
        %v3639 = vsel %vm3528, %v3636, %v3638
        %v3640 = vrot.slane %v3448, 6
        %v3641 = vsel %vm3528, %v3638, %v3640
        %v3642 = vrot.slane %v3449, 6
        %v3643 = vsel %vm3528, %v3640, %v3642
        %v3644 = vrot.slane %v3450, 6
        %v3645 = vsel %vm3528, %v3642, %v3644
        %v3646 = vrot.slane %v3451, 6
        %v3647 = vsel %vm3528, %v3644, %v3646
        %v3648 = vrot.slane %v3452, 6
        %v3649 = vsel %vm3528, %v3646, %v3648
        %v3650 = vrot.slane %v3453, 6
        %v3651 = vsel %vm3528, %v3648, %v3650
        %v3652 = vrot.slane %v3454, 6
        %v3653 = vsel %vm3528, %v3650, %v3652
        %v3654 = vrot.slane %v3455, 6
        %v3655 = vsel %vm3528, %v3652, %v3654
        %v3656 = vrot.slane %v3456, 6
        %v3657 = vsel %vm3528, %v3654, %v3656
        %v3658 = vrot.slane %v3457, 6
        %v3659 = vsel %vm3528, %v3656, %v3658
        %v3660 = vrot.slane %v3458, 6
        %v3661 = vsel %vm3528, %v3658, %v3660
        %v3662 = vrot.slane %v3459, 6
        %v3663 = vsel %vm3528, %v3660, %v3662
        %v3732 = vsel %vm1257, %v3529, 0.0
        %v3733 = vsel %vm1258, %v3531, 0.0
        %v3734 = vsel %vm1259, %v3533, 0.0
        %v3735 = vsel %vm1260, %v3535, 0.0
        %v3736 = vsel %vm1261, %v3537, 0.0
        %v3737 = vsel %vm1262, %v3539, 0.0
        %v3738 = vsel %vm1263, %v3541, 0.0
        %v3739 = vsel %vm1264, %v3543, 0.0
        %v3740 = vsel %vm1265, %v3545, 0.0
        %v3741 = vsel %vm1266, %v3547, 0.0
        %v3742 = vsel %vm1267, %v3549, 0.0
        %v3743 = vsel %vm1268, %v3551, 0.0
        %v3744 = vsel %vm1269, %v3553, 0.0
        %v3745 = vsel %vm1270, %v3555, 0.0
        %v3746 = vsel %vm1271, %v3557, 0.0
        %v3747 = vsel %vm1272, %v3559, 0.0
        %v3748 = vsel %vm1273, %v3561, 0.0
        %v3749 = vsel %vm1274, %v3563, 0.0
        %v3750 = vsel %vm1275, %v3565, 0.0
        %v3751 = vsel %vm1276, %v3567, 0.0
        %v3752 = vsel %vm1277, %v3569, 0.0
        %v3753 = vsel %vm1278, %v3571, 0.0
        %v3754 = vsel %vm1279, %v3573, 0.0
        %v3755 = vsel %vm1280, %v3575, 0.0
        %v3756 = vsel %vm1281, %v3577, 0.0
        %v3757 = vsel %vm1282, %v3579, 0.0
        %v3758 = vsel %vm1283, %v3581, 0.0
        %v3759 = vsel %vm1284, %v3583, 0.0
        %v3760 = vsel %vm1285, %v3585, 0.0
        %v3761 = vsel %vm1286, %v3587, 0.0
        %v3762 = vsel %vm1287, %v3589, 0.0
        %v3763 = vsel %vm1288, %v3591, 0.0
        %v3764 = vsel %vm1289, %v3593, 0.0
        %v3765 = vsel %vm1290, %v3595, 0.0
        %v3766 = vsel %vm1291, %v3597, 0.0
        %v3767 = vsel %vm1292, %v3599, 0.0
        %v3768 = vsel %vm1293, %v3601, 0.0
        %v3769 = vsel %vm1294, %v3603, 0.0
        %v3770 = vsel %vm1295, %v3605, 0.0
        %v3771 = vsel %vm1296, %v3607, 0.0
        %v3772 = vsel %vm1297, %v3609, 0.0
        %v3773 = vsel %vm1298, %v3611, 0.0
        %v3774 = vsel %vm1299, %v3613, 0.0
        %v3775 = vsel %vm1300, %v3615, 0.0
        %v3776 = vsel %vm1301, %v3617, 0.0
        %v3777 = vsel %vm1302, %v3619, 0.0
        %v3778 = vsel %vm1303, %v3621, 0.0
        %v3779 = vsel %vm1304, %v3623, 0.0
        %v3780 = vsel %vm1305, %v3625, 0.0
        %v3781 = vsel %vm1306, %v3627, 0.0
        %v3782 = vsel %vm1307, %v3629, 0.0
        %v3783 = vsel %vm1308, %v3631, 0.0
        %v3784 = vsel %vm1309, %v3633, 0.0
        %v3785 = vsel %vm1310, %v3635, 0.0
        %v3786 = vsel %vm1311, %v3637, 0.0
        %v3787 = vsel %vm1312, %v3639, 0.0
        %v3788 = vsel %vm1313, %v3641, 0.0
        %v3789 = vsel %vm1314, %v3643, 0.0
        %v3790 = vsel %vm1315, %v3645, 0.0
        %v3791 = vsel %vm1316, %v3647, 0.0
        %v3792 = vsel %vm1317, %v3649, 0.0
        %v3793 = vsel %vm1318, %v3651, 0.0
        %v3794 = vsel %vm1319, %v3653, 0.0
        %v3795 = vsel %vm1320, %v3655, 0.0
        %v3796 = vsel %vm1321, %v3657, 0.0
        %v3797 = vsel %vm1322, %v3659, 0.0
        %v3798 = vsel %vm1323, %v3661, 0.0
        %v3799 = vsel %vm1324, %v3663, 0.0
        %v3800 = vpack.c.bf16 %v3733, %v3732
        %v3801 = vpack.c.bf16 %v3735, %v3734
        %v3802 = vpack.c.bf16 %v3737, %v3736
        %v3803 = vpack.c.bf16 %v3739, %v3738
        %v3804 = vpack.c.bf16 %v3741, %v3740
        %v3805 = vpack.c.bf16 %v3743, %v3742
        %v3806 = vpack.c.bf16 %v3745, %v3744
        %v3807 = vpack.c.bf16 %v3747, %v3746
        %v3808 = vpack.c.bf16 %v3749, %v3748
        %v3809 = vpack.c.bf16 %v3751, %v3750
        %v3810 = vpack.c.bf16 %v3753, %v3752
        %v3811 = vpack.c.bf16 %v3755, %v3754
        %v3812 = vpack.c.bf16 %v3757, %v3756
        %v3813 = vpack.c.bf16 %v3759, %v3758
        %v3814 = vpack.c.bf16 %v3761, %v3760
        %v3815 = vpack.c.bf16 %v3763, %v3762
        %v3816 = vpack.c.bf16 %v3765, %v3764
        %v3817 = vpack.c.bf16 %v3767, %v3766
        %v3818 = vpack.c.bf16 %v3769, %v3768
        %v3819 = vpack.c.bf16 %v3771, %v3770
        %v3820 = vpack.c.bf16 %v3773, %v3772
        %v3821 = vpack.c.bf16 %v3775, %v3774
        %v3822 = vpack.c.bf16 %v3777, %v3776
        %v3823 = vpack.c.bf16 %v3779, %v3778
        %v3824 = vpack.c.bf16 %v3781, %v3780
        %v3825 = vpack.c.bf16 %v3783, %v3782
        %v3826 = vpack.c.bf16 %v3785, %v3784
        %v3827 = vpack.c.bf16 %v3787, %v3786
        %v3828 = vpack.c.bf16 %v3789, %v3788
        %v3829 = vpack.c.bf16 %v3791, %v3790
        %v3830 = vpack.c.bf16 %v3793, %v3792
        %v3831 = vpack.c.bf16 %v3795, %v3794
        %v3832 = vpack.c.bf16 %v3797, %v3796
        %v3833 = vpack.c.bf16 %v3799, %v3798
        %v3868 = vrot.slane %v3800, 1
        %v3869 = vrot.slane %v3801, 1
        %v3870 = vsel %vm1733, %v3868, %v3869
        %v3871 = vrot.slane %v3802, 1
        %v3872 = vsel %vm1733, %v3869, %v3871
        %v3873 = vrot.slane %v3803, 1
        %v3874 = vsel %vm1733, %v3871, %v3873
        %v3875 = vrot.slane %v3804, 1
        %v3876 = vsel %vm1733, %v3873, %v3875
        %v3877 = vrot.slane %v3805, 1
        %v3878 = vsel %vm1733, %v3875, %v3877
        %v3879 = vrot.slane %v3806, 1
        %v3880 = vsel %vm1733, %v3877, %v3879
        %v3881 = vrot.slane %v3807, 1
        %v3882 = vsel %vm1733, %v3879, %v3881
        %v3883 = vrot.slane %v3808, 1
        %v3884 = vsel %vm1733, %v3881, %v3883
        %v3885 = vrot.slane %v3809, 1
        %v3886 = vsel %vm1733, %v3883, %v3885
        %v3887 = vrot.slane %v3810, 1
        %v3888 = vsel %vm1733, %v3885, %v3887
        %v3889 = vrot.slane %v3811, 1
        %v3890 = vsel %vm1733, %v3887, %v3889
        %v3891 = vrot.slane %v3812, 1
        %v3892 = vsel %vm1733, %v3889, %v3891
        %v3893 = vrot.slane %v3813, 1
        %v3894 = vsel %vm1733, %v3891, %v3893
        %v3895 = vrot.slane %v3814, 1
        %v3896 = vsel %vm1733, %v3893, %v3895
        %v3897 = vrot.slane %v3815, 1
        %v3898 = vsel %vm1733, %v3895, %v3897
        %v3899 = vrot.slane %v3816, 1
        %v3900 = vsel %vm1733, %v3897, %v3899
        %v3901 = vrot.slane %v3817, 1
        %v3902 = vsel %vm1733, %v3899, %v3901
        %v3903 = vrot.slane %v3818, 1
        %v3904 = vsel %vm1733, %v3901, %v3903
        %v3905 = vrot.slane %v3819, 1
        %v3906 = vsel %vm1733, %v3903, %v3905
        %v3907 = vrot.slane %v3820, 1
        %v3908 = vsel %vm1733, %v3905, %v3907
        %v3909 = vrot.slane %v3821, 1
        %v3910 = vsel %vm1733, %v3907, %v3909
        %v3911 = vrot.slane %v3822, 1
        %v3912 = vsel %vm1733, %v3909, %v3911
        %v3913 = vrot.slane %v3823, 1
        %v3914 = vsel %vm1733, %v3911, %v3913
        %v3915 = vrot.slane %v3824, 1
        %v3916 = vsel %vm1733, %v3913, %v3915
        %v3917 = vrot.slane %v3825, 1
        %v3918 = vsel %vm1733, %v3915, %v3917
        %v3919 = vrot.slane %v3826, 1
        %v3920 = vsel %vm1733, %v3917, %v3919
        %v3921 = vrot.slane %v3827, 1
        %v3922 = vsel %vm1733, %v3919, %v3921
        %v3923 = vrot.slane %v3828, 1
        %v3924 = vsel %vm1733, %v3921, %v3923
        %v3925 = vrot.slane %v3829, 1
        %v3926 = vsel %vm1733, %v3923, %v3925
        %v3927 = vrot.slane %v3830, 1
        %v3928 = vsel %vm1733, %v3925, %v3927
        %v3929 = vrot.slane %v3831, 1
        %v3930 = vsel %vm1733, %v3927, %v3929
        %v3931 = vrot.slane %v3832, 1
        %v3932 = vsel %vm1733, %v3929, %v3931
        %v3933 = vrot.slane %v3833, 1
        %v3934 = vsel %vm1733, %v3931, %v3933
        %vm3935 = vcmask 1045504
        %v3936 = vrot.slane %v3800, 2
        %v3937 = vrot.slane %v3801, 2
        %v3938 = vsel %vm3935, %v3936, %v3937
        %v3939 = vrot.slane %v3802, 2
        %v3940 = vsel %vm3935, %v3937, %v3939
        %v3941 = vrot.slane %v3803, 2
        %v3942 = vsel %vm3935, %v3939, %v3941
        %v3943 = vrot.slane %v3804, 2
        %v3944 = vsel %vm3935, %v3941, %v3943
        %v3945 = vrot.slane %v3805, 2
        %v3946 = vsel %vm3935, %v3943, %v3945
        %v3947 = vrot.slane %v3806, 2
        %v3948 = vsel %vm3935, %v3945, %v3947
        %v3949 = vrot.slane %v3807, 2
        %v3950 = vsel %vm3935, %v3947, %v3949
        %v3951 = vrot.slane %v3808, 2
        %v3952 = vsel %vm3935, %v3949, %v3951
        %v3953 = vrot.slane %v3809, 2
        %v3954 = vsel %vm3935, %v3951, %v3953
        %v3955 = vrot.slane %v3810, 2
        %v3956 = vsel %vm3935, %v3953, %v3955
        %v3957 = vrot.slane %v3811, 2
        %v3958 = vsel %vm3935, %v3955, %v3957
        %v3959 = vrot.slane %v3812, 2
        %v3960 = vsel %vm3935, %v3957, %v3959
        %v3961 = vrot.slane %v3813, 2
        %v3962 = vsel %vm3935, %v3959, %v3961
        %v3963 = vrot.slane %v3814, 2
        %v3964 = vsel %vm3935, %v3961, %v3963
        %v3965 = vrot.slane %v3815, 2
        %v3966 = vsel %vm3935, %v3963, %v3965
        %v3967 = vrot.slane %v3816, 2
        %v3968 = vsel %vm3935, %v3965, %v3967
        %v3969 = vrot.slane %v3817, 2
        %v3970 = vsel %vm3935, %v3967, %v3969
        %v3971 = vrot.slane %v3818, 2
        %v3972 = vsel %vm3935, %v3969, %v3971
        %v3973 = vrot.slane %v3819, 2
        %v3974 = vsel %vm3935, %v3971, %v3973
        %v3975 = vrot.slane %v3820, 2
        %v3976 = vsel %vm3935, %v3973, %v3975
        %v3977 = vrot.slane %v3821, 2
        %v3978 = vsel %vm3935, %v3975, %v3977
        %v3979 = vrot.slane %v3822, 2
        %v3980 = vsel %vm3935, %v3977, %v3979
        %v3981 = vrot.slane %v3823, 2
        %v3982 = vsel %vm3935, %v3979, %v3981
        %v3983 = vrot.slane %v3824, 2
        %v3984 = vsel %vm3935, %v3981, %v3983
        %v3985 = vrot.slane %v3825, 2
        %v3986 = vsel %vm3935, %v3983, %v3985
        %v3987 = vrot.slane %v3826, 2
        %v3988 = vsel %vm3935, %v3985, %v3987
        %v3989 = vrot.slane %v3827, 2
        %v3990 = vsel %vm3935, %v3987, %v3989
        %v3991 = vrot.slane %v3828, 2
        %v3992 = vsel %vm3935, %v3989, %v3991
        %v3993 = vrot.slane %v3829, 2
        %v3994 = vsel %vm3935, %v3991, %v3993
        %v3995 = vrot.slane %v3830, 2
        %v3996 = vsel %vm3935, %v3993, %v3995
        %v3997 = vrot.slane %v3831, 2
        %v3998 = vsel %vm3935, %v3995, %v3997
        %v3999 = vrot.slane %v3832, 2
        %v4000 = vsel %vm3935, %v3997, %v3999
        %v4001 = vrot.slane %v3833, 2
        %v4002 = vsel %vm3935, %v3999, %v4001
        %s4003 = scalar_lea.vmem %s2, 192
        %v4004 = vld [vmem:[%s4003] sm:$0xf]
        %v4005 = vld [vmem:[%s4003 + $0x4] sm:$0xf]
        %v4006 = vld [vmem:[%s4003 + $0x8] sm:$0xf]
        %v4007 = vld [vmem:[%s4003 + $0xc] sm:$0xf]
        %v4008 = vld [vmem:[%s4003 + $0x10] sm:$0xf]
        %v4009 = vld [vmem:[%s4003 + $0x14] sm:$0xf]
        %v4010 = vld [vmem:[%s4003 + $0x18] sm:$0xf]
        %v4011 = vld [vmem:[%s4003 + $0x1c] sm:$0xf]
        %v4012 = vld [vmem:[%s4003 + $0x20] sm:$0xf]
        %v4013 = vld [vmem:[%s4003 + $0x24] sm:$0xf]
        %v4014 = vld [vmem:[%s4003 + $0x28] sm:$0xf]
        %v4015 = vld [vmem:[%s4003 + $0x2c] sm:$0xf]
        %v4016 = vld [vmem:[%s4003 + $0x30] sm:$0xf]
        %v4017 = vld [vmem:[%s4003 + $0x34] sm:$0xf]
        %v4018 = vld [vmem:[%s4003 + $0x38] sm:$0xf]
        %v4019 = vld [vmem:[%s4003 + $0x3c] sm:$0xf]
        %v4020 = vld [vmem:[%s4003 + $0x40] sm:$0xf]
        %v4021 = vld [vmem:[%s4003 + $0x44] sm:$0xf]
        %v4022 = vld [vmem:[%s4003 + $0x48] sm:$0xf]
        %v4023 = vld [vmem:[%s4003 + $0x4c] sm:$0xf]
        %v4024 = vld [vmem:[%s4003 + $0x50] sm:$0xf]
        %v4025 = vld [vmem:[%s4003 + $0x54] sm:$0xf]
        %v4026 = vld [vmem:[%s4003 + $0x58] sm:$0xf]
        %v4027 = vld [vmem:[%s4003 + $0x5c] sm:$0xf]
        %v4028 = vld [vmem:[%s4003 + $0x60] sm:$0xf]
        %v4029 = vld [vmem:[%s4003 + $0x64] sm:$0xf]
        %v4030 = vld [vmem:[%s4003 + $0x68] sm:$0xf]
        %v4031 = vld [vmem:[%s4003 + $0x6c] sm:$0xf]
        %v4032 = vld [vmem:[%s4003 + $0x70] sm:$0xf]
        %v4033 = vld [vmem:[%s4003 + $0x74] sm:$0xf]
        %v4034 = vld [vmem:[%s4003 + $0x78] sm:$0xf]
        %v4035 = vld [vmem:[%s4003 + $0x7c] sm:$0xf]
        %v4036 = vld [vmem:[%s4003 + $0x80] sm:$0xf]
        %v4037 = vld [vmem:[%s4003 + $0x84] sm:$0xf]
        %v4038 = vld [vmem:[%s4003 + $0x88] sm:$0xf]
        %v4039 = vld [vmem:[%s4003 + $0x8c] sm:$0xf]
        %v4040 = vld [vmem:[%s4003 + $0x90] sm:$0xf]
        %v4041 = vld [vmem:[%s4003 + $0x94] sm:$0xf]
        %v4042 = vld [vmem:[%s4003 + $0x98] sm:$0xf]
        %v4043 = vld [vmem:[%s4003 + $0x9c] sm:$0xf]
        %v4044 = vld [vmem:[%s4003 + $0xa0] sm:$0xf]
        %v4045 = vld [vmem:[%s4003 + $0xa4] sm:$0xf]
        %v4046 = vld [vmem:[%s4003 + $0xa8] sm:$0xf]
        %v4047 = vld [vmem:[%s4003 + $0xac] sm:$0xf]
        %v4048 = vld [vmem:[%s4003 + $0xb0] sm:$0xf]
        %v4049 = vld [vmem:[%s4003 + $0xb4] sm:$0xf]
        %v4050 = vld [vmem:[%s4003 + $0xb8] sm:$0xf]
        %v4051 = vld [vmem:[%s4003 + $0xbc] sm:$0xf]
        %s4052 = scalar_lea.vmem %s4, 1
        %v4053 = vld [vmem:[%s4052] sm:$0x1]
        %v4055 = vlaneseq
        %v4056 = vshrl.u32 %v4055, 7
        %v4057 = vsub.s32 0, %v4056
        %v4058 = vrot.slane %v4053, %v4057
        %v4060 = vrot.slane %v3870, 1
        %v4061 = vrot.slane %v3872, 1
        %v4062 = vsel %vm1733, %v4060, %v4061
        %v4063 = vrot.slane %v3938, 1
        %v4064 = vrot.slane %v3940, 1
        %v4065 = vsel %vm1733, %v4063, %v4064
        %v4066 = vrot.slane %v3874, 1
        %v4067 = vsel %vm1733, %v4061, %v4066
        %v4068 = vrot.slane %v3942, 1
        %v4069 = vsel %vm1733, %v4064, %v4068
        %v4070 = vrot.slane %v3876, 1
        %v4071 = vsel %vm1733, %v4066, %v4070
        %v4072 = vrot.slane %v3944, 1
        %v4073 = vsel %vm1733, %v4068, %v4072
        %v4074 = vrot.slane %v3878, 1
        %v4075 = vsel %vm1733, %v4070, %v4074
        %v4076 = vrot.slane %v3946, 1
        %v4077 = vsel %vm1733, %v4072, %v4076
        %v4078 = vrot.slane %v3880, 1
        %v4079 = vsel %vm1733, %v4074, %v4078
        %v4080 = vrot.slane %v3948, 1
        %v4081 = vsel %vm1733, %v4076, %v4080
        %v4082 = vrot.slane %v3882, 1
        %v4083 = vsel %vm1733, %v4078, %v4082
        %v4084 = vrot.slane %v3950, 1
        %v4085 = vsel %vm1733, %v4080, %v4084
        %v4086 = vrot.slane %v3884, 1
        %v4087 = vsel %vm1733, %v4082, %v4086
        %v4088 = vrot.slane %v3952, 1
        %v4089 = vsel %vm1733, %v4084, %v4088
        %v4090 = vrot.slane %v3886, 1
        %v4091 = vsel %vm1733, %v4086, %v4090
        %v4092 = vrot.slane %v3954, 1
        %v4093 = vsel %vm1733, %v4088, %v4092
        %v4094 = vrot.slane %v3888, 1
        %v4095 = vsel %vm1733, %v4090, %v4094
        %v4096 = vrot.slane %v3956, 1
        %v4097 = vsel %vm1733, %v4092, %v4096
        %v4098 = vrot.slane %v3890, 1
        %v4099 = vsel %vm1733, %v4094, %v4098
        %v4100 = vrot.slane %v3958, 1
        %v4101 = vsel %vm1733, %v4096, %v4100
        %v4102 = vrot.slane %v3892, 1
        %v4103 = vsel %vm1733, %v4098, %v4102
        %v4104 = vrot.slane %v3960, 1
        %v4105 = vsel %vm1733, %v4100, %v4104
        %v4106 = vrot.slane %v3894, 1
        %v4107 = vsel %vm1733, %v4102, %v4106
        %v4108 = vrot.slane %v3962, 1
        %v4109 = vsel %vm1733, %v4104, %v4108
        %v4110 = vrot.slane %v3896, 1
        %v4111 = vsel %vm1733, %v4106, %v4110
        %v4112 = vrot.slane %v3964, 1
        %v4113 = vsel %vm1733, %v4108, %v4112
        %v4114 = vrot.slane %v3898, 1
        %v4115 = vsel %vm1733, %v4110, %v4114
        %v4116 = vrot.slane %v3966, 1
        %v4117 = vsel %vm1733, %v4112, %v4116
        %v4118 = vrot.slane %v3900, 1
        %v4119 = vsel %vm1733, %v4114, %v4118
        %v4120 = vrot.slane %v3968, 1
        %v4121 = vsel %vm1733, %v4116, %v4120
        %v4122 = vrot.slane %v3902, 1
        %v4123 = vsel %vm1733, %v4118, %v4122
        %v4124 = vrot.slane %v3970, 1
        %v4125 = vsel %vm1733, %v4120, %v4124
        %v4126 = vrot.slane %v3904, 1
        %v4127 = vsel %vm1733, %v4122, %v4126
        %v4128 = vrot.slane %v3972, 1
        %v4129 = vsel %vm1733, %v4124, %v4128
        %v4130 = vrot.slane %v3906, 1
        %v4131 = vsel %vm1733, %v4126, %v4130
        %v4132 = vrot.slane %v3974, 1
        %v4133 = vsel %vm1733, %v4128, %v4132
        %v4134 = vrot.slane %v3908, 1
        %v4135 = vsel %vm1733, %v4130, %v4134
        %v4136 = vrot.slane %v3976, 1
        %v4137 = vsel %vm1733, %v4132, %v4136
        %v4138 = vrot.slane %v3910, 1
        %v4139 = vsel %vm1733, %v4134, %v4138
        %v4140 = vrot.slane %v3978, 1
        %v4141 = vsel %vm1733, %v4136, %v4140
        %v4142 = vrot.slane %v3912, 1
        %v4143 = vsel %vm1733, %v4138, %v4142
        %v4144 = vrot.slane %v3980, 1
        %v4145 = vsel %vm1733, %v4140, %v4144
        %v4146 = vrot.slane %v3914, 1
        %v4147 = vsel %vm1733, %v4142, %v4146
        %v4148 = vrot.slane %v3982, 1
        %v4149 = vsel %vm1733, %v4144, %v4148
        %v4150 = vrot.slane %v3916, 1
        %v4151 = vsel %vm1733, %v4146, %v4150
        %v4152 = vrot.slane %v3984, 1
        %v4153 = vsel %vm1733, %v4148, %v4152
        %v4154 = vrot.slane %v3918, 1
        %v4155 = vsel %vm1733, %v4150, %v4154
        %v4156 = vrot.slane %v3986, 1
        %v4157 = vsel %vm1733, %v4152, %v4156
        %v4158 = vrot.slane %v3920, 1
        %v4159 = vsel %vm1733, %v4154, %v4158
        %v4160 = vrot.slane %v3988, 1
        %v4161 = vsel %vm1733, %v4156, %v4160
        %v4162 = vrot.slane %v3922, 1
        %v4163 = vsel %vm1733, %v4158, %v4162
        %v4164 = vrot.slane %v3990, 1
        %v4165 = vsel %vm1733, %v4160, %v4164
        %v4166 = vrot.slane %v3924, 1
        %v4167 = vsel %vm1733, %v4162, %v4166
        %v4168 = vrot.slane %v3992, 1
        %v4169 = vsel %vm1733, %v4164, %v4168
        %v4170 = vrot.slane %v3926, 1
        %v4171 = vsel %vm1733, %v4166, %v4170
        %v4172 = vrot.slane %v3994, 1
        %v4173 = vsel %vm1733, %v4168, %v4172
        %v4174 = vrot.slane %v3928, 1
        %v4175 = vsel %vm1733, %v4170, %v4174
        %v4176 = vrot.slane %v3996, 1
        %v4177 = vsel %vm1733, %v4172, %v4176
        %v4178 = vrot.slane %v3930, 1
        %v4179 = vsel %vm1733, %v4174, %v4178
        %v4180 = vrot.slane %v3998, 1
        %v4181 = vsel %vm1733, %v4176, %v4180
        %v4182 = vrot.slane %v3932, 1
        %v4183 = vsel %vm1733, %v4178, %v4182
        %v4184 = vrot.slane %v4000, 1
        %v4185 = vsel %vm1733, %v4180, %v4184
        %v4186 = vrot.slane %v3934, 1
        %v4187 = vsel %vm1733, %v4182, %v4186
        %v4188 = vrot.slane %v4002, 1
        %v4189 = vsel %vm1733, %v4184, %v4188
        %v4190 = vrot.slane %v3933, 1
        %v4191 = vsel %vm1733, %v4186, %v4190
        %v4192 = vrot.slane %v4001, 1
        %v4193 = vsel %vm1733, %v4188, %v4192
        %v4344 = vunpack.c.l.b16 %v4004
        %v4345 = vunpack.c.l.b16 %v4005
        %v4346 = vunpack.c.l.b16 %v4006
        %v4347 = vunpack.c.l.b16 %v4007
        %v4348 = vunpack.c.l.b16 %v4008
        %v4349 = vunpack.c.l.b16 %v4009
        %v4350 = vunpack.c.l.b16 %v4010
        %v4351 = vunpack.c.l.b16 %v4011
        %v4352 = vunpack.c.l.b16 %v4012
        %v4353 = vunpack.c.l.b16 %v4013
        %v4354 = vunpack.c.l.b16 %v4014
        %v4355 = vunpack.c.l.b16 %v4015
        %v4356 = vunpack.c.l.b16 %v4016
        %v4357 = vunpack.c.l.b16 %v4017
        %v4358 = vunpack.c.l.b16 %v4018
        %v4359 = vunpack.c.l.b16 %v4019
        %v4360 = vunpack.c.l.b16 %v4020
        %v4361 = vunpack.c.l.b16 %v4021
        %v4362 = vunpack.c.l.b16 %v4022
        %v4363 = vunpack.c.l.b16 %v4023
        %v4364 = vunpack.c.l.b16 %v4024
        %v4365 = vunpack.c.l.b16 %v4025
        %v4366 = vunpack.c.l.b16 %v4026
        %v4367 = vunpack.c.l.b16 %v4027
        %v4368 = vunpack.c.l.b16 %v4028
        %v4369 = vunpack.c.l.b16 %v4029
        %v4370 = vunpack.c.l.b16 %v4030
        %v4371 = vunpack.c.l.b16 %v4031
        %v4372 = vunpack.c.l.b16 %v4032
        %v4373 = vunpack.c.l.b16 %v4033
        %v4374 = vunpack.c.l.b16 %v4034
        %v4375 = vunpack.c.l.b16 %v4035
        %v4376 = vunpack.c.l.b16 %v4036
        %v4377 = vunpack.c.l.b16 %v4037
        %v4378 = vunpack.c.l.b16 %v4038
        %v4379 = vunpack.c.l.b16 %v4039
        %v4380 = vunpack.c.l.b16 %v4040
        %v4381 = vunpack.c.l.b16 %v4041
        %v4382 = vunpack.c.l.b16 %v4042
        %v4383 = vunpack.c.l.b16 %v4043
        %v4384 = vunpack.c.l.b16 %v4044
        %v4385 = vunpack.c.l.b16 %v4045
        %v4386 = vunpack.c.l.b16 %v4046
        %v4387 = vunpack.c.l.b16 %v4047
        %v4388 = vunpack.c.l.b16 %v4048
        %v4389 = vunpack.c.l.b16 %v4049
        %v4390 = vunpack.c.l.b16 %v4050
        %v4391 = vunpack.c.l.b16 %v4051
        %v4392 = vpack.c.b16 %v4345, %v4344
        %v4393 = vpack.c.b16 %v4347, %v4346
        %v4394 = vpack.c.b16 %v4349, %v4348
        %v4395 = vpack.c.b16 %v4351, %v4350
        %v4396 = vpack.c.b16 %v4353, %v4352
        %v4397 = vpack.c.b16 %v4355, %v4354
        %v4398 = vpack.c.b16 %v4357, %v4356
        %v4399 = vpack.c.b16 %v4359, %v4358
        %v4400 = vpack.c.b16 %v4361, %v4360
        %v4401 = vpack.c.b16 %v4363, %v4362
        %v4402 = vpack.c.b16 %v4365, %v4364
        %v4403 = vpack.c.b16 %v4367, %v4366
        %v4404 = vpack.c.b16 %v4369, %v4368
        %v4405 = vpack.c.b16 %v4371, %v4370
        %v4406 = vpack.c.b16 %v4373, %v4372
        %v4407 = vpack.c.b16 %v4375, %v4374
        %v4408 = vpack.c.b16 %v4377, %v4376
        %v4409 = vpack.c.b16 %v4379, %v4378
        %v4410 = vpack.c.b16 %v4381, %v4380
        %v4411 = vpack.c.b16 %v4383, %v4382
        %v4412 = vpack.c.b16 %v4385, %v4384
        %v4413 = vpack.c.b16 %v4387, %v4386
        %v4414 = vpack.c.b16 %v4389, %v4388
        %v4415 = vpack.c.b16 %v4391, %v4390
        %4440 = vmatprep.subr.bf16.mxu0 0
        %4441 = vmatpush1.bf16.msra.mxu0 %v4392
        %4442 = vmatprep.subr.bf16.mxu0 0
        %4443 = vmatpush1.bf16.msra.mxu0 %v4393
        %4444 = vmatprep.subr.bf16.mxu0 0
        %4445 = vmatpush1.bf16.msra.mxu0 %v4394
        %4446 = vmatprep.subr.bf16.mxu0 0
        %4447 = vmatpush1.bf16.msra.mxu0 %v4395
        %4448 = vmatprep.subr.bf16.mxu0 0
        %4449 = vmatpush1.bf16.msra.mxu0 %v4396
        %4450 = vmatprep.subr.bf16.mxu0 0
        %4451 = vmatpush1.bf16.msra.mxu0 %v4397
        %4452 = vmatprep.subr.bf16.mxu0 0
        %4453 = vmatpush1.bf16.msra.mxu0 %v4398
        %4454 = vmatprep.subr.bf16.mxu0 0
        %4455 = vmatpush1.bf16.msra.mxu0 %v4399
        %4456 = vmatprep.subr.bf16.mxu0 0
        %4457 = vmatpush1.bf16.msra.mxu0 %v4400
        %4458 = vmatprep.subr.bf16.mxu0 0
        %4459 = vmatpush1.bf16.msra.mxu0 %v4401
        %4460 = vmatprep.subr.bf16.mxu0 0
        %4461 = vmatpush1.bf16.msra.mxu0 %v4402
        %4462 = vmatprep.subr.bf16.mxu0 0
        %4463 = vmatpush1.bf16.msra.mxu0 %v4403
        %4464 = vmatprep.subr.bf16.mxu0 0
        %4465 = vmatpush1.bf16.msra.mxu0 %v4404
        %4466 = vmatprep.subr.bf16.mxu0 0
        %4467 = vmatpush1.bf16.msra.mxu0 %v4405
        %4468 = vmatprep.subr.bf16.mxu0 0
        %4469 = vmatpush1.bf16.msra.mxu0 %v4406
        %4470 = vmatprep.subr.bf16.mxu0 0
        %4471 = vmatpush1.bf16.msra.mxu0 %v4407
        %4472 = vmatprep.mubr.bf16.mxu0 %v4062
        %4473 = vmatmul.mubr.bf16.gmra.mrb[0].mxu0 %v3870
        %v4474 = vpop.f32.mrb[0].mxu0
        %v4475 = vadd.f32 %v4058, %v4474
        %v4476 = vpop.f32.mrb[0].mxu0
        %v4477 = vpop.f32.mrb[0].mxu0
        %v4478 = vadd.f32 %v4058, %v4477
        %v4479 = vpop.f32.mrb[0].mxu0
        %4480 = vmatprep.mubr.bf16.mxu0 %v4067
        %4481 = vmatmul.mubr.bf16.gmra.mrb[0].mxu0 %v3872
        %v4482 = vpop.f32.mrb[0].mxu0
        %v4483 = vadd.f32 %v4058, %v4482
        %v4484 = vpop.f32.mrb[0].mxu0
        %v4485 = vpop.f32.mrb[0].mxu0
        %v4486 = vadd.f32 %v4058, %v4485
        %v4487 = vpop.f32.mrb[0].mxu0
        %4488 = vmatprep.mubr.bf16.mxu0 %v4071
        %4489 = vmatmul.mubr.bf16.gmra.mrb[0].mxu0 %v3874
        %v4490 = vpop.f32.mrb[0].mxu0
        %v4491 = vadd.f32 %v4058, %v4490
        %v4492 = vpop.f32.mrb[0].mxu0
        %v4493 = vpop.f32.mrb[0].mxu0
        %v4494 = vadd.f32 %v4058, %v4493
        %v4495 = vpop.f32.mrb[0].mxu0
        %4496 = vmatprep.mubr.bf16.mxu0 %v4075
        %4497 = vmatmul.mubr.bf16.gmra.mrb[0].mxu0 %v3876
        %v4498 = vpop.f32.mrb[0].mxu0
        %v4499 = vadd.f32 %v4058, %v4498
        %v4500 = vpop.f32.mrb[0].mxu0
        %v4501 = vpop.f32.mrb[0].mxu0
        %v4502 = vadd.f32 %v4058, %v4501
        %v4503 = vpop.f32.mrb[0].mxu0
        %4504 = vmatprep.mubr.bf16.mxu0 %v4079
        %4505 = vmatmul.mubr.bf16.gmra.mrb[0].mxu0 %v3878
        %v4506 = vpop.f32.mrb[0].mxu0
        %v4507 = vadd.f32 %v4058, %v4506
        %v4508 = vpop.f32.mrb[0].mxu0
        %v4509 = vpop.f32.mrb[0].mxu0
        %v4510 = vadd.f32 %v4058, %v4509
        %v4511 = vpop.f32.mrb[0].mxu0
        %4512 = vmatprep.mubr.bf16.mxu0 %v4083
        %4513 = vmatmul.mubr.bf16.gmra.mrb[0].mxu0 %v3880
        %v4514 = vpop.f32.mrb[0].mxu0
        %v4515 = vadd.f32 %v4058, %v4514
        %v4516 = vpop.f32.mrb[0].mxu0
        %v4517 = vpop.f32.mrb[0].mxu0
        %v4518 = vadd.f32 %v4058, %v4517
        %v4519 = vpop.f32.mrb[0].mxu0
        %4520 = vmatprep.mubr.bf16.mxu0 %v4087
        %4521 = vmatmul.mubr.bf16.gmra.mrb[0].mxu0 %v3882
        %v4522 = vpop.f32.mrb[0].mxu0
        %v4523 = vadd.f32 %v4058, %v4522
        %v4524 = vpop.f32.mrb[0].mxu0
        %v4525 = vpop.f32.mrb[0].mxu0
        %v4526 = vadd.f32 %v4058, %v4525
        %v4527 = vpop.f32.mrb[0].mxu0
        %4528 = vmatprep.mubr.bf16.mxu0 %v4091
        %4529 = vmatmul.mubr.bf16.gmra.mrb[0].mxu0 %v3884
        %v4530 = vpop.f32.mrb[0].mxu0
        %v4531 = vadd.f32 %v4058, %v4530
        %v4532 = vpop.f32.mrb[0].mxu0
        %v4533 = vpop.f32.mrb[0].mxu0
        %v4534 = vadd.f32 %v4058, %v4533
        %v4535 = vpop.f32.mrb[0].mxu0
        %4536 = vmatprep.mubr.bf16.mxu0 %v4095
        %4537 = vmatmul.mubr.bf16.gmra.mrb[0].mxu0 %v3886
        %v4538 = vpop.f32.mrb[0].mxu0
        %v4539 = vadd.f32 %v4058, %v4538
        %v4540 = vpop.f32.mrb[0].mxu0
        %v4541 = vpop.f32.mrb[0].mxu0
        %v4542 = vadd.f32 %v4058, %v4541
        %v4543 = vpop.f32.mrb[0].mxu0
        %4544 = vmatprep.mubr.bf16.mxu0 %v4099
        %4545 = vmatmul.mubr.bf16.gmra.mrb[0].mxu0 %v3888
        %v4546 = vpop.f32.mrb[0].mxu0
        %v4547 = vadd.f32 %v4058, %v4546
        %v4548 = vpop.f32.mrb[0].mxu0
        %v4549 = vpop.f32.mrb[0].mxu0
        %v4550 = vadd.f32 %v4058, %v4549
        %v4551 = vpop.f32.mrb[0].mxu0
        %4552 = vmatprep.mubr.bf16.mxu0 %v4103
        %4553 = vmatmul.mubr.bf16.gmra.mrb[0].mxu0 %v3890
        %v4554 = vpop.f32.mrb[0].mxu0
        %v4555 = vadd.f32 %v4058, %v4554
        %v4556 = vpop.f32.mrb[0].mxu0
        %v4557 = vpop.f32.mrb[0].mxu0
        %v4558 = vadd.f32 %v4058, %v4557
        %v4559 = vpop.f32.mrb[0].mxu0
        %4560 = vmatprep.mubr.bf16.mxu0 %v4107
        %4561 = vmatmul.mubr.bf16.gmra.mrb[0].mxu0 %v3892
        %v4562 = vpop.f32.mrb[0].mxu0
        %v4563 = vadd.f32 %v4058, %v4562
        %v4564 = vpop.f32.mrb[0].mxu0
        %v4565 = vpop.f32.mrb[0].mxu0
        %v4566 = vadd.f32 %v4058, %v4565
        %v4567 = vpop.f32.mrb[0].mxu0
        %4568 = vmatprep.mubr.bf16.mxu0 %v4111
        %4569 = vmatmul.mubr.bf16.gmra.mrb[0].mxu0 %v3894
        %v4570 = vpop.f32.mrb[0].mxu0
        %v4571 = vadd.f32 %v4058, %v4570
        %v4572 = vpop.f32.mrb[0].mxu0
        %v4573 = vpop.f32.mrb[0].mxu0
        %v4574 = vadd.f32 %v4058, %v4573
        %v4575 = vpop.f32.mrb[0].mxu0
        %4576 = vmatprep.mubr.bf16.mxu0 %v4115
        %4577 = vmatmul.mubr.bf16.gmra.mrb[0].mxu0 %v3896
        %v4578 = vpop.f32.mrb[0].mxu0
        %v4579 = vadd.f32 %v4058, %v4578
        %v4580 = vpop.f32.mrb[0].mxu0
        %v4581 = vpop.f32.mrb[0].mxu0
        %v4582 = vadd.f32 %v4058, %v4581
        %v4583 = vpop.f32.mrb[0].mxu0
        %4584 = vmatprep.mubr.bf16.mxu0 %v4119
        %4585 = vmatmul.mubr.bf16.gmra.mrb[0].mxu0 %v3898
        %v4586 = vpop.f32.mrb[0].mxu0
        %v4587 = vadd.f32 %v4058, %v4586
        %v4588 = vpop.f32.mrb[0].mxu0
        %v4589 = vpop.f32.mrb[0].mxu0
        %v4590 = vadd.f32 %v4058, %v4589
        %v4591 = vpop.f32.mrb[0].mxu0
        %4592 = vmatprep.mubr.bf16.mxu0 %v4123
        %4593 = vmatmul.mubr.bf16.gmra.mrb[0].mxu0 %v3900
        %v4594 = vpop.f32.mrb[0].mxu0
        %v4595 = vadd.f32 %v4058, %v4594
        %v4596 = vpop.f32.mrb[0].mxu0
        %v4597 = vpop.f32.mrb[0].mxu0
        %v4598 = vadd.f32 %v4058, %v4597
        %v4599 = vpop.f32.mrb[0].mxu0
        %4600 = vmatprep.mubr.bf16.mxu0 %v4127
        %4601 = vmatmul.mubr.bf16.gmra.mrb[0].mxu0 %v3902
        %v4602 = vpop.f32.mrb[0].mxu0
        %v4603 = vadd.f32 %v4058, %v4602
        %v4604 = vpop.f32.mrb[0].mxu0
        %v4605 = vpop.f32.mrb[0].mxu0
        %v4606 = vadd.f32 %v4058, %v4605
        %v4607 = vpop.f32.mrb[0].mxu0
        %4608 = vmatprep.mubr.bf16.mxu0 %v4131
        %4609 = vmatmul.mubr.bf16.gmra.mrb[0].mxu0 %v3904
        %v4610 = vpop.f32.mrb[0].mxu0
        %v4611 = vadd.f32 %v4058, %v4610
        %v4612 = vpop.f32.mrb[0].mxu0
        %v4613 = vpop.f32.mrb[0].mxu0
        %v4614 = vadd.f32 %v4058, %v4613
        %v4615 = vpop.f32.mrb[0].mxu0
        %4616 = vmatprep.mubr.bf16.mxu0 %v4135
        %4617 = vmatmul.mubr.bf16.gmra.mrb[0].mxu0 %v3906
        %v4618 = vpop.f32.mrb[0].mxu0
        %v4619 = vadd.f32 %v4058, %v4618
        %v4620 = vpop.f32.mrb[0].mxu0
        %v4621 = vpop.f32.mrb[0].mxu0
        %v4622 = vadd.f32 %v4058, %v4621
        %v4623 = vpop.f32.mrb[0].mxu0
        %4624 = vmatprep.mubr.bf16.mxu0 %v4139
        %4625 = vmatmul.mubr.bf16.gmra.mrb[0].mxu0 %v3908
        %v4626 = vpop.f32.mrb[0].mxu0
        %v4627 = vadd.f32 %v4058, %v4626
        %v4628 = vpop.f32.mrb[0].mxu0
        %v4629 = vpop.f32.mrb[0].mxu0
        %v4630 = vadd.f32 %v4058, %v4629
        %v4631 = vpop.f32.mrb[0].mxu0
        %4632 = vmatprep.mubr.bf16.mxu0 %v4143
        %4633 = vmatmul.mubr.bf16.gmra.mrb[0].mxu0 %v3910
        %v4634 = vpop.f32.mrb[0].mxu0
        %v4635 = vadd.f32 %v4058, %v4634
        %v4636 = vpop.f32.mrb[0].mxu0
        %v4637 = vpop.f32.mrb[0].mxu0
        %v4638 = vadd.f32 %v4058, %v4637
        %v4639 = vpop.f32.mrb[0].mxu0
        %4640 = vmatprep.mubr.bf16.mxu0 %v4147
        %4641 = vmatmul.mubr.bf16.gmra.mrb[0].mxu0 %v3912
        %v4642 = vpop.f32.mrb[0].mxu0
        %v4643 = vadd.f32 %v4058, %v4642
        %v4644 = vpop.f32.mrb[0].mxu0
        %v4645 = vpop.f32.mrb[0].mxu0
        %v4646 = vadd.f32 %v4058, %v4645
        %v4647 = vpop.f32.mrb[0].mxu0
        %4648 = vmatprep.mubr.bf16.mxu0 %v4151
        %4649 = vmatmul.mubr.bf16.gmra.mrb[0].mxu0 %v3914
        %v4650 = vpop.f32.mrb[0].mxu0
        %v4651 = vadd.f32 %v4058, %v4650
        %v4652 = vpop.f32.mrb[0].mxu0
        %v4653 = vpop.f32.mrb[0].mxu0
        %v4654 = vadd.f32 %v4058, %v4653
        %v4655 = vpop.f32.mrb[0].mxu0
        %4656 = vmatprep.mubr.bf16.mxu0 %v4155
        %4657 = vmatmul.mubr.bf16.gmra.mrb[0].mxu0 %v3916
        %v4658 = vpop.f32.mrb[0].mxu0
        %v4659 = vadd.f32 %v4058, %v4658
        %v4660 = vpop.f32.mrb[0].mxu0
        %v4661 = vpop.f32.mrb[0].mxu0
        %v4662 = vadd.f32 %v4058, %v4661
        %v4663 = vpop.f32.mrb[0].mxu0
        %4664 = vmatprep.mubr.bf16.mxu0 %v4159
        %4665 = vmatmul.mubr.bf16.gmra.mrb[0].mxu0 %v3918
        %v4666 = vpop.f32.mrb[0].mxu0
        %v4667 = vadd.f32 %v4058, %v4666
        %v4668 = vpop.f32.mrb[0].mxu0
        %v4669 = vpop.f32.mrb[0].mxu0
        %v4670 = vadd.f32 %v4058, %v4669
        %v4671 = vpop.f32.mrb[0].mxu0
        %4672 = vmatprep.mubr.bf16.mxu0 %v4163
        %4673 = vmatmul.mubr.bf16.gmra.mrb[0].mxu0 %v3920
        %v4674 = vpop.f32.mrb[0].mxu0
        %v4675 = vadd.f32 %v4058, %v4674
        %v4676 = vpop.f32.mrb[0].mxu0
        %v4677 = vpop.f32.mrb[0].mxu0
        %v4678 = vadd.f32 %v4058, %v4677
        %v4679 = vpop.f32.mrb[0].mxu0
        %4680 = vmatprep.mubr.bf16.mxu0 %v4167
        %4681 = vmatmul.mubr.bf16.gmra.mrb[0].mxu0 %v3922
        %v4682 = vpop.f32.mrb[0].mxu0
        %v4683 = vadd.f32 %v4058, %v4682
        %v4684 = vpop.f32.mrb[0].mxu0
        %v4685 = vpop.f32.mrb[0].mxu0
        %v4686 = vadd.f32 %v4058, %v4685
        %v4687 = vpop.f32.mrb[0].mxu0
        %4688 = vmatprep.mubr.bf16.mxu0 %v4171
        %4689 = vmatmul.mubr.bf16.gmra.mrb[0].mxu0 %v3924
        %v4690 = vpop.f32.mrb[0].mxu0
        %v4691 = vadd.f32 %v4058, %v4690
        %v4692 = vpop.f32.mrb[0].mxu0
        %v4693 = vpop.f32.mrb[0].mxu0
        %v4694 = vadd.f32 %v4058, %v4693
        %v4695 = vpop.f32.mrb[0].mxu0
        %4696 = vmatprep.mubr.bf16.mxu0 %v4175
        %4697 = vmatmul.mubr.bf16.gmra.mrb[0].mxu0 %v3926
        %v4698 = vpop.f32.mrb[0].mxu0
        %v4699 = vadd.f32 %v4058, %v4698
        %v4700 = vpop.f32.mrb[0].mxu0
        %v4701 = vpop.f32.mrb[0].mxu0
        %v4702 = vadd.f32 %v4058, %v4701
        %v4703 = vpop.f32.mrb[0].mxu0
        %4704 = vmatprep.mubr.bf16.mxu0 %v4179
        %4705 = vmatmul.mubr.bf16.gmra.mrb[0].mxu0 %v3928
        %v4706 = vpop.f32.mrb[0].mxu0
        %v4707 = vadd.f32 %v4058, %v4706
        %v4708 = vpop.f32.mrb[0].mxu0
        %v4709 = vpop.f32.mrb[0].mxu0
        %v4710 = vadd.f32 %v4058, %v4709
        %v4711 = vpop.f32.mrb[0].mxu0
        %4712 = vmatprep.mubr.bf16.mxu0 %v4183
        %4713 = vmatmul.mubr.bf16.gmra.mrb[0].mxu0 %v3930
        %v4714 = vpop.f32.mrb[0].mxu0
        %v4715 = vadd.f32 %v4058, %v4714
        %v4716 = vpop.f32.mrb[0].mxu0
        %v4717 = vpop.f32.mrb[0].mxu0
        %v4718 = vadd.f32 %v4058, %v4717
        %v4719 = vpop.f32.mrb[0].mxu0
        %4720 = vmatprep.mubr.bf16.mxu0 %v4187
        %4721 = vmatmul.mubr.bf16.gmra.mrb[0].mxu0 %v3932
        %v4722 = vpop.f32.mrb[0].mxu0
        %v4723 = vadd.f32 %v4058, %v4722
        %v4724 = vpop.f32.mrb[0].mxu0
        %v4725 = vpop.f32.mrb[0].mxu0
        %v4726 = vadd.f32 %v4058, %v4725
        %v4727 = vpop.f32.mrb[0].mxu0
        %4728 = vmatprep.mubr.bf16.mxu0 %v4191
        %4729 = vmatmul.mubr.bf16.gmra.mrb[0].mxu0 %v3934
        %v4730 = vpop.f32.mrb[0].mxu0
        %v4731 = vadd.f32 %v4058, %v4730
        %v4732 = vpop.f32.mrb[0].mxu0
        %v4733 = vpop.f32.mrb[0].mxu0
        %v4734 = vadd.f32 %v4058, %v4733
        %v4735 = vpop.f32.mrb[0].mxu0
        %4736 = vmatprep.mubr.bf16.mxu0 %v4190
        %4737 = vmatmul.mubr.bf16.gmra.mrb[0].mxu0 %v3933
        %v4738 = vpop.f32.mrb[0].mxu0
        %v4739 = vadd.f32 %v4058, %v4738
        %v4740 = vpop.f32.mrb[0].mxu0
        %v4741 = vpop.f32.mrb[0].mxu0
        %v4742 = vpop.f32.mrb[0].mxu0
        %4743 = vdwg.mxu0
        %4744 = vmatprep.subr.bf16.mxu0 0
        %4745 = vmatpush1.bf16.msra.mxu0 %v4408
        %4746 = vmatprep.subr.bf16.mxu0 0
        %4747 = vmatpush1.bf16.msra.mxu0 %v4409
        %4748 = vmatprep.subr.bf16.mxu0 0
        %4749 = vmatpush1.bf16.msra.mxu0 %v4410
        %4750 = vmatprep.subr.bf16.mxu0 0
        %4751 = vmatpush1.bf16.msra.mxu0 %v4411
        %4752 = vmatprep.subr.bf16.mxu0 0
        %4753 = vmatpush1.bf16.msra.mxu0 %v4412
        %4754 = vmatprep.subr.bf16.mxu0 0
        %4755 = vmatpush1.bf16.msra.mxu0 %v4413
        %4756 = vmatprep.subr.bf16.mxu0 0
        %4757 = vmatpush1.bf16.msra.mxu0 %v4414
        %4758 = vmatprep.subr.bf16.mxu0 0
        %4759 = vmatpush1.bf16.msra.mxu0 %v4415
        %4760 = vmatprep.subr.bf16.mxu0 0
        %4761 = vmatpush1.bf16.msra.mxu0 0
        %4762 = vmatprep.subr.bf16.mxu0 0
        %4763 = vmatpush1.bf16.msra.mxu0 0
        %4764 = vmatprep.subr.bf16.mxu0 0
        %4765 = vmatpush1.bf16.msra.mxu0 0
        %4766 = vmatprep.subr.bf16.mxu0 0
        %4767 = vmatpush1.bf16.msra.mxu0 0
        %4768 = vmatprep.subr.bf16.mxu0 0
        %4769 = vmatpush1.bf16.msra.mxu0 0
        %4770 = vmatprep.subr.bf16.mxu0 0
        %4771 = vmatpush1.bf16.msra.mxu0 0
        %4772 = vmatprep.subr.bf16.mxu0 0
        %4773 = vmatpush1.bf16.msra.mxu0 0
        %4774 = vmatprep.subr.bf16.mxu0 0
        %4775 = vmatpush1.bf16.msra.mxu0 0
        %4776 = vmatprep.mubr.bf16.mxu0 0
        %4777 = vmatmul.mubr.bf16.gmra.mrb[0].mxu0 %v4065
        %v4778 = vpop.f32.mrb[0].mxu0
        %v4779 = vadd.f32 %v4475, %v4778
        %v4780 = vpop.f32.mrb[0].mxu0
        %v4781 = vpop.f32.mrb[0].mxu0
        %v4782 = vadd.f32 %v4478, %v4781
        %v4783 = vpop.f32.mrb[0].mxu0
        %4784 = vmatprep.mubr.bf16.mxu0 0
        %4785 = vmatmul.mubr.bf16.gmra.mrb[0].mxu0 %v4069
        %v4786 = vpop.f32.mrb[0].mxu0
        %v4787 = vadd.f32 %v4483, %v4786
        %v4788 = vpop.f32.mrb[0].mxu0
        %v4789 = vpop.f32.mrb[0].mxu0
        %v4790 = vadd.f32 %v4486, %v4789
        %v4791 = vpop.f32.mrb[0].mxu0
        %4792 = vmatprep.mubr.bf16.mxu0 0
        %4793 = vmatmul.mubr.bf16.gmra.mrb[0].mxu0 %v4073
        %v4794 = vpop.f32.mrb[0].mxu0
        %v4795 = vadd.f32 %v4491, %v4794
        %v4796 = vpop.f32.mrb[0].mxu0
        %v4797 = vpop.f32.mrb[0].mxu0
        %v4798 = vadd.f32 %v4494, %v4797
        %v4799 = vpop.f32.mrb[0].mxu0
        %4800 = vmatprep.mubr.bf16.mxu0 0
        %4801 = vmatmul.mubr.bf16.gmra.mrb[0].mxu0 %v4077
        %v4802 = vpop.f32.mrb[0].mxu0
        %v4803 = vadd.f32 %v4499, %v4802
        %v4804 = vpop.f32.mrb[0].mxu0
        %v4805 = vpop.f32.mrb[0].mxu0
        %v4806 = vadd.f32 %v4502, %v4805
        %v4807 = vpop.f32.mrb[0].mxu0
        %4808 = vmatprep.mubr.bf16.mxu0 0
        %4809 = vmatmul.mubr.bf16.gmra.mrb[0].mxu0 %v4081
        %v4810 = vpop.f32.mrb[0].mxu0
        %v4811 = vadd.f32 %v4507, %v4810
        %v4812 = vpop.f32.mrb[0].mxu0
        %v4813 = vpop.f32.mrb[0].mxu0
        %v4814 = vadd.f32 %v4510, %v4813
        %v4815 = vpop.f32.mrb[0].mxu0
        %4816 = vmatprep.mubr.bf16.mxu0 0
        %4817 = vmatmul.mubr.bf16.gmra.mrb[0].mxu0 %v4085
        %v4818 = vpop.f32.mrb[0].mxu0
        %v4819 = vadd.f32 %v4515, %v4818
        %v4820 = vpop.f32.mrb[0].mxu0
        %v4821 = vpop.f32.mrb[0].mxu0
        %v4822 = vadd.f32 %v4518, %v4821
        %v4823 = vpop.f32.mrb[0].mxu0
        %4824 = vmatprep.mubr.bf16.mxu0 0
        %4825 = vmatmul.mubr.bf16.gmra.mrb[0].mxu0 %v4089
        %v4826 = vpop.f32.mrb[0].mxu0
        %v4827 = vadd.f32 %v4523, %v4826
        %v4828 = vpop.f32.mrb[0].mxu0
        %v4829 = vpop.f32.mrb[0].mxu0
        %v4830 = vadd.f32 %v4526, %v4829
        %v4831 = vpop.f32.mrb[0].mxu0
        %4832 = vmatprep.mubr.bf16.mxu0 0
        %4833 = vmatmul.mubr.bf16.gmra.mrb[0].mxu0 %v4093
        %v4834 = vpop.f32.mrb[0].mxu0
        %v4835 = vadd.f32 %v4531, %v4834
        %v4836 = vpop.f32.mrb[0].mxu0
        %v4837 = vpop.f32.mrb[0].mxu0
        %v4838 = vadd.f32 %v4534, %v4837
        %v4839 = vpop.f32.mrb[0].mxu0
        %4840 = vmatprep.mubr.bf16.mxu0 0
        %4841 = vmatmul.mubr.bf16.gmra.mrb[0].mxu0 %v4097
        %v4842 = vpop.f32.mrb[0].mxu0
        %v4843 = vadd.f32 %v4539, %v4842
        %v4844 = vpop.f32.mrb[0].mxu0
        %v4845 = vpop.f32.mrb[0].mxu0
        %v4846 = vadd.f32 %v4542, %v4845
        %v4847 = vpop.f32.mrb[0].mxu0
        %4848 = vmatprep.mubr.bf16.mxu0 0
        %4849 = vmatmul.mubr.bf16.gmra.mrb[0].mxu0 %v4101
        %v4850 = vpop.f32.mrb[0].mxu0
        %v4851 = vadd.f32 %v4547, %v4850
        %v4852 = vpop.f32.mrb[0].mxu0
        %v4853 = vpop.f32.mrb[0].mxu0
        %v4854 = vadd.f32 %v4550, %v4853
        %v4855 = vpop.f32.mrb[0].mxu0
        %4856 = vmatprep.mubr.bf16.mxu0 0
        %4857 = vmatmul.mubr.bf16.gmra.mrb[0].mxu0 %v4105
        %v4858 = vpop.f32.mrb[0].mxu0
        %v4859 = vadd.f32 %v4555, %v4858
        %v4860 = vpop.f32.mrb[0].mxu0
        %v4861 = vpop.f32.mrb[0].mxu0
        %v4862 = vadd.f32 %v4558, %v4861
        %v4863 = vpop.f32.mrb[0].mxu0
        %4864 = vmatprep.mubr.bf16.mxu0 0
        %4865 = vmatmul.mubr.bf16.gmra.mrb[0].mxu0 %v4109
        %v4866 = vpop.f32.mrb[0].mxu0
        %v4867 = vadd.f32 %v4563, %v4866
        %v4868 = vpop.f32.mrb[0].mxu0
        %v4869 = vpop.f32.mrb[0].mxu0
        %v4870 = vadd.f32 %v4566, %v4869
        %v4871 = vpop.f32.mrb[0].mxu0
        %4872 = vmatprep.mubr.bf16.mxu0 0
        %4873 = vmatmul.mubr.bf16.gmra.mrb[0].mxu0 %v4113
        %v4874 = vpop.f32.mrb[0].mxu0
        %v4875 = vadd.f32 %v4571, %v4874
        %v4876 = vpop.f32.mrb[0].mxu0
        %v4877 = vpop.f32.mrb[0].mxu0
        %v4878 = vadd.f32 %v4574, %v4877
        %v4879 = vpop.f32.mrb[0].mxu0
        %4880 = vmatprep.mubr.bf16.mxu0 0
        %4881 = vmatmul.mubr.bf16.gmra.mrb[0].mxu0 %v4117
        %v4882 = vpop.f32.mrb[0].mxu0
        %v4883 = vadd.f32 %v4579, %v4882
        %v4884 = vpop.f32.mrb[0].mxu0
        %v4885 = vpop.f32.mrb[0].mxu0
        %v4886 = vadd.f32 %v4582, %v4885
        %v4887 = vpop.f32.mrb[0].mxu0
        %4888 = vmatprep.mubr.bf16.mxu0 0
        %4889 = vmatmul.mubr.bf16.gmra.mrb[0].mxu0 %v4121
        %v4890 = vpop.f32.mrb[0].mxu0
        %v4891 = vadd.f32 %v4587, %v4890
        %v4892 = vpop.f32.mrb[0].mxu0
        %v4893 = vpop.f32.mrb[0].mxu0
        %v4894 = vadd.f32 %v4590, %v4893
        %v4895 = vpop.f32.mrb[0].mxu0
        %4896 = vmatprep.mubr.bf16.mxu0 0
        %4897 = vmatmul.mubr.bf16.gmra.mrb[0].mxu0 %v4125
        %v4898 = vpop.f32.mrb[0].mxu0
        %v4899 = vadd.f32 %v4595, %v4898
        %v4900 = vpop.f32.mrb[0].mxu0
        %v4901 = vpop.f32.mrb[0].mxu0
        %v4902 = vadd.f32 %v4598, %v4901
        %v4903 = vpop.f32.mrb[0].mxu0
        %4904 = vmatprep.mubr.bf16.mxu0 0
        %4905 = vmatmul.mubr.bf16.gmra.mrb[0].mxu0 %v4129
        %v4906 = vpop.f32.mrb[0].mxu0
        %v4907 = vadd.f32 %v4603, %v4906
        %v4908 = vpop.f32.mrb[0].mxu0
        %v4909 = vpop.f32.mrb[0].mxu0
        %v4910 = vadd.f32 %v4606, %v4909
        %v4911 = vpop.f32.mrb[0].mxu0
        %4912 = vmatprep.mubr.bf16.mxu0 0
        %4913 = vmatmul.mubr.bf16.gmra.mrb[0].mxu0 %v4133
        %v4914 = vpop.f32.mrb[0].mxu0
        %v4915 = vadd.f32 %v4611, %v4914
        %v4916 = vpop.f32.mrb[0].mxu0
        %v4917 = vpop.f32.mrb[0].mxu0
        %v4918 = vadd.f32 %v4614, %v4917
        %v4919 = vpop.f32.mrb[0].mxu0
        %4920 = vmatprep.mubr.bf16.mxu0 0
        %4921 = vmatmul.mubr.bf16.gmra.mrb[0].mxu0 %v4137
        %v4922 = vpop.f32.mrb[0].mxu0
        %v4923 = vadd.f32 %v4619, %v4922
        %v4924 = vpop.f32.mrb[0].mxu0
        %v4925 = vpop.f32.mrb[0].mxu0
        %v4926 = vadd.f32 %v4622, %v4925
        %v4927 = vpop.f32.mrb[0].mxu0
        %4928 = vmatprep.mubr.bf16.mxu0 0
        %4929 = vmatmul.mubr.bf16.gmra.mrb[0].mxu0 %v4141
        %v4930 = vpop.f32.mrb[0].mxu0
        %v4931 = vadd.f32 %v4627, %v4930
        %v4932 = vpop.f32.mrb[0].mxu0
        %v4933 = vpop.f32.mrb[0].mxu0
        %v4934 = vadd.f32 %v4630, %v4933
        %v4935 = vpop.f32.mrb[0].mxu0
        %4936 = vmatprep.mubr.bf16.mxu0 0
        %4937 = vmatmul.mubr.bf16.gmra.mrb[0].mxu0 %v4145
        %v4938 = vpop.f32.mrb[0].mxu0
        %v4939 = vadd.f32 %v4635, %v4938
        %v4940 = vpop.f32.mrb[0].mxu0
        %v4941 = vpop.f32.mrb[0].mxu0
        %v4942 = vadd.f32 %v4638, %v4941
        %v4943 = vpop.f32.mrb[0].mxu0
        %4944 = vmatprep.mubr.bf16.mxu0 0
        %4945 = vmatmul.mubr.bf16.gmra.mrb[0].mxu0 %v4149
        %v4946 = vpop.f32.mrb[0].mxu0
        %v4947 = vadd.f32 %v4643, %v4946
        %v4948 = vpop.f32.mrb[0].mxu0
        %v4949 = vpop.f32.mrb[0].mxu0
        %v4950 = vadd.f32 %v4646, %v4949
        %v4951 = vpop.f32.mrb[0].mxu0
        %4952 = vmatprep.mubr.bf16.mxu0 0
        %4953 = vmatmul.mubr.bf16.gmra.mrb[0].mxu0 %v4153
        %v4954 = vpop.f32.mrb[0].mxu0
        %v4955 = vadd.f32 %v4651, %v4954
        %v4956 = vpop.f32.mrb[0].mxu0
        %v4957 = vpop.f32.mrb[0].mxu0
        %v4958 = vadd.f32 %v4654, %v4957
        %v4959 = vpop.f32.mrb[0].mxu0
        %4960 = vmatprep.mubr.bf16.mxu0 0
        %4961 = vmatmul.mubr.bf16.gmra.mrb[0].mxu0 %v4157
        %v4962 = vpop.f32.mrb[0].mxu0
        %v4963 = vadd.f32 %v4659, %v4962
        %v4964 = vpop.f32.mrb[0].mxu0
        %v4965 = vpop.f32.mrb[0].mxu0
        %v4966 = vadd.f32 %v4662, %v4965
        %v4967 = vpop.f32.mrb[0].mxu0
        %4968 = vmatprep.mubr.bf16.mxu0 0
        %4969 = vmatmul.mubr.bf16.gmra.mrb[0].mxu0 %v4161
        %v4970 = vpop.f32.mrb[0].mxu0
        %v4971 = vadd.f32 %v4667, %v4970
        %v4972 = vpop.f32.mrb[0].mxu0
        %v4973 = vpop.f32.mrb[0].mxu0
        %v4974 = vadd.f32 %v4670, %v4973
        %v4975 = vpop.f32.mrb[0].mxu0
        %4976 = vmatprep.mubr.bf16.mxu0 0
        %4977 = vmatmul.mubr.bf16.gmra.mrb[0].mxu0 %v4165
        %v4978 = vpop.f32.mrb[0].mxu0
        %v4979 = vadd.f32 %v4675, %v4978
        %v4980 = vpop.f32.mrb[0].mxu0
        %v4981 = vpop.f32.mrb[0].mxu0
        %v4982 = vadd.f32 %v4678, %v4981
        %v4983 = vpop.f32.mrb[0].mxu0
        %4984 = vmatprep.mubr.bf16.mxu0 0
        %4985 = vmatmul.mubr.bf16.gmra.mrb[0].mxu0 %v4169
        %v4986 = vpop.f32.mrb[0].mxu0
        %v4987 = vadd.f32 %v4683, %v4986
        %v4988 = vpop.f32.mrb[0].mxu0
        %v4989 = vpop.f32.mrb[0].mxu0
        %v4990 = vadd.f32 %v4686, %v4989
        %v4991 = vpop.f32.mrb[0].mxu0
        %4992 = vmatprep.mubr.bf16.mxu0 0
        %4993 = vmatmul.mubr.bf16.gmra.mrb[0].mxu0 %v4173
        %v4994 = vpop.f32.mrb[0].mxu0
        %v4995 = vadd.f32 %v4691, %v4994
        %v4996 = vpop.f32.mrb[0].mxu0
        %v4997 = vpop.f32.mrb[0].mxu0
        %v4998 = vadd.f32 %v4694, %v4997
        %v4999 = vpop.f32.mrb[0].mxu0
        %5000 = vmatprep.mubr.bf16.mxu0 0
        %5001 = vmatmul.mubr.bf16.gmra.mrb[0].mxu0 %v4177
        %v5002 = vpop.f32.mrb[0].mxu0
        %v5003 = vadd.f32 %v4699, %v5002
        %v5004 = vpop.f32.mrb[0].mxu0
        %v5005 = vpop.f32.mrb[0].mxu0
        %v5006 = vadd.f32 %v4702, %v5005
        %v5007 = vpop.f32.mrb[0].mxu0
        %5008 = vmatprep.mubr.bf16.mxu0 0
        %5009 = vmatmul.mubr.bf16.gmra.mrb[0].mxu0 %v4181
        %v5010 = vpop.f32.mrb[0].mxu0
        %v5011 = vadd.f32 %v4707, %v5010
        %v5012 = vpop.f32.mrb[0].mxu0
        %v5013 = vpop.f32.mrb[0].mxu0
        %v5014 = vadd.f32 %v4710, %v5013
        %v5015 = vpop.f32.mrb[0].mxu0
        %5016 = vmatprep.mubr.bf16.mxu0 0
        %5017 = vmatmul.mubr.bf16.gmra.mrb[0].mxu0 %v4185
        %v5018 = vpop.f32.mrb[0].mxu0
        %v5019 = vadd.f32 %v4715, %v5018
        %v5020 = vpop.f32.mrb[0].mxu0
        %v5021 = vpop.f32.mrb[0].mxu0
        %v5022 = vadd.f32 %v4718, %v5021
        %v5023 = vpop.f32.mrb[0].mxu0
        %5024 = vmatprep.mubr.bf16.mxu0 0
        %5025 = vmatmul.mubr.bf16.gmra.mrb[0].mxu0 %v4189
        %v5026 = vpop.f32.mrb[0].mxu0
        %v5027 = vadd.f32 %v4723, %v5026
        %v5028 = vpop.f32.mrb[0].mxu0
        %v5029 = vpop.f32.mrb[0].mxu0
        %v5030 = vadd.f32 %v4726, %v5029
        %v5031 = vpop.f32.mrb[0].mxu0
        %5032 = vmatprep.mubr.bf16.mxu0 0
        %5033 = vmatmul.mubr.bf16.gmra.mrb[0].mxu0 %v4193
        %v5034 = vpop.f32.mrb[0].mxu0
        %v5035 = vadd.f32 %v4731, %v5034
        %v5036 = vpop.f32.mrb[0].mxu0
        %v5037 = vpop.f32.mrb[0].mxu0
        %v5038 = vadd.f32 %v4734, %v5037
        %v5039 = vpop.f32.mrb[0].mxu0
        %5040 = vmatprep.mubr.bf16.mxu0 0
        %5041 = vmatmul.mubr.bf16.gmra.mrb[0].mxu0 %v4192
        %v5042 = vpop.f32.mrb[0].mxu0
        %v5043 = vadd.f32 %v4739, %v5042
        %v5044 = vpop.f32.mrb[0].mxu0
        %v5045 = vpop.f32.mrb[0].mxu0
        %v5046 = vpop.f32.mrb[0].mxu0
        %5047 = vdwg.mxu0
        %s5048 = sld [smem:[#allocation2 + $0x1]]
        %vm5049 = vcmp.gt.f32.partialorder %v4779, 0.0
        %vm5050 = vcmp.gt.f32.partialorder %v4782, 0.0
        %vm5051 = vcmp.gt.f32.partialorder %v4787, 0.0
        %vm5052 = vcmp.gt.f32.partialorder %v4790, 0.0
        %vm5053 = vcmp.gt.f32.partialorder %v4795, 0.0
        %vm5054 = vcmp.gt.f32.partialorder %v4798, 0.0
        %vm5055 = vcmp.gt.f32.partialorder %v4803, 0.0
        %vm5056 = vcmp.gt.f32.partialorder %v4806, 0.0
        %vm5057 = vcmp.gt.f32.partialorder %v4811, 0.0
        %vm5058 = vcmp.gt.f32.partialorder %v4814, 0.0
        %vm5059 = vcmp.gt.f32.partialorder %v4819, 0.0
        %vm5060 = vcmp.gt.f32.partialorder %v4822, 0.0
        %vm5061 = vcmp.gt.f32.partialorder %v4827, 0.0
        %vm5062 = vcmp.gt.f32.partialorder %v4830, 0.0
        %vm5063 = vcmp.gt.f32.partialorder %v4835, 0.0
        %vm5064 = vcmp.gt.f32.partialorder %v4838, 0.0
        %vm5065 = vcmp.gt.f32.partialorder %v4843, 0.0
        %vm5066 = vcmp.gt.f32.partialorder %v4846, 0.0
        %vm5067 = vcmp.gt.f32.partialorder %v4851, 0.0
        %vm5068 = vcmp.gt.f32.partialorder %v4854, 0.0
        %vm5069 = vcmp.gt.f32.partialorder %v4859, 0.0
        %vm5070 = vcmp.gt.f32.partialorder %v4862, 0.0
        %vm5071 = vcmp.gt.f32.partialorder %v4867, 0.0
        %vm5072 = vcmp.gt.f32.partialorder %v4870, 0.0
        %vm5073 = vcmp.gt.f32.partialorder %v4875, 0.0
        %vm5074 = vcmp.gt.f32.partialorder %v4878, 0.0
        %vm5075 = vcmp.gt.f32.partialorder %v4883, 0.0
        %vm5076 = vcmp.gt.f32.partialorder %v4886, 0.0
        %vm5077 = vcmp.gt.f32.partialorder %v4891, 0.0
        %vm5078 = vcmp.gt.f32.partialorder %v4894, 0.0
        %vm5079 = vcmp.gt.f32.partialorder %v4899, 0.0
        %vm5080 = vcmp.gt.f32.partialorder %v4902, 0.0
        %vm5081 = vcmp.gt.f32.partialorder %v4907, 0.0
        %vm5082 = vcmp.gt.f32.partialorder %v4910, 0.0
        %vm5083 = vcmp.gt.f32.partialorder %v4915, 0.0
        %vm5084 = vcmp.gt.f32.partialorder %v4918, 0.0
        %vm5085 = vcmp.gt.f32.partialorder %v4923, 0.0
        %vm5086 = vcmp.gt.f32.partialorder %v4926, 0.0
        %vm5087 = vcmp.gt.f32.partialorder %v4931, 0.0
        %vm5088 = vcmp.gt.f32.partialorder %v4934, 0.0
        %vm5089 = vcmp.gt.f32.partialorder %v4939, 0.0
        %vm5090 = vcmp.gt.f32.partialorder %v4942, 0.0
        %vm5091 = vcmp.gt.f32.partialorder %v4947, 0.0
        %vm5092 = vcmp.gt.f32.partialorder %v4950, 0.0
        %vm5093 = vcmp.gt.f32.partialorder %v4955, 0.0
        %vm5094 = vcmp.gt.f32.partialorder %v4958, 0.0
        %vm5095 = vcmp.gt.f32.partialorder %v4963, 0.0
        %vm5096 = vcmp.gt.f32.partialorder %v4966, 0.0
        %vm5097 = vcmp.gt.f32.partialorder %v4971, 0.0
        %vm5098 = vcmp.gt.f32.partialorder %v4974, 0.0
        %vm5099 = vcmp.gt.f32.partialorder %v4979, 0.0
        %vm5100 = vcmp.gt.f32.partialorder %v4982, 0.0
        %vm5101 = vcmp.gt.f32.partialorder %v4987, 0.0
        %vm5102 = vcmp.gt.f32.partialorder %v4990, 0.0
        %vm5103 = vcmp.gt.f32.partialorder %v4995, 0.0
        %vm5104 = vcmp.gt.f32.partialorder %v4998, 0.0
        %vm5105 = vcmp.gt.f32.partialorder %v5003, 0.0
        %vm5106 = vcmp.gt.f32.partialorder %v5006, 0.0
        %vm5107 = vcmp.gt.f32.partialorder %v5011, 0.0
        %vm5108 = vcmp.gt.f32.partialorder %v5014, 0.0
        %vm5109 = vcmp.gt.f32.partialorder %v5019, 0.0
        %vm5110 = vcmp.gt.f32.partialorder %v5022, 0.0
        %vm5111 = vcmp.gt.f32.partialorder %v5027, 0.0
        %vm5112 = vcmp.gt.f32.partialorder %v5030, 0.0
        %vm5113 = vcmp.gt.f32.partialorder %v5035, 0.0
        %vm5114 = vcmp.gt.f32.partialorder %v5038, 0.0
        %vm5115 = vcmp.gt.f32.partialorder %v5043, 0.0
        %v5116 = vstv %s5048
        %v5117 = vmul.f32 %v5116, %v4779
        %v5118 = vmul.f32 %v5116, %v4782
        %v5119 = vmul.f32 %v5116, %v4787
        %v5120 = vmul.f32 %v5116, %v4790
        %v5121 = vmul.f32 %v5116, %v4795
        %v5122 = vmul.f32 %v5116, %v4798
        %v5123 = vmul.f32 %v5116, %v4803
        %v5124 = vmul.f32 %v5116, %v4806
        %v5125 = vmul.f32 %v5116, %v4811
        %v5126 = vmul.f32 %v5116, %v4814
        %v5127 = vmul.f32 %v5116, %v4819
        %v5128 = vmul.f32 %v5116, %v4822
        %v5129 = vmul.f32 %v5116, %v4827
        %v5130 = vmul.f32 %v5116, %v4830
        %v5131 = vmul.f32 %v5116, %v4835
        %v5132 = vmul.f32 %v5116, %v4838
        %v5133 = vmul.f32 %v5116, %v4843
        %v5134 = vmul.f32 %v5116, %v4846
        %v5135 = vmul.f32 %v5116, %v4851
        %v5136 = vmul.f32 %v5116, %v4854
        %v5137 = vmul.f32 %v5116, %v4859
        %v5138 = vmul.f32 %v5116, %v4862
        %v5139 = vmul.f32 %v5116, %v4867
        %v5140 = vmul.f32 %v5116, %v4870
        %v5141 = vmul.f32 %v5116, %v4875
        %v5142 = vmul.f32 %v5116, %v4878
        %v5143 = vmul.f32 %v5116, %v4883
        %v5144 = vmul.f32 %v5116, %v4886
        %v5145 = vmul.f32 %v5116, %v4891
        %v5146 = vmul.f32 %v5116, %v4894
        %v5147 = vmul.f32 %v5116, %v4899
        %v5148 = vmul.f32 %v5116, %v4902
        %v5149 = vmul.f32 %v5116, %v4907
        %v5150 = vmul.f32 %v5116, %v4910
        %v5151 = vmul.f32 %v5116, %v4915
        %v5152 = vmul.f32 %v5116, %v4918
        %v5153 = vmul.f32 %v5116, %v4923
        %v5154 = vmul.f32 %v5116, %v4926
        %v5155 = vmul.f32 %v5116, %v4931
        %v5156 = vmul.f32 %v5116, %v4934
        %v5157 = vmul.f32 %v5116, %v4939
        %v5158 = vmul.f32 %v5116, %v4942
        %v5159 = vmul.f32 %v5116, %v4947
        %v5160 = vmul.f32 %v5116, %v4950
        %v5161 = vmul.f32 %v5116, %v4955
        %v5162 = vmul.f32 %v5116, %v4958
        %v5163 = vmul.f32 %v5116, %v4963
        %v5164 = vmul.f32 %v5116, %v4966
        %v5165 = vmul.f32 %v5116, %v4971
        %v5166 = vmul.f32 %v5116, %v4974
        %v5167 = vmul.f32 %v5116, %v4979
        %v5168 = vmul.f32 %v5116, %v4982
        %v5169 = vmul.f32 %v5116, %v4987
        %v5170 = vmul.f32 %v5116, %v4990
        %v5171 = vmul.f32 %v5116, %v4995
        %v5172 = vmul.f32 %v5116, %v4998
        %v5173 = vmul.f32 %v5116, %v5003
        %v5174 = vmul.f32 %v5116, %v5006
        %v5175 = vmul.f32 %v5116, %v5011
        %v5176 = vmul.f32 %v5116, %v5014
        %v5177 = vmul.f32 %v5116, %v5019
        %v5178 = vmul.f32 %v5116, %v5022
        %v5179 = vmul.f32 %v5116, %v5027
        %v5180 = vmul.f32 %v5116, %v5030
        %v5181 = vmul.f32 %v5116, %v5035
        %v5182 = vmul.f32 %v5116, %v5038
        %v5183 = vmul.f32 %v5116, %v5043
        %v5184 = vsel %vm5049, %v4779, %v5117
        %v5185 = vsel %vm5050, %v4782, %v5118
        %v5186 = vsel %vm5051, %v4787, %v5119
        %v5187 = vsel %vm5052, %v4790, %v5120
        %v5188 = vsel %vm5053, %v4795, %v5121
        %v5189 = vsel %vm5054, %v4798, %v5122
        %v5190 = vsel %vm5055, %v4803, %v5123
        %v5191 = vsel %vm5056, %v4806, %v5124
        %v5192 = vsel %vm5057, %v4811, %v5125
        %v5193 = vsel %vm5058, %v4814, %v5126
        %v5194 = vsel %vm5059, %v4819, %v5127
        %v5195 = vsel %vm5060, %v4822, %v5128
        %v5196 = vsel %vm5061, %v4827, %v5129
        %v5197 = vsel %vm5062, %v4830, %v5130
        %v5198 = vsel %vm5063, %v4835, %v5131
        %v5199 = vsel %vm5064, %v4838, %v5132
        %v5200 = vsel %vm5065, %v4843, %v5133
        %v5201 = vsel %vm5066, %v4846, %v5134
        %v5202 = vsel %vm5067, %v4851, %v5135
        %v5203 = vsel %vm5068, %v4854, %v5136
        %v5204 = vsel %vm5069, %v4859, %v5137
        %v5205 = vsel %vm5070, %v4862, %v5138
        %v5206 = vsel %vm5071, %v4867, %v5139
        %v5207 = vsel %vm5072, %v4870, %v5140
        %v5208 = vsel %vm5073, %v4875, %v5141
        %v5209 = vsel %vm5074, %v4878, %v5142
        %v5210 = vsel %vm5075, %v4883, %v5143
        %v5211 = vsel %vm5076, %v4886, %v5144
        %v5212 = vsel %vm5077, %v4891, %v5145
        %v5213 = vsel %vm5078, %v4894, %v5146
        %v5214 = vsel %vm5079, %v4899, %v5147
        %v5215 = vsel %vm5080, %v4902, %v5148
        %v5216 = vsel %vm5081, %v4907, %v5149
        %v5217 = vsel %vm5082, %v4910, %v5150
        %v5218 = vsel %vm5083, %v4915, %v5151
        %v5219 = vsel %vm5084, %v4918, %v5152
        %v5220 = vsel %vm5085, %v4923, %v5153
        %v5221 = vsel %vm5086, %v4926, %v5154
        %v5222 = vsel %vm5087, %v4931, %v5155
        %v5223 = vsel %vm5088, %v4934, %v5156
        %v5224 = vsel %vm5089, %v4939, %v5157
        %v5225 = vsel %vm5090, %v4942, %v5158
        %v5226 = vsel %vm5091, %v4947, %v5159
        %v5227 = vsel %vm5092, %v4950, %v5160
        %v5228 = vsel %vm5093, %v4955, %v5161
        %v5229 = vsel %vm5094, %v4958, %v5162
        %v5230 = vsel %vm5095, %v4963, %v5163
        %v5231 = vsel %vm5096, %v4966, %v5164
        %v5232 = vsel %vm5097, %v4971, %v5165
        %v5233 = vsel %vm5098, %v4974, %v5166
        %v5234 = vsel %vm5099, %v4979, %v5167
        %v5235 = vsel %vm5100, %v4982, %v5168
        %v5236 = vsel %vm5101, %v4987, %v5169
        %v5237 = vsel %vm5102, %v4990, %v5170
        %v5238 = vsel %vm5103, %v4995, %v5171
        %v5239 = vsel %vm5104, %v4998, %v5172
        %v5240 = vsel %vm5105, %v5003, %v5173
        %v5241 = vsel %vm5106, %v5006, %v5174
        %v5242 = vsel %vm5107, %v5011, %v5175
        %v5243 = vsel %vm5108, %v5014, %v5176
        %v5244 = vsel %vm5109, %v5019, %v5177
        %v5245 = vsel %vm5110, %v5022, %v5178
        %v5246 = vsel %vm5111, %v5027, %v5179
        %v5247 = vsel %vm5112, %v5030, %v5180
        %v5248 = vsel %vm5113, %v5035, %v5181
        %v5249 = vsel %vm5114, %v5038, %v5182
        %v5250 = vsel %vm5115, %v5043, %v5183
        %vm5318 = vcmask 1043456
        %v5319 = vrot.slane %v5184, 4
        %v5320 = vrot.slane %v5185, 4
        %v5321 = vsel %vm5318, %v5319, %v5320
        %v5322 = vrot.slane %v5186, 4
        %v5323 = vsel %vm5318, %v5320, %v5322
        %v5324 = vrot.slane %v5187, 4
        %v5325 = vsel %vm5318, %v5322, %v5324
        %v5326 = vrot.slane %v5188, 4
        %v5327 = vsel %vm5318, %v5324, %v5326
        %v5328 = vrot.slane %v5189, 4
        %v5329 = vsel %vm5318, %v5326, %v5328
        %v5330 = vrot.slane %v5190, 4
        %v5331 = vsel %vm5318, %v5328, %v5330
        %v5332 = vrot.slane %v5191, 4
        %v5333 = vsel %vm5318, %v5330, %v5332
        %v5334 = vrot.slane %v5192, 4
        %v5335 = vsel %vm5318, %v5332, %v5334
        %v5336 = vrot.slane %v5193, 4
        %v5337 = vsel %vm5318, %v5334, %v5336
        %v5338 = vrot.slane %v5194, 4
        %v5339 = vsel %vm5318, %v5336, %v5338
        %v5340 = vrot.slane %v5195, 4
        %v5341 = vsel %vm5318, %v5338, %v5340
        %v5342 = vrot.slane %v5196, 4
        %v5343 = vsel %vm5318, %v5340, %v5342
        %v5344 = vrot.slane %v5197, 4
        %v5345 = vsel %vm5318, %v5342, %v5344
        %v5346 = vrot.slane %v5198, 4
        %v5347 = vsel %vm5318, %v5344, %v5346
        %v5348 = vrot.slane %v5199, 4
        %v5349 = vsel %vm5318, %v5346, %v5348
        %v5350 = vrot.slane %v5200, 4
        %v5351 = vsel %vm5318, %v5348, %v5350
        %v5352 = vrot.slane %v5201, 4
        %v5353 = vsel %vm5318, %v5350, %v5352
        %v5354 = vrot.slane %v5202, 4
        %v5355 = vsel %vm5318, %v5352, %v5354
        %v5356 = vrot.slane %v5203, 4
        %v5357 = vsel %vm5318, %v5354, %v5356
        %v5358 = vrot.slane %v5204, 4
        %v5359 = vsel %vm5318, %v5356, %v5358
        %v5360 = vrot.slane %v5205, 4
        %v5361 = vsel %vm5318, %v5358, %v5360
        %v5362 = vrot.slane %v5206, 4
        %v5363 = vsel %vm5318, %v5360, %v5362
        %v5364 = vrot.slane %v5207, 4
        %v5365 = vsel %vm5318, %v5362, %v5364
        %v5366 = vrot.slane %v5208, 4
        %v5367 = vsel %vm5318, %v5364, %v5366
        %v5368 = vrot.slane %v5209, 4
        %v5369 = vsel %vm5318, %v5366, %v5368
        %v5370 = vrot.slane %v5210, 4
        %v5371 = vsel %vm5318, %v5368, %v5370
        %v5372 = vrot.slane %v5211, 4
        %v5373 = vsel %vm5318, %v5370, %v5372
        %v5374 = vrot.slane %v5212, 4
        %v5375 = vsel %vm5318, %v5372, %v5374
        %v5376 = vrot.slane %v5213, 4
        %v5377 = vsel %vm5318, %v5374, %v5376
        %v5378 = vrot.slane %v5214, 4
        %v5379 = vsel %vm5318, %v5376, %v5378
        %v5380 = vrot.slane %v5215, 4
        %v5381 = vsel %vm5318, %v5378, %v5380
        %v5382 = vrot.slane %v5216, 4
        %v5383 = vsel %vm5318, %v5380, %v5382
        %v5384 = vrot.slane %v5217, 4
        %v5385 = vsel %vm5318, %v5382, %v5384
        %v5386 = vrot.slane %v5218, 4
        %v5387 = vsel %vm5318, %v5384, %v5386
        %v5388 = vrot.slane %v5219, 4
        %v5389 = vsel %vm5318, %v5386, %v5388
        %v5390 = vrot.slane %v5220, 4
        %v5391 = vsel %vm5318, %v5388, %v5390
        %v5392 = vrot.slane %v5221, 4
        %v5393 = vsel %vm5318, %v5390, %v5392
        %v5394 = vrot.slane %v5222, 4
        %v5395 = vsel %vm5318, %v5392, %v5394
        %v5396 = vrot.slane %v5223, 4
        %v5397 = vsel %vm5318, %v5394, %v5396
        %v5398 = vrot.slane %v5224, 4
        %v5399 = vsel %vm5318, %v5396, %v5398
        %v5400 = vrot.slane %v5225, 4
        %v5401 = vsel %vm5318, %v5398, %v5400
        %v5402 = vrot.slane %v5226, 4
        %v5403 = vsel %vm5318, %v5400, %v5402
        %v5404 = vrot.slane %v5227, 4
        %v5405 = vsel %vm5318, %v5402, %v5404
        %v5406 = vrot.slane %v5228, 4
        %v5407 = vsel %vm5318, %v5404, %v5406
        %v5408 = vrot.slane %v5229, 4
        %v5409 = vsel %vm5318, %v5406, %v5408
        %v5410 = vrot.slane %v5230, 4
        %v5411 = vsel %vm5318, %v5408, %v5410
        %v5412 = vrot.slane %v5231, 4
        %v5413 = vsel %vm5318, %v5410, %v5412
        %v5414 = vrot.slane %v5232, 4
        %v5415 = vsel %vm5318, %v5412, %v5414
        %v5416 = vrot.slane %v5233, 4
        %v5417 = vsel %vm5318, %v5414, %v5416
        %v5418 = vrot.slane %v5234, 4
        %v5419 = vsel %vm5318, %v5416, %v5418
        %v5420 = vrot.slane %v5235, 4
        %v5421 = vsel %vm5318, %v5418, %v5420
        %v5422 = vrot.slane %v5236, 4
        %v5423 = vsel %vm5318, %v5420, %v5422
        %v5424 = vrot.slane %v5237, 4
        %v5425 = vsel %vm5318, %v5422, %v5424
        %v5426 = vrot.slane %v5238, 4
        %v5427 = vsel %vm5318, %v5424, %v5426
        %v5428 = vrot.slane %v5239, 4
        %v5429 = vsel %vm5318, %v5426, %v5428
        %v5430 = vrot.slane %v5240, 4
        %v5431 = vsel %vm5318, %v5428, %v5430
        %v5432 = vrot.slane %v5241, 4
        %v5433 = vsel %vm5318, %v5430, %v5432
        %v5434 = vrot.slane %v5242, 4
        %v5435 = vsel %vm5318, %v5432, %v5434
        %v5436 = vrot.slane %v5243, 4
        %v5437 = vsel %vm5318, %v5434, %v5436
        %v5438 = vrot.slane %v5244, 4
        %v5439 = vsel %vm5318, %v5436, %v5438
        %v5440 = vrot.slane %v5245, 4
        %v5441 = vsel %vm5318, %v5438, %v5440
        %v5442 = vrot.slane %v5246, 4
        %v5443 = vsel %vm5318, %v5440, %v5442
        %v5444 = vrot.slane %v5247, 4
        %v5445 = vsel %vm5318, %v5442, %v5444
        %v5446 = vrot.slane %v5248, 4
        %v5447 = vsel %vm5318, %v5444, %v5446
        %v5448 = vrot.slane %v5249, 4
        %v5449 = vsel %vm5318, %v5446, %v5448
        %v5450 = vrot.slane %v5250, 4
        %v5451 = vsel %vm5318, %v5448, %v5450
        %v5520 = vsel %vm1257, %v5319, 0.0
        %v5521 = vsel %vm1258, %v5321, 0.0
        %v5522 = vsel %vm1259, %v5323, 0.0
        %v5523 = vsel %vm1260, %v5325, 0.0
        %v5524 = vsel %vm1261, %v5327, 0.0
        %v5525 = vsel %vm1262, %v5329, 0.0
        %v5526 = vsel %vm1263, %v5331, 0.0
        %v5527 = vsel %vm1264, %v5333, 0.0
        %v5528 = vsel %vm1265, %v5335, 0.0
        %v5529 = vsel %vm1266, %v5337, 0.0
        %v5530 = vsel %vm1267, %v5339, 0.0
        %v5531 = vsel %vm1268, %v5341, 0.0
        %v5532 = vsel %vm1269, %v5343, 0.0
        %v5533 = vsel %vm1270, %v5345, 0.0
        %v5534 = vsel %vm1271, %v5347, 0.0
        %v5535 = vsel %vm1272, %v5349, 0.0
        %v5536 = vsel %vm1273, %v5351, 0.0
        %v5537 = vsel %vm1274, %v5353, 0.0
        %v5538 = vsel %vm1275, %v5355, 0.0
        %v5539 = vsel %vm1276, %v5357, 0.0
        %v5540 = vsel %vm1277, %v5359, 0.0
        %v5541 = vsel %vm1278, %v5361, 0.0
        %v5542 = vsel %vm1279, %v5363, 0.0
        %v5543 = vsel %vm1280, %v5365, 0.0
        %v5544 = vsel %vm1281, %v5367, 0.0
        %v5545 = vsel %vm1282, %v5369, 0.0
        %v5546 = vsel %vm1283, %v5371, 0.0
        %v5547 = vsel %vm1284, %v5373, 0.0
        %v5548 = vsel %vm1285, %v5375, 0.0
        %v5549 = vsel %vm1286, %v5377, 0.0
        %v5550 = vsel %vm1287, %v5379, 0.0
        %v5551 = vsel %vm1288, %v5381, 0.0
        %v5552 = vsel %vm1289, %v5383, 0.0
        %v5553 = vsel %vm1290, %v5385, 0.0
        %v5554 = vsel %vm1291, %v5387, 0.0
        %v5555 = vsel %vm1292, %v5389, 0.0
        %v5556 = vsel %vm1293, %v5391, 0.0
        %v5557 = vsel %vm1294, %v5393, 0.0
        %v5558 = vsel %vm1295, %v5395, 0.0
        %v5559 = vsel %vm1296, %v5397, 0.0
        %v5560 = vsel %vm1297, %v5399, 0.0
        %v5561 = vsel %vm1298, %v5401, 0.0
        %v5562 = vsel %vm1299, %v5403, 0.0
        %v5563 = vsel %vm1300, %v5405, 0.0
        %v5564 = vsel %vm1301, %v5407, 0.0
        %v5565 = vsel %vm1302, %v5409, 0.0
        %v5566 = vsel %vm1303, %v5411, 0.0
        %v5567 = vsel %vm1304, %v5413, 0.0
        %v5568 = vsel %vm1305, %v5415, 0.0
        %v5569 = vsel %vm1306, %v5417, 0.0
        %v5570 = vsel %vm1307, %v5419, 0.0
        %v5571 = vsel %vm1308, %v5421, 0.0
        %v5572 = vsel %vm1309, %v5423, 0.0
        %v5573 = vsel %vm1310, %v5425, 0.0
        %v5574 = vsel %vm1311, %v5427, 0.0
        %v5575 = vsel %vm1312, %v5429, 0.0
        %v5576 = vsel %vm1313, %v5431, 0.0
        %v5577 = vsel %vm1314, %v5433, 0.0
        %v5578 = vsel %vm1315, %v5435, 0.0
        %v5579 = vsel %vm1316, %v5437, 0.0
        %v5580 = vsel %vm1317, %v5439, 0.0
        %v5581 = vsel %vm1318, %v5441, 0.0
        %v5582 = vsel %vm1319, %v5443, 0.0
        %v5583 = vsel %vm1320, %v5445, 0.0
        %v5584 = vsel %vm1321, %v5447, 0.0
        %v5585 = vsel %vm1322, %v5449, 0.0
        %v5586 = vsel %vm1323, %v5451, 0.0
        %v5587 = vsel %vm1324, %v5450, 0.0
        %v5588 = vpack.c.bf16 %v5521, %v5520
        %v5589 = vpack.c.bf16 %v5523, %v5522
        %v5590 = vpack.c.bf16 %v5525, %v5524
        %v5591 = vpack.c.bf16 %v5527, %v5526
        %v5592 = vpack.c.bf16 %v5529, %v5528
        %v5593 = vpack.c.bf16 %v5531, %v5530
        %v5594 = vpack.c.bf16 %v5533, %v5532
        %v5595 = vpack.c.bf16 %v5535, %v5534
        %v5596 = vpack.c.bf16 %v5537, %v5536
        %v5597 = vpack.c.bf16 %v5539, %v5538
        %v5598 = vpack.c.bf16 %v5541, %v5540
        %v5599 = vpack.c.bf16 %v5543, %v5542
        %v5600 = vpack.c.bf16 %v5545, %v5544
        %v5601 = vpack.c.bf16 %v5547, %v5546
        %v5602 = vpack.c.bf16 %v5549, %v5548
        %v5603 = vpack.c.bf16 %v5551, %v5550
        %v5604 = vpack.c.bf16 %v5553, %v5552
        %v5605 = vpack.c.bf16 %v5555, %v5554
        %v5606 = vpack.c.bf16 %v5557, %v5556
        %v5607 = vpack.c.bf16 %v5559, %v5558
        %v5608 = vpack.c.bf16 %v5561, %v5560
        %v5609 = vpack.c.bf16 %v5563, %v5562
        %v5610 = vpack.c.bf16 %v5565, %v5564
        %v5611 = vpack.c.bf16 %v5567, %v5566
        %v5612 = vpack.c.bf16 %v5569, %v5568
        %v5613 = vpack.c.bf16 %v5571, %v5570
        %v5614 = vpack.c.bf16 %v5573, %v5572
        %v5615 = vpack.c.bf16 %v5575, %v5574
        %v5616 = vpack.c.bf16 %v5577, %v5576
        %v5617 = vpack.c.bf16 %v5579, %v5578
        %v5618 = vpack.c.bf16 %v5581, %v5580
        %v5619 = vpack.c.bf16 %v5583, %v5582
        %v5620 = vpack.c.bf16 %v5585, %v5584
        %v5621 = vpack.c.bf16 %v5587, %v5586
        %v5656 = vrot.slane %v5588, 2
        %v5657 = vrot.slane %v5589, 2
        %v5658 = vsel %vm3935, %v5656, %v5657
        %v5659 = vrot.slane %v5590, 2
        %v5660 = vsel %vm3935, %v5657, %v5659
        %v5661 = vrot.slane %v5591, 2
        %v5662 = vsel %vm3935, %v5659, %v5661
        %v5663 = vrot.slane %v5592, 2
        %v5664 = vsel %vm3935, %v5661, %v5663
        %v5665 = vrot.slane %v5593, 2
        %v5666 = vsel %vm3935, %v5663, %v5665
        %v5667 = vrot.slane %v5594, 2
        %v5668 = vsel %vm3935, %v5665, %v5667
        %v5669 = vrot.slane %v5595, 2
        %v5670 = vsel %vm3935, %v5667, %v5669
        %v5671 = vrot.slane %v5596, 2
        %v5672 = vsel %vm3935, %v5669, %v5671
        %v5673 = vrot.slane %v5597, 2
        %v5674 = vsel %vm3935, %v5671, %v5673
        %v5675 = vrot.slane %v5598, 2
        %v5676 = vsel %vm3935, %v5673, %v5675
        %v5677 = vrot.slane %v5599, 2
        %v5678 = vsel %vm3935, %v5675, %v5677
        %v5679 = vrot.slane %v5600, 2
        %v5680 = vsel %vm3935, %v5677, %v5679
        %v5681 = vrot.slane %v5601, 2
        %v5682 = vsel %vm3935, %v5679, %v5681
        %v5683 = vrot.slane %v5602, 2
        %v5684 = vsel %vm3935, %v5681, %v5683
        %v5685 = vrot.slane %v5603, 2
        %v5686 = vsel %vm3935, %v5683, %v5685
        %v5687 = vrot.slane %v5604, 2
        %v5688 = vsel %vm3935, %v5685, %v5687
        %v5689 = vrot.slane %v5605, 2
        %v5690 = vsel %vm3935, %v5687, %v5689
        %v5691 = vrot.slane %v5606, 2
        %v5692 = vsel %vm3935, %v5689, %v5691
        %v5693 = vrot.slane %v5607, 2
        %v5694 = vsel %vm3935, %v5691, %v5693
        %v5695 = vrot.slane %v5608, 2
        %v5696 = vsel %vm3935, %v5693, %v5695
        %v5697 = vrot.slane %v5609, 2
        %v5698 = vsel %vm3935, %v5695, %v5697
        %v5699 = vrot.slane %v5610, 2
        %v5700 = vsel %vm3935, %v5697, %v5699
        %v5701 = vrot.slane %v5611, 2
        %v5702 = vsel %vm3935, %v5699, %v5701
        %v5703 = vrot.slane %v5612, 2
        %v5704 = vsel %vm3935, %v5701, %v5703
        %v5705 = vrot.slane %v5613, 2
        %v5706 = vsel %vm3935, %v5703, %v5705
        %v5707 = vrot.slane %v5614, 2
        %v5708 = vsel %vm3935, %v5705, %v5707
        %v5709 = vrot.slane %v5615, 2
        %v5710 = vsel %vm3935, %v5707, %v5709
        %v5711 = vrot.slane %v5616, 2
        %v5712 = vsel %vm3935, %v5709, %v5711
        %v5713 = vrot.slane %v5617, 2
        %v5714 = vsel %vm3935, %v5711, %v5713
        %v5715 = vrot.slane %v5618, 2
        %v5716 = vsel %vm3935, %v5713, %v5715
        %v5717 = vrot.slane %v5619, 2
        %v5718 = vsel %vm3935, %v5715, %v5717
        %v5719 = vrot.slane %v5620, 2
        %v5720 = vsel %vm3935, %v5717, %v5719
        %v5721 = vrot.slane %v5621, 2
        %v5722 = vsel %vm3935, %v5719, %v5721
        %vm5723 = vcmask 1043456
        %v5724 = vrot.slane %v5588, 4
        %v5725 = vrot.slane %v5589, 4
        %v5726 = vsel %vm5723, %v5724, %v5725
        %v5727 = vrot.slane %v5590, 4
        %v5728 = vsel %vm5723, %v5725, %v5727
        %v5729 = vrot.slane %v5591, 4
        %v5730 = vsel %vm5723, %v5727, %v5729
        %v5731 = vrot.slane %v5592, 4
        %v5732 = vsel %vm5723, %v5729, %v5731
        %v5733 = vrot.slane %v5593, 4
        %v5734 = vsel %vm5723, %v5731, %v5733
        %v5735 = vrot.slane %v5594, 4
        %v5736 = vsel %vm5723, %v5733, %v5735
        %v5737 = vrot.slane %v5595, 4
        %v5738 = vsel %vm5723, %v5735, %v5737
        %v5739 = vrot.slane %v5596, 4
        %v5740 = vsel %vm5723, %v5737, %v5739
        %v5741 = vrot.slane %v5597, 4
        %v5742 = vsel %vm5723, %v5739, %v5741
        %v5743 = vrot.slane %v5598, 4
        %v5744 = vsel %vm5723, %v5741, %v5743
        %v5745 = vrot.slane %v5599, 4
        %v5746 = vsel %vm5723, %v5743, %v5745
        %v5747 = vrot.slane %v5600, 4
        %v5748 = vsel %vm5723, %v5745, %v5747
        %v5749 = vrot.slane %v5601, 4
        %v5750 = vsel %vm5723, %v5747, %v5749
        %v5751 = vrot.slane %v5602, 4
        %v5752 = vsel %vm5723, %v5749, %v5751
        %v5753 = vrot.slane %v5603, 4
        %v5754 = vsel %vm5723, %v5751, %v5753
        %v5755 = vrot.slane %v5604, 4
        %v5756 = vsel %vm5723, %v5753, %v5755
        %v5757 = vrot.slane %v5605, 4
        %v5758 = vsel %vm5723, %v5755, %v5757
        %v5759 = vrot.slane %v5606, 4
        %v5760 = vsel %vm5723, %v5757, %v5759
        %v5761 = vrot.slane %v5607, 4
        %v5762 = vsel %vm5723, %v5759, %v5761
        %v5763 = vrot.slane %v5608, 4
        %v5764 = vsel %vm5723, %v5761, %v5763
        %v5765 = vrot.slane %v5609, 4
        %v5766 = vsel %vm5723, %v5763, %v5765
        %v5767 = vrot.slane %v5610, 4
        %v5768 = vsel %vm5723, %v5765, %v5767
        %v5769 = vrot.slane %v5611, 4
        %v5770 = vsel %vm5723, %v5767, %v5769
        %v5771 = vrot.slane %v5612, 4
        %v5772 = vsel %vm5723, %v5769, %v5771
        %v5773 = vrot.slane %v5613, 4
        %v5774 = vsel %vm5723, %v5771, %v5773
        %v5775 = vrot.slane %v5614, 4
        %v5776 = vsel %vm5723, %v5773, %v5775
        %v5777 = vrot.slane %v5615, 4
        %v5778 = vsel %vm5723, %v5775, %v5777
        %v5779 = vrot.slane %v5616, 4
        %v5780 = vsel %vm5723, %v5777, %v5779
        %v5781 = vrot.slane %v5617, 4
        %v5782 = vsel %vm5723, %v5779, %v5781
        %v5783 = vrot.slane %v5618, 4
        %v5784 = vsel %vm5723, %v5781, %v5783
        %v5785 = vrot.slane %v5619, 4
        %v5786 = vsel %vm5723, %v5783, %v5785
        %v5787 = vrot.slane %v5620, 4
        %v5788 = vsel %vm5723, %v5785, %v5787
        %v5789 = vrot.slane %v5621, 4
        %v5790 = vsel %vm5723, %v5787, %v5789
        %s5791 = scalar_lea.vmem %s2, 384
        %v5792 = vld [vmem:[%s5791] sm:$0xf]
        %v5793 = vld [vmem:[%s5791 + $0x4] sm:$0xf]
        %v5794 = vld [vmem:[%s5791 + $0x8] sm:$0xf]
        %v5795 = vld [vmem:[%s5791 + $0xc] sm:$0xf]
        %v5796 = vld [vmem:[%s5791 + $0x10] sm:$0xf]
        %v5797 = vld [vmem:[%s5791 + $0x14] sm:$0xf]
        %v5798 = vld [vmem:[%s5791 + $0x18] sm:$0xf]
        %v5799 = vld [vmem:[%s5791 + $0x1c] sm:$0xf]
        %v5800 = vld [vmem:[%s5791 + $0x20] sm:$0xf]
        %v5801 = vld [vmem:[%s5791 + $0x24] sm:$0xf]
        %v5802 = vld [vmem:[%s5791 + $0x28] sm:$0xf]
        %v5803 = vld [vmem:[%s5791 + $0x2c] sm:$0xf]
        %v5804 = vld [vmem:[%s5791 + $0x30] sm:$0xf]
        %v5805 = vld [vmem:[%s5791 + $0x34] sm:$0xf]
        %v5806 = vld [vmem:[%s5791 + $0x38] sm:$0xf]
        %v5807 = vld [vmem:[%s5791 + $0x3c] sm:$0xf]
        %v5808 = vld [vmem:[%s5791 + $0x40] sm:$0xf]
        %v5809 = vld [vmem:[%s5791 + $0x44] sm:$0xf]
        %v5810 = vld [vmem:[%s5791 + $0x48] sm:$0xf]
        %v5811 = vld [vmem:[%s5791 + $0x4c] sm:$0xf]
        %v5812 = vld [vmem:[%s5791 + $0x50] sm:$0xf]
        %v5813 = vld [vmem:[%s5791 + $0x54] sm:$0xf]
        %v5814 = vld [vmem:[%s5791 + $0x58] sm:$0xf]
        %v5815 = vld [vmem:[%s5791 + $0x5c] sm:$0xf]
        %v5816 = vld [vmem:[%s5791 + $0x60] sm:$0xf]
        %v5817 = vld [vmem:[%s5791 + $0x64] sm:$0xf]
        %v5818 = vld [vmem:[%s5791 + $0x68] sm:$0xf]
        %v5819 = vld [vmem:[%s5791 + $0x6c] sm:$0xf]
        %v5820 = vld [vmem:[%s5791 + $0x70] sm:$0xf]
        %v5821 = vld [vmem:[%s5791 + $0x74] sm:$0xf]
        %v5822 = vld [vmem:[%s5791 + $0x78] sm:$0xf]
        %v5823 = vld [vmem:[%s5791 + $0x7c] sm:$0xf]
        %v5824 = vld [vmem:[%s5791 + $0x80] sm:$0xf]
        %v5825 = vld [vmem:[%s5791 + $0x84] sm:$0xf]
        %v5826 = vld [vmem:[%s5791 + $0x88] sm:$0xf]
        %v5827 = vld [vmem:[%s5791 + $0x8c] sm:$0xf]
        %v5828 = vld [vmem:[%s5791 + $0x90] sm:$0xf]
        %v5829 = vld [vmem:[%s5791 + $0x94] sm:$0xf]
        %v5830 = vld [vmem:[%s5791 + $0x98] sm:$0xf]
        %v5831 = vld [vmem:[%s5791 + $0x9c] sm:$0xf]
        %v5832 = vld [vmem:[%s5791 + $0xa0] sm:$0xf]
        %v5833 = vld [vmem:[%s5791 + $0xa4] sm:$0xf]
        %v5834 = vld [vmem:[%s5791 + $0xa8] sm:$0xf]
        %v5835 = vld [vmem:[%s5791 + $0xac] sm:$0xf]
        %v5836 = vld [vmem:[%s5791 + $0xb0] sm:$0xf]
        %v5837 = vld [vmem:[%s5791 + $0xb4] sm:$0xf]
        %v5838 = vld [vmem:[%s5791 + $0xb8] sm:$0xf]
        %v5839 = vld [vmem:[%s5791 + $0xbc] sm:$0xf]
        %s5840 = scalar_lea.vmem %s4, 2
        %v5841 = vld [vmem:[%s5840] sm:$0x1]
        %v5843 = vlaneseq
        %v5844 = vshrl.u32 %v5843, 7
        %v5845 = vsub.s32 0, %v5844
        %v5846 = vrot.slane %v5841, %v5845
        %v5848 = vrot.slane %v5658, 2
        %v5849 = vrot.slane %v5660, 2
        %v5850 = vsel %vm3935, %v5848, %v5849
        %v5851 = vrot.slane %v5726, 2
        %v5852 = vrot.slane %v5728, 2
        %v5853 = vsel %vm3935, %v5851, %v5852
        %v5854 = vrot.slane %v5662, 2
        %v5855 = vsel %vm3935, %v5849, %v5854
        %v5856 = vrot.slane %v5730, 2
        %v5857 = vsel %vm3935, %v5852, %v5856
        %v5858 = vrot.slane %v5664, 2
        %v5859 = vsel %vm3935, %v5854, %v5858
        %v5860 = vrot.slane %v5732, 2
        %v5861 = vsel %vm3935, %v5856, %v5860
        %v5862 = vrot.slane %v5666, 2
        %v5863 = vsel %vm3935, %v5858, %v5862
        %v5864 = vrot.slane %v5734, 2
        %v5865 = vsel %vm3935, %v5860, %v5864
        %v5866 = vrot.slane %v5668, 2
        %v5867 = vsel %vm3935, %v5862, %v5866
        %v5868 = vrot.slane %v5736, 2
        %v5869 = vsel %vm3935, %v5864, %v5868
        %v5870 = vrot.slane %v5670, 2
        %v5871 = vsel %vm3935, %v5866, %v5870
        %v5872 = vrot.slane %v5738, 2
        %v5873 = vsel %vm3935, %v5868, %v5872
        %v5874 = vrot.slane %v5672, 2
        %v5875 = vsel %vm3935, %v5870, %v5874
        %v5876 = vrot.slane %v5740, 2
        %v5877 = vsel %vm3935, %v5872, %v5876
        %v5878 = vrot.slane %v5674, 2
        %v5879 = vsel %vm3935, %v5874, %v5878
        %v5880 = vrot.slane %v5742, 2
        %v5881 = vsel %vm3935, %v5876, %v5880
        %v5882 = vrot.slane %v5676, 2
        %v5883 = vsel %vm3935, %v5878, %v5882
        %v5884 = vrot.slane %v5744, 2
        %v5885 = vsel %vm3935, %v5880, %v5884
        %v5886 = vrot.slane %v5678, 2
        %v5887 = vsel %vm3935, %v5882, %v5886
        %v5888 = vrot.slane %v5746, 2
        %v5889 = vsel %vm3935, %v5884, %v5888
        %v5890 = vrot.slane %v5680, 2
        %v5891 = vsel %vm3935, %v5886, %v5890
        %v5892 = vrot.slane %v5748, 2
        %v5893 = vsel %vm3935, %v5888, %v5892
        %v5894 = vrot.slane %v5682, 2
        %v5895 = vsel %vm3935, %v5890, %v5894
        %v5896 = vrot.slane %v5750, 2
        %v5897 = vsel %vm3935, %v5892, %v5896
        %v5898 = vrot.slane %v5684, 2
        %v5899 = vsel %vm3935, %v5894, %v5898
        %v5900 = vrot.slane %v5752, 2
        %v5901 = vsel %vm3935, %v5896, %v5900
        %v5902 = vrot.slane %v5686, 2
        %v5903 = vsel %vm3935, %v5898, %v5902
        %v5904 = vrot.slane %v5754, 2
        %v5905 = vsel %vm3935, %v5900, %v5904
        %v5906 = vrot.slane %v5688, 2
        %v5907 = vsel %vm3935, %v5902, %v5906
        %v5908 = vrot.slane %v5756, 2
        %v5909 = vsel %vm3935, %v5904, %v5908
        %v5910 = vrot.slane %v5690, 2
        %v5911 = vsel %vm3935, %v5906, %v5910
        %v5912 = vrot.slane %v5758, 2
        %v5913 = vsel %vm3935, %v5908, %v5912
        %v5914 = vrot.slane %v5692, 2
        %v5915 = vsel %vm3935, %v5910, %v5914
        %v5916 = vrot.slane %v5760, 2
        %v5917 = vsel %vm3935, %v5912, %v5916
        %v5918 = vrot.slane %v5694, 2
        %v5919 = vsel %vm3935, %v5914, %v5918
        %v5920 = vrot.slane %v5762, 2
        %v5921 = vsel %vm3935, %v5916, %v5920
        %v5922 = vrot.slane %v5696, 2
        %v5923 = vsel %vm3935, %v5918, %v5922
        %v5924 = vrot.slane %v5764, 2
        %v5925 = vsel %vm3935, %v5920, %v5924
        %v5926 = vrot.slane %v5698, 2
        %v5927 = vsel %vm3935, %v5922, %v5926
        %v5928 = vrot.slane %v5766, 2
        %v5929 = vsel %vm3935, %v5924, %v5928
        %v5930 = vrot.slane %v5700, 2
        %v5931 = vsel %vm3935, %v5926, %v5930
        %v5932 = vrot.slane %v5768, 2
        %v5933 = vsel %vm3935, %v5928, %v5932
        %v5934 = vrot.slane %v5702, 2
        %v5935 = vsel %vm3935, %v5930, %v5934
        %v5936 = vrot.slane %v5770, 2
        %v5937 = vsel %vm3935, %v5932, %v5936
        %v5938 = vrot.slane %v5704, 2
        %v5939 = vsel %vm3935, %v5934, %v5938
        %v5940 = vrot.slane %v5772, 2
        %v5941 = vsel %vm3935, %v5936, %v5940
        %v5942 = vrot.slane %v5706, 2
        %v5943 = vsel %vm3935, %v5938, %v5942
        %v5944 = vrot.slane %v5774, 2
        %v5945 = vsel %vm3935, %v5940, %v5944
        %v5946 = vrot.slane %v5708, 2
        %v5947 = vsel %vm3935, %v5942, %v5946
        %v5948 = vrot.slane %v5776, 2
        %v5949 = vsel %vm3935, %v5944, %v5948
        %v5950 = vrot.slane %v5710, 2
        %v5951 = vsel %vm3935, %v5946, %v5950
        %v5952 = vrot.slane %v5778, 2
        %v5953 = vsel %vm3935, %v5948, %v5952
        %v5954 = vrot.slane %v5712, 2
        %v5955 = vsel %vm3935, %v5950, %v5954
        %v5956 = vrot.slane %v5780, 2
        %v5957 = vsel %vm3935, %v5952, %v5956
        %v5958 = vrot.slane %v5714, 2
        %v5959 = vsel %vm3935, %v5954, %v5958
        %v5960 = vrot.slane %v5782, 2
        %v5961 = vsel %vm3935, %v5956, %v5960
        %v5962 = vrot.slane %v5716, 2
        %v5963 = vsel %vm3935, %v5958, %v5962
        %v5964 = vrot.slane %v5784, 2
        %v5965 = vsel %vm3935, %v5960, %v5964
        %v5966 = vrot.slane %v5718, 2
        %v5967 = vsel %vm3935, %v5962, %v5966
        %v5968 = vrot.slane %v5786, 2
        %v5969 = vsel %vm3935, %v5964, %v5968
        %v5970 = vrot.slane %v5720, 2
        %v5971 = vsel %vm3935, %v5966, %v5970
        %v5972 = vrot.slane %v5788, 2
        %v5973 = vsel %vm3935, %v5968, %v5972
        %v5974 = vrot.slane %v5722, 2
        %v5975 = vsel %vm3935, %v5970, %v5974
        %v5976 = vrot.slane %v5790, 2
        %v5977 = vsel %vm3935, %v5972, %v5976
        %v5978 = vrot.slane %v5721, 2
        %v5979 = vsel %vm3935, %v5974, %v5978
        %v5980 = vrot.slane %v5789, 2
        %v5981 = vsel %vm3935, %v5976, %v5980
        %v6129 = vunpack.c.l.b16 %v5792
        %v6130 = vunpack.c.l.b16 %v5793
        %v6131 = vunpack.c.l.b16 %v5794
        %v6132 = vunpack.c.l.b16 %v5795
        %v6133 = vunpack.c.l.b16 %v5796
        %v6134 = vunpack.c.l.b16 %v5797
        %v6135 = vunpack.c.l.b16 %v5798
        %v6136 = vunpack.c.l.b16 %v5799
        %v6137 = vunpack.c.l.b16 %v5800
        %v6138 = vunpack.c.l.b16 %v5801
        %v6139 = vunpack.c.l.b16 %v5802
        %v6140 = vunpack.c.l.b16 %v5803
        %v6141 = vunpack.c.l.b16 %v5804
        %v6142 = vunpack.c.l.b16 %v5805
        %v6143 = vunpack.c.l.b16 %v5806
        %v6144 = vunpack.c.l.b16 %v5807
        %v6145 = vunpack.c.l.b16 %v5808
        %v6146 = vunpack.c.l.b16 %v5809
        %v6147 = vunpack.c.l.b16 %v5810
        %v6148 = vunpack.c.l.b16 %v5811
        %v6149 = vunpack.c.l.b16 %v5812
        %v6150 = vunpack.c.l.b16 %v5813
        %v6151 = vunpack.c.l.b16 %v5814
        %v6152 = vunpack.c.l.b16 %v5815
        %v6153 = vunpack.c.l.b16 %v5816
        %v6154 = vunpack.c.l.b16 %v5817
        %v6155 = vunpack.c.l.b16 %v5818
        %v6156 = vunpack.c.l.b16 %v5819
        %v6157 = vunpack.c.l.b16 %v5820
        %v6158 = vunpack.c.l.b16 %v5821
        %v6159 = vunpack.c.l.b16 %v5822
        %v6160 = vunpack.c.l.b16 %v5823
        %v6161 = vunpack.c.l.b16 %v5824
        %v6162 = vunpack.c.l.b16 %v5825
        %v6163 = vunpack.c.l.b16 %v5826
        %v6164 = vunpack.c.l.b16 %v5827
        %v6165 = vunpack.c.l.b16 %v5828
        %v6166 = vunpack.c.l.b16 %v5829
        %v6167 = vunpack.c.l.b16 %v5830
        %v6168 = vunpack.c.l.b16 %v5831
        %v6169 = vunpack.c.l.b16 %v5832
        %v6170 = vunpack.c.l.b16 %v5833
        %v6171 = vunpack.c.l.b16 %v5834
        %v6172 = vunpack.c.l.b16 %v5835
        %v6173 = vunpack.c.l.b16 %v5836
        %v6174 = vunpack.c.l.b16 %v5837
        %v6175 = vunpack.c.l.b16 %v5838
        %v6176 = vunpack.c.l.b16 %v5839
        %v6177 = vpack.c.b16 %v6130, %v6129
        %v6178 = vpack.c.b16 %v6132, %v6131
        %v6179 = vpack.c.b16 %v6134, %v6133
        %v6180 = vpack.c.b16 %v6136, %v6135
        %v6181 = vpack.c.b16 %v6138, %v6137
        %v6182 = vpack.c.b16 %v6140, %v6139
        %v6183 = vpack.c.b16 %v6142, %v6141
        %v6184 = vpack.c.b16 %v6144, %v6143
        %v6185 = vpack.c.b16 %v6146, %v6145
        %v6186 = vpack.c.b16 %v6148, %v6147
        %v6187 = vpack.c.b16 %v6150, %v6149
        %v6188 = vpack.c.b16 %v6152, %v6151
        %v6189 = vpack.c.b16 %v6154, %v6153
        %v6190 = vpack.c.b16 %v6156, %v6155
        %v6191 = vpack.c.b16 %v6158, %v6157
        %v6192 = vpack.c.b16 %v6160, %v6159
        %v6193 = vpack.c.b16 %v6162, %v6161
        %v6194 = vpack.c.b16 %v6164, %v6163
        %v6195 = vpack.c.b16 %v6166, %v6165
        %v6196 = vpack.c.b16 %v6168, %v6167
        %v6197 = vpack.c.b16 %v6170, %v6169
        %v6198 = vpack.c.b16 %v6172, %v6171
        %v6199 = vpack.c.b16 %v6174, %v6173
        %v6200 = vpack.c.b16 %v6176, %v6175
        %6225 = vmatprep.subr.bf16.mxu0 0
        %6226 = vmatpush1.bf16.msra.mxu0 %v6177
        %6227 = vmatprep.subr.bf16.mxu0 0
        %6228 = vmatpush1.bf16.msra.mxu0 %v6178
        %6229 = vmatprep.subr.bf16.mxu0 0
        %6230 = vmatpush1.bf16.msra.mxu0 %v6179
        %6231 = vmatprep.subr.bf16.mxu0 0
        %6232 = vmatpush1.bf16.msra.mxu0 %v6180
        %6233 = vmatprep.subr.bf16.mxu0 0
        %6234 = vmatpush1.bf16.msra.mxu0 %v6181
        %6235 = vmatprep.subr.bf16.mxu0 0
        %6236 = vmatpush1.bf16.msra.mxu0 %v6182
        %6237 = vmatprep.subr.bf16.mxu0 0
        %6238 = vmatpush1.bf16.msra.mxu0 %v6183
        %6239 = vmatprep.subr.bf16.mxu0 0
        %6240 = vmatpush1.bf16.msra.mxu0 %v6184
        %6241 = vmatprep.subr.bf16.mxu0 0
        %6242 = vmatpush1.bf16.msra.mxu0 %v6185
        %6243 = vmatprep.subr.bf16.mxu0 0
        %6244 = vmatpush1.bf16.msra.mxu0 %v6186
        %6245 = vmatprep.subr.bf16.mxu0 0
        %6246 = vmatpush1.bf16.msra.mxu0 %v6187
        %6247 = vmatprep.subr.bf16.mxu0 0
        %6248 = vmatpush1.bf16.msra.mxu0 %v6188
        %6249 = vmatprep.subr.bf16.mxu0 0
        %6250 = vmatpush1.bf16.msra.mxu0 %v6189
        %6251 = vmatprep.subr.bf16.mxu0 0
        %6252 = vmatpush1.bf16.msra.mxu0 %v6190
        %6253 = vmatprep.subr.bf16.mxu0 0
        %6254 = vmatpush1.bf16.msra.mxu0 %v6191
        %6255 = vmatprep.subr.bf16.mxu0 0
        %6256 = vmatpush1.bf16.msra.mxu0 %v6192
        %6257 = vmatprep.mubr.bf16.mxu0 %v5850
        %6258 = vmatmul.mubr.bf16.gmra.mrb[0].mxu0 %v5658
        %v6259 = vpop.f32.mrb[0].mxu0
        %v6260 = vadd.f32 %v5846, %v6259
        %v6261 = vpop.f32.mrb[0].mxu0
        %v6262 = vpop.f32.mrb[0].mxu0
        %v6263 = vadd.f32 %v5846, %v6262
        %v6264 = vpop.f32.mrb[0].mxu0
        %6265 = vmatprep.mubr.bf16.mxu0 %v5855
        %6266 = vmatmul.mubr.bf16.gmra.mrb[0].mxu0 %v5660
        %v6267 = vpop.f32.mrb[0].mxu0
        %v6268 = vadd.f32 %v5846, %v6267
        %v6269 = vpop.f32.mrb[0].mxu0
        %v6270 = vpop.f32.mrb[0].mxu0
        %v6271 = vadd.f32 %v5846, %v6270
        %v6272 = vpop.f32.mrb[0].mxu0
        %6273 = vmatprep.mubr.bf16.mxu0 %v5859
        %6274 = vmatmul.mubr.bf16.gmra.mrb[0].mxu0 %v5662
        %v6275 = vpop.f32.mrb[0].mxu0
        %v6276 = vadd.f32 %v5846, %v6275
        %v6277 = vpop.f32.mrb[0].mxu0
        %v6278 = vpop.f32.mrb[0].mxu0
        %v6279 = vadd.f32 %v5846, %v6278
        %v6280 = vpop.f32.mrb[0].mxu0
        %6281 = vmatprep.mubr.bf16.mxu0 %v5863
        %6282 = vmatmul.mubr.bf16.gmra.mrb[0].mxu0 %v5664
        %v6283 = vpop.f32.mrb[0].mxu0
        %v6284 = vadd.f32 %v5846, %v6283
        %v6285 = vpop.f32.mrb[0].mxu0
        %v6286 = vpop.f32.mrb[0].mxu0
        %v6287 = vadd.f32 %v5846, %v6286
        %v6288 = vpop.f32.mrb[0].mxu0
        %6289 = vmatprep.mubr.bf16.mxu0 %v5867
        %6290 = vmatmul.mubr.bf16.gmra.mrb[0].mxu0 %v5666
        %v6291 = vpop.f32.mrb[0].mxu0
        %v6292 = vadd.f32 %v5846, %v6291
        %v6293 = vpop.f32.mrb[0].mxu0
        %v6294 = vpop.f32.mrb[0].mxu0
        %v6295 = vadd.f32 %v5846, %v6294
        %v6296 = vpop.f32.mrb[0].mxu0
        %6297 = vmatprep.mubr.bf16.mxu0 %v5871
        %6298 = vmatmul.mubr.bf16.gmra.mrb[0].mxu0 %v5668
        %v6299 = vpop.f32.mrb[0].mxu0
        %v6300 = vadd.f32 %v5846, %v6299
        %v6301 = vpop.f32.mrb[0].mxu0
        %v6302 = vpop.f32.mrb[0].mxu0
        %v6303 = vadd.f32 %v5846, %v6302
        %v6304 = vpop.f32.mrb[0].mxu0
        %6305 = vmatprep.mubr.bf16.mxu0 %v5875
        %6306 = vmatmul.mubr.bf16.gmra.mrb[0].mxu0 %v5670
        %v6307 = vpop.f32.mrb[0].mxu0
        %v6308 = vadd.f32 %v5846, %v6307
        %v6309 = vpop.f32.mrb[0].mxu0
        %v6310 = vpop.f32.mrb[0].mxu0
        %v6311 = vadd.f32 %v5846, %v6310
        %v6312 = vpop.f32.mrb[0].mxu0
        %6313 = vmatprep.mubr.bf16.mxu0 %v5879
        %6314 = vmatmul.mubr.bf16.gmra.mrb[0].mxu0 %v5672
        %v6315 = vpop.f32.mrb[0].mxu0
        %v6316 = vadd.f32 %v5846, %v6315
        %v6317 = vpop.f32.mrb[0].mxu0
        %v6318 = vpop.f32.mrb[0].mxu0
        %v6319 = vadd.f32 %v5846, %v6318
        %v6320 = vpop.f32.mrb[0].mxu0
        %6321 = vmatprep.mubr.bf16.mxu0 %v5883
        %6322 = vmatmul.mubr.bf16.gmra.mrb[0].mxu0 %v5674
        %v6323 = vpop.f32.mrb[0].mxu0
        %v6324 = vadd.f32 %v5846, %v6323
        %v6325 = vpop.f32.mrb[0].mxu0
        %v6326 = vpop.f32.mrb[0].mxu0
        %v6327 = vadd.f32 %v5846, %v6326
        %v6328 = vpop.f32.mrb[0].mxu0
        %6329 = vmatprep.mubr.bf16.mxu0 %v5887
        %6330 = vmatmul.mubr.bf16.gmra.mrb[0].mxu0 %v5676
        %v6331 = vpop.f32.mrb[0].mxu0
        %v6332 = vadd.f32 %v5846, %v6331
        %v6333 = vpop.f32.mrb[0].mxu0
        %v6334 = vpop.f32.mrb[0].mxu0
        %v6335 = vadd.f32 %v5846, %v6334
        %v6336 = vpop.f32.mrb[0].mxu0
        %6337 = vmatprep.mubr.bf16.mxu0 %v5891
        %6338 = vmatmul.mubr.bf16.gmra.mrb[0].mxu0 %v5678
        %v6339 = vpop.f32.mrb[0].mxu0
        %v6340 = vadd.f32 %v5846, %v6339
        %v6341 = vpop.f32.mrb[0].mxu0
        %v6342 = vpop.f32.mrb[0].mxu0
        %v6343 = vadd.f32 %v5846, %v6342
        %v6344 = vpop.f32.mrb[0].mxu0
        %6345 = vmatprep.mubr.bf16.mxu0 %v5895
        %6346 = vmatmul.mubr.bf16.gmra.mrb[0].mxu0 %v5680
        %v6347 = vpop.f32.mrb[0].mxu0
        %v6348 = vadd.f32 %v5846, %v6347
        %v6349 = vpop.f32.mrb[0].mxu0
        %v6350 = vpop.f32.mrb[0].mxu0
        %v6351 = vadd.f32 %v5846, %v6350
        %v6352 = vpop.f32.mrb[0].mxu0
        %6353 = vmatprep.mubr.bf16.mxu0 %v5899
        %6354 = vmatmul.mubr.bf16.gmra.mrb[0].mxu0 %v5682
        %v6355 = vpop.f32.mrb[0].mxu0
        %v6356 = vadd.f32 %v5846, %v6355
        %v6357 = vpop.f32.mrb[0].mxu0
        %v6358 = vpop.f32.mrb[0].mxu0
        %v6359 = vadd.f32 %v5846, %v6358
        %v6360 = vpop.f32.mrb[0].mxu0
        %6361 = vmatprep.mubr.bf16.mxu0 %v5903
        %6362 = vmatmul.mubr.bf16.gmra.mrb[0].mxu0 %v5684
        %v6363 = vpop.f32.mrb[0].mxu0
        %v6364 = vadd.f32 %v5846, %v6363
        %v6365 = vpop.f32.mrb[0].mxu0
        %v6366 = vpop.f32.mrb[0].mxu0
        %v6367 = vadd.f32 %v5846, %v6366
        %v6368 = vpop.f32.mrb[0].mxu0
        %6369 = vmatprep.mubr.bf16.mxu0 %v5907
        %6370 = vmatmul.mubr.bf16.gmra.mrb[0].mxu0 %v5686
        %v6371 = vpop.f32.mrb[0].mxu0
        %v6372 = vadd.f32 %v5846, %v6371
        %v6373 = vpop.f32.mrb[0].mxu0
        %v6374 = vpop.f32.mrb[0].mxu0
        %v6375 = vadd.f32 %v5846, %v6374
        %v6376 = vpop.f32.mrb[0].mxu0
        %6377 = vmatprep.mubr.bf16.mxu0 %v5911
        %6378 = vmatmul.mubr.bf16.gmra.mrb[0].mxu0 %v5688
        %v6379 = vpop.f32.mrb[0].mxu0
        %v6380 = vadd.f32 %v5846, %v6379
        %v6381 = vpop.f32.mrb[0].mxu0
        %v6382 = vpop.f32.mrb[0].mxu0
        %v6383 = vadd.f32 %v5846, %v6382
        %v6384 = vpop.f32.mrb[0].mxu0
        %6385 = vmatprep.mubr.bf16.mxu0 %v5915
        %6386 = vmatmul.mubr.bf16.gmra.mrb[0].mxu0 %v5690
        %v6387 = vpop.f32.mrb[0].mxu0
        %v6388 = vadd.f32 %v5846, %v6387
        %v6389 = vpop.f32.mrb[0].mxu0
        %v6390 = vpop.f32.mrb[0].mxu0
        %v6391 = vadd.f32 %v5846, %v6390
        %v6392 = vpop.f32.mrb[0].mxu0
        %6393 = vmatprep.mubr.bf16.mxu0 %v5919
        %6394 = vmatmul.mubr.bf16.gmra.mrb[0].mxu0 %v5692
        %v6395 = vpop.f32.mrb[0].mxu0
        %v6396 = vadd.f32 %v5846, %v6395
        %v6397 = vpop.f32.mrb[0].mxu0
        %v6398 = vpop.f32.mrb[0].mxu0
        %v6399 = vadd.f32 %v5846, %v6398
        %v6400 = vpop.f32.mrb[0].mxu0
        %6401 = vmatprep.mubr.bf16.mxu0 %v5923
        %6402 = vmatmul.mubr.bf16.gmra.mrb[0].mxu0 %v5694
        %v6403 = vpop.f32.mrb[0].mxu0
        %v6404 = vadd.f32 %v5846, %v6403
        %v6405 = vpop.f32.mrb[0].mxu0
        %v6406 = vpop.f32.mrb[0].mxu0
        %v6407 = vadd.f32 %v5846, %v6406
        %v6408 = vpop.f32.mrb[0].mxu0
        %6409 = vmatprep.mubr.bf16.mxu0 %v5927
        %6410 = vmatmul.mubr.bf16.gmra.mrb[0].mxu0 %v5696
        %v6411 = vpop.f32.mrb[0].mxu0
        %v6412 = vadd.f32 %v5846, %v6411
        %v6413 = vpop.f32.mrb[0].mxu0
        %v6414 = vpop.f32.mrb[0].mxu0
        %v6415 = vadd.f32 %v5846, %v6414
        %v6416 = vpop.f32.mrb[0].mxu0
        %6417 = vmatprep.mubr.bf16.mxu0 %v5931
        %6418 = vmatmul.mubr.bf16.gmra.mrb[0].mxu0 %v5698
        %v6419 = vpop.f32.mrb[0].mxu0
        %v6420 = vadd.f32 %v5846, %v6419
        %v6421 = vpop.f32.mrb[0].mxu0
        %v6422 = vpop.f32.mrb[0].mxu0
        %v6423 = vadd.f32 %v5846, %v6422
        %v6424 = vpop.f32.mrb[0].mxu0
        %6425 = vmatprep.mubr.bf16.mxu0 %v5935
        %6426 = vmatmul.mubr.bf16.gmra.mrb[0].mxu0 %v5700
        %v6427 = vpop.f32.mrb[0].mxu0
        %v6428 = vadd.f32 %v5846, %v6427
        %v6429 = vpop.f32.mrb[0].mxu0
        %v6430 = vpop.f32.mrb[0].mxu0
        %v6431 = vadd.f32 %v5846, %v6430
        %v6432 = vpop.f32.mrb[0].mxu0
        %6433 = vmatprep.mubr.bf16.mxu0 %v5939
        %6434 = vmatmul.mubr.bf16.gmra.mrb[0].mxu0 %v5702
        %v6435 = vpop.f32.mrb[0].mxu0
        %v6436 = vadd.f32 %v5846, %v6435
        %v6437 = vpop.f32.mrb[0].mxu0
        %v6438 = vpop.f32.mrb[0].mxu0
        %v6439 = vadd.f32 %v5846, %v6438
        %v6440 = vpop.f32.mrb[0].mxu0
        %6441 = vmatprep.mubr.bf16.mxu0 %v5943
        %6442 = vmatmul.mubr.bf16.gmra.mrb[0].mxu0 %v5704
        %v6443 = vpop.f32.mrb[0].mxu0
        %v6444 = vadd.f32 %v5846, %v6443
        %v6445 = vpop.f32.mrb[0].mxu0
        %v6446 = vpop.f32.mrb[0].mxu0
        %v6447 = vadd.f32 %v5846, %v6446
        %v6448 = vpop.f32.mrb[0].mxu0
        %6449 = vmatprep.mubr.bf16.mxu0 %v5947
        %6450 = vmatmul.mubr.bf16.gmra.mrb[0].mxu0 %v5706
        %v6451 = vpop.f32.mrb[0].mxu0
        %v6452 = vadd.f32 %v5846, %v6451
        %v6453 = vpop.f32.mrb[0].mxu0
        %v6454 = vpop.f32.mrb[0].mxu0
        %v6455 = vadd.f32 %v5846, %v6454
        %v6456 = vpop.f32.mrb[0].mxu0
        %6457 = vmatprep.mubr.bf16.mxu0 %v5951
        %6458 = vmatmul.mubr.bf16.gmra.mrb[0].mxu0 %v5708
        %v6459 = vpop.f32.mrb[0].mxu0
        %v6460 = vadd.f32 %v5846, %v6459
        %v6461 = vpop.f32.mrb[0].mxu0
        %v6462 = vpop.f32.mrb[0].mxu0
        %v6463 = vadd.f32 %v5846, %v6462
        %v6464 = vpop.f32.mrb[0].mxu0
        %6465 = vmatprep.mubr.bf16.mxu0 %v5955
        %6466 = vmatmul.mubr.bf16.gmra.mrb[0].mxu0 %v5710
        %v6467 = vpop.f32.mrb[0].mxu0
        %v6468 = vadd.f32 %v5846, %v6467
        %v6469 = vpop.f32.mrb[0].mxu0
        %v6470 = vpop.f32.mrb[0].mxu0
        %v6471 = vadd.f32 %v5846, %v6470
        %v6472 = vpop.f32.mrb[0].mxu0
        %6473 = vmatprep.mubr.bf16.mxu0 %v5959
        %6474 = vmatmul.mubr.bf16.gmra.mrb[0].mxu0 %v5712
        %v6475 = vpop.f32.mrb[0].mxu0
        %v6476 = vadd.f32 %v5846, %v6475
        %v6477 = vpop.f32.mrb[0].mxu0
        %v6478 = vpop.f32.mrb[0].mxu0
        %v6479 = vadd.f32 %v5846, %v6478
        %v6480 = vpop.f32.mrb[0].mxu0
        %6481 = vmatprep.mubr.bf16.mxu0 %v5963
        %6482 = vmatmul.mubr.bf16.gmra.mrb[0].mxu0 %v5714
        %v6483 = vpop.f32.mrb[0].mxu0
        %v6484 = vadd.f32 %v5846, %v6483
        %v6485 = vpop.f32.mrb[0].mxu0
        %v6486 = vpop.f32.mrb[0].mxu0
        %v6487 = vadd.f32 %v5846, %v6486
        %v6488 = vpop.f32.mrb[0].mxu0
        %6489 = vmatprep.mubr.bf16.mxu0 %v5967
        %6490 = vmatmul.mubr.bf16.gmra.mrb[0].mxu0 %v5716
        %v6491 = vpop.f32.mrb[0].mxu0
        %v6492 = vadd.f32 %v5846, %v6491
        %v6493 = vpop.f32.mrb[0].mxu0
        %v6494 = vpop.f32.mrb[0].mxu0
        %v6495 = vadd.f32 %v5846, %v6494
        %v6496 = vpop.f32.mrb[0].mxu0
        %6497 = vmatprep.mubr.bf16.mxu0 %v5971
        %6498 = vmatmul.mubr.bf16.gmra.mrb[0].mxu0 %v5718
        %v6499 = vpop.f32.mrb[0].mxu0
        %v6500 = vadd.f32 %v5846, %v6499
        %v6501 = vpop.f32.mrb[0].mxu0
        %v6502 = vpop.f32.mrb[0].mxu0
        %v6503 = vadd.f32 %v5846, %v6502
        %v6504 = vpop.f32.mrb[0].mxu0
        %6505 = vmatprep.mubr.bf16.mxu0 %v5975
        %6506 = vmatmul.mubr.bf16.gmra.mrb[0].mxu0 %v5720
        %v6507 = vpop.f32.mrb[0].mxu0
        %v6508 = vadd.f32 %v5846, %v6507
        %v6509 = vpop.f32.mrb[0].mxu0
        %v6510 = vpop.f32.mrb[0].mxu0
        %v6511 = vadd.f32 %v5846, %v6510
        %v6512 = vpop.f32.mrb[0].mxu0
        %6513 = vmatprep.mubr.bf16.mxu0 %v5979
        %6514 = vmatmul.mubr.bf16.gmra.mrb[0].mxu0 %v5722
        %v6515 = vpop.f32.mrb[0].mxu0
        %v6516 = vadd.f32 %v5846, %v6515
        %v6517 = vpop.f32.mrb[0].mxu0
        %v6518 = vpop.f32.mrb[0].mxu0
        %v6519 = vadd.f32 %v5846, %v6518
        %v6520 = vpop.f32.mrb[0].mxu0
        %6521 = vdwg.mxu0
        %6522 = vmatprep.subr.bf16.mxu0 0
        %6523 = vmatpush1.bf16.msra.mxu0 %v6193
        %6524 = vmatprep.subr.bf16.mxu0 0
        %6525 = vmatpush1.bf16.msra.mxu0 %v6194
        %6526 = vmatprep.subr.bf16.mxu0 0
        %6527 = vmatpush1.bf16.msra.mxu0 %v6195
        %6528 = vmatprep.subr.bf16.mxu0 0
        %6529 = vmatpush1.bf16.msra.mxu0 %v6196
        %6530 = vmatprep.subr.bf16.mxu0 0
        %6531 = vmatpush1.bf16.msra.mxu0 %v6197
        %6532 = vmatprep.subr.bf16.mxu0 0
        %6533 = vmatpush1.bf16.msra.mxu0 %v6198
        %6534 = vmatprep.subr.bf16.mxu0 0
        %6535 = vmatpush1.bf16.msra.mxu0 %v6199
        %6536 = vmatprep.subr.bf16.mxu0 0
        %6537 = vmatpush1.bf16.msra.mxu0 %v6200
        %6538 = vmatprep.subr.bf16.mxu0 0
        %6539 = vmatpush1.bf16.msra.mxu0 0
        %6540 = vmatprep.subr.bf16.mxu0 0
        %6541 = vmatpush1.bf16.msra.mxu0 0
        %6542 = vmatprep.subr.bf16.mxu0 0
        %6543 = vmatpush1.bf16.msra.mxu0 0
        %6544 = vmatprep.subr.bf16.mxu0 0
        %6545 = vmatpush1.bf16.msra.mxu0 0
        %6546 = vmatprep.subr.bf16.mxu0 0
        %6547 = vmatpush1.bf16.msra.mxu0 0
        %6548 = vmatprep.subr.bf16.mxu0 0
        %6549 = vmatpush1.bf16.msra.mxu0 0
        %6550 = vmatprep.subr.bf16.mxu0 0
        %6551 = vmatpush1.bf16.msra.mxu0 0
        %6552 = vmatprep.subr.bf16.mxu0 0
        %6553 = vmatpush1.bf16.msra.mxu0 0
        %6554 = vmatprep.mubr.bf16.mxu0 0
        %6555 = vmatmul.mubr.bf16.gmra.mrb[0].mxu0 %v5853
        %v6556 = vpop.f32.mrb[0].mxu0
        %v6557 = vadd.f32 %v6260, %v6556
        %v6558 = vpop.f32.mrb[0].mxu0
        %v6559 = vpop.f32.mrb[0].mxu0
        %v6560 = vadd.f32 %v6263, %v6559
        %v6561 = vpop.f32.mrb[0].mxu0
        %6562 = vmatprep.mubr.bf16.mxu0 0
        %6563 = vmatmul.mubr.bf16.gmra.mrb[0].mxu0 %v5857
        %v6564 = vpop.f32.mrb[0].mxu0
        %v6565 = vadd.f32 %v6268, %v6564
        %v6566 = vpop.f32.mrb[0].mxu0
        %v6567 = vpop.f32.mrb[0].mxu0
        %v6568 = vadd.f32 %v6271, %v6567
        %v6569 = vpop.f32.mrb[0].mxu0
        %6570 = vmatprep.mubr.bf16.mxu0 0
        %6571 = vmatmul.mubr.bf16.gmra.mrb[0].mxu0 %v5861
        %v6572 = vpop.f32.mrb[0].mxu0
        %v6573 = vadd.f32 %v6276, %v6572
        %v6574 = vpop.f32.mrb[0].mxu0
        %v6575 = vpop.f32.mrb[0].mxu0
        %v6576 = vadd.f32 %v6279, %v6575
        %v6577 = vpop.f32.mrb[0].mxu0
        %6578 = vmatprep.mubr.bf16.mxu0 0
        %6579 = vmatmul.mubr.bf16.gmra.mrb[0].mxu0 %v5865
        %v6580 = vpop.f32.mrb[0].mxu0
        %v6581 = vadd.f32 %v6284, %v6580
        %v6582 = vpop.f32.mrb[0].mxu0
        %v6583 = vpop.f32.mrb[0].mxu0
        %v6584 = vadd.f32 %v6287, %v6583
        %v6585 = vpop.f32.mrb[0].mxu0
        %6586 = vmatprep.mubr.bf16.mxu0 0
        %6587 = vmatmul.mubr.bf16.gmra.mrb[0].mxu0 %v5869
        %v6588 = vpop.f32.mrb[0].mxu0
        %v6589 = vadd.f32 %v6292, %v6588
        %v6590 = vpop.f32.mrb[0].mxu0
        %v6591 = vpop.f32.mrb[0].mxu0
        %v6592 = vadd.f32 %v6295, %v6591
        %v6593 = vpop.f32.mrb[0].mxu0
        %6594 = vmatprep.mubr.bf16.mxu0 0
        %6595 = vmatmul.mubr.bf16.gmra.mrb[0].mxu0 %v5873
        %v6596 = vpop.f32.mrb[0].mxu0
        %v6597 = vadd.f32 %v6300, %v6596
        %v6598 = vpop.f32.mrb[0].mxu0
        %v6599 = vpop.f32.mrb[0].mxu0
        %v6600 = vadd.f32 %v6303, %v6599
        %v6601 = vpop.f32.mrb[0].mxu0
        %6602 = vmatprep.mubr.bf16.mxu0 0
        %6603 = vmatmul.mubr.bf16.gmra.mrb[0].mxu0 %v5877
        %v6604 = vpop.f32.mrb[0].mxu0
        %v6605 = vadd.f32 %v6308, %v6604
        %v6606 = vpop.f32.mrb[0].mxu0
        %v6607 = vpop.f32.mrb[0].mxu0
        %v6608 = vadd.f32 %v6311, %v6607
        %v6609 = vpop.f32.mrb[0].mxu0
        %6610 = vmatprep.mubr.bf16.mxu0 0
        %6611 = vmatmul.mubr.bf16.gmra.mrb[0].mxu0 %v5881
        %v6612 = vpop.f32.mrb[0].mxu0
        %v6613 = vadd.f32 %v6316, %v6612
        %v6614 = vpop.f32.mrb[0].mxu0
        %v6615 = vpop.f32.mrb[0].mxu0
        %v6616 = vadd.f32 %v6319, %v6615
        %v6617 = vpop.f32.mrb[0].mxu0
        %6618 = vmatprep.mubr.bf16.mxu0 0
        %6619 = vmatmul.mubr.bf16.gmra.mrb[0].mxu0 %v5885
        %v6620 = vpop.f32.mrb[0].mxu0
        %v6621 = vadd.f32 %v6324, %v6620
        %v6622 = vpop.f32.mrb[0].mxu0
        %v6623 = vpop.f32.mrb[0].mxu0
        %v6624 = vadd.f32 %v6327, %v6623
        %v6625 = vpop.f32.mrb[0].mxu0
        %6626 = vmatprep.mubr.bf16.mxu0 0
        %6627 = vmatmul.mubr.bf16.gmra.mrb[0].mxu0 %v5889
        %v6628 = vpop.f32.mrb[0].mxu0
        %v6629 = vadd.f32 %v6332, %v6628
        %v6630 = vpop.f32.mrb[0].mxu0
        %v6631 = vpop.f32.mrb[0].mxu0
        %v6632 = vadd.f32 %v6335, %v6631
        %v6633 = vpop.f32.mrb[0].mxu0
        %6634 = vmatprep.mubr.bf16.mxu0 0
        %6635 = vmatmul.mubr.bf16.gmra.mrb[0].mxu0 %v5893
        %v6636 = vpop.f32.mrb[0].mxu0
        %v6637 = vadd.f32 %v6340, %v6636
        %v6638 = vpop.f32.mrb[0].mxu0
        %v6639 = vpop.f32.mrb[0].mxu0
        %v6640 = vadd.f32 %v6343, %v6639
        %v6641 = vpop.f32.mrb[0].mxu0
        %6642 = vmatprep.mubr.bf16.mxu0 0
        %6643 = vmatmul.mubr.bf16.gmra.mrb[0].mxu0 %v5897
        %v6644 = vpop.f32.mrb[0].mxu0
        %v6645 = vadd.f32 %v6348, %v6644
        %v6646 = vpop.f32.mrb[0].mxu0
        %v6647 = vpop.f32.mrb[0].mxu0
        %v6648 = vadd.f32 %v6351, %v6647
        %v6649 = vpop.f32.mrb[0].mxu0
        %6650 = vmatprep.mubr.bf16.mxu0 0
        %6651 = vmatmul.mubr.bf16.gmra.mrb[0].mxu0 %v5901
        %v6652 = vpop.f32.mrb[0].mxu0
        %v6653 = vadd.f32 %v6356, %v6652
        %v6654 = vpop.f32.mrb[0].mxu0
        %v6655 = vpop.f32.mrb[0].mxu0
        %v6656 = vadd.f32 %v6359, %v6655
        %v6657 = vpop.f32.mrb[0].mxu0
        %6658 = vmatprep.mubr.bf16.mxu0 0
        %6659 = vmatmul.mubr.bf16.gmra.mrb[0].mxu0 %v5905
        %v6660 = vpop.f32.mrb[0].mxu0
        %v6661 = vadd.f32 %v6364, %v6660
        %v6662 = vpop.f32.mrb[0].mxu0
        %v6663 = vpop.f32.mrb[0].mxu0
        %v6664 = vadd.f32 %v6367, %v6663
        %v6665 = vpop.f32.mrb[0].mxu0
        %6666 = vmatprep.mubr.bf16.mxu0 0
        %6667 = vmatmul.mubr.bf16.gmra.mrb[0].mxu0 %v5909
        %v6668 = vpop.f32.mrb[0].mxu0
        %v6669 = vadd.f32 %v6372, %v6668
        %v6670 = vpop.f32.mrb[0].mxu0
        %v6671 = vpop.f32.mrb[0].mxu0
        %v6672 = vadd.f32 %v6375, %v6671
        %v6673 = vpop.f32.mrb[0].mxu0
        %6674 = vmatprep.mubr.bf16.mxu0 0
        %6675 = vmatmul.mubr.bf16.gmra.mrb[0].mxu0 %v5913
        %v6676 = vpop.f32.mrb[0].mxu0
        %v6677 = vadd.f32 %v6380, %v6676
        %v6678 = vpop.f32.mrb[0].mxu0
        %v6679 = vpop.f32.mrb[0].mxu0
        %v6680 = vadd.f32 %v6383, %v6679
        %v6681 = vpop.f32.mrb[0].mxu0
        %6682 = vmatprep.mubr.bf16.mxu0 0
        %6683 = vmatmul.mubr.bf16.gmra.mrb[0].mxu0 %v5917
        %v6684 = vpop.f32.mrb[0].mxu0
        %v6685 = vadd.f32 %v6388, %v6684
        %v6686 = vpop.f32.mrb[0].mxu0
        %v6687 = vpop.f32.mrb[0].mxu0
        %v6688 = vadd.f32 %v6391, %v6687
        %v6689 = vpop.f32.mrb[0].mxu0
        %6690 = vmatprep.mubr.bf16.mxu0 0
        %6691 = vmatmul.mubr.bf16.gmra.mrb[0].mxu0 %v5921
        %v6692 = vpop.f32.mrb[0].mxu0
        %v6693 = vadd.f32 %v6396, %v6692
        %v6694 = vpop.f32.mrb[0].mxu0
        %v6695 = vpop.f32.mrb[0].mxu0
        %v6696 = vadd.f32 %v6399, %v6695
        %v6697 = vpop.f32.mrb[0].mxu0
        %6698 = vmatprep.mubr.bf16.mxu0 0
        %6699 = vmatmul.mubr.bf16.gmra.mrb[0].mxu0 %v5925
        %v6700 = vpop.f32.mrb[0].mxu0
        %v6701 = vadd.f32 %v6404, %v6700
        %v6702 = vpop.f32.mrb[0].mxu0
        %v6703 = vpop.f32.mrb[0].mxu0
        %v6704 = vadd.f32 %v6407, %v6703
        %v6705 = vpop.f32.mrb[0].mxu0
        %6706 = vmatprep.mubr.bf16.mxu0 0
        %6707 = vmatmul.mubr.bf16.gmra.mrb[0].mxu0 %v5929
        %v6708 = vpop.f32.mrb[0].mxu0
        %v6709 = vadd.f32 %v6412, %v6708
        %v6710 = vpop.f32.mrb[0].mxu0
        %v6711 = vpop.f32.mrb[0].mxu0
        %v6712 = vadd.f32 %v6415, %v6711
        %v6713 = vpop.f32.mrb[0].mxu0
        %6714 = vmatprep.mubr.bf16.mxu0 0
        %6715 = vmatmul.mubr.bf16.gmra.mrb[0].mxu0 %v5933
        %v6716 = vpop.f32.mrb[0].mxu0
        %v6717 = vadd.f32 %v6420, %v6716
        %v6718 = vpop.f32.mrb[0].mxu0
        %v6719 = vpop.f32.mrb[0].mxu0
        %v6720 = vadd.f32 %v6423, %v6719
        %v6721 = vpop.f32.mrb[0].mxu0
        %6722 = vmatprep.mubr.bf16.mxu0 0
        %6723 = vmatmul.mubr.bf16.gmra.mrb[0].mxu0 %v5937
        %v6724 = vpop.f32.mrb[0].mxu0
        %v6725 = vadd.f32 %v6428, %v6724
        %v6726 = vpop.f32.mrb[0].mxu0
        %v6727 = vpop.f32.mrb[0].mxu0
        %v6728 = vadd.f32 %v6431, %v6727
        %v6729 = vpop.f32.mrb[0].mxu0
        %6730 = vmatprep.mubr.bf16.mxu0 0
        %6731 = vmatmul.mubr.bf16.gmra.mrb[0].mxu0 %v5941
        %v6732 = vpop.f32.mrb[0].mxu0
        %v6733 = vadd.f32 %v6436, %v6732
        %v6734 = vpop.f32.mrb[0].mxu0
        %v6735 = vpop.f32.mrb[0].mxu0
        %v6736 = vadd.f32 %v6439, %v6735
        %v6737 = vpop.f32.mrb[0].mxu0
        %6738 = vmatprep.mubr.bf16.mxu0 0
        %6739 = vmatmul.mubr.bf16.gmra.mrb[0].mxu0 %v5945
        %v6740 = vpop.f32.mrb[0].mxu0
        %v6741 = vadd.f32 %v6444, %v6740
        %v6742 = vpop.f32.mrb[0].mxu0
        %v6743 = vpop.f32.mrb[0].mxu0
        %v6744 = vadd.f32 %v6447, %v6743
        %v6745 = vpop.f32.mrb[0].mxu0
        %6746 = vmatprep.mubr.bf16.mxu0 0
        %6747 = vmatmul.mubr.bf16.gmra.mrb[0].mxu0 %v5949
        %v6748 = vpop.f32.mrb[0].mxu0
        %v6749 = vadd.f32 %v6452, %v6748
        %v6750 = vpop.f32.mrb[0].mxu0
        %v6751 = vpop.f32.mrb[0].mxu0
        %v6752 = vadd.f32 %v6455, %v6751
        %v6753 = vpop.f32.mrb[0].mxu0
        %6754 = vmatprep.mubr.bf16.mxu0 0
        %6755 = vmatmul.mubr.bf16.gmra.mrb[0].mxu0 %v5953
        %v6756 = vpop.f32.mrb[0].mxu0
        %v6757 = vadd.f32 %v6460, %v6756
        %v6758 = vpop.f32.mrb[0].mxu0
        %v6759 = vpop.f32.mrb[0].mxu0
        %v6760 = vadd.f32 %v6463, %v6759
        %v6761 = vpop.f32.mrb[0].mxu0
        %6762 = vmatprep.mubr.bf16.mxu0 0
        %6763 = vmatmul.mubr.bf16.gmra.mrb[0].mxu0 %v5957
        %v6764 = vpop.f32.mrb[0].mxu0
        %v6765 = vadd.f32 %v6468, %v6764
        %v6766 = vpop.f32.mrb[0].mxu0
        %v6767 = vpop.f32.mrb[0].mxu0
        %v6768 = vadd.f32 %v6471, %v6767
        %v6769 = vpop.f32.mrb[0].mxu0
        %6770 = vmatprep.mubr.bf16.mxu0 0
        %6771 = vmatmul.mubr.bf16.gmra.mrb[0].mxu0 %v5961
        %v6772 = vpop.f32.mrb[0].mxu0
        %v6773 = vadd.f32 %v6476, %v6772
        %v6774 = vpop.f32.mrb[0].mxu0
        %v6775 = vpop.f32.mrb[0].mxu0
        %v6776 = vadd.f32 %v6479, %v6775
        %v6777 = vpop.f32.mrb[0].mxu0
        %6778 = vmatprep.mubr.bf16.mxu0 0
        %6779 = vmatmul.mubr.bf16.gmra.mrb[0].mxu0 %v5965
        %v6780 = vpop.f32.mrb[0].mxu0
        %v6781 = vadd.f32 %v6484, %v6780
        %v6782 = vpop.f32.mrb[0].mxu0
        %v6783 = vpop.f32.mrb[0].mxu0
        %v6784 = vadd.f32 %v6487, %v6783
        %v6785 = vpop.f32.mrb[0].mxu0
        %6786 = vmatprep.mubr.bf16.mxu0 0
        %6787 = vmatmul.mubr.bf16.gmra.mrb[0].mxu0 %v5969
        %v6788 = vpop.f32.mrb[0].mxu0
        %v6789 = vadd.f32 %v6492, %v6788
        %v6790 = vpop.f32.mrb[0].mxu0
        %v6791 = vpop.f32.mrb[0].mxu0
        %v6792 = vadd.f32 %v6495, %v6791
        %v6793 = vpop.f32.mrb[0].mxu0
        %6794 = vmatprep.mubr.bf16.mxu0 0
        %6795 = vmatmul.mubr.bf16.gmra.mrb[0].mxu0 %v5973
        %v6796 = vpop.f32.mrb[0].mxu0
        %v6797 = vadd.f32 %v6500, %v6796
        %v6798 = vpop.f32.mrb[0].mxu0
        %v6799 = vpop.f32.mrb[0].mxu0
        %v6800 = vadd.f32 %v6503, %v6799
        %v6801 = vpop.f32.mrb[0].mxu0
        %6802 = vmatprep.mubr.bf16.mxu0 0
        %6803 = vmatmul.mubr.bf16.gmra.mrb[0].mxu0 %v5977
        %v6804 = vpop.f32.mrb[0].mxu0
        %v6805 = vadd.f32 %v6508, %v6804
        %v6806 = vpop.f32.mrb[0].mxu0
        %v6807 = vpop.f32.mrb[0].mxu0
        %v6808 = vadd.f32 %v6511, %v6807
        %v6809 = vpop.f32.mrb[0].mxu0
        %6810 = vmatprep.mubr.bf16.mxu0 0
        %6811 = vmatmul.mubr.bf16.gmra.mrb[0].mxu0 %v5981
        %v6812 = vpop.f32.mrb[0].mxu0
        %v6813 = vadd.f32 %v6516, %v6812
        %v6814 = vpop.f32.mrb[0].mxu0
        %v6815 = vpop.f32.mrb[0].mxu0
        %v6816 = vadd.f32 %v6519, %v6815
        %v6817 = vpop.f32.mrb[0].mxu0
        %6818 = vdwg.mxu0
        %s6819 = sld [smem:[#allocation2 + $0x2]]
        %vm6820 = vcmp.gt.f32.partialorder %v6557, 0.0
        %vm6821 = vcmp.gt.f32.partialorder %v6560, 0.0
        %vm6822 = vcmp.gt.f32.partialorder %v6565, 0.0
        %vm6823 = vcmp.gt.f32.partialorder %v6568, 0.0
        %vm6824 = vcmp.gt.f32.partialorder %v6573, 0.0
        %vm6825 = vcmp.gt.f32.partialorder %v6576, 0.0
        %vm6826 = vcmp.gt.f32.partialorder %v6581, 0.0
        %vm6827 = vcmp.gt.f32.partialorder %v6584, 0.0
        %vm6828 = vcmp.gt.f32.partialorder %v6589, 0.0
        %vm6829 = vcmp.gt.f32.partialorder %v6592, 0.0
        %vm6830 = vcmp.gt.f32.partialorder %v6597, 0.0
        %vm6831 = vcmp.gt.f32.partialorder %v6600, 0.0
        %vm6832 = vcmp.gt.f32.partialorder %v6605, 0.0
        %vm6833 = vcmp.gt.f32.partialorder %v6608, 0.0
        %vm6834 = vcmp.gt.f32.partialorder %v6613, 0.0
        %vm6835 = vcmp.gt.f32.partialorder %v6616, 0.0
        %vm6836 = vcmp.gt.f32.partialorder %v6621, 0.0
        %vm6837 = vcmp.gt.f32.partialorder %v6624, 0.0
        %vm6838 = vcmp.gt.f32.partialorder %v6629, 0.0
        %vm6839 = vcmp.gt.f32.partialorder %v6632, 0.0
        %vm6840 = vcmp.gt.f32.partialorder %v6637, 0.0
        %vm6841 = vcmp.gt.f32.partialorder %v6640, 0.0
        %vm6842 = vcmp.gt.f32.partialorder %v6645, 0.0
        %vm6843 = vcmp.gt.f32.partialorder %v6648, 0.0
        %vm6844 = vcmp.gt.f32.partialorder %v6653, 0.0
        %vm6845 = vcmp.gt.f32.partialorder %v6656, 0.0
        %vm6846 = vcmp.gt.f32.partialorder %v6661, 0.0
        %vm6847 = vcmp.gt.f32.partialorder %v6664, 0.0
        %vm6848 = vcmp.gt.f32.partialorder %v6669, 0.0
        %vm6849 = vcmp.gt.f32.partialorder %v6672, 0.0
        %vm6850 = vcmp.gt.f32.partialorder %v6677, 0.0
        %vm6851 = vcmp.gt.f32.partialorder %v6680, 0.0
        %vm6852 = vcmp.gt.f32.partialorder %v6685, 0.0
        %vm6853 = vcmp.gt.f32.partialorder %v6688, 0.0
        %vm6854 = vcmp.gt.f32.partialorder %v6693, 0.0
        %vm6855 = vcmp.gt.f32.partialorder %v6696, 0.0
        %vm6856 = vcmp.gt.f32.partialorder %v6701, 0.0
        %vm6857 = vcmp.gt.f32.partialorder %v6704, 0.0
        %vm6858 = vcmp.gt.f32.partialorder %v6709, 0.0
        %vm6859 = vcmp.gt.f32.partialorder %v6712, 0.0
        %vm6860 = vcmp.gt.f32.partialorder %v6717, 0.0
        %vm6861 = vcmp.gt.f32.partialorder %v6720, 0.0
        %vm6862 = vcmp.gt.f32.partialorder %v6725, 0.0
        %vm6863 = vcmp.gt.f32.partialorder %v6728, 0.0
        %vm6864 = vcmp.gt.f32.partialorder %v6733, 0.0
        %vm6865 = vcmp.gt.f32.partialorder %v6736, 0.0
        %vm6866 = vcmp.gt.f32.partialorder %v6741, 0.0
        %vm6867 = vcmp.gt.f32.partialorder %v6744, 0.0
        %vm6868 = vcmp.gt.f32.partialorder %v6749, 0.0
        %vm6869 = vcmp.gt.f32.partialorder %v6752, 0.0
        %vm6870 = vcmp.gt.f32.partialorder %v6757, 0.0
        %vm6871 = vcmp.gt.f32.partialorder %v6760, 0.0
        %vm6872 = vcmp.gt.f32.partialorder %v6765, 0.0
        %vm6873 = vcmp.gt.f32.partialorder %v6768, 0.0
        %vm6874 = vcmp.gt.f32.partialorder %v6773, 0.0
        %vm6875 = vcmp.gt.f32.partialorder %v6776, 0.0
        %vm6876 = vcmp.gt.f32.partialorder %v6781, 0.0
        %vm6877 = vcmp.gt.f32.partialorder %v6784, 0.0
        %vm6878 = vcmp.gt.f32.partialorder %v6789, 0.0
        %vm6879 = vcmp.gt.f32.partialorder %v6792, 0.0
        %vm6880 = vcmp.gt.f32.partialorder %v6797, 0.0
        %vm6881 = vcmp.gt.f32.partialorder %v6800, 0.0
        %vm6882 = vcmp.gt.f32.partialorder %v6805, 0.0
        %vm6883 = vcmp.gt.f32.partialorder %v6808, 0.0
        %vm6884 = vcmp.gt.f32.partialorder %v6813, 0.0
        %vm6885 = vcmp.gt.f32.partialorder %v6816, 0.0
        %v6886 = vstv %s6819
        %v6887 = vmul.f32 %v6886, %v6557
        %v6888 = vmul.f32 %v6886, %v6560
        %v6889 = vmul.f32 %v6886, %v6565
        %v6890 = vmul.f32 %v6886, %v6568
        %v6891 = vmul.f32 %v6886, %v6573
        %v6892 = vmul.f32 %v6886, %v6576
        %v6893 = vmul.f32 %v6886, %v6581
        %v6894 = vmul.f32 %v6886, %v6584
        %v6895 = vmul.f32 %v6886, %v6589
        %v6896 = vmul.f32 %v6886, %v6592
        %v6897 = vmul.f32 %v6886, %v6597
        %v6898 = vmul.f32 %v6886, %v6600
        %v6899 = vmul.f32 %v6886, %v6605
        %v6900 = vmul.f32 %v6886, %v6608
        %v6901 = vmul.f32 %v6886, %v6613
        %v6902 = vmul.f32 %v6886, %v6616
        %v6903 = vmul.f32 %v6886, %v6621
        %v6904 = vmul.f32 %v6886, %v6624
        %v6905 = vmul.f32 %v6886, %v6629
        %v6906 = vmul.f32 %v6886, %v6632
        %v6907 = vmul.f32 %v6886, %v6637
        %v6908 = vmul.f32 %v6886, %v6640
        %v6909 = vmul.f32 %v6886, %v6645
        %v6910 = vmul.f32 %v6886, %v6648
        %v6911 = vmul.f32 %v6886, %v6653
        %v6912 = vmul.f32 %v6886, %v6656
        %v6913 = vmul.f32 %v6886, %v6661
        %v6914 = vmul.f32 %v6886, %v6664
        %v6915 = vmul.f32 %v6886, %v6669
        %v6916 = vmul.f32 %v6886, %v6672
        %v6917 = vmul.f32 %v6886, %v6677
        %v6918 = vmul.f32 %v6886, %v6680
        %v6919 = vmul.f32 %v6886, %v6685
        %v6920 = vmul.f32 %v6886, %v6688
        %v6921 = vmul.f32 %v6886, %v6693
        %v6922 = vmul.f32 %v6886, %v6696
        %v6923 = vmul.f32 %v6886, %v6701
        %v6924 = vmul.f32 %v6886, %v6704
        %v6925 = vmul.f32 %v6886, %v6709
        %v6926 = vmul.f32 %v6886, %v6712
        %v6927 = vmul.f32 %v6886, %v6717
        %v6928 = vmul.f32 %v6886, %v6720
        %v6929 = vmul.f32 %v6886, %v6725
        %v6930 = vmul.f32 %v6886, %v6728
        %v6931 = vmul.f32 %v6886, %v6733
        %v6932 = vmul.f32 %v6886, %v6736
        %v6933 = vmul.f32 %v6886, %v6741
        %v6934 = vmul.f32 %v6886, %v6744
        %v6935 = vmul.f32 %v6886, %v6749
        %v6936 = vmul.f32 %v6886, %v6752
        %v6937 = vmul.f32 %v6886, %v6757
        %v6938 = vmul.f32 %v6886, %v6760
        %v6939 = vmul.f32 %v6886, %v6765
        %v6940 = vmul.f32 %v6886, %v6768
        %v6941 = vmul.f32 %v6886, %v6773
        %v6942 = vmul.f32 %v6886, %v6776
        %v6943 = vmul.f32 %v6886, %v6781
        %v6944 = vmul.f32 %v6886, %v6784
        %v6945 = vmul.f32 %v6886, %v6789
        %v6946 = vmul.f32 %v6886, %v6792
        %v6947 = vmul.f32 %v6886, %v6797
        %v6948 = vmul.f32 %v6886, %v6800
        %v6949 = vmul.f32 %v6886, %v6805
        %v6950 = vmul.f32 %v6886, %v6808
        %v6951 = vmul.f32 %v6886, %v6813
        %v6952 = vmul.f32 %v6886, %v6816
        %v6953 = vsel %vm6820, %v6557, %v6887
        %v6954 = vsel %vm6821, %v6560, %v6888
        %v6955 = vsel %vm6822, %v6565, %v6889
        %v6956 = vsel %vm6823, %v6568, %v6890
        %v6957 = vsel %vm6824, %v6573, %v6891
        %v6958 = vsel %vm6825, %v6576, %v6892
        %v6959 = vsel %vm6826, %v6581, %v6893
        %v6960 = vsel %vm6827, %v6584, %v6894
        %v6961 = vsel %vm6828, %v6589, %v6895
        %v6962 = vsel %vm6829, %v6592, %v6896
        %v6963 = vsel %vm6830, %v6597, %v6897
        %v6964 = vsel %vm6831, %v6600, %v6898
        %v6965 = vsel %vm6832, %v6605, %v6899
        %v6966 = vsel %vm6833, %v6608, %v6900
        %v6967 = vsel %vm6834, %v6613, %v6901
        %v6968 = vsel %vm6835, %v6616, %v6902
        %v6969 = vsel %vm6836, %v6621, %v6903
        %v6970 = vsel %vm6837, %v6624, %v6904
        %v6971 = vsel %vm6838, %v6629, %v6905
        %v6972 = vsel %vm6839, %v6632, %v6906
        %v6973 = vsel %vm6840, %v6637, %v6907
        %v6974 = vsel %vm6841, %v6640, %v6908
        %v6975 = vsel %vm6842, %v6645, %v6909
        %v6976 = vsel %vm6843, %v6648, %v6910
        %v6977 = vsel %vm6844, %v6653, %v6911
        %v6978 = vsel %vm6845, %v6656, %v6912
        %v6979 = vsel %vm6846, %v6661, %v6913
        %v6980 = vsel %vm6847, %v6664, %v6914
        %v6981 = vsel %vm6848, %v6669, %v6915
        %v6982 = vsel %vm6849, %v6672, %v6916
        %v6983 = vsel %vm6850, %v6677, %v6917
        %v6984 = vsel %vm6851, %v6680, %v6918
        %v6985 = vsel %vm6852, %v6685, %v6919
        %v6986 = vsel %vm6853, %v6688, %v6920
        %v6987 = vsel %vm6854, %v6693, %v6921
        %v6988 = vsel %vm6855, %v6696, %v6922
        %v6989 = vsel %vm6856, %v6701, %v6923
        %v6990 = vsel %vm6857, %v6704, %v6924
        %v6991 = vsel %vm6858, %v6709, %v6925
        %v6992 = vsel %vm6859, %v6712, %v6926
        %v6993 = vsel %vm6860, %v6717, %v6927
        %v6994 = vsel %vm6861, %v6720, %v6928
        %v6995 = vsel %vm6862, %v6725, %v6929
        %v6996 = vsel %vm6863, %v6728, %v6930
        %v6997 = vsel %vm6864, %v6733, %v6931
        %v6998 = vsel %vm6865, %v6736, %v6932
        %v6999 = vsel %vm6866, %v6741, %v6933
        %v7000 = vsel %vm6867, %v6744, %v6934
        %v7001 = vsel %vm6868, %v6749, %v6935
        %v7002 = vsel %vm6869, %v6752, %v6936
        %v7003 = vsel %vm6870, %v6757, %v6937
        %v7004 = vsel %vm6871, %v6760, %v6938
        %v7005 = vsel %vm6872, %v6765, %v6939
        %v7006 = vsel %vm6873, %v6768, %v6940
        %v7007 = vsel %vm6874, %v6773, %v6941
        %v7008 = vsel %vm6875, %v6776, %v6942
        %v7009 = vsel %vm6876, %v6781, %v6943
        %v7010 = vsel %vm6877, %v6784, %v6944
        %v7011 = vsel %vm6878, %v6789, %v6945
        %v7012 = vsel %vm6879, %v6792, %v6946
        %v7013 = vsel %vm6880, %v6797, %v6947
        %v7014 = vsel %vm6881, %v6800, %v6948
        %v7015 = vsel %vm6882, %v6805, %v6949
        %v7016 = vsel %vm6883, %v6808, %v6950
        %v7017 = vsel %vm6884, %v6813, %v6951
        %v7018 = vsel %vm6885, %v6816, %v6952
        %v7019 = vsel %vm1258, %v6953, 0.0
        %v7020 = vsel %vm1259, %v6954, 0.0
        %v7021 = vsel %vm1260, %v6955, 0.0
        %v7022 = vsel %vm1261, %v6956, 0.0
        %v7023 = vsel %vm1262, %v6957, 0.0
        %v7024 = vsel %vm1263, %v6958, 0.0
        %v7025 = vsel %vm1264, %v6959, 0.0
        %v7026 = vsel %vm1265, %v6960, 0.0
        %v7027 = vsel %vm1266, %v6961, 0.0
        %v7028 = vsel %vm1267, %v6962, 0.0
        %v7029 = vsel %vm1268, %v6963, 0.0
        %v7030 = vsel %vm1269, %v6964, 0.0
        %v7031 = vsel %vm1270, %v6965, 0.0
        %v7032 = vsel %vm1271, %v6966, 0.0
        %v7033 = vsel %vm1272, %v6967, 0.0
        %v7034 = vsel %vm1273, %v6968, 0.0
        %v7035 = vsel %vm1274, %v6969, 0.0
        %v7036 = vsel %vm1275, %v6970, 0.0
        %v7037 = vsel %vm1276, %v6971, 0.0
        %v7038 = vsel %vm1277, %v6972, 0.0
        %v7039 = vsel %vm1278, %v6973, 0.0
        %v7040 = vsel %vm1279, %v6974, 0.0
        %v7041 = vsel %vm1280, %v6975, 0.0
        %v7042 = vsel %vm1281, %v6976, 0.0
        %v7043 = vsel %vm1282, %v6977, 0.0
        %v7044 = vsel %vm1283, %v6978, 0.0
        %v7045 = vsel %vm1284, %v6979, 0.0
        %v7046 = vsel %vm1285, %v6980, 0.0
        %v7047 = vsel %vm1286, %v6981, 0.0
        %v7048 = vsel %vm1287, %v6982, 0.0
        %v7049 = vsel %vm1288, %v6983, 0.0
        %v7050 = vsel %vm1289, %v6984, 0.0
        %v7051 = vsel %vm1290, %v6985, 0.0
        %v7052 = vsel %vm1291, %v6986, 0.0
        %v7053 = vsel %vm1292, %v6987, 0.0
        %v7054 = vsel %vm1293, %v6988, 0.0
        %v7055 = vsel %vm1294, %v6989, 0.0
        %v7056 = vsel %vm1295, %v6990, 0.0
        %v7057 = vsel %vm1296, %v6991, 0.0
        %v7058 = vsel %vm1297, %v6992, 0.0
        %v7059 = vsel %vm1298, %v6993, 0.0
        %v7060 = vsel %vm1299, %v6994, 0.0
        %v7061 = vsel %vm1300, %v6995, 0.0
        %v7062 = vsel %vm1301, %v6996, 0.0
        %v7063 = vsel %vm1302, %v6997, 0.0
        %v7064 = vsel %vm1303, %v6998, 0.0
        %v7065 = vsel %vm1304, %v6999, 0.0
        %v7066 = vsel %vm1305, %v7000, 0.0
        %v7067 = vsel %vm1306, %v7001, 0.0
        %v7068 = vsel %vm1307, %v7002, 0.0
        %v7069 = vsel %vm1308, %v7003, 0.0
        %v7070 = vsel %vm1309, %v7004, 0.0
        %v7071 = vsel %vm1310, %v7005, 0.0
        %v7072 = vsel %vm1311, %v7006, 0.0
        %v7073 = vsel %vm1312, %v7007, 0.0
        %v7074 = vsel %vm1313, %v7008, 0.0
        %v7075 = vsel %vm1314, %v7009, 0.0
        %v7076 = vsel %vm1315, %v7010, 0.0
        %v7077 = vsel %vm1316, %v7011, 0.0
        %v7078 = vsel %vm1317, %v7012, 0.0
        %v7079 = vsel %vm1318, %v7013, 0.0
        %v7080 = vsel %vm1319, %v7014, 0.0
        %v7081 = vsel %vm1320, %v7015, 0.0
        %v7082 = vsel %vm1321, %v7016, 0.0
        %v7083 = vsel %vm1322, %v7017, 0.0
        %v7084 = vsel %vm1323, %v7018, 0.0
        %v7085 = vpack.c.bf16 %v7020, %v7019
        %v7086 = vpack.c.bf16 %v7022, %v7021
        %v7087 = vpack.c.bf16 %v7024, %v7023
        %v7088 = vpack.c.bf16 %v7026, %v7025
        %v7089 = vpack.c.bf16 %v7028, %v7027
        %v7090 = vpack.c.bf16 %v7030, %v7029
        %v7091 = vpack.c.bf16 %v7032, %v7031
        %v7092 = vpack.c.bf16 %v7034, %v7033
        %v7093 = vpack.c.bf16 %v7036, %v7035
        %v7094 = vpack.c.bf16 %v7038, %v7037
        %v7095 = vpack.c.bf16 %v7040, %v7039
        %v7096 = vpack.c.bf16 %v7042, %v7041
        %v7097 = vpack.c.bf16 %v7044, %v7043
        %v7098 = vpack.c.bf16 %v7046, %v7045
        %v7099 = vpack.c.bf16 %v7048, %v7047
        %v7100 = vpack.c.bf16 %v7050, %v7049
        %v7101 = vpack.c.bf16 %v7052, %v7051
        %v7102 = vpack.c.bf16 %v7054, %v7053
        %v7103 = vpack.c.bf16 %v7056, %v7055
        %v7104 = vpack.c.bf16 %v7058, %v7057
        %v7105 = vpack.c.bf16 %v7060, %v7059
        %v7106 = vpack.c.bf16 %v7062, %v7061
        %v7107 = vpack.c.bf16 %v7064, %v7063
        %v7108 = vpack.c.bf16 %v7066, %v7065
        %v7109 = vpack.c.bf16 %v7068, %v7067
        %v7110 = vpack.c.bf16 %v7070, %v7069
        %v7111 = vpack.c.bf16 %v7072, %v7071
        %v7112 = vpack.c.bf16 %v7074, %v7073
        %v7113 = vpack.c.bf16 %v7076, %v7075
        %v7114 = vpack.c.bf16 %v7078, %v7077
        %v7115 = vpack.c.bf16 %v7080, %v7079
        %v7116 = vpack.c.bf16 %v7082, %v7081
        %v7117 = vpack.c.bf16 %v7084, %v7083
        %v7151 = vrot.slane %v7085, 4
        %v7152 = vrot.slane %v7086, 4
        %v7153 = vsel %vm5723, %v7151, %v7152
        %v7154 = vrot.slane %v7087, 4
        %v7155 = vsel %vm5723, %v7152, %v7154
        %v7156 = vrot.slane %v7088, 4
        %v7157 = vsel %vm5723, %v7154, %v7156
        %v7158 = vrot.slane %v7089, 4
        %v7159 = vsel %vm5723, %v7156, %v7158
        %v7160 = vrot.slane %v7090, 4
        %v7161 = vsel %vm5723, %v7158, %v7160
        %v7162 = vrot.slane %v7091, 4
        %v7163 = vsel %vm5723, %v7160, %v7162
        %v7164 = vrot.slane %v7092, 4
        %v7165 = vsel %vm5723, %v7162, %v7164
        %v7166 = vrot.slane %v7093, 4
        %v7167 = vsel %vm5723, %v7164, %v7166
        %v7168 = vrot.slane %v7094, 4
        %v7169 = vsel %vm5723, %v7166, %v7168
        %v7170 = vrot.slane %v7095, 4
        %v7171 = vsel %vm5723, %v7168, %v7170
        %v7172 = vrot.slane %v7096, 4
        %v7173 = vsel %vm5723, %v7170, %v7172
        %v7174 = vrot.slane %v7097, 4
        %v7175 = vsel %vm5723, %v7172, %v7174
        %v7176 = vrot.slane %v7098, 4
        %v7177 = vsel %vm5723, %v7174, %v7176
        %v7178 = vrot.slane %v7099, 4
        %v7179 = vsel %vm5723, %v7176, %v7178
        %v7180 = vrot.slane %v7100, 4
        %v7181 = vsel %vm5723, %v7178, %v7180
        %v7182 = vrot.slane %v7101, 4
        %v7183 = vsel %vm5723, %v7180, %v7182
        %v7184 = vrot.slane %v7102, 4
        %v7185 = vsel %vm5723, %v7182, %v7184
        %v7186 = vrot.slane %v7103, 4
        %v7187 = vsel %vm5723, %v7184, %v7186
        %v7188 = vrot.slane %v7104, 4
        %v7189 = vsel %vm5723, %v7186, %v7188
        %v7190 = vrot.slane %v7105, 4
        %v7191 = vsel %vm5723, %v7188, %v7190
        %v7192 = vrot.slane %v7106, 4
        %v7193 = vsel %vm5723, %v7190, %v7192
        %v7194 = vrot.slane %v7107, 4
        %v7195 = vsel %vm5723, %v7192, %v7194
        %v7196 = vrot.slane %v7108, 4
        %v7197 = vsel %vm5723, %v7194, %v7196
        %v7198 = vrot.slane %v7109, 4
        %v7199 = vsel %vm5723, %v7196, %v7198
        %v7200 = vrot.slane %v7110, 4
        %v7201 = vsel %vm5723, %v7198, %v7200
        %v7202 = vrot.slane %v7111, 4
        %v7203 = vsel %vm5723, %v7200, %v7202
        %v7204 = vrot.slane %v7112, 4
        %v7205 = vsel %vm5723, %v7202, %v7204
        %v7206 = vrot.slane %v7113, 4
        %v7207 = vsel %vm5723, %v7204, %v7206
        %v7208 = vrot.slane %v7114, 4
        %v7209 = vsel %vm5723, %v7206, %v7208
        %v7210 = vrot.slane %v7115, 4
        %v7211 = vsel %vm5723, %v7208, %v7210
        %v7212 = vrot.slane %v7116, 4
        %v7213 = vsel %vm5723, %v7210, %v7212
        %v7214 = vrot.slane %v7117, 4
        %v7215 = vsel %vm5723, %v7212, %v7214
        %s7248 = scalar_lea.vmem %s2, 576
        %v7249 = vld [vmem:[%s7248] sm:$0xf]
        %v7250 = vld [vmem:[%s7248 + $0x4] sm:$0xf]
        %v7251 = vld [vmem:[%s7248 + $0x8] sm:$0xf]
        %v7252 = vld [vmem:[%s7248 + $0xc] sm:$0xf]
        %v7253 = vld [vmem:[%s7248 + $0x10] sm:$0xf]
        %v7254 = vld [vmem:[%s7248 + $0x14] sm:$0xf]
        %v7255 = vld [vmem:[%s7248 + $0x18] sm:$0xf]
        %v7256 = vld [vmem:[%s7248 + $0x1c] sm:$0xf]
        %v7257 = vld [vmem:[%s7248 + $0x20] sm:$0xf]
        %v7258 = vld [vmem:[%s7248 + $0x24] sm:$0xf]
        %v7259 = vld [vmem:[%s7248 + $0x28] sm:$0xf]
        %v7260 = vld [vmem:[%s7248 + $0x2c] sm:$0xf]
        %v7261 = vld [vmem:[%s7248 + $0x30] sm:$0xf]
        %v7262 = vld [vmem:[%s7248 + $0x34] sm:$0xf]
        %v7263 = vld [vmem:[%s7248 + $0x38] sm:$0xf]
        %v7264 = vld [vmem:[%s7248 + $0x3c] sm:$0xf]
        %v7265 = vld [vmem:[%s7248 + $0x40] sm:$0xf]
        %v7266 = vld [vmem:[%s7248 + $0x44] sm:$0xf]
        %v7267 = vld [vmem:[%s7248 + $0x48] sm:$0xf]
        %v7268 = vld [vmem:[%s7248 + $0x4c] sm:$0xf]
        %v7269 = vld [vmem:[%s7248 + $0x50] sm:$0xf]
        %v7270 = vld [vmem:[%s7248 + $0x54] sm:$0xf]
        %v7271 = vld [vmem:[%s7248 + $0x58] sm:$0xf]
        %v7272 = vld [vmem:[%s7248 + $0x5c] sm:$0xf]
        %v7273 = vld [vmem:[%s7248 + $0x60] sm:$0xf]
        %v7274 = vld [vmem:[%s7248 + $0x64] sm:$0xf]
        %v7275 = vld [vmem:[%s7248 + $0x68] sm:$0xf]
        %v7276 = vld [vmem:[%s7248 + $0x6c] sm:$0xf]
        %v7277 = vld [vmem:[%s7248 + $0x70] sm:$0xf]
        %v7278 = vld [vmem:[%s7248 + $0x74] sm:$0xf]
        %v7279 = vld [vmem:[%s7248 + $0x78] sm:$0xf]
        %v7280 = vld [vmem:[%s7248 + $0x7c] sm:$0xf]
        %v7281 = vld [vmem:[%s7248 + $0x80] sm:$0xf]
        %v7282 = vld [vmem:[%s7248 + $0x84] sm:$0xf]
        %v7283 = vld [vmem:[%s7248 + $0x88] sm:$0xf]
        %v7284 = vld [vmem:[%s7248 + $0x8c] sm:$0xf]
        %v7285 = vld [vmem:[%s7248 + $0x90] sm:$0xf]
        %v7286 = vld [vmem:[%s7248 + $0x94] sm:$0xf]
        %v7287 = vld [vmem:[%s7248 + $0x98] sm:$0xf]
        %v7288 = vld [vmem:[%s7248 + $0x9c] sm:$0xf]
        %v7289 = vld [vmem:[%s7248 + $0xa0] sm:$0xf]
        %v7290 = vld [vmem:[%s7248 + $0xa4] sm:$0xf]
        %v7291 = vld [vmem:[%s7248 + $0xa8] sm:$0xf]
        %v7292 = vld [vmem:[%s7248 + $0xac] sm:$0xf]
        %v7293 = vld [vmem:[%s7248 + $0xb0] sm:$0xf]
        %v7294 = vld [vmem:[%s7248 + $0xb4] sm:$0xf]
        %v7295 = vld [vmem:[%s7248 + $0xb8] sm:$0xf]
        %v7296 = vld [vmem:[%s7248 + $0xbc] sm:$0xf]
        %s7297 = scalar_lea.vmem %s4, 3
        %v7298 = vld [vmem:[%s7297] sm:$0x1]
        %v7300 = vlaneseq
        %v7301 = vshrl.u32 %v7300, 7
        %v7302 = vsub.s32 0, %v7301
        %v7303 = vrot.slane %v7298, %v7302
        %v7353 = vunpack.c.l.b16 %v7249
        %v7354 = vunpack.c.l.b16 %v7250
        %v7355 = vunpack.c.l.b16 %v7251
        %v7356 = vunpack.c.l.b16 %v7252
        %v7357 = vunpack.c.l.b16 %v7253
        %v7358 = vunpack.c.l.b16 %v7254
        %v7359 = vunpack.c.l.b16 %v7255
        %v7360 = vunpack.c.l.b16 %v7256
        %v7361 = vunpack.c.l.b16 %v7257
        %v7362 = vunpack.c.l.b16 %v7258
        %v7363 = vunpack.c.l.b16 %v7259
        %v7364 = vunpack.c.l.b16 %v7260
        %v7365 = vunpack.c.l.b16 %v7261
        %v7366 = vunpack.c.l.b16 %v7262
        %v7367 = vunpack.c.l.b16 %v7263
        %v7368 = vunpack.c.l.b16 %v7264
        %v7369 = vunpack.c.l.b16 %v7265
        %v7370 = vunpack.c.l.b16 %v7266
        %v7371 = vunpack.c.l.b16 %v7267
        %v7372 = vunpack.c.l.b16 %v7268
        %v7373 = vunpack.c.l.b16 %v7269
        %v7374 = vunpack.c.l.b16 %v7270
        %v7375 = vunpack.c.l.b16 %v7271
        %v7376 = vunpack.c.l.b16 %v7272
        %v7377 = vunpack.c.l.b16 %v7273
        %v7378 = vunpack.c.l.b16 %v7274
        %v7379 = vunpack.c.l.b16 %v7275
        %v7380 = vunpack.c.l.b16 %v7276
        %v7381 = vunpack.c.l.b16 %v7277
        %v7382 = vunpack.c.l.b16 %v7278
        %v7383 = vunpack.c.l.b16 %v7279
        %v7384 = vunpack.c.l.b16 %v7280
        %v7385 = vunpack.c.l.b16 %v7281
        %v7386 = vunpack.c.l.b16 %v7282
        %v7387 = vunpack.c.l.b16 %v7283
        %v7388 = vunpack.c.l.b16 %v7284
        %v7389 = vunpack.c.l.b16 %v7285
        %v7390 = vunpack.c.l.b16 %v7286
        %v7391 = vunpack.c.l.b16 %v7287
        %v7392 = vunpack.c.l.b16 %v7288
        %v7393 = vunpack.c.l.b16 %v7289
        %v7394 = vunpack.c.l.b16 %v7290
        %v7395 = vunpack.c.l.b16 %v7291
        %v7396 = vunpack.c.l.b16 %v7292
        %v7397 = vunpack.c.l.b16 %v7293
        %v7398 = vunpack.c.l.b16 %v7294
        %v7399 = vunpack.c.l.b16 %v7295
        %v7400 = vunpack.c.l.b16 %v7296
        %v7401 = vpack.c.b16 %v7354, %v7353
        %v7402 = vpack.c.b16 %v7356, %v7355
        %v7403 = vpack.c.b16 %v7358, %v7357
        %v7404 = vpack.c.b16 %v7360, %v7359
        %v7405 = vpack.c.b16 %v7362, %v7361
        %v7406 = vpack.c.b16 %v7364, %v7363
        %v7407 = vpack.c.b16 %v7366, %v7365
        %v7408 = vpack.c.b16 %v7368, %v7367
        %v7409 = vpack.c.b16 %v7370, %v7369
        %v7410 = vpack.c.b16 %v7372, %v7371
        %v7411 = vpack.c.b16 %v7374, %v7373
        %v7412 = vpack.c.b16 %v7376, %v7375
        %v7413 = vpack.c.b16 %v7378, %v7377
        %v7414 = vpack.c.b16 %v7380, %v7379
        %v7415 = vpack.c.b16 %v7382, %v7381
        %v7416 = vpack.c.b16 %v7384, %v7383
        %v7417 = vpack.c.b16 %v7386, %v7385
        %v7418 = vpack.c.b16 %v7388, %v7387
        %v7419 = vpack.c.b16 %v7390, %v7389
        %v7420 = vpack.c.b16 %v7392, %v7391
        %v7421 = vpack.c.b16 %v7394, %v7393
        %v7422 = vpack.c.b16 %v7396, %v7395
        %v7423 = vpack.c.b16 %v7398, %v7397
        %v7424 = vpack.c.b16 %v7400, %v7399
        %7449 = vmatprep.subr.bf16.mxu0 0
        %7450 = vmatpush1.bf16.msra.mxu0 %v7401
        %7451 = vmatprep.subr.bf16.mxu0 0
        %7452 = vmatpush1.bf16.msra.mxu0 %v7402
        %7453 = vmatprep.subr.bf16.mxu0 0
        %7454 = vmatpush1.bf16.msra.mxu0 %v7403
        %7455 = vmatprep.subr.bf16.mxu0 0
        %7456 = vmatpush1.bf16.msra.mxu0 %v7404
        %7457 = vmatprep.subr.bf16.mxu0 0
        %7458 = vmatpush1.bf16.msra.mxu0 %v7405
        %7459 = vmatprep.subr.bf16.mxu0 0
        %7460 = vmatpush1.bf16.msra.mxu0 %v7406
        %7461 = vmatprep.subr.bf16.mxu0 0
        %7462 = vmatpush1.bf16.msra.mxu0 %v7407
        %7463 = vmatprep.subr.bf16.mxu0 0
        %7464 = vmatpush1.bf16.msra.mxu0 %v7408
        %7465 = vmatprep.subr.bf16.mxu0 0
        %7466 = vmatpush1.bf16.msra.mxu0 %v7409
        %7467 = vmatprep.subr.bf16.mxu0 0
        %7468 = vmatpush1.bf16.msra.mxu0 %v7410
        %7469 = vmatprep.subr.bf16.mxu0 0
        %7470 = vmatpush1.bf16.msra.mxu0 %v7411
        %7471 = vmatprep.subr.bf16.mxu0 0
        %7472 = vmatpush1.bf16.msra.mxu0 %v7412
        %7473 = vmatprep.subr.bf16.mxu0 0
        %7474 = vmatpush1.bf16.msra.mxu0 %v7413
        %7475 = vmatprep.subr.bf16.mxu0 0
        %7476 = vmatpush1.bf16.msra.mxu0 %v7414
        %7477 = vmatprep.subr.bf16.mxu0 0
        %7478 = vmatpush1.bf16.msra.mxu0 %v7415
        %7479 = vmatprep.subr.bf16.mxu0 0
        %7480 = vmatpush1.bf16.msra.mxu0 %v7416
        %7481 = vmatprep.mubr.bf16.mxu0 %v7153
        %7482 = vmatmul.mubr.bf16.gmra.mrb[0].mxu0 %v7085
        %v7483 = vpop.f32.mrb[0].mxu0
        %v7484 = vadd.f32 %v7303, %v7483
        %v7485 = vpop.f32.mrb[0].mxu0
        %v7486 = vpop.f32.mrb[0].mxu0
        %v7487 = vadd.f32 %v7303, %v7486
        %v7488 = vpop.f32.mrb[0].mxu0
        %7489 = vmatprep.mubr.bf16.mxu0 %v7155
        %7490 = vmatmul.mubr.bf16.gmra.mrb[0].mxu0 %v7086
        %v7491 = vpop.f32.mrb[0].mxu0
        %v7492 = vadd.f32 %v7303, %v7491
        %v7493 = vpop.f32.mrb[0].mxu0
        %v7494 = vpop.f32.mrb[0].mxu0
        %v7495 = vadd.f32 %v7303, %v7494
        %v7496 = vpop.f32.mrb[0].mxu0
        %7497 = vmatprep.mubr.bf16.mxu0 %v7157
        %7498 = vmatmul.mubr.bf16.gmra.mrb[0].mxu0 %v7087
        %v7499 = vpop.f32.mrb[0].mxu0
        %v7500 = vadd.f32 %v7303, %v7499
        %v7501 = vpop.f32.mrb[0].mxu0
        %v7502 = vpop.f32.mrb[0].mxu0
        %v7503 = vadd.f32 %v7303, %v7502
        %v7504 = vpop.f32.mrb[0].mxu0
        %7505 = vmatprep.mubr.bf16.mxu0 %v7159
        %7506 = vmatmul.mubr.bf16.gmra.mrb[0].mxu0 %v7088
        %v7507 = vpop.f32.mrb[0].mxu0
        %v7508 = vadd.f32 %v7303, %v7507
        %v7509 = vpop.f32.mrb[0].mxu0
        %v7510 = vpop.f32.mrb[0].mxu0
        %v7511 = vadd.f32 %v7303, %v7510
        %v7512 = vpop.f32.mrb[0].mxu0
        %7513 = vmatprep.mubr.bf16.mxu0 %v7161
        %7514 = vmatmul.mubr.bf16.gmra.mrb[0].mxu0 %v7089
        %v7515 = vpop.f32.mrb[0].mxu0
        %v7516 = vadd.f32 %v7303, %v7515
        %v7517 = vpop.f32.mrb[0].mxu0
        %v7518 = vpop.f32.mrb[0].mxu0
        %v7519 = vadd.f32 %v7303, %v7518
        %v7520 = vpop.f32.mrb[0].mxu0
        %7521 = vmatprep.mubr.bf16.mxu0 %v7163
        %7522 = vmatmul.mubr.bf16.gmra.mrb[0].mxu0 %v7090
        %v7523 = vpop.f32.mrb[0].mxu0
        %v7524 = vadd.f32 %v7303, %v7523
        %v7525 = vpop.f32.mrb[0].mxu0
        %v7526 = vpop.f32.mrb[0].mxu0
        %v7527 = vadd.f32 %v7303, %v7526
        %v7528 = vpop.f32.mrb[0].mxu0
        %7529 = vmatprep.mubr.bf16.mxu0 %v7165
        %7530 = vmatmul.mubr.bf16.gmra.mrb[0].mxu0 %v7091
        %v7531 = vpop.f32.mrb[0].mxu0
        %v7532 = vadd.f32 %v7303, %v7531
        %v7533 = vpop.f32.mrb[0].mxu0
        %v7534 = vpop.f32.mrb[0].mxu0
        %v7535 = vadd.f32 %v7303, %v7534
        %v7536 = vpop.f32.mrb[0].mxu0
        %7537 = vmatprep.mubr.bf16.mxu0 %v7167
        %7538 = vmatmul.mubr.bf16.gmra.mrb[0].mxu0 %v7092
        %v7539 = vpop.f32.mrb[0].mxu0
        %v7540 = vadd.f32 %v7303, %v7539
        %v7541 = vpop.f32.mrb[0].mxu0
        %v7542 = vpop.f32.mrb[0].mxu0
        %v7543 = vadd.f32 %v7303, %v7542
        %v7544 = vpop.f32.mrb[0].mxu0
        %7545 = vmatprep.mubr.bf16.mxu0 %v7169
        %7546 = vmatmul.mubr.bf16.gmra.mrb[0].mxu0 %v7093
        %v7547 = vpop.f32.mrb[0].mxu0
        %v7548 = vadd.f32 %v7303, %v7547
        %v7549 = vpop.f32.mrb[0].mxu0
        %v7550 = vpop.f32.mrb[0].mxu0
        %v7551 = vadd.f32 %v7303, %v7550
        %v7552 = vpop.f32.mrb[0].mxu0
        %7553 = vmatprep.mubr.bf16.mxu0 %v7171
        %7554 = vmatmul.mubr.bf16.gmra.mrb[0].mxu0 %v7094
        %v7555 = vpop.f32.mrb[0].mxu0
        %v7556 = vadd.f32 %v7303, %v7555
        %v7557 = vpop.f32.mrb[0].mxu0
        %v7558 = vpop.f32.mrb[0].mxu0
        %v7559 = vadd.f32 %v7303, %v7558
        %v7560 = vpop.f32.mrb[0].mxu0
        %7561 = vmatprep.mubr.bf16.mxu0 %v7173
        %7562 = vmatmul.mubr.bf16.gmra.mrb[0].mxu0 %v7095
        %v7563 = vpop.f32.mrb[0].mxu0
        %v7564 = vadd.f32 %v7303, %v7563
        %v7565 = vpop.f32.mrb[0].mxu0
        %v7566 = vpop.f32.mrb[0].mxu0
        %v7567 = vadd.f32 %v7303, %v7566
        %v7568 = vpop.f32.mrb[0].mxu0
        %7569 = vmatprep.mubr.bf16.mxu0 %v7175
        %7570 = vmatmul.mubr.bf16.gmra.mrb[0].mxu0 %v7096
        %v7571 = vpop.f32.mrb[0].mxu0
        %v7572 = vadd.f32 %v7303, %v7571
        %v7573 = vpop.f32.mrb[0].mxu0
        %v7574 = vpop.f32.mrb[0].mxu0
        %v7575 = vadd.f32 %v7303, %v7574
        %v7576 = vpop.f32.mrb[0].mxu0
        %7577 = vmatprep.mubr.bf16.mxu0 %v7177
        %7578 = vmatmul.mubr.bf16.gmra.mrb[0].mxu0 %v7097
        %v7579 = vpop.f32.mrb[0].mxu0
        %v7580 = vadd.f32 %v7303, %v7579
        %v7581 = vpop.f32.mrb[0].mxu0
        %v7582 = vpop.f32.mrb[0].mxu0
        %v7583 = vadd.f32 %v7303, %v7582
        %v7584 = vpop.f32.mrb[0].mxu0
        %7585 = vmatprep.mubr.bf16.mxu0 %v7179
        %7586 = vmatmul.mubr.bf16.gmra.mrb[0].mxu0 %v7098
        %v7587 = vpop.f32.mrb[0].mxu0
        %v7588 = vadd.f32 %v7303, %v7587
        %v7589 = vpop.f32.mrb[0].mxu0
        %v7590 = vpop.f32.mrb[0].mxu0
        %v7591 = vadd.f32 %v7303, %v7590
        %v7592 = vpop.f32.mrb[0].mxu0
        %7593 = vmatprep.mubr.bf16.mxu0 %v7181
        %7594 = vmatmul.mubr.bf16.gmra.mrb[0].mxu0 %v7099
        %v7595 = vpop.f32.mrb[0].mxu0
        %v7596 = vadd.f32 %v7303, %v7595
        %v7597 = vpop.f32.mrb[0].mxu0
        %v7598 = vpop.f32.mrb[0].mxu0
        %v7599 = vadd.f32 %v7303, %v7598
        %v7600 = vpop.f32.mrb[0].mxu0
        %7601 = vmatprep.mubr.bf16.mxu0 %v7183
        %7602 = vmatmul.mubr.bf16.gmra.mrb[0].mxu0 %v7100
        %v7603 = vpop.f32.mrb[0].mxu0
        %v7604 = vadd.f32 %v7303, %v7603
        %v7605 = vpop.f32.mrb[0].mxu0
        %v7606 = vpop.f32.mrb[0].mxu0
        %v7607 = vadd.f32 %v7303, %v7606
        %v7608 = vpop.f32.mrb[0].mxu0
        %7609 = vmatprep.mubr.bf16.mxu0 %v7185
        %7610 = vmatmul.mubr.bf16.gmra.mrb[0].mxu0 %v7101
        %v7611 = vpop.f32.mrb[0].mxu0
        %v7612 = vadd.f32 %v7303, %v7611
        %v7613 = vpop.f32.mrb[0].mxu0
        %v7614 = vpop.f32.mrb[0].mxu0
        %v7615 = vadd.f32 %v7303, %v7614
        %v7616 = vpop.f32.mrb[0].mxu0
        %7617 = vmatprep.mubr.bf16.mxu0 %v7187
        %7618 = vmatmul.mubr.bf16.gmra.mrb[0].mxu0 %v7102
        %v7619 = vpop.f32.mrb[0].mxu0
        %v7620 = vadd.f32 %v7303, %v7619
        %v7621 = vpop.f32.mrb[0].mxu0
        %v7622 = vpop.f32.mrb[0].mxu0
        %v7623 = vadd.f32 %v7303, %v7622
        %v7624 = vpop.f32.mrb[0].mxu0
        %7625 = vmatprep.mubr.bf16.mxu0 %v7189
        %7626 = vmatmul.mubr.bf16.gmra.mrb[0].mxu0 %v7103
        %v7627 = vpop.f32.mrb[0].mxu0
        %v7628 = vadd.f32 %v7303, %v7627
        %v7629 = vpop.f32.mrb[0].mxu0
        %v7630 = vpop.f32.mrb[0].mxu0
        %v7631 = vadd.f32 %v7303, %v7630
        %v7632 = vpop.f32.mrb[0].mxu0
        %7633 = vmatprep.mubr.bf16.mxu0 %v7191
        %7634 = vmatmul.mubr.bf16.gmra.mrb[0].mxu0 %v7104
        %v7635 = vpop.f32.mrb[0].mxu0
        %v7636 = vadd.f32 %v7303, %v7635
        %v7637 = vpop.f32.mrb[0].mxu0
        %v7638 = vpop.f32.mrb[0].mxu0
        %v7639 = vadd.f32 %v7303, %v7638
        %v7640 = vpop.f32.mrb[0].mxu0
        %7641 = vmatprep.mubr.bf16.mxu0 %v7193
        %7642 = vmatmul.mubr.bf16.gmra.mrb[0].mxu0 %v7105
        %v7643 = vpop.f32.mrb[0].mxu0
        %v7644 = vadd.f32 %v7303, %v7643
        %v7645 = vpop.f32.mrb[0].mxu0
        %v7646 = vpop.f32.mrb[0].mxu0
        %v7647 = vadd.f32 %v7303, %v7646
        %v7648 = vpop.f32.mrb[0].mxu0
        %7649 = vmatprep.mubr.bf16.mxu0 %v7195
        %7650 = vmatmul.mubr.bf16.gmra.mrb[0].mxu0 %v7106
        %v7651 = vpop.f32.mrb[0].mxu0
        %v7652 = vadd.f32 %v7303, %v7651
        %v7653 = vpop.f32.mrb[0].mxu0
        %v7654 = vpop.f32.mrb[0].mxu0
        %v7655 = vadd.f32 %v7303, %v7654
        %v7656 = vpop.f32.mrb[0].mxu0
        %7657 = vmatprep.mubr.bf16.mxu0 %v7197
        %7658 = vmatmul.mubr.bf16.gmra.mrb[0].mxu0 %v7107
        %v7659 = vpop.f32.mrb[0].mxu0
        %v7660 = vadd.f32 %v7303, %v7659
        %v7661 = vpop.f32.mrb[0].mxu0
        %v7662 = vpop.f32.mrb[0].mxu0
        %v7663 = vadd.f32 %v7303, %v7662
        %v7664 = vpop.f32.mrb[0].mxu0
        %7665 = vmatprep.mubr.bf16.mxu0 %v7199
        %7666 = vmatmul.mubr.bf16.gmra.mrb[0].mxu0 %v7108
        %v7667 = vpop.f32.mrb[0].mxu0
        %v7668 = vadd.f32 %v7303, %v7667
        %v7669 = vpop.f32.mrb[0].mxu0
        %v7670 = vpop.f32.mrb[0].mxu0
        %v7671 = vadd.f32 %v7303, %v7670
        %v7672 = vpop.f32.mrb[0].mxu0
        %7673 = vmatprep.mubr.bf16.mxu0 %v7201
        %7674 = vmatmul.mubr.bf16.gmra.mrb[0].mxu0 %v7109
        %v7675 = vpop.f32.mrb[0].mxu0
        %v7676 = vadd.f32 %v7303, %v7675
        %v7677 = vpop.f32.mrb[0].mxu0
        %v7678 = vpop.f32.mrb[0].mxu0
        %v7679 = vadd.f32 %v7303, %v7678
        %v7680 = vpop.f32.mrb[0].mxu0
        %7681 = vmatprep.mubr.bf16.mxu0 %v7203
        %7682 = vmatmul.mubr.bf16.gmra.mrb[0].mxu0 %v7110
        %v7683 = vpop.f32.mrb[0].mxu0
        %v7684 = vadd.f32 %v7303, %v7683
        %v7685 = vpop.f32.mrb[0].mxu0
        %v7686 = vpop.f32.mrb[0].mxu0
        %v7687 = vadd.f32 %v7303, %v7686
        %v7688 = vpop.f32.mrb[0].mxu0
        %7689 = vmatprep.mubr.bf16.mxu0 %v7205
        %7690 = vmatmul.mubr.bf16.gmra.mrb[0].mxu0 %v7111
        %v7691 = vpop.f32.mrb[0].mxu0
        %v7692 = vadd.f32 %v7303, %v7691
        %v7693 = vpop.f32.mrb[0].mxu0
        %v7694 = vpop.f32.mrb[0].mxu0
        %v7695 = vadd.f32 %v7303, %v7694
        %v7696 = vpop.f32.mrb[0].mxu0
        %7697 = vmatprep.mubr.bf16.mxu0 %v7207
        %7698 = vmatmul.mubr.bf16.gmra.mrb[0].mxu0 %v7112
        %v7699 = vpop.f32.mrb[0].mxu0
        %v7700 = vadd.f32 %v7303, %v7699
        %v7701 = vpop.f32.mrb[0].mxu0
        %v7702 = vpop.f32.mrb[0].mxu0
        %v7703 = vadd.f32 %v7303, %v7702
        %v7704 = vpop.f32.mrb[0].mxu0
        %7705 = vmatprep.mubr.bf16.mxu0 %v7209
        %7706 = vmatmul.mubr.bf16.gmra.mrb[0].mxu0 %v7113
        %v7707 = vpop.f32.mrb[0].mxu0
        %v7708 = vadd.f32 %v7303, %v7707
        %v7709 = vpop.f32.mrb[0].mxu0
        %v7710 = vpop.f32.mrb[0].mxu0
        %v7711 = vadd.f32 %v7303, %v7710
        %v7712 = vpop.f32.mrb[0].mxu0
        %7713 = vmatprep.mubr.bf16.mxu0 %v7211
        %7714 = vmatmul.mubr.bf16.gmra.mrb[0].mxu0 %v7114
        %v7715 = vpop.f32.mrb[0].mxu0
        %v7716 = vadd.f32 %v7303, %v7715
        %v7717 = vpop.f32.mrb[0].mxu0
        %v7718 = vpop.f32.mrb[0].mxu0
        %v7719 = vadd.f32 %v7303, %v7718
        %v7720 = vpop.f32.mrb[0].mxu0
        %7721 = vmatprep.mubr.bf16.mxu0 %v7213
        %7722 = vmatmul.mubr.bf16.gmra.mrb[0].mxu0 %v7115
        %v7723 = vpop.f32.mrb[0].mxu0
        %v7724 = vadd.f32 %v7303, %v7723
        %v7725 = vpop.f32.mrb[0].mxu0
        %v7726 = vpop.f32.mrb[0].mxu0
        %v7727 = vadd.f32 %v7303, %v7726
        %v7728 = vpop.f32.mrb[0].mxu0
        %7729 = vmatprep.mubr.bf16.mxu0 %v7215
        %7730 = vmatmul.mubr.bf16.gmra.mrb[0].mxu0 %v7116
        %v7731 = vpop.f32.mrb[0].mxu0
        %v7732 = vadd.f32 %v7303, %v7731
        %v7733 = vpop.f32.mrb[0].mxu0
        %v7734 = vpop.f32.mrb[0].mxu0
        %v7735 = vadd.f32 %v7303, %v7734
        %v7736 = vpop.f32.mrb[0].mxu0
        %7737 = vdwg.mxu0
        %7738 = vmatprep.subr.bf16.mxu0 0
        %7739 = vmatpush1.bf16.msra.mxu0 %v7417
        %7740 = vmatprep.subr.bf16.mxu0 0
        %7741 = vmatpush1.bf16.msra.mxu0 %v7418
        %7742 = vmatprep.subr.bf16.mxu0 0
        %7743 = vmatpush1.bf16.msra.mxu0 %v7419
        %7744 = vmatprep.subr.bf16.mxu0 0
        %7745 = vmatpush1.bf16.msra.mxu0 %v7420
        %7746 = vmatprep.subr.bf16.mxu0 0
        %7747 = vmatpush1.bf16.msra.mxu0 %v7421
        %7748 = vmatprep.subr.bf16.mxu0 0
        %7749 = vmatpush1.bf16.msra.mxu0 %v7422
        %7750 = vmatprep.subr.bf16.mxu0 0
        %7751 = vmatpush1.bf16.msra.mxu0 %v7423
        %7752 = vmatprep.subr.bf16.mxu0 0
        %7753 = vmatpush1.bf16.msra.mxu0 %v7424
        %7754 = vmatprep.subr.bf16.mxu0 0
        %7755 = vmatpush1.bf16.msra.mxu0 0
        %7756 = vmatprep.subr.bf16.mxu0 0
        %7757 = vmatpush1.bf16.msra.mxu0 0
        %7758 = vmatprep.subr.bf16.mxu0 0
        %7759 = vmatpush1.bf16.msra.mxu0 0
        %7760 = vmatprep.subr.bf16.mxu0 0
        %7761 = vmatpush1.bf16.msra.mxu0 0
        %7762 = vmatprep.subr.bf16.mxu0 0
        %7763 = vmatpush1.bf16.msra.mxu0 0
        %7764 = vmatprep.subr.bf16.mxu0 0
        %7765 = vmatpush1.bf16.msra.mxu0 0
        %7766 = vmatprep.subr.bf16.mxu0 0
        %7767 = vmatpush1.bf16.msra.mxu0 0
        %7768 = vmatprep.subr.bf16.mxu0 0
        %7769 = vmatpush1.bf16.msra.mxu0 0
        %7770 = vmatprep.mubr.bf16.mxu0 0
        %7771 = vmatmul.mubr.bf16.gmra.mrb[0].mxu0 %v7086
        %v7772 = vpop.f32.mrb[0].mxu0
        %v7773 = vadd.f32 %v7484, %v7772
        %v7774 = vpop.f32.mrb[0].mxu0
        %v7775 = vpop.f32.mrb[0].mxu0
        %v7776 = vadd.f32 %v7487, %v7775
        %v7777 = vpop.f32.mrb[0].mxu0
        %7778 = vmatprep.mubr.bf16.mxu0 0
        %7779 = vmatmul.mubr.bf16.gmra.mrb[0].mxu0 %v7087
        %v7780 = vpop.f32.mrb[0].mxu0
        %v7781 = vadd.f32 %v7492, %v7780
        %v7782 = vpop.f32.mrb[0].mxu0
        %v7783 = vpop.f32.mrb[0].mxu0
        %v7784 = vadd.f32 %v7495, %v7783
        %v7785 = vpop.f32.mrb[0].mxu0
        %7786 = vmatprep.mubr.bf16.mxu0 0
        %7787 = vmatmul.mubr.bf16.gmra.mrb[0].mxu0 %v7088
        %v7788 = vpop.f32.mrb[0].mxu0
        %v7789 = vadd.f32 %v7500, %v7788
        %v7790 = vpop.f32.mrb[0].mxu0
        %v7791 = vpop.f32.mrb[0].mxu0
        %v7792 = vadd.f32 %v7503, %v7791
        %v7793 = vpop.f32.mrb[0].mxu0
        %7794 = vmatprep.mubr.bf16.mxu0 0
        %7795 = vmatmul.mubr.bf16.gmra.mrb[0].mxu0 %v7089
        %v7796 = vpop.f32.mrb[0].mxu0
        %v7797 = vadd.f32 %v7508, %v7796
        %v7798 = vpop.f32.mrb[0].mxu0
        %v7799 = vpop.f32.mrb[0].mxu0
        %v7800 = vadd.f32 %v7511, %v7799
        %v7801 = vpop.f32.mrb[0].mxu0
        %7802 = vmatprep.mubr.bf16.mxu0 0
        %7803 = vmatmul.mubr.bf16.gmra.mrb[0].mxu0 %v7090
        %v7804 = vpop.f32.mrb[0].mxu0
        %v7805 = vadd.f32 %v7516, %v7804
        %v7806 = vpop.f32.mrb[0].mxu0
        %v7807 = vpop.f32.mrb[0].mxu0
        %v7808 = vadd.f32 %v7519, %v7807
        %v7809 = vpop.f32.mrb[0].mxu0
        %7810 = vmatprep.mubr.bf16.mxu0 0
        %7811 = vmatmul.mubr.bf16.gmra.mrb[0].mxu0 %v7091
        %v7812 = vpop.f32.mrb[0].mxu0
        %v7813 = vadd.f32 %v7524, %v7812
        %v7814 = vpop.f32.mrb[0].mxu0
        %v7815 = vpop.f32.mrb[0].mxu0
        %v7816 = vadd.f32 %v7527, %v7815
        %v7817 = vpop.f32.mrb[0].mxu0
        %7818 = vmatprep.mubr.bf16.mxu0 0
        %7819 = vmatmul.mubr.bf16.gmra.mrb[0].mxu0 %v7092
        %v7820 = vpop.f32.mrb[0].mxu0
        %v7821 = vadd.f32 %v7532, %v7820
        %v7822 = vpop.f32.mrb[0].mxu0
        %v7823 = vpop.f32.mrb[0].mxu0
        %v7824 = vadd.f32 %v7535, %v7823
        %v7825 = vpop.f32.mrb[0].mxu0
        %7826 = vmatprep.mubr.bf16.mxu0 0
        %7827 = vmatmul.mubr.bf16.gmra.mrb[0].mxu0 %v7093
        %v7828 = vpop.f32.mrb[0].mxu0
        %v7829 = vadd.f32 %v7540, %v7828
        %v7830 = vpop.f32.mrb[0].mxu0
        %v7831 = vpop.f32.mrb[0].mxu0
        %v7832 = vadd.f32 %v7543, %v7831
        %v7833 = vpop.f32.mrb[0].mxu0
        %7834 = vmatprep.mubr.bf16.mxu0 0
        %7835 = vmatmul.mubr.bf16.gmra.mrb[0].mxu0 %v7094
        %v7836 = vpop.f32.mrb[0].mxu0
        %v7837 = vadd.f32 %v7548, %v7836
        %v7838 = vpop.f32.mrb[0].mxu0
        %v7839 = vpop.f32.mrb[0].mxu0
        %v7840 = vadd.f32 %v7551, %v7839
        %v7841 = vpop.f32.mrb[0].mxu0
        %7842 = vmatprep.mubr.bf16.mxu0 0
        %7843 = vmatmul.mubr.bf16.gmra.mrb[0].mxu0 %v7095
        %v7844 = vpop.f32.mrb[0].mxu0
        %v7845 = vadd.f32 %v7556, %v7844
        %v7846 = vpop.f32.mrb[0].mxu0
        %v7847 = vpop.f32.mrb[0].mxu0
        %v7848 = vadd.f32 %v7559, %v7847
        %v7849 = vpop.f32.mrb[0].mxu0
        %7850 = vmatprep.mubr.bf16.mxu0 0
        %7851 = vmatmul.mubr.bf16.gmra.mrb[0].mxu0 %v7096
        %v7852 = vpop.f32.mrb[0].mxu0
        %v7853 = vadd.f32 %v7564, %v7852
        %v7854 = vpop.f32.mrb[0].mxu0
        %v7855 = vpop.f32.mrb[0].mxu0
        %v7856 = vadd.f32 %v7567, %v7855
        %v7857 = vpop.f32.mrb[0].mxu0
        %7858 = vmatprep.mubr.bf16.mxu0 0
        %7859 = vmatmul.mubr.bf16.gmra.mrb[0].mxu0 %v7097
        %v7860 = vpop.f32.mrb[0].mxu0
        %v7861 = vadd.f32 %v7572, %v7860
        %v7862 = vpop.f32.mrb[0].mxu0
        %v7863 = vpop.f32.mrb[0].mxu0
        %v7864 = vadd.f32 %v7575, %v7863
        %v7865 = vpop.f32.mrb[0].mxu0
        %7866 = vmatprep.mubr.bf16.mxu0 0
        %7867 = vmatmul.mubr.bf16.gmra.mrb[0].mxu0 %v7098
        %v7868 = vpop.f32.mrb[0].mxu0
        %v7869 = vadd.f32 %v7580, %v7868
        %v7870 = vpop.f32.mrb[0].mxu0
        %v7871 = vpop.f32.mrb[0].mxu0
        %v7872 = vadd.f32 %v7583, %v7871
        %v7873 = vpop.f32.mrb[0].mxu0
        %7874 = vmatprep.mubr.bf16.mxu0 0
        %7875 = vmatmul.mubr.bf16.gmra.mrb[0].mxu0 %v7099
        %v7876 = vpop.f32.mrb[0].mxu0
        %v7877 = vadd.f32 %v7588, %v7876
        %v7878 = vpop.f32.mrb[0].mxu0
        %v7879 = vpop.f32.mrb[0].mxu0
        %v7880 = vadd.f32 %v7591, %v7879
        %v7881 = vpop.f32.mrb[0].mxu0
        %7882 = vmatprep.mubr.bf16.mxu0 0
        %7883 = vmatmul.mubr.bf16.gmra.mrb[0].mxu0 %v7100
        %v7884 = vpop.f32.mrb[0].mxu0
        %v7885 = vadd.f32 %v7596, %v7884
        %v7886 = vpop.f32.mrb[0].mxu0
        %v7887 = vpop.f32.mrb[0].mxu0
        %v7888 = vadd.f32 %v7599, %v7887
        %v7889 = vpop.f32.mrb[0].mxu0
        %7890 = vmatprep.mubr.bf16.mxu0 0
        %7891 = vmatmul.mubr.bf16.gmra.mrb[0].mxu0 %v7101
        %v7892 = vpop.f32.mrb[0].mxu0
        %v7893 = vadd.f32 %v7604, %v7892
        %v7894 = vpop.f32.mrb[0].mxu0
        %v7895 = vpop.f32.mrb[0].mxu0
        %v7896 = vadd.f32 %v7607, %v7895
        %v7897 = vpop.f32.mrb[0].mxu0
        %7898 = vmatprep.mubr.bf16.mxu0 0
        %7899 = vmatmul.mubr.bf16.gmra.mrb[0].mxu0 %v7102
        %v7900 = vpop.f32.mrb[0].mxu0
        %v7901 = vadd.f32 %v7612, %v7900
        %v7902 = vpop.f32.mrb[0].mxu0
        %v7903 = vpop.f32.mrb[0].mxu0
        %v7904 = vadd.f32 %v7615, %v7903
        %v7905 = vpop.f32.mrb[0].mxu0
        %7906 = vmatprep.mubr.bf16.mxu0 0
        %7907 = vmatmul.mubr.bf16.gmra.mrb[0].mxu0 %v7103
        %v7908 = vpop.f32.mrb[0].mxu0
        %v7909 = vadd.f32 %v7620, %v7908
        %v7910 = vpop.f32.mrb[0].mxu0
        %v7911 = vpop.f32.mrb[0].mxu0
        %v7912 = vadd.f32 %v7623, %v7911
        %v7913 = vpop.f32.mrb[0].mxu0
        %7914 = vmatprep.mubr.bf16.mxu0 0
        %7915 = vmatmul.mubr.bf16.gmra.mrb[0].mxu0 %v7104
        %v7916 = vpop.f32.mrb[0].mxu0
        %v7917 = vadd.f32 %v7628, %v7916
        %v7918 = vpop.f32.mrb[0].mxu0
        %v7919 = vpop.f32.mrb[0].mxu0
        %v7920 = vadd.f32 %v7631, %v7919
        %v7921 = vpop.f32.mrb[0].mxu0
        %7922 = vmatprep.mubr.bf16.mxu0 0
        %7923 = vmatmul.mubr.bf16.gmra.mrb[0].mxu0 %v7105
        %v7924 = vpop.f32.mrb[0].mxu0
        %v7925 = vadd.f32 %v7636, %v7924
        %v7926 = vpop.f32.mrb[0].mxu0
        %v7927 = vpop.f32.mrb[0].mxu0
        %v7928 = vadd.f32 %v7639, %v7927
        %v7929 = vpop.f32.mrb[0].mxu0
        %7930 = vmatprep.mubr.bf16.mxu0 0
        %7931 = vmatmul.mubr.bf16.gmra.mrb[0].mxu0 %v7106
        %v7932 = vpop.f32.mrb[0].mxu0
        %v7933 = vadd.f32 %v7644, %v7932
        %v7934 = vpop.f32.mrb[0].mxu0
        %v7935 = vpop.f32.mrb[0].mxu0
        %v7936 = vadd.f32 %v7647, %v7935
        %v7937 = vpop.f32.mrb[0].mxu0
        %7938 = vmatprep.mubr.bf16.mxu0 0
        %7939 = vmatmul.mubr.bf16.gmra.mrb[0].mxu0 %v7107
        %v7940 = vpop.f32.mrb[0].mxu0
        %v7941 = vadd.f32 %v7652, %v7940
        %v7942 = vpop.f32.mrb[0].mxu0
        %v7943 = vpop.f32.mrb[0].mxu0
        %v7944 = vadd.f32 %v7655, %v7943
        %v7945 = vpop.f32.mrb[0].mxu0
        %7946 = vmatprep.mubr.bf16.mxu0 0
        %7947 = vmatmul.mubr.bf16.gmra.mrb[0].mxu0 %v7108
        %v7948 = vpop.f32.mrb[0].mxu0
        %v7949 = vadd.f32 %v7660, %v7948
        %v7950 = vpop.f32.mrb[0].mxu0
        %v7951 = vpop.f32.mrb[0].mxu0
        %v7952 = vadd.f32 %v7663, %v7951
        %v7953 = vpop.f32.mrb[0].mxu0
        %7954 = vmatprep.mubr.bf16.mxu0 0
        %7955 = vmatmul.mubr.bf16.gmra.mrb[0].mxu0 %v7109
        %v7956 = vpop.f32.mrb[0].mxu0
        %v7957 = vadd.f32 %v7668, %v7956
        %v7958 = vpop.f32.mrb[0].mxu0
        %v7959 = vpop.f32.mrb[0].mxu0
        %v7960 = vadd.f32 %v7671, %v7959
        %v7961 = vpop.f32.mrb[0].mxu0
        %7962 = vmatprep.mubr.bf16.mxu0 0
        %7963 = vmatmul.mubr.bf16.gmra.mrb[0].mxu0 %v7110
        %v7964 = vpop.f32.mrb[0].mxu0
        %v7965 = vadd.f32 %v7676, %v7964
        %v7966 = vpop.f32.mrb[0].mxu0
        %v7967 = vpop.f32.mrb[0].mxu0
        %v7968 = vadd.f32 %v7679, %v7967
        %v7969 = vpop.f32.mrb[0].mxu0
        %7970 = vmatprep.mubr.bf16.mxu0 0
        %7971 = vmatmul.mubr.bf16.gmra.mrb[0].mxu0 %v7111
        %v7972 = vpop.f32.mrb[0].mxu0
        %v7973 = vadd.f32 %v7684, %v7972
        %v7974 = vpop.f32.mrb[0].mxu0
        %v7975 = vpop.f32.mrb[0].mxu0
        %v7976 = vadd.f32 %v7687, %v7975
        %v7977 = vpop.f32.mrb[0].mxu0
        %7978 = vmatprep.mubr.bf16.mxu0 0
        %7979 = vmatmul.mubr.bf16.gmra.mrb[0].mxu0 %v7112
        %v7980 = vpop.f32.mrb[0].mxu0
        %v7981 = vadd.f32 %v7692, %v7980
        %v7982 = vpop.f32.mrb[0].mxu0
        %v7983 = vpop.f32.mrb[0].mxu0
        %v7984 = vadd.f32 %v7695, %v7983
        %v7985 = vpop.f32.mrb[0].mxu0
        %7986 = vmatprep.mubr.bf16.mxu0 0
        %7987 = vmatmul.mubr.bf16.gmra.mrb[0].mxu0 %v7113
        %v7988 = vpop.f32.mrb[0].mxu0
        %v7989 = vadd.f32 %v7700, %v7988
        %v7990 = vpop.f32.mrb[0].mxu0
        %v7991 = vpop.f32.mrb[0].mxu0
        %v7992 = vadd.f32 %v7703, %v7991
        %v7993 = vpop.f32.mrb[0].mxu0
        %7994 = vmatprep.mubr.bf16.mxu0 0
        %7995 = vmatmul.mubr.bf16.gmra.mrb[0].mxu0 %v7114
        %v7996 = vpop.f32.mrb[0].mxu0
        %v7997 = vadd.f32 %v7708, %v7996
        %v7998 = vpop.f32.mrb[0].mxu0
        %v7999 = vpop.f32.mrb[0].mxu0
        %v8000 = vadd.f32 %v7711, %v7999
        %v8001 = vpop.f32.mrb[0].mxu0
        %8002 = vmatprep.mubr.bf16.mxu0 0
        %8003 = vmatmul.mubr.bf16.gmra.mrb[0].mxu0 %v7115
        %v8004 = vpop.f32.mrb[0].mxu0
        %v8005 = vadd.f32 %v7716, %v8004
        %v8006 = vpop.f32.mrb[0].mxu0
        %v8007 = vpop.f32.mrb[0].mxu0
        %v8008 = vadd.f32 %v7719, %v8007
        %v8009 = vpop.f32.mrb[0].mxu0
        %8010 = vmatprep.mubr.bf16.mxu0 0
        %8011 = vmatmul.mubr.bf16.gmra.mrb[0].mxu0 %v7116
        %v8012 = vpop.f32.mrb[0].mxu0
        %v8013 = vadd.f32 %v7724, %v8012
        %v8014 = vpop.f32.mrb[0].mxu0
        %v8015 = vpop.f32.mrb[0].mxu0
        %v8016 = vadd.f32 %v7727, %v8015
        %v8017 = vpop.f32.mrb[0].mxu0
        %8018 = vmatprep.mubr.bf16.mxu0 0
        %8019 = vmatmul.mubr.bf16.gmra.mrb[0].mxu0 %v7117
        %v8020 = vpop.f32.mrb[0].mxu0
        %v8021 = vadd.f32 %v7732, %v8020
        %v8022 = vpop.f32.mrb[0].mxu0
        %v8023 = vpop.f32.mrb[0].mxu0
        %v8024 = vadd.f32 %v7735, %v8023
        %v8025 = vpop.f32.mrb[0].mxu0
        %8026 = vdwg.mxu0
        %s8027 = sld [smem:[#allocation2 + $0x3]]
        %vm8028 = vcmp.gt.f32.partialorder %v7773, 0.0
        %vm8029 = vcmp.gt.f32.partialorder %v7776, 0.0
        %vm8030 = vcmp.gt.f32.partialorder %v7781, 0.0
        %vm8031 = vcmp.gt.f32.partialorder %v7784, 0.0
        %vm8032 = vcmp.gt.f32.partialorder %v7789, 0.0
        %vm8033 = vcmp.gt.f32.partialorder %v7792, 0.0
        %vm8034 = vcmp.gt.f32.partialorder %v7797, 0.0
        %vm8035 = vcmp.gt.f32.partialorder %v7800, 0.0
        %vm8036 = vcmp.gt.f32.partialorder %v7805, 0.0
        %vm8037 = vcmp.gt.f32.partialorder %v7808, 0.0
        %vm8038 = vcmp.gt.f32.partialorder %v7813, 0.0
        %vm8039 = vcmp.gt.f32.partialorder %v7816, 0.0
        %vm8040 = vcmp.gt.f32.partialorder %v7821, 0.0
        %vm8041 = vcmp.gt.f32.partialorder %v7824, 0.0
        %vm8042 = vcmp.gt.f32.partialorder %v7829, 0.0
        %vm8043 = vcmp.gt.f32.partialorder %v7832, 0.0
        %vm8044 = vcmp.gt.f32.partialorder %v7837, 0.0
        %vm8045 = vcmp.gt.f32.partialorder %v7840, 0.0
        %vm8046 = vcmp.gt.f32.partialorder %v7845, 0.0
        %vm8047 = vcmp.gt.f32.partialorder %v7848, 0.0
        %vm8048 = vcmp.gt.f32.partialorder %v7853, 0.0
        %vm8049 = vcmp.gt.f32.partialorder %v7856, 0.0
        %vm8050 = vcmp.gt.f32.partialorder %v7861, 0.0
        %vm8051 = vcmp.gt.f32.partialorder %v7864, 0.0
        %vm8052 = vcmp.gt.f32.partialorder %v7869, 0.0
        %vm8053 = vcmp.gt.f32.partialorder %v7872, 0.0
        %vm8054 = vcmp.gt.f32.partialorder %v7877, 0.0
        %vm8055 = vcmp.gt.f32.partialorder %v7880, 0.0
        %vm8056 = vcmp.gt.f32.partialorder %v7885, 0.0
        %vm8057 = vcmp.gt.f32.partialorder %v7888, 0.0
        %vm8058 = vcmp.gt.f32.partialorder %v7893, 0.0
        %vm8059 = vcmp.gt.f32.partialorder %v7896, 0.0
        %vm8060 = vcmp.gt.f32.partialorder %v7901, 0.0
        %vm8061 = vcmp.gt.f32.partialorder %v7904, 0.0
        %vm8062 = vcmp.gt.f32.partialorder %v7909, 0.0
        %vm8063 = vcmp.gt.f32.partialorder %v7912, 0.0
        %vm8064 = vcmp.gt.f32.partialorder %v7917, 0.0
        %vm8065 = vcmp.gt.f32.partialorder %v7920, 0.0
        %vm8066 = vcmp.gt.f32.partialorder %v7925, 0.0
        %vm8067 = vcmp.gt.f32.partialorder %v7928, 0.0
        %vm8068 = vcmp.gt.f32.partialorder %v7933, 0.0
        %vm8069 = vcmp.gt.f32.partialorder %v7936, 0.0
        %vm8070 = vcmp.gt.f32.partialorder %v7941, 0.0
        %vm8071 = vcmp.gt.f32.partialorder %v7944, 0.0
        %vm8072 = vcmp.gt.f32.partialorder %v7949, 0.0
        %vm8073 = vcmp.gt.f32.partialorder %v7952, 0.0
        %vm8074 = vcmp.gt.f32.partialorder %v7957, 0.0
        %vm8075 = vcmp.gt.f32.partialorder %v7960, 0.0
        %vm8076 = vcmp.gt.f32.partialorder %v7965, 0.0
        %vm8077 = vcmp.gt.f32.partialorder %v7968, 0.0
        %vm8078 = vcmp.gt.f32.partialorder %v7973, 0.0
        %vm8079 = vcmp.gt.f32.partialorder %v7976, 0.0
        %vm8080 = vcmp.gt.f32.partialorder %v7981, 0.0
        %vm8081 = vcmp.gt.f32.partialorder %v7984, 0.0
        %vm8082 = vcmp.gt.f32.partialorder %v7989, 0.0
        %vm8083 = vcmp.gt.f32.partialorder %v7992, 0.0
        %vm8084 = vcmp.gt.f32.partialorder %v7997, 0.0
        %vm8085 = vcmp.gt.f32.partialorder %v8000, 0.0
        %vm8086 = vcmp.gt.f32.partialorder %v8005, 0.0
        %vm8087 = vcmp.gt.f32.partialorder %v8008, 0.0
        %vm8088 = vcmp.gt.f32.partialorder %v8013, 0.0
        %vm8089 = vcmp.gt.f32.partialorder %v8016, 0.0
        %vm8090 = vcmp.gt.f32.partialorder %v8021, 0.0
        %vm8091 = vcmp.gt.f32.partialorder %v8024, 0.0
        %v8092 = vstv %s8027
        %v8093 = vmul.f32 %v8092, %v7773
        %v8094 = vmul.f32 %v8092, %v7776
        %v8095 = vmul.f32 %v8092, %v7781
        %v8096 = vmul.f32 %v8092, %v7784
        %v8097 = vmul.f32 %v8092, %v7789
        %v8098 = vmul.f32 %v8092, %v7792
        %v8099 = vmul.f32 %v8092, %v7797
        %v8100 = vmul.f32 %v8092, %v7800
        %v8101 = vmul.f32 %v8092, %v7805
        %v8102 = vmul.f32 %v8092, %v7808
        %v8103 = vmul.f32 %v8092, %v7813
        %v8104 = vmul.f32 %v8092, %v7816
        %v8105 = vmul.f32 %v8092, %v7821
        %v8106 = vmul.f32 %v8092, %v7824
        %v8107 = vmul.f32 %v8092, %v7829
        %v8108 = vmul.f32 %v8092, %v7832
        %v8109 = vmul.f32 %v8092, %v7837
        %v8110 = vmul.f32 %v8092, %v7840
        %v8111 = vmul.f32 %v8092, %v7845
        %v8112 = vmul.f32 %v8092, %v7848
        %v8113 = vmul.f32 %v8092, %v7853
        %v8114 = vmul.f32 %v8092, %v7856
        %v8115 = vmul.f32 %v8092, %v7861
        %v8116 = vmul.f32 %v8092, %v7864
        %v8117 = vmul.f32 %v8092, %v7869
        %v8118 = vmul.f32 %v8092, %v7872
        %v8119 = vmul.f32 %v8092, %v7877
        %v8120 = vmul.f32 %v8092, %v7880
        %v8121 = vmul.f32 %v8092, %v7885
        %v8122 = vmul.f32 %v8092, %v7888
        %v8123 = vmul.f32 %v8092, %v7893
        %v8124 = vmul.f32 %v8092, %v7896
        %v8125 = vmul.f32 %v8092, %v7901
        %v8126 = vmul.f32 %v8092, %v7904
        %v8127 = vmul.f32 %v8092, %v7909
        %v8128 = vmul.f32 %v8092, %v7912
        %v8129 = vmul.f32 %v8092, %v7917
        %v8130 = vmul.f32 %v8092, %v7920
        %v8131 = vmul.f32 %v8092, %v7925
        %v8132 = vmul.f32 %v8092, %v7928
        %v8133 = vmul.f32 %v8092, %v7933
        %v8134 = vmul.f32 %v8092, %v7936
        %v8135 = vmul.f32 %v8092, %v7941
        %v8136 = vmul.f32 %v8092, %v7944
        %v8137 = vmul.f32 %v8092, %v7949
        %v8138 = vmul.f32 %v8092, %v7952
        %v8139 = vmul.f32 %v8092, %v7957
        %v8140 = vmul.f32 %v8092, %v7960
        %v8141 = vmul.f32 %v8092, %v7965
        %v8142 = vmul.f32 %v8092, %v7968
        %v8143 = vmul.f32 %v8092, %v7973
        %v8144 = vmul.f32 %v8092, %v7976
        %v8145 = vmul.f32 %v8092, %v7981
        %v8146 = vmul.f32 %v8092, %v7984
        %v8147 = vmul.f32 %v8092, %v7989
        %v8148 = vmul.f32 %v8092, %v7992
        %v8149 = vmul.f32 %v8092, %v7997
        %v8150 = vmul.f32 %v8092, %v8000
        %v8151 = vmul.f32 %v8092, %v8005
        %v8152 = vmul.f32 %v8092, %v8008
        %v8153 = vmul.f32 %v8092, %v8013
        %v8154 = vmul.f32 %v8092, %v8016
        %v8155 = vmul.f32 %v8092, %v8021
        %v8156 = vmul.f32 %v8092, %v8024
        %v8157 = vsel %vm8028, %v7773, %v8093
        %v8158 = vsel %vm8029, %v7776, %v8094
        %v8159 = vsel %vm8030, %v7781, %v8095
        %v8160 = vsel %vm8031, %v7784, %v8096
        %v8161 = vsel %vm8032, %v7789, %v8097
        %v8162 = vsel %vm8033, %v7792, %v8098
        %v8163 = vsel %vm8034, %v7797, %v8099
        %v8164 = vsel %vm8035, %v7800, %v8100
        %v8165 = vsel %vm8036, %v7805, %v8101
        %v8166 = vsel %vm8037, %v7808, %v8102
        %v8167 = vsel %vm8038, %v7813, %v8103
        %v8168 = vsel %vm8039, %v7816, %v8104
        %v8169 = vsel %vm8040, %v7821, %v8105
        %v8170 = vsel %vm8041, %v7824, %v8106
        %v8171 = vsel %vm8042, %v7829, %v8107
        %v8172 = vsel %vm8043, %v7832, %v8108
        %v8173 = vsel %vm8044, %v7837, %v8109
        %v8174 = vsel %vm8045, %v7840, %v8110
        %v8175 = vsel %vm8046, %v7845, %v8111
        %v8176 = vsel %vm8047, %v7848, %v8112
        %v8177 = vsel %vm8048, %v7853, %v8113
        %v8178 = vsel %vm8049, %v7856, %v8114
        %v8179 = vsel %vm8050, %v7861, %v8115
        %v8180 = vsel %vm8051, %v7864, %v8116
        %v8181 = vsel %vm8052, %v7869, %v8117
        %v8182 = vsel %vm8053, %v7872, %v8118
        %v8183 = vsel %vm8054, %v7877, %v8119
        %v8184 = vsel %vm8055, %v7880, %v8120
        %v8185 = vsel %vm8056, %v7885, %v8121
        %v8186 = vsel %vm8057, %v7888, %v8122
        %v8187 = vsel %vm8058, %v7893, %v8123
        %v8188 = vsel %vm8059, %v7896, %v8124
        %v8189 = vsel %vm8060, %v7901, %v8125
        %v8190 = vsel %vm8061, %v7904, %v8126
        %v8191 = vsel %vm8062, %v7909, %v8127
        %v8192 = vsel %vm8063, %v7912, %v8128
        %v8193 = vsel %vm8064, %v7917, %v8129
        %v8194 = vsel %vm8065, %v7920, %v8130
        %v8195 = vsel %vm8066, %v7925, %v8131
        %v8196 = vsel %vm8067, %v7928, %v8132
        %v8197 = vsel %vm8068, %v7933, %v8133
        %v8198 = vsel %vm8069, %v7936, %v8134
        %v8199 = vsel %vm8070, %v7941, %v8135
        %v8200 = vsel %vm8071, %v7944, %v8136
        %v8201 = vsel %vm8072, %v7949, %v8137
        %v8202 = vsel %vm8073, %v7952, %v8138
        %v8203 = vsel %vm8074, %v7957, %v8139
        %v8204 = vsel %vm8075, %v7960, %v8140
        %v8205 = vsel %vm8076, %v7965, %v8141
        %v8206 = vsel %vm8077, %v7968, %v8142
        %v8207 = vsel %vm8078, %v7973, %v8143
        %v8208 = vsel %vm8079, %v7976, %v8144
        %v8209 = vsel %vm8080, %v7981, %v8145
        %v8210 = vsel %vm8081, %v7984, %v8146
        %v8211 = vsel %vm8082, %v7989, %v8147
        %v8212 = vsel %vm8083, %v7992, %v8148
        %v8213 = vsel %vm8084, %v7997, %v8149
        %v8214 = vsel %vm8085, %v8000, %v8150
        %v8215 = vsel %vm8086, %v8005, %v8151
        %v8216 = vsel %vm8087, %v8008, %v8152
        %v8217 = vsel %vm8088, %v8013, %v8153
        %v8218 = vsel %vm8089, %v8016, %v8154
        %v8219 = vsel %vm8090, %v8021, %v8155
        %v8220 = vsel %vm8091, %v8024, %v8156
        %8221 = vxpose.xlu0.b32.start [1/16] %v8157, 128
        %8222 = vxpose.xlu0.b32.cont [2/16] %v8158, 128
        %8223 = vxpose.xlu0.b32.cont [3/16] %v8159, 128
        %8224 = vxpose.xlu0.b32.cont [4/16] %v8160, 128
        %8225 = vxpose.xlu0.b32.cont [5/16] %v8161, 128
        %8226 = vxpose.xlu0.b32.cont [6/16] %v8162, 128
        %8227 = vxpose.xlu0.b32.cont [7/16] %v8163, 128
        %8228 = vxpose.xlu0.b32.cont [8/16] %v8164, 128
        %8229 = vxpose.xlu0.b32.cont [9/16] %v8165, 128
        %8230 = vxpose.xlu0.b32.cont [10/16] %v8166, 128
        %8231 = vxpose.xlu0.b32.cont [11/16] %v8167, 128
        %8232 = vxpose.xlu0.b32.cont [12/16] %v8168, 128
        %8233 = vxpose.xlu0.b32.cont [13/16] %v8169, 128
        %8234 = vxpose.xlu0.b32.cont [14/16] %v8170, 128
        %8235 = vxpose.xlu0.b32.cont [15/16] %v8171, 128
        %8236 = vxpose.xlu0.b32.end [16/16] %v8172, 128
        %v8237 = vpop.trf.xlu0
        %v8238 = vpop.trf.xlu0
        %v8239 = vpop.trf.xlu0
        %v8240 = vpop.trf.xlu0
        %v8241 = vpop.trf.xlu0
        %v8242 = vpop.trf.xlu0
        %v8243 = vpop.trf.xlu0
        %v8244 = vpop.trf.xlu0
        %v8245 = vpop.trf.xlu0
        %v8246 = vpop.trf.xlu0
        %v8247 = vpop.trf.xlu0
        %v8248 = vpop.trf.xlu0
        %v8249 = vpop.trf.xlu0
        %v8250 = vpop.trf.xlu0
        %v8251 = vpop.trf.xlu0
        %v8252 = vpop.trf.xlu0
        %8253 = vxpose.xlu0.b32.start [1/16] %v8173, 128
        %8254 = vxpose.xlu0.b32.cont [2/16] %v8174, 128
        %8255 = vxpose.xlu0.b32.cont [3/16] %v8175, 128
        %8256 = vxpose.xlu0.b32.cont [4/16] %v8176, 128
        %8257 = vxpose.xlu0.b32.cont [5/16] %v8177, 128
        %8258 = vxpose.xlu0.b32.cont [6/16] %v8178, 128
        %8259 = vxpose.xlu0.b32.cont [7/16] %v8179, 128
        %8260 = vxpose.xlu0.b32.cont [8/16] %v8180, 128
        %8261 = vxpose.xlu0.b32.cont [9/16] %v8181, 128
        %8262 = vxpose.xlu0.b32.cont [10/16] %v8182, 128
        %8263 = vxpose.xlu0.b32.cont [11/16] %v8183, 128
        %8264 = vxpose.xlu0.b32.cont [12/16] %v8184, 128
        %8265 = vxpose.xlu0.b32.cont [13/16] %v8185, 128
        %8266 = vxpose.xlu0.b32.cont [14/16] %v8186, 128
        %8267 = vxpose.xlu0.b32.cont [15/16] %v8187, 128
        %8268 = vxpose.xlu0.b32.end [16/16] %v8188, 128
        %v8269 = vpop.trf.xlu0
        %v8270 = vpop.trf.xlu0
        %v8271 = vpop.trf.xlu0
        %v8272 = vpop.trf.xlu0
        %v8273 = vpop.trf.xlu0
        %v8274 = vpop.trf.xlu0
        %v8275 = vpop.trf.xlu0
        %v8276 = vpop.trf.xlu0
        %v8277 = vpop.trf.xlu0
        %v8278 = vpop.trf.xlu0
        %v8279 = vpop.trf.xlu0
        %v8280 = vpop.trf.xlu0
        %v8281 = vpop.trf.xlu0
        %v8282 = vpop.trf.xlu0
        %v8283 = vpop.trf.xlu0
        %v8284 = vpop.trf.xlu0
        %8285 = vxpose.xlu0.b32.start [1/16] %v8189, 128
        %8286 = vxpose.xlu0.b32.cont [2/16] %v8190, 128
        %8287 = vxpose.xlu0.b32.cont [3/16] %v8191, 128
        %8288 = vxpose.xlu0.b32.cont [4/16] %v8192, 128
        %8289 = vxpose.xlu0.b32.cont [5/16] %v8193, 128
        %8290 = vxpose.xlu0.b32.cont [6/16] %v8194, 128
        %8291 = vxpose.xlu0.b32.cont [7/16] %v8195, 128
        %8292 = vxpose.xlu0.b32.cont [8/16] %v8196, 128
        %8293 = vxpose.xlu0.b32.cont [9/16] %v8197, 128
        %8294 = vxpose.xlu0.b32.cont [10/16] %v8198, 128
        %8295 = vxpose.xlu0.b32.cont [11/16] %v8199, 128
        %8296 = vxpose.xlu0.b32.cont [12/16] %v8200, 128
        %8297 = vxpose.xlu0.b32.cont [13/16] %v8201, 128
        %8298 = vxpose.xlu0.b32.cont [14/16] %v8202, 128
        %8299 = vxpose.xlu0.b32.cont [15/16] %v8203, 128
        %8300 = vxpose.xlu0.b32.end [16/16] %v8204, 128
        %v8301 = vpop.trf.xlu0
        %v8302 = vpop.trf.xlu0
        %v8303 = vpop.trf.xlu0
        %v8304 = vpop.trf.xlu0
        %v8305 = vpop.trf.xlu0
        %v8306 = vpop.trf.xlu0
        %v8307 = vpop.trf.xlu0
        %v8308 = vpop.trf.xlu0
        %v8309 = vpop.trf.xlu0
        %v8310 = vpop.trf.xlu0
        %v8311 = vpop.trf.xlu0
        %v8312 = vpop.trf.xlu0
        %v8313 = vpop.trf.xlu0
        %v8314 = vpop.trf.xlu0
        %v8315 = vpop.trf.xlu0
        %v8316 = vpop.trf.xlu0
        %8317 = vxpose.xlu0.b32.start [1/16] %v8205, 128
        %8318 = vxpose.xlu0.b32.cont [2/16] %v8206, 128
        %8319 = vxpose.xlu0.b32.cont [3/16] %v8207, 128
        %8320 = vxpose.xlu0.b32.cont [4/16] %v8208, 128
        %8321 = vxpose.xlu0.b32.cont [5/16] %v8209, 128
        %8322 = vxpose.xlu0.b32.cont [6/16] %v8210, 128
        %8323 = vxpose.xlu0.b32.cont [7/16] %v8211, 128
        %8324 = vxpose.xlu0.b32.cont [8/16] %v8212, 128
        %8325 = vxpose.xlu0.b32.cont [9/16] %v8213, 128
        %8326 = vxpose.xlu0.b32.cont [10/16] %v8214, 128
        %8327 = vxpose.xlu0.b32.cont [11/16] %v8215, 128
        %8328 = vxpose.xlu0.b32.cont [12/16] %v8216, 128
        %8329 = vxpose.xlu0.b32.cont [13/16] %v8217, 128
        %8330 = vxpose.xlu0.b32.cont [14/16] %v8218, 128
        %8331 = vxpose.xlu0.b32.cont [15/16] %v8219, 128
        %8332 = vxpose.xlu0.b32.end [16/16] %v8220, 128
        %v8333 = vpop.trf.xlu0
        %v8334 = vpop.trf.xlu0
        %v8335 = vpop.trf.xlu0
        %v8336 = vpop.trf.xlu0
        %v8337 = vpop.trf.xlu0
        %v8338 = vpop.trf.xlu0
        %v8339 = vpop.trf.xlu0
        %v8340 = vpop.trf.xlu0
        %v8341 = vpop.trf.xlu0
        %v8342 = vpop.trf.xlu0
        %v8343 = vpop.trf.xlu0
        %v8344 = vpop.trf.xlu0
        %v8345 = vpop.trf.xlu0
        %v8346 = vpop.trf.xlu0
        %v8347 = vpop.trf.xlu0
        %v8348 = vpop.trf.xlu0
        %8349 = vst [vmem:[%s282] sm:$0xff] %v8237
        %8350 = vst [vmem:[%s282 + $0x8] sm:$0xff] %v8269
        %8351 = vst [vmem:[%s282 + $0x10] sm:$0xff] %v8301
        %8352 = vst [vmem:[%s282 + $0x18] sm:$0xff] %v8333
        %8353 = vst [vmem:[%s282 + $0x20] sm:$0xff] %v8238
        %8354 = vst [vmem:[%s282 + $0x28] sm:$0xff] %v8270
        %8355 = vst [vmem:[%s282 + $0x30] sm:$0xff] %v8302
        %8356 = vst [vmem:[%s282 + $0x38] sm:$0xff] %v8334
        %8357 = vst [vmem:[%s282 + $0x40] sm:$0xff] %v8239
        %8358 = vst [vmem:[%s282 + $0x48] sm:$0xff] %v8271
        %8359 = vst [vmem:[%s282 + $0x50] sm:$0xff] %v8303
        %8360 = vst [vmem:[%s282 + $0x58] sm:$0xff] %v8335
        %8361 = vst [vmem:[%s282 + $0x60] sm:$0xff] %v8240
        %8362 = vst [vmem:[%s282 + $0x68] sm:$0xff] %v8272
        %8363 = vst [vmem:[%s282 + $0x70] sm:$0xff] %v8304
        %8364 = vst [vmem:[%s282 + $0x78] sm:$0xff] %v8336
        %8365 = vst [vmem:[%s282 + $0x80] sm:$0xff] %v8241
        %8366 = vst [vmem:[%s282 + $0x88] sm:$0xff] %v8273
        %8367 = vst [vmem:[%s282 + $0x90] sm:$0xff] %v8305
        %8368 = vst [vmem:[%s282 + $0x98] sm:$0xff] %v8337
        %8369 = vst [vmem:[%s282 + $0xa0] sm:$0xff] %v8242
        %8370 = vst [vmem:[%s282 + $0xa8] sm:$0xff] %v8274
        %8371 = vst [vmem:[%s282 + $0xb0] sm:$0xff] %v8306
        %8372 = vst [vmem:[%s282 + $0xb8] sm:$0xff] %v8338
        %8373 = vst [vmem:[%s282 + $0xc0] sm:$0xff] %v8243
        %8374 = vst [vmem:[%s282 + $0xc8] sm:$0xff] %v8275
        %8375 = vst [vmem:[%s282 + $0xd0] sm:$0xff] %v8307
        %8376 = vst [vmem:[%s282 + $0xd8] sm:$0xff] %v8339
        %8377 = vst [vmem:[%s282 + $0xe0] sm:$0xff] %v8244
        %8378 = vst [vmem:[%s282 + $0xe8] sm:$0xff] %v8276
        %8379 = vst [vmem:[%s282 + $0xf0] sm:$0xff] %v8308
        %8380 = vst [vmem:[%s282 + $0xf8] sm:$0xff] %v8340
        %8381 = vst [vmem:[%s282 + $0x100] sm:$0xff] %v8245
        %8382 = vst [vmem:[%s282 + $0x108] sm:$0xff] %v8277
        %8383 = vst [vmem:[%s282 + $0x110] sm:$0xff] %v8309
        %8384 = vst [vmem:[%s282 + $0x118] sm:$0xff] %v8341
        %8385 = vst [vmem:[%s282 + $0x120] sm:$0xff] %v8246
        %8386 = vst [vmem:[%s282 + $0x128] sm:$0xff] %v8278
        %8387 = vst [vmem:[%s282 + $0x130] sm:$0xff] %v8310
        %8388 = vst [vmem:[%s282 + $0x138] sm:$0xff] %v8342
        %8389 = vst [vmem:[%s282 + $0x140] sm:$0xff] %v8247
        %8390 = vst [vmem:[%s282 + $0x148] sm:$0xff] %v8279
        %8391 = vst [vmem:[%s282 + $0x150] sm:$0xff] %v8311
        %8392 = vst [vmem:[%s282 + $0x158] sm:$0xff] %v8343
        %8393 = vst [vmem:[%s282 + $0x160] sm:$0xff] %v8248
        %8394 = vst [vmem:[%s282 + $0x168] sm:$0xff] %v8280
        %8395 = vst [vmem:[%s282 + $0x170] sm:$0xff] %v8312
        %8396 = vst [vmem:[%s282 + $0x178] sm:$0xff] %v8344
        %8397 = vst [vmem:[%s282 + $0x180] sm:$0xff] %v8249
        %8398 = vst [vmem:[%s282 + $0x188] sm:$0xff] %v8281
        %8399 = vst [vmem:[%s282 + $0x190] sm:$0xff] %v8313
        %8400 = vst [vmem:[%s282 + $0x198] sm:$0xff] %v8345
        %8401 = vst [vmem:[%s282 + $0x1a0] sm:$0xff] %v8250
        %8402 = vst [vmem:[%s282 + $0x1a8] sm:$0xff] %v8282
        %8403 = vst [vmem:[%s282 + $0x1b0] sm:$0xff] %v8314
        %8404 = vst [vmem:[%s282 + $0x1b8] sm:$0xff] %v8346
        %8405 = vst [vmem:[%s282 + $0x1c0] sm:$0xff] %v8251
        %8406 = vst [vmem:[%s282 + $0x1c8] sm:$0xff] %v8283
        %8407 = vst [vmem:[%s282 + $0x1d0] sm:$0xff] %v8315
        %8408 = vst [vmem:[%s282 + $0x1d8] sm:$0xff] %v8347
        %8409 = vst [vmem:[%s282 + $0x1e0] sm:$0xff] %v8252
        %8410 = vst [vmem:[%s282 + $0x1e8] sm:$0xff] %v8284
        %8411 = vst [vmem:[%s282 + $0x1f0] sm:$0xff] %v8316
        %8412 = vst [vmem:[%s282 + $0x1f8] sm:$0xff] %v8348
        %s8413 = sand.u32 %s176, 1
        %s8414 = scalar_lea.sflag [#allocation3], %s8413
        %s8415 = sand.u32 %s176, 1
        %s8416 = smul.addr %s8415, 512
        %s8417 = scalar_lea.vmem [#allocation5], %s8416
        // Predicated region
        $region49: #{deep_encoder_forward.1} parent=43 // pred_check
          %p8418 = pneg %p186
        $region50: #{deep_encoder_forward.1} parent=43 // pred_check_branch
          %8420 = sbr.rel (%p8418) target = $region52
        $region51: #{deep_encoder_forward.1} parent=43 // pred_region
          %s8421 = smul.u32 4, %s25
          %s8423 = ssub.s32 8192, 8192
          %8424 = vsyncadd %s8414, %s8423
          %s8425 = smul.addr %s26, 128
          %s8426 = sadd.s32 %s8421, %s8425
          %s8427 = smul.addr %s8426, 128
          %s8428 = scalar_lea.hbm %s6, %s8427
          %s8429 = sshll.u32 %s8417, 4
          %s8430 = int_to_ptr.vmem [resolvable:$true] %s8429
          %8435 = dma.vmem_to_hbm [thread:$0]  %s8430, 8192, %s8428, %s8414, 512, 1024, 32
        $region52: #{deep_encoder_forward.1} parent=43 // pred_fallthru
          _
      $region44: #{deep_encoder_forward.1} parent=5 // pred_fallthru
        _
      %p8436 = scmp.le.s32.totalorder 2, %s16
      // Predicated region
      $region53: #{deep_encoder_forward.1} parent=5 // pred_check
        %p8437 = pneg %p8436
      $region54: #{deep_encoder_forward.1} parent=5 // pred_check_branch
        %8439 = sbr.rel (%p8437) target = $region56
      $region55: #{deep_encoder_forward.1} parent=5 // pred_region
        %s8440 = ssub.s32 %s16, 2
        // Predicated region
        $region57: #{deep_encoder_forward.1} parent=55 // pred_check
          %p8441 = pneg %p192
        $region58: #{deep_encoder_forward.1} parent=55 // pred_check_branch
          %8443 = sbr.rel (%p8441) target = $region60
        $region59: #{deep_encoder_forward.1} parent=55 // pred_region
          %s8444 = sand.u32 %s177, 1
          %s8445 = scalar_lea.sflag [#allocation3], %s8444
          %s8446 = sand.u32 %s177, 1
          %s8447 = smul.addr %s8446, 512
          %s8448 = scalar_lea.vmem [#allocation5], %s8447
          %8449 = dma.done %s8445, 8192
        $region60: #{deep_encoder_forward.1} parent=55 // pred_fallthru
          _
      $region56: #{deep_encoder_forward.1} parent=5 // pred_fallthru
        _
    $region6: #{deep_encoder_forward.1} parent=1 // loop_footer
      %s20 = sadd.s32 1, %s16
    $region7: #{deep_encoder_forward.1} parent=1 // loop_footer_branch
      %15 = sbr.rel target = $region3
    $region8: #{deep_encoder_forward.1} parent=1 // loop_exit
      _
    %8450 = vsyncpa [#allocation3], 1
    %s8451 = scalar_lea.sflag [#allocation3], 1
    %8452 = vsyncpa %s8451, 1
    %8453 = vsyncpa [#allocation4], 1
    %s8454 = scalar_lea.sflag [#allocation4], 1
    %8455 = vsyncpa %s8454, 1

</llo_original>
